<compile_context>
chip_gen: v5e
topology: v5e:2x2
jax: 0.10.0
libtpu: 0.0.40
codegen_flags: <defaults>
</compile_context>

<pallas_src>
import functools

import jax
import jax.numpy as jnp
from jax.experimental import pallas as pl
from jax.experimental.pallas import tpu as pltpu


def _round_up(x, m):
    return ((x + m - 1) // m) * m


# ------------------------------ Pallas kernels ------------------------------

def _conv3x3_bn_stats_kernel(*refs, fuse_affine, W, Wp, CR):
    """One image: [optional fused per-channel affine + ReLU on the input] -> 3x3 'same'
    conv (stride 1, bias=False) -> conv output (bf16) + per-channel sum / sum-of-squares.

    Layout: padded image rows have pitch Wp (multiple of 16); real data sits in columns
    [0, W) of each pitch-row, the remaining columns / the top & bottom pitch-rows are zero.
    The kw-grouped patch matrix M (bf16, VMEM scratch) satisfies
        M[p, kw*Cin + c] = Xpad_flat[p + kw - 1, c]
    so output row-band chunks are computed as 3 chained MXU dots (one per kh) with
    K = 3*Cin, LHS slices starting at multiples of Wp (aligned).
    """
    if fuse_affine:
        (x_ref, scale_ref, shift_ref, w_ref, mask_ref,
         y_ref, sum_ref, ssq_ref, m_ref) = refs
    else:
        x_ref, w_ref, mask_ref, y_ref, sum_ref, ssq_ref, m_ref = refs

    H = x_ref.shape[0]
    Cin = x_ref.shape[-1]
    Cout = w_ref.shape[-1]

    # Load input; apply previous layer's BN affine + ReLU in f32; single cast to bf16.
    xin = x_ref[...].astype(jnp.float32)
    if fuse_affine:
        xin = jnp.maximum(xin * scale_ref[...] + shift_ref[...], 0.0)
    xin = xin.astype(jnp.bfloat16)                      # (H, W, Cin)

    # Stage the kw-grouped patch matrix (zero-fill covers all pad rows / pad columns;
    # store offsets for the center block are multiples of Wp -> sublane aligned).
    m_ref[...] = jnp.zeros_like(m_ref)
    for kw in range(3):
        c0 = kw * Cin
        for h in range(H):
            r0 = (h + 1) * Wp + (1 - kw)
            m_ref[r0:r0 + W, c0:c0 + Cin] = xin[h]

    # Conv over chunks of CR output rows: 3 large-K dots chained in an SSA f32
    # accumulator (no VMEM RMW), one masked stats reduction per chunk, aligned per-row
    # writeback of the valid output columns.
    s = jnp.zeros((1, Cout), jnp.float32)
    q = jnp.zeros((1, Cout), jnp.float32)
    for h0 in range(0, H, CR):
        ch = min(CR, H - h0)
        rows = ch * Wp
        acc = jnp.dot(m_ref[h0 * Wp:h0 * Wp + rows, :], w_ref[0],
                      preferred_element_type=jnp.float32)
        acc = acc + jnp.dot(m_ref[(h0 + 1) * Wp:(h0 + 1) * Wp + rows, :], w_ref[1],
                            preferred_element_type=jnp.float32)
        acc = acc + jnp.dot(m_ref[(h0 + 2) * Wp:(h0 + 2) * Wp + rows, :], w_ref[2],
                            preferred_element_type=jnp.float32)

        # BatchNorm statistics over valid columns only (mask is 1.0 where col < W).
        masked = acc * mask_ref[0:rows, :]
        s = s + jnp.sum(masked, axis=0, keepdims=True)
        q = q + jnp.sum(masked * acc, axis=0, keepdims=True)

        # Write the valid output rows (offsets i*Wp are sublane aligned).
        for i in range(ch):
            y_ref[h0 + i] = acc[i * Wp:i * Wp + W, :].astype(y_ref.dtype)

    sum_ref[...] = s
    ssq_ref[...] = q


def _bn_add_relu_kernel(y_ref, res_ref, scale_ref, shift_ref, o_ref):
    """out = relu(bn2(y2) + residual): single elementwise pass (bf16 in / bf16 out)."""
    y = y_ref[...].astype(jnp.float32) * scale_ref[...] + shift_ref[...]
    o_ref[...] = jnp.maximum(y + res_ref[...].astype(jnp.float32), 0.0).astype(o_ref.dtype)


# ------------------------------ pallas_call wrappers ------------------------------

def _conv3x3_with_stats(x, w3, mask, scale=None, shift=None, *, Wp, CR):
    """x: (N,H,W,Cin) bf16; w3: (3, 3*Cin, Cout) bf16 (kh-major, rows ordered kw-major);
    mask: (CR*Wp, 1) f32 column-validity mask. Optional scale/shift (1,Cin) f32 apply a
    fused per-channel affine + ReLU to x first. Returns (conv output (N,H,W,Cout) bf16,
    per-image channel sums (N,1,Cout) f32, per-image channel sum-of-squares (N,1,Cout) f32).
    """
    N, H, W, Cin = x.shape
    Cout = w3.shape[-1]
    P = (H + 2) * Wp
    fuse = scale is not None

    in_arrays = [x]
    in_specs = [pl.BlockSpec((None, H, W, Cin), lambda n: (n, 0, 0, 0))]
    if fuse:
        in_arrays += [scale, shift]
        in_specs += [pl.BlockSpec((1, Cin), lambda n: (0, 0)),
                     pl.BlockSpec((1, Cin), lambda n: (0, 0))]
    in_arrays += [w3, mask]
    in_specs += [pl.BlockSpec((3, 3 * Cin, Cout), lambda n: (0, 0, 0)),
                 pl.BlockSpec((CR * Wp, 1), lambda n: (0, 0))]

    return pl.pallas_call(
        functools.partial(_conv3x3_bn_stats_kernel,
                          fuse_affine=fuse, W=W, Wp=Wp, CR=CR),
        out_shape=(
            jax.ShapeDtypeStruct((N, H, W, Cout), jnp.bfloat16),
            jax.ShapeDtypeStruct((N, 1, Cout), jnp.float32),
            jax.ShapeDtypeStruct((N, 1, Cout), jnp.float32),
        ),
        grid_spec=pltpu.PrefetchScalarGridSpec(
            num_scalar_prefetch=0,
            grid=(N,),
            in_specs=in_specs,
            out_specs=[
                pl.BlockSpec((None, H, W, Cout), lambda n: (n, 0, 0, 0)),
                pl.BlockSpec((None, 1, Cout), lambda n: (n, 0, 0)),
                pl.BlockSpec((None, 1, Cout), lambda n: (n, 0, 0)),
            ],
            scratch_shapes=[
                pltpu.VMEM((P, 3 * Cin), jnp.bfloat16),   # kw-grouped patch matrix (bf16)
            ],
        ),
        compiler_params=pltpu.CompilerParams(
            dimension_semantics=("parallel",)),
    )(*in_arrays)


def _bn_add_relu(y2, residual, scale, shift):
    N, H, W, C = y2.shape
    return pl.pallas_call(
        _bn_add_relu_kernel,
        out_shape=jax.ShapeDtypeStruct((N, H, W, C), jnp.bfloat16),
        grid_spec=pltpu.PrefetchScalarGridSpec(
            num_scalar_prefetch=0,
            grid=(N,),
            in_specs=[
                pl.BlockSpec((None, H, W, C), lambda n: (n, 0, 0, 0)),
                pl.BlockSpec((None, H, W, C), lambda n: (n, 0, 0, 0)),
                pl.BlockSpec((1, C), lambda n: (0, 0)),
                pl.BlockSpec((1, C), lambda n: (0, 0)),
            ],
            out_specs=pl.BlockSpec((None, H, W, C), lambda n: (n, 0, 0, 0)),
        ),
        compiler_params=pltpu.CompilerParams(
            dimension_semantics=("parallel",)),
    )(y2, residual, scale, shift)


# ------------------------------ glue ------------------------------

def _bn_scale_shift(psum, pssq, gamma, beta, count, eps=1e-5):
    """Training-mode BatchNorm (batch stats, biased variance) folded to y*scale + shift."""
    mean = jnp.sum(psum, axis=(0, 1)) / count
    ex2 = jnp.sum(pssq, axis=(0, 1)) / count
    var = jnp.maximum(ex2 - mean * mean, 0.0)
    scale = gamma * jax.lax.rsqrt(var + eps)
    shift = beta - mean * scale
    return scale, shift


def basic_block_res_forward(x_nchw, params, eps=1e-5):
    """BasicBlock_res.forward with stride=1, downsample=None (identity residual)."""
    # TODO(synk): stride>1 / downsample path of BasicBlock_res is not implemented
    # (constructor defaults are stride=1, downsample=None).
    x = jnp.transpose(x_nchw, (0, 2, 3, 1)).astype(jnp.float32)   # NCHW -> NHWC
    N, H, W, C = x.shape
    count = N * H * W

    Wp = _round_up(W + 2, 16)                 # padded row pitch (bf16 sublane aligned)
    CR = max(1, 256 // Wp)                    # output rows per chunk (~256 LHS rows)
    mask = (jnp.arange(CR * Wp) % Wp < W).astype(jnp.float32).reshape(CR * Wp, 1)

    x_bf = x.astype(jnp.bfloat16)
    planes = params["w1"].shape[-1]
    # HWIO (3,3,Cin,Cout) -> (kh, kw*Cin, Cout): rows of each kh slab are kw-major.
    w1 = params["w1"].reshape(3, 3 * C, planes).astype(jnp.bfloat16)
    w2 = params["w2"].reshape(3, 3 * planes, planes).astype(jnp.bfloat16)

    # conv1 (+ fused BN1 batch statistics)
    y1, s1, q1 = _conv3x3_with_stats(x_bf, w1, mask, Wp=Wp, CR=CR)
    scale1, shift1 = _bn_scale_shift(s1, q1, params["gamma1"], params["beta1"], count, eps)

    # BN1-affine + ReLU fused into conv2's input stage; conv2 (+ fused BN2 statistics)
    y2, s2, q2 = _conv3x3_with_stats(y1, w2, mask, scale1[None, :], shift1[None, :],
                                     Wp=Wp, CR=CR)
    scale2, shift2 = _bn_scale_shift(s2, q2, params["gamma2"], params["beta2"], count, eps)

    # BN2-affine + residual add + final ReLU (single elementwise pass, bf16 in / bf16 out)
    out = _bn_add_relu(y2, x_bf, scale2[None, :], shift2[None, :])
    return jnp.transpose(out, (0, 3, 1, 2)).astype(jnp.float32)   # NHWC -> NCHW


def init_params(key, inplanes, planes):
    k1, k2 = jax.random.split(key)
    std1 = (2.0 / (9 * inplanes)) ** 0.5
    std2 = (2.0 / (9 * planes)) ** 0.5
    return {
        # conv weights kept in HWIO layout (= torch OIHW transposed (2, 3, 1, 0)); bias=False
        "w1": std1 * jax.random.normal(k1, (3, 3, inplanes, planes), jnp.float32),
        "w2": std2 * jax.random.normal(k2, (3, 3, planes, planes), jnp.float32),
        # BatchNorm2d affine params (PyTorch default init)
        "gamma1": jnp.ones((planes,), jnp.float32),
        "beta1": jnp.zeros((planes,), jnp.float32),
        "gamma2": jnp.ones((planes,), jnp.float32),
        "beta2": jnp.zeros((planes,), jnp.float32),
    }


# ------------------------------ pure-JAX reference (f32) ------------------------------

def _reference_forward(x_nchw, params, eps=1e-5):
    x = jnp.transpose(x_nchw, (0, 2, 3, 1)).astype(jnp.float32)

    def conv(v, w):
        return jax.lax.conv_general_dilated(
            v, w, window_strides=(1, 1), padding="SAME",
            dimension_numbers=("NHWC", "HWIO", "NHWC"),
            precision=jax.lax.Precision.HIGHEST)

    def bn(v, g, b):
        m = jnp.mean(v, axis=(0, 1, 2))
        var = jnp.mean(jnp.square(v - m), axis=(0, 1, 2))
        return (v - m) * (g * jax.lax.rsqrt(var + eps)) + b

    h = jax.nn.relu(bn(conv(x, params["w1"]), params["gamma1"], params["beta1"]))
    h = bn(conv(h, params["w2"]), params["gamma2"], params["beta2"])
    out = jax.nn.relu(h + x)
    return jnp.transpose(out, (0, 3, 1, 2))


# ------------------------------ main ------------------------------

if __name__ == "__main__":
    key = jax.random.PRNGKey(0)
    kx, kp = jax.random.split(key)

    # BasicBlock_res(inplanes=64, planes=64, stride=1, downsample=None)
    N, C, H, W = 2, 64, 16, 16
    x = jax.random.normal(kx, (N, C, H, W), jnp.float32)
    params = init_params(kp, C, C)

    fwd = jax.jit(basic_block_res_forward)
    out = fwd(x, params)
    jax.block_until_ready(out)

    assert out.shape == (N, C, H, W), out.shape
    assert bool(jnp.all(jnp.isfinite(out)))
    assert bool(jnp.all(out >= 0.0))          # final ReLU

    # Compare against a pure-JAX f32 reference (kernel path uses bf16 activations/weights
    # and a bf16 final output -> loose tolerance).
    ref = _reference_forward(x, params)
    max_err = float(jnp.max(jnp.abs(out - ref)))
    mean_err = float(jnp.mean(jnp.abs(out - ref)))
    assert max_err < 0.35 and mean_err < 0.06, (max_err, mean_err)

    print("KERNEL_OK")
</pallas_src>

<mosaic_0001>
module attributes {stable_mosaic.version = 11 : i64} {
  func.func @_conv3x3_bn_stats_kernel(%arg0: i32, %arg1: memref<1x16x16x64xbf16, #tpu.memory_space<vmem>>, %arg2: memref<3x192x64xbf16, #tpu.memory_space<vmem>>, %arg3: memref<256x1xf32, #tpu.memory_space<vmem>>, %arg4: memref<1x16x16x64xbf16, #tpu.memory_space<vmem>>, %arg5: memref<1x1x64xf32, #tpu.memory_space<vmem>>, %arg6: memref<1x1x64xf32, #tpu.memory_space<vmem>>, %arg7: memref<576x192xbf16, #tpu.memory_space<vmem>>) attributes {dimension_semantics = [#tpu.dimension_semantics<parallel>], iteration_bounds = array<i64: 2>, scalar_prefetch = 0 : i64, scratch_operands = 1 : i64, tpu.core_type = #tpu.core_type<tc>, window_params = [{transform_indices = @transform_0, window_bounds = array<i64: 1, 16, 16, 64>}, {pipeline_mode = #tpu.pipeline_mode<synchronous>, transform_indices = @transform_1, window_bounds = array<i64: 3, 192, 64>}, {pipeline_mode = #tpu.pipeline_mode<synchronous>, transform_indices = @transform_2, window_bounds = array<i64: 256, 1>}, {transform_indices = @transform_3, window_bounds = array<i64: 1, 16, 16, 64>}, {transform_indices = @transform_4, window_bounds = array<i64: 1, 1, 64>}, {transform_indices = @transform_5, window_bounds = array<i64: 1, 1, 64>}]} {
    %c0 = arith.constant 0 : index
    %c0_0 = arith.constant 0 : index
    %c0_1 = arith.constant 0 : index
    %c0_2 = arith.constant 0 : index
    %0 = vector.load %arg1[%c0, %c0_0, %c0_1, %c0_2] : memref<1x16x16x64xbf16, #tpu.memory_space<vmem>>, vector<1x16x16x64xbf16>
    %1 = vector.shape_cast %0 : vector<1x16x16x64xbf16> to vector<16x16x64xbf16>
    %2 = arith.extf %1 : vector<16x16x64xbf16> to vector<16x16x64xf32>
    %3 = arith.truncf %2 : vector<16x16x64xf32> to vector<16x16x64xbf16>
    %cst = arith.constant 0.000000e+00 : bf16
    %4 = vector.broadcast %cst : bf16 to vector<576x192xbf16>
    %c0_3 = arith.constant 0 : index
    %c0_4 = arith.constant 0 : index
    %5 = vector.load %arg7[%c0_3, %c0_4] : memref<576x192xbf16, #tpu.memory_space<vmem>>, vector<576x192xbf16>
    tpu.vector_store %arg7[%c0_3, %c0_4], %4 {strides = array<i32>} : memref<576x192xbf16, #tpu.memory_space<vmem>>, vector<576x192xbf16>,
    %6 = vector.extract_strided_slice %3 {offsets = [0, 0, 0], sizes = [1, 16, 64], strides = [1, 1, 1]} : vector<16x16x64xbf16> to vector<1x16x64xbf16>
    %7 = vector.shape_cast %6 : vector<1x16x64xbf16> to vector<16x64xbf16>
    %c33 = arith.constant 33 : index
    %c0_5 = arith.constant 0 : index
    %8 = vector.load %arg7[%c33, %c0_5] : memref<576x192xbf16, #tpu.memory_space<vmem>>, vector<16x64xbf16>
    tpu.vector_store %arg7[%c33, %c0_5], %7 {strides = array<i32>} : memref<576x192xbf16, #tpu.memory_space<vmem>>, vector<16x64xbf16>,
    %9 = vector.extract_strided_slice %3 {offsets = [1, 0, 0], sizes = [1, 16, 64], strides = [1, 1, 1]} : vector<16x16x64xbf16> to vector<1x16x64xbf16>
    %10 = vector.shape_cast %9 : vector<1x16x64xbf16> to vector<16x64xbf16>
    %c65 = arith.constant 65 : index
    %c0_6 = arith.constant 0 : index
    %11 = vector.load %arg7[%c65, %c0_6] : memref<576x192xbf16, #tpu.memory_space<vmem>>, vector<16x64xbf16>
    tpu.vector_store %arg7[%c65, %c0_6], %10 {strides = array<i32>} : memref<576x192xbf16, #tpu.memory_space<vmem>>, vector<16x64xbf16>,
    %12 = vector.extract_strided_slice %3 {offsets = [2, 0, 0], sizes = [1, 16, 64], strides = [1, 1, 1]} : vector<16x16x64xbf16> to vector<1x16x64xbf16>
    %13 = vector.shape_cast %12 : vector<1x16x64xbf16> to vector<16x64xbf16>
    %c97 = arith.constant 97 : index
    %c0_7 = arith.constant 0 : index
    %14 = vector.load %arg7[%c97, %c0_7] : memref<576x192xbf16, #tpu.memory_space<vmem>>, vector<16x64xbf16>
    tpu.vector_store %arg7[%c97, %c0_7], %13 {strides = array<i32>} : memref<576x192xbf16, #tpu.memory_space<vmem>>, vector<16x64xbf16>,
    %15 = vector.extract_strided_slice %3 {offsets = [3, 0, 0], sizes = [1, 16, 64], strides = [1, 1, 1]} : vector<16x16x64xbf16> to vector<1x16x64xbf16>
    %16 = vector.shape_cast %15 : vector<1x16x64xbf16> to vector<16x64xbf16>
    %c129 = arith.constant 129 : index
    %c0_8 = arith.constant 0 : index
    %17 = vector.load %arg7[%c129, %c0_8] : memref<576x192xbf16, #tpu.memory_space<vmem>>, vector<16x64xbf16>
    tpu.vector_store %arg7[%c129, %c0_8], %16 {strides = array<i32>} : memref<576x192xbf16, #tpu.memory_space<vmem>>, vector<16x64xbf16>,
    %18 = vector.extract_strided_slice %3 {offsets = [4, 0, 0], sizes = [1, 16, 64], strides = [1, 1, 1]} : vector<16x16x64xbf16> to vector<1x16x64xbf16>
    %19 = vector.shape_cast %18 : vector<1x16x64xbf16> to vector<16x64xbf16>
    %c161 = arith.constant 161 : index
    %c0_9 = arith.constant 0 : index
    %20 = vector.load %arg7[%c161, %c0_9] : memref<576x192xbf16, #tpu.memory_space<vmem>>, vector<16x64xbf16>
    tpu.vector_store %arg7[%c161, %c0_9], %19 {strides = array<i32>} : memref<576x192xbf16, #tpu.memory_space<vmem>>, vector<16x64xbf16>,
    %21 = vector.extract_strided_slice %3 {offsets = [5, 0, 0], sizes = [1, 16, 64], strides = [1, 1, 1]} : vector<16x16x64xbf16> to vector<1x16x64xbf16>
    %22 = vector.shape_cast %21 : vector<1x16x64xbf16> to vector<16x64xbf16>
    %c193 = arith.constant 193 : index
    %c0_10 = arith.constant 0 : index
    %23 = vector.load %arg7[%c193, %c0_10] : memref<576x192xbf16, #tpu.memory_space<vmem>>, vector<16x64xbf16>
    tpu.vector_store %arg7[%c193, %c0_10], %22 {strides = array<i32>} : memref<576x192xbf16, #tpu.memory_space<vmem>>, vector<16x64xbf16>,
    %24 = vector.extract_strided_slice %3 {offsets = [6, 0, 0], sizes = [1, 16, 64], strides = [1, 1, 1]} : vector<16x16x64xbf16> to vector<1x16x64xbf16>
    %25 = vector.shape_cast %24 : vector<1x16x64xbf16> to vector<16x64xbf16>
    %c225 = arith.constant 225 : index
    %c0_11 = arith.constant 0 : index
    %26 = vector.load %arg7[%c225, %c0_11] : memref<576x192xbf16, #tpu.memory_space<vmem>>, vector<16x64xbf16>
    tpu.vector_store %arg7[%c225, %c0_11], %25 {strides = array<i32>} : memref<576x192xbf16, #tpu.memory_space<vmem>>, vector<16x64xbf16>,
    %27 = vector.extract_strided_slice %3 {offsets = [7, 0, 0], sizes = [1, 16, 64], strides = [1, 1, 1]} : vector<16x16x64xbf16> to vector<1x16x64xbf16>
    %28 = vector.shape_cast %27 : vector<1x16x64xbf16> to vector<16x64xbf16>
    %c257 = arith.constant 257 : index
    %c0_12 = arith.constant 0 : index
    %29 = vector.load %arg7[%c257, %c0_12] : memref<576x192xbf16, #tpu.memory_space<vmem>>, vector<16x64xbf16>
    tpu.vector_store %arg7[%c257, %c0_12], %28 {strides = array<i32>} : memref<576x192xbf16, #tpu.memory_space<vmem>>, vector<16x64xbf16>,
    %30 = vector.extract_strided_slice %3 {offsets = [8, 0, 0], sizes = [1, 16, 64], strides = [1, 1, 1]} : vector<16x16x64xbf16> to vector<1x16x64xbf16>
    %31 = vector.shape_cast %30 : vector<1x16x64xbf16> to vector<16x64xbf16>
    %c289 = arith.constant 289 : index
    %c0_13 = arith.constant 0 : index
    %32 = vector.load %arg7[%c289, %c0_13] : memref<576x192xbf16, #tpu.memory_space<vmem>>, vector<16x64xbf16>
    tpu.vector_store %arg7[%c289, %c0_13], %31 {strides = array<i32>} : memref<576x192xbf16, #tpu.memory_space<vmem>>, vector<16x64xbf16>,
    %33 = vector.extract_strided_slice %3 {offsets = [9, 0, 0], sizes = [1, 16, 64], strides = [1, 1, 1]} : vector<16x16x64xbf16> to vector<1x16x64xbf16>
    %34 = vector.shape_cast %33 : vector<1x16x64xbf16> to vector<16x64xbf16>
    %c321 = arith.constant 321 : index
    %c0_14 = arith.constant 0 : index
    %35 = vector.load %arg7[%c321, %c0_14] : memref<576x192xbf16, #tpu.memory_space<vmem>>, vector<16x64xbf16>
    tpu.vector_store %arg7[%c321, %c0_14], %34 {strides = array<i32>} : memref<576x192xbf16, #tpu.memory_space<vmem>>, vector<16x64xbf16>,
    %36 = vector.extract_strided_slice %3 {offsets = [10, 0, 0], sizes = [1, 16, 64], strides = [1, 1, 1]} : vector<16x16x64xbf16> to vector<1x16x64xbf16>
    %37 = vector.shape_cast %36 : vector<1x16x64xbf16> to vector<16x64xbf16>
    %c353 = arith.constant 353 : index
    %c0_15 = arith.constant 0 : index
    %38 = vector.load %arg7[%c353, %c0_15] : memref<576x192xbf16, #tpu.memory_space<vmem>>, vector<16x64xbf16>
    tpu.vector_store %arg7[%c353, %c0_15], %37 {strides = array<i32>} : memref<576x192xbf16, #tpu.memory_space<vmem>>, vector<16x64xbf16>,
    %39 = vector.extract_strided_slice %3 {offsets = [11, 0, 0], sizes = [1, 16, 64], strides = [1, 1, 1]} : vector<16x16x64xbf16> to vector<1x16x64xbf16>
    %40 = vector.shape_cast %39 : vector<1x16x64xbf16> to vector<16x64xbf16>
    %c385 = arith.constant 385 : index
    %c0_16 = arith.constant 0 : index
    %41 = vector.load %arg7[%c385, %c0_16] : memref<576x192xbf16, #tpu.memory_space<vmem>>, vector<16x64xbf16>
    tpu.vector_store %arg7[%c385, %c0_16], %40 {strides = array<i32>} : memref<576x192xbf16, #tpu.memory_space<vmem>>, vector<16x64xbf16>,
    %42 = vector.extract_strided_slice %3 {offsets = [12, 0, 0], sizes = [1, 16, 64], strides = [1, 1, 1]} : vector<16x16x64xbf16> to vector<1x16x64xbf16>
    %43 = vector.shape_cast %42 : vector<1x16x64xbf16> to vector<16x64xbf16>
    %c417 = arith.constant 417 : index
    %c0_17 = arith.constant 0 : index
    %44 = vector.load %arg7[%c417, %c0_17] : memref<576x192xbf16, #tpu.memory_space<vmem>>, vector<16x64xbf16>
    tpu.vector_store %arg7[%c417, %c0_17], %43 {strides = array<i32>} : memref<576x192xbf16, #tpu.memory_space<vmem>>, vector<16x64xbf16>,
    %45 = vector.extract_strided_slice %3 {offsets = [13, 0, 0], sizes = [1, 16, 64], strides = [1, 1, 1]} : vector<16x16x64xbf16> to vector<1x16x64xbf16>
    %46 = vector.shape_cast %45 : vector<1x16x64xbf16> to vector<16x64xbf16>
    %c449 = arith.constant 449 : index
    %c0_18 = arith.constant 0 : index
    %47 = vector.load %arg7[%c449, %c0_18] : memref<576x192xbf16, #tpu.memory_space<vmem>>, vector<16x64xbf16>
    tpu.vector_store %arg7[%c449, %c0_18], %46 {strides = array<i32>} : memref<576x192xbf16, #tpu.memory_space<vmem>>, vector<16x64xbf16>,
    %48 = vector.extract_strided_slice %3 {offsets = [14, 0, 0], sizes = [1, 16, 64], strides = [1, 1, 1]} : vector<16x16x64xbf16> to vector<1x16x64xbf16>
    %49 = vector.shape_cast %48 : vector<1x16x64xbf16> to vector<16x64xbf16>
    %c481 = arith.constant 481 : index
    %c0_19 = arith.constant 0 : index
    %50 = vector.load %arg7[%c481, %c0_19] : memref<576x192xbf16, #tpu.memory_space<vmem>>, vector<16x64xbf16>
    tpu.vector_store %arg7[%c481, %c0_19], %49 {strides = array<i32>} : memref<576x192xbf16, #tpu.memory_space<vmem>>, vector<16x64xbf16>,
    %51 = vector.extract_strided_slice %3 {offsets = [15, 0, 0], sizes = [1, 16, 64], strides = [1, 1, 1]} : vector<16x16x64xbf16> to vector<1x16x64xbf16>
    %52 = vector.shape_cast %51 : vector<1x16x64xbf16> to vector<16x64xbf16>
    %c513 = arith.constant 513 : index
    %c0_20 = arith.constant 0 : index
    %53 = vector.load %arg7[%c513, %c0_20] : memref<576x192xbf16, #tpu.memory_space<vmem>>, vector<16x64xbf16>
    tpu.vector_store %arg7[%c513, %c0_20], %52 {strides = array<i32>} : memref<576x192xbf16, #tpu.memory_space<vmem>>, vector<16x64xbf16>,
    %54 = vector.extract_strided_slice %3 {offsets = [0, 0, 0], sizes = [1, 16, 64], strides = [1, 1, 1]} : vector<16x16x64xbf16> to vector<1x16x64xbf16>
    %55 = vector.shape_cast %54 : vector<1x16x64xbf16> to vector<16x64xbf16>
    %c32 = arith.constant 32 : index
    %c64 = arith.constant 64 : index
    %56 = vector.load %arg7[%c32, %c64] : memref<576x192xbf16, #tpu.memory_space<vmem>>, vector<16x64xbf16>
    tpu.vector_store %arg7[%c32, %c64], %55 {strides = array<i32>} : memref<576x192xbf16, #tpu.memory_space<vmem>>, vector<16x64xbf16>,
    %57 = vector.extract_strided_slice %3 {offsets = [1, 0, 0], sizes = [1, 16, 64], strides = [1, 1, 1]} : vector<16x16x64xbf16> to vector<1x16x64xbf16>
    %58 = vector.shape_cast %57 : vector<1x16x64xbf16> to vector<16x64xbf16>
    %c64_21 = arith.constant 64 : index
    %c64_22 = arith.constant 64 : index
    %59 = vector.load %arg7[%c64_21, %c64_22] : memref<576x192xbf16, #tpu.memory_space<vmem>>, vector<16x64xbf16>
    tpu.vector_store %arg7[%c64_21, %c64_22], %58 {strides = array<i32>} : memref<576x192xbf16, #tpu.memory_space<vmem>>, vector<16x64xbf16>,
    %60 = vector.extract_strided_slice %3 {offsets = [2, 0, 0], sizes = [1, 16, 64], strides = [1, 1, 1]} : vector<16x16x64xbf16> to vector<1x16x64xbf16>
    %61 = vector.shape_cast %60 : vector<1x16x64xbf16> to vector<16x64xbf16>
    %c96 = arith.constant 96 : index
    %c64_23 = arith.constant 64 : index
    %62 = vector.load %arg7[%c96, %c64_23] : memref<576x192xbf16, #tpu.memory_space<vmem>>, vector<16x64xbf16>
    tpu.vector_store %arg7[%c96, %c64_23], %61 {strides = array<i32>} : memref<576x192xbf16, #tpu.memory_space<vmem>>, vector<16x64xbf16>,
    %63 = vector.extract_strided_slice %3 {offsets = [3, 0, 0], sizes = [1, 16, 64], strides = [1, 1, 1]} : vector<16x16x64xbf16> to vector<1x16x64xbf16>
    %64 = vector.shape_cast %63 : vector<1x16x64xbf16> to vector<16x64xbf16>
    %c128 = arith.constant 128 : index
    %c64_24 = arith.constant 64 : index
    %65 = vector.load %arg7[%c128, %c64_24] : memref<576x192xbf16, #tpu.memory_space<vmem>>, vector<16x64xbf16>
    tpu.vector_store %arg7[%c128, %c64_24], %64 {strides = array<i32>} : memref<576x192xbf16, #tpu.memory_space<vmem>>, vector<16x64xbf16>,
    %66 = vector.extract_strided_slice %3 {offsets = [4, 0, 0], sizes = [1, 16, 64], strides = [1, 1, 1]} : vector<16x16x64xbf16> to vector<1x16x64xbf16>
    %67 = vector.shape_cast %66 : vector<1x16x64xbf16> to vector<16x64xbf16>
    %c160 = arith.constant 160 : index
    %c64_25 = arith.constant 64 : index
    %68 = vector.load %arg7[%c160, %c64_25] : memref<576x192xbf16, #tpu.memory_space<vmem>>, vector<16x64xbf16>
    tpu.vector_store %arg7[%c160, %c64_25], %67 {strides = array<i32>} : memref<576x192xbf16, #tpu.memory_space<vmem>>, vector<16x64xbf16>,
    %69 = vector.extract_strided_slice %3 {offsets = [5, 0, 0], sizes = [1, 16, 64], strides = [1, 1, 1]} : vector<16x16x64xbf16> to vector<1x16x64xbf16>
    %70 = vector.shape_cast %69 : vector<1x16x64xbf16> to vector<16x64xbf16>
    %c192 = arith.constant 192 : index
    %c64_26 = arith.constant 64 : index
    %71 = vector.load %arg7[%c192, %c64_26] : memref<576x192xbf16, #tpu.memory_space<vmem>>, vector<16x64xbf16>
    tpu.vector_store %arg7[%c192, %c64_26], %70 {strides = array<i32>} : memref<576x192xbf16, #tpu.memory_space<vmem>>, vector<16x64xbf16>,
    %72 = vector.extract_strided_slice %3 {offsets = [6, 0, 0], sizes = [1, 16, 64], strides = [1, 1, 1]} : vector<16x16x64xbf16> to vector<1x16x64xbf16>
    %73 = vector.shape_cast %72 : vector<1x16x64xbf16> to vector<16x64xbf16>
    %c224 = arith.constant 224 : index
    %c64_27 = arith.constant 64 : index
    %74 = vector.load %arg7[%c224, %c64_27] : memref<576x192xbf16, #tpu.memory_space<vmem>>, vector<16x64xbf16>
    tpu.vector_store %arg7[%c224, %c64_27], %73 {strides = array<i32>} : memref<576x192xbf16, #tpu.memory_space<vmem>>, vector<16x64xbf16>,
    %75 = vector.extract_strided_slice %3 {offsets = [7, 0, 0], sizes = [1, 16, 64], strides = [1, 1, 1]} : vector<16x16x64xbf16> to vector<1x16x64xbf16>
    %76 = vector.shape_cast %75 : vector<1x16x64xbf16> to vector<16x64xbf16>
    %c256 = arith.constant 256 : index
    %c64_28 = arith.constant 64 : index
    %77 = vector.load %arg7[%c256, %c64_28] : memref<576x192xbf16, #tpu.memory_space<vmem>>, vector<16x64xbf16>
    tpu.vector_store %arg7[%c256, %c64_28], %76 {strides = array<i32>} : memref<576x192xbf16, #tpu.memory_space<vmem>>, vector<16x64xbf16>,
    %78 = vector.extract_strided_slice %3 {offsets = [8, 0, 0], sizes = [1, 16, 64], strides = [1, 1, 1]} : vector<16x16x64xbf16> to vector<1x16x64xbf16>
    %79 = vector.shape_cast %78 : vector<1x16x64xbf16> to vector<16x64xbf16>
    %c288 = arith.constant 288 : index
    %c64_29 = arith.constant 64 : index
    %80 = vector.load %arg7[%c288, %c64_29] : memref<576x192xbf16, #tpu.memory_space<vmem>>, vector<16x64xbf16>
    tpu.vector_store %arg7[%c288, %c64_29], %79 {strides = array<i32>} : memref<576x192xbf16, #tpu.memory_space<vmem>>, vector<16x64xbf16>,
    %81 = vector.extract_strided_slice %3 {offsets = [9, 0, 0], sizes = [1, 16, 64], strides = [1, 1, 1]} : vector<16x16x64xbf16> to vector<1x16x64xbf16>
    %82 = vector.shape_cast %81 : vector<1x16x64xbf16> to vector<16x64xbf16>
    %c320 = arith.constant 320 : index
    %c64_30 = arith.constant 64 : index
    %83 = vector.load %arg7[%c320, %c64_30] : memref<576x192xbf16, #tpu.memory_space<vmem>>, vector<16x64xbf16>
    tpu.vector_store %arg7[%c320, %c64_30], %82 {strides = array<i32>} : memref<576x192xbf16, #tpu.memory_space<vmem>>, vector<16x64xbf16>,
    %84 = vector.extract_strided_slice %3 {offsets = [10, 0, 0], sizes = [1, 16, 64], strides = [1, 1, 1]} : vector<16x16x64xbf16> to vector<1x16x64xbf16>
    %85 = vector.shape_cast %84 : vector<1x16x64xbf16> to vector<16x64xbf16>
    %c352 = arith.constant 352 : index
    %c64_31 = arith.constant 64 : index
    %86 = vector.load %arg7[%c352, %c64_31] : memref<576x192xbf16, #tpu.memory_space<vmem>>, vector<16x64xbf16>
    tpu.vector_store %arg7[%c352, %c64_31], %85 {strides = array<i32>} : memref<576x192xbf16, #tpu.memory_space<vmem>>, vector<16x64xbf16>,
    %87 = vector.extract_strided_slice %3 {offsets = [11, 0, 0], sizes = [1, 16, 64], strides = [1, 1, 1]} : vector<16x16x64xbf16> to vector<1x16x64xbf16>
    %88 = vector.shape_cast %87 : vector<1x16x64xbf16> to vector<16x64xbf16>
    %c384 = arith.constant 384 : index
    %c64_32 = arith.constant 64 : index
    %89 = vector.load %arg7[%c384, %c64_32] : memref<576x192xbf16, #tpu.memory_space<vmem>>, vector<16x64xbf16>
    tpu.vector_store %arg7[%c384, %c64_32], %88 {strides = array<i32>} : memref<576x192xbf16, #tpu.memory_space<vmem>>, vector<16x64xbf16>,
    %90 = vector.extract_strided_slice %3 {offsets = [12, 0, 0], sizes = [1, 16, 64], strides = [1, 1, 1]} : vector<16x16x64xbf16> to vector<1x16x64xbf16>
    %91 = vector.shape_cast %90 : vector<1x16x64xbf16> to vector<16x64xbf16>
    %c416 = arith.constant 416 : index
    %c64_33 = arith.constant 64 : index
    %92 = vector.load %arg7[%c416, %c64_33] : memref<576x192xbf16, #tpu.memory_space<vmem>>, vector<16x64xbf16>
    tpu.vector_store %arg7[%c416, %c64_33], %91 {strides = array<i32>} : memref<576x192xbf16, #tpu.memory_space<vmem>>, vector<16x64xbf16>,
    %93 = vector.extract_strided_slice %3 {offsets = [13, 0, 0], sizes = [1, 16, 64], strides = [1, 1, 1]} : vector<16x16x64xbf16> to vector<1x16x64xbf16>
    %94 = vector.shape_cast %93 : vector<1x16x64xbf16> to vector<16x64xbf16>
    %c448 = arith.constant 448 : index
    %c64_34 = arith.constant 64 : index
    %95 = vector.load %arg7[%c448, %c64_34] : memref<576x192xbf16, #tpu.memory_space<vmem>>, vector<16x64xbf16>
    tpu.vector_store %arg7[%c448, %c64_34], %94 {strides = array<i32>} : memref<576x192xbf16, #tpu.memory_space<vmem>>, vector<16x64xbf16>,
    %96 = vector.extract_strided_slice %3 {offsets = [14, 0, 0], sizes = [1, 16, 64], strides = [1, 1, 1]} : vector<16x16x64xbf16> to vector<1x16x64xbf16>
    %97 = vector.shape_cast %96 : vector<1x16x64xbf16> to vector<16x64xbf16>
    %c480 = arith.constant 480 : index
    %c64_35 = arith.constant 64 : index
    %98 = vector.load %arg7[%c480, %c64_35] : memref<576x192xbf16, #tpu.memory_space<vmem>>, vector<16x64xbf16>
    tpu.vector_store %arg7[%c480, %c64_35], %97 {strides = array<i32>} : memref<576x192xbf16, #tpu.memory_space<vmem>>, vector<16x64xbf16>,
    %99 = vector.extract_strided_slice %3 {offsets = [15, 0, 0], sizes = [1, 16, 64], strides = [1, 1, 1]} : vector<16x16x64xbf16> to vector<1x16x64xbf16>
    %100 = vector.shape_cast %99 : vector<1x16x64xbf16> to vector<16x64xbf16>
    %c512 = arith.constant 512 : index
    %c64_36 = arith.constant 64 : index
    %101 = vector.load %arg7[%c512, %c64_36] : memref<576x192xbf16, #tpu.memory_space<vmem>>, vector<16x64xbf16>
    tpu.vector_store %arg7[%c512, %c64_36], %100 {strides = array<i32>} : memref<576x192xbf16, #tpu.memory_space<vmem>>, vector<16x64xbf16>,
    %102 = vector.extract_strided_slice %3 {offsets = [0, 0, 0], sizes = [1, 16, 64], strides = [1, 1, 1]} : vector<16x16x64xbf16> to vector<1x16x64xbf16>
    %103 = vector.shape_cast %102 : vector<1x16x64xbf16> to vector<16x64xbf16>
    %c31 = arith.constant 31 : index
    %c128_37 = arith.constant 128 : index
    %104 = vector.load %arg7[%c31, %c128_37] : memref<576x192xbf16, #tpu.memory_space<vmem>>, vector<16x64xbf16>
    tpu.vector_store %arg7[%c31, %c128_37], %103 {strides = array<i32>} : memref<576x192xbf16, #tpu.memory_space<vmem>>, vector<16x64xbf16>,
    %105 = vector.extract_strided_slice %3 {offsets = [1, 0, 0], sizes = [1, 16, 64], strides = [1, 1, 1]} : vector<16x16x64xbf16> to vector<1x16x64xbf16>
    %106 = vector.shape_cast %105 : vector<1x16x64xbf16> to vector<16x64xbf16>
    %c63 = arith.constant 63 : index
    %c128_38 = arith.constant 128 : index
    %107 = vector.load %arg7[%c63, %c128_38] : memref<576x192xbf16, #tpu.memory_space<vmem>>, vector<16x64xbf16>
    tpu.vector_store %arg7[%c63, %c128_38], %106 {strides = array<i32>} : memref<576x192xbf16, #tpu.memory_space<vmem>>, vector<16x64xbf16>,
    %108 = vector.extract_strided_slice %3 {offsets = [2, 0, 0], sizes = [1, 16, 64], strides = [1, 1, 1]} : vector<16x16x64xbf16> to vector<1x16x64xbf16>
    %109 = vector.shape_cast %108 : vector<1x16x64xbf16> to vector<16x64xbf16>
    %c95 = arith.constant 95 : index
    %c128_39 = arith.constant 128 : index
    %110 = vector.load %arg7[%c95, %c128_39] : memref<576x192xbf16, #tpu.memory_space<vmem>>, vector<16x64xbf16>
    tpu.vector_store %arg7[%c95, %c128_39], %109 {strides = array<i32>} : memref<576x192xbf16, #tpu.memory_space<vmem>>, vector<16x64xbf16>,
    %111 = vector.extract_strided_slice %3 {offsets = [3, 0, 0], sizes = [1, 16, 64], strides = [1, 1, 1]} : vector<16x16x64xbf16> to vector<1x16x64xbf16>
    %112 = vector.shape_cast %111 : vector<1x16x64xbf16> to vector<16x64xbf16>
    %c127 = arith.constant 127 : index
    %c128_40 = arith.constant 128 : index
    %113 = vector.load %arg7[%c127, %c128_40] : memref<576x192xbf16, #tpu.memory_space<vmem>>, vector<16x64xbf16>
    tpu.vector_store %arg7[%c127, %c128_40], %112 {strides = array<i32>} : memref<576x192xbf16, #tpu.memory_space<vmem>>, vector<16x64xbf16>,
    %114 = vector.extract_strided_slice %3 {offsets = [4, 0, 0], sizes = [1, 16, 64], strides = [1, 1, 1]} : vector<16x16x64xbf16> to vector<1x16x64xbf16>
    %115 = vector.shape_cast %114 : vector<1x16x64xbf16> to vector<16x64xbf16>
    %c159 = arith.constant 159 : index
    %c128_41 = arith.constant 128 : index
    %116 = vector.load %arg7[%c159, %c128_41] : memref<576x192xbf16, #tpu.memory_space<vmem>>, vector<16x64xbf16>
    tpu.vector_store %arg7[%c159, %c128_41], %115 {strides = array<i32>} : memref<576x192xbf16, #tpu.memory_space<vmem>>, vector<16x64xbf16>,
    %117 = vector.extract_strided_slice %3 {offsets = [5, 0, 0], sizes = [1, 16, 64], strides = [1, 1, 1]} : vector<16x16x64xbf16> to vector<1x16x64xbf16>
    %118 = vector.shape_cast %117 : vector<1x16x64xbf16> to vector<16x64xbf16>
    %c191 = arith.constant 191 : index
    %c128_42 = arith.constant 128 : index
    %119 = vector.load %arg7[%c191, %c128_42] : memref<576x192xbf16, #tpu.memory_space<vmem>>, vector<16x64xbf16>
    tpu.vector_store %arg7[%c191, %c128_42], %118 {strides = array<i32>} : memref<576x192xbf16, #tpu.memory_space<vmem>>, vector<16x64xbf16>,
    %120 = vector.extract_strided_slice %3 {offsets = [6, 0, 0], sizes = [1, 16, 64], strides = [1, 1, 1]} : vector<16x16x64xbf16> to vector<1x16x64xbf16>
    %121 = vector.shape_cast %120 : vector<1x16x64xbf16> to vector<16x64xbf16>
    %c223 = arith.constant 223 : index
    %c128_43 = arith.constant 128 : index
    %122 = vector.load %arg7[%c223, %c128_43] : memref<576x192xbf16, #tpu.memory_space<vmem>>, vector<16x64xbf16>
    tpu.vector_store %arg7[%c223, %c128_43], %121 {strides = array<i32>} : memref<576x192xbf16, #tpu.memory_space<vmem>>, vector<16x64xbf16>,
    %123 = vector.extract_strided_slice %3 {offsets = [7, 0, 0], sizes = [1, 16, 64], strides = [1, 1, 1]} : vector<16x16x64xbf16> to vector<1x16x64xbf16>
    %124 = vector.shape_cast %123 : vector<1x16x64xbf16> to vector<16x64xbf16>
    %c255 = arith.constant 255 : index
    %c128_44 = arith.constant 128 : index
    %125 = vector.load %arg7[%c255, %c128_44] : memref<576x192xbf16, #tpu.memory_space<vmem>>, vector<16x64xbf16>
    tpu.vector_store %arg7[%c255, %c128_44], %124 {strides = array<i32>} : memref<576x192xbf16, #tpu.memory_space<vmem>>, vector<16x64xbf16>,
    %126 = vector.extract_strided_slice %3 {offsets = [8, 0, 0], sizes = [1, 16, 64], strides = [1, 1, 1]} : vector<16x16x64xbf16> to vector<1x16x64xbf16>
    %127 = vector.shape_cast %126 : vector<1x16x64xbf16> to vector<16x64xbf16>
    %c287 = arith.constant 287 : index
    %c128_45 = arith.constant 128 : index
    %128 = vector.load %arg7[%c287, %c128_45] : memref<576x192xbf16, #tpu.memory_space<vmem>>, vector<16x64xbf16>
    tpu.vector_store %arg7[%c287, %c128_45], %127 {strides = array<i32>} : memref<576x192xbf16, #tpu.memory_space<vmem>>, vector<16x64xbf16>,
    %129 = vector.extract_strided_slice %3 {offsets = [9, 0, 0], sizes = [1, 16, 64], strides = [1, 1, 1]} : vector<16x16x64xbf16> to vector<1x16x64xbf16>
    %130 = vector.shape_cast %129 : vector<1x16x64xbf16> to vector<16x64xbf16>
    %c319 = arith.constant 319 : index
    %c128_46 = arith.constant 128 : index
    %131 = vector.load %arg7[%c319, %c128_46] : memref<576x192xbf16, #tpu.memory_space<vmem>>, vector<16x64xbf16>
    tpu.vector_store %arg7[%c319, %c128_46], %130 {strides = array<i32>} : memref<576x192xbf16, #tpu.memory_space<vmem>>, vector<16x64xbf16>,
    %132 = vector.extract_strided_slice %3 {offsets = [10, 0, 0], sizes = [1, 16, 64], strides = [1, 1, 1]} : vector<16x16x64xbf16> to vector<1x16x64xbf16>
    %133 = vector.shape_cast %132 : vector<1x16x64xbf16> to vector<16x64xbf16>
    %c351 = arith.constant 351 : index
    %c128_47 = arith.constant 128 : index
    %134 = vector.load %arg7[%c351, %c128_47] : memref<576x192xbf16, #tpu.memory_space<vmem>>, vector<16x64xbf16>
    tpu.vector_store %arg7[%c351, %c128_47], %133 {strides = array<i32>} : memref<576x192xbf16, #tpu.memory_space<vmem>>, vector<16x64xbf16>,
    %135 = vector.extract_strided_slice %3 {offsets = [11, 0, 0], sizes = [1, 16, 64], strides = [1, 1, 1]} : vector<16x16x64xbf16> to vector<1x16x64xbf16>
    %136 = vector.shape_cast %135 : vector<1x16x64xbf16> to vector<16x64xbf16>
    %c383 = arith.constant 383 : index
    %c128_48 = arith.constant 128 : index
    %137 = vector.load %arg7[%c383, %c128_48] : memref<576x192xbf16, #tpu.memory_space<vmem>>, vector<16x64xbf16>
    tpu.vector_store %arg7[%c383, %c128_48], %136 {strides = array<i32>} : memref<576x192xbf16, #tpu.memory_space<vmem>>, vector<16x64xbf16>,
    %138 = vector.extract_strided_slice %3 {offsets = [12, 0, 0], sizes = [1, 16, 64], strides = [1, 1, 1]} : vector<16x16x64xbf16> to vector<1x16x64xbf16>
    %139 = vector.shape_cast %138 : vector<1x16x64xbf16> to vector<16x64xbf16>
    %c415 = arith.constant 415 : index
    %c128_49 = arith.constant 128 : index
    %140 = vector.load %arg7[%c415, %c128_49] : memref<576x192xbf16, #tpu.memory_space<vmem>>, vector<16x64xbf16>
    tpu.vector_store %arg7[%c415, %c128_49], %139 {strides = array<i32>} : memref<576x192xbf16, #tpu.memory_space<vmem>>, vector<16x64xbf16>,
    %141 = vector.extract_strided_slice %3 {offsets = [13, 0, 0], sizes = [1, 16, 64], strides = [1, 1, 1]} : vector<16x16x64xbf16> to vector<1x16x64xbf16>
    %142 = vector.shape_cast %141 : vector<1x16x64xbf16> to vector<16x64xbf16>
    %c447 = arith.constant 447 : index
    %c128_50 = arith.constant 128 : index
    %143 = vector.load %arg7[%c447, %c128_50] : memref<576x192xbf16, #tpu.memory_space<vmem>>, vector<16x64xbf16>
    tpu.vector_store %arg7[%c447, %c128_50], %142 {strides = array<i32>} : memref<576x192xbf16, #tpu.memory_space<vmem>>, vector<16x64xbf16>,
    %144 = vector.extract_strided_slice %3 {offsets = [14, 0, 0], sizes = [1, 16, 64], strides = [1, 1, 1]} : vector<16x16x64xbf16> to vector<1x16x64xbf16>
    %145 = vector.shape_cast %144 : vector<1x16x64xbf16> to vector<16x64xbf16>
    %c479 = arith.constant 479 : index
    %c128_51 = arith.constant 128 : index
    %146 = vector.load %arg7[%c479, %c128_51] : memref<576x192xbf16, #tpu.memory_space<vmem>>, vector<16x64xbf16>
    tpu.vector_store %arg7[%c479, %c128_51], %145 {strides = array<i32>} : memref<576x192xbf16, #tpu.memory_space<vmem>>, vector<16x64xbf16>,
    %147 = vector.extract_strided_slice %3 {offsets = [15, 0, 0], sizes = [1, 16, 64], strides = [1, 1, 1]} : vector<16x16x64xbf16> to vector<1x16x64xbf16>
    %148 = vector.shape_cast %147 : vector<1x16x64xbf16> to vector<16x64xbf16>
    %c511 = arith.constant 511 : index
    %c128_52 = arith.constant 128 : index
    %149 = vector.load %arg7[%c511, %c128_52] : memref<576x192xbf16, #tpu.memory_space<vmem>>, vector<16x64xbf16>
    tpu.vector_store %arg7[%c511, %c128_52], %148 {strides = array<i32>} : memref<576x192xbf16, #tpu.memory_space<vmem>>, vector<16x64xbf16>,
    %cst_53 = arith.constant 0.000000e+00 : f32
    %150 = vector.broadcast %cst_53 : f32 to vector<1x64xf32>
    %cst_54 = arith.constant 0.000000e+00 : f32
    %151 = vector.broadcast %cst_54 : f32 to vector<1x64xf32>
    %c0_55 = arith.constant 0 : index
    %c0_56 = arith.constant 0 : index
    %152 = vector.load %arg7[%c0_55, %c0_56] : memref<576x192xbf16, #tpu.memory_space<vmem>>, vector<256x192xbf16>
    %c0_57 = arith.constant 0 : index
    %c0_58 = arith.constant 0 : index
    %c0_59 = arith.constant 0 : index
    %153 = vector.load %arg2[%c0_57, %c0_58, %c0_59] : memref<3x192x64xbf16, #tpu.memory_space<vmem>>, vector<1x192x64xbf16>
    %154 = vector.shape_cast %153 : vector<1x192x64xbf16> to vector<192x64xbf16>
    %cst_60 = arith.constant dense<0.000000e+00> : vector<256x64xf32>
    %155 = tpu.matmul %152, %154, %cst_60 {dimension_numbers = #tpu.dot_dimension_numbers<[1], [0], [0], [1], [0, 0, 1, 1], [], []>} : vector<256x192xbf16>, vector<192x64xbf16>, vector<256x64xf32> -> vector<256x64xf32>
    %c32_61 = arith.constant 32 : index
    %c0_62 = arith.constant 0 : index
    %156 = vector.load %arg7[%c32_61, %c0_62] : memref<576x192xbf16, #tpu.memory_space<vmem>>, vector<256x192xbf16>
    %c1 = arith.constant 1 : index
    %c0_63 = arith.constant 0 : index
    %c0_64 = arith.constant 0 : index
    %157 = vector.load %arg2[%c1, %c0_63, %c0_64] : memref<3x192x64xbf16, #tpu.memory_space<vmem>>, vector<1x192x64xbf16>
    %158 = vector.shape_cast %157 : vector<1x192x64xbf16> to vector<192x64xbf16>
    %cst_65 = arith.constant dense<0.000000e+00> : vector<256x64xf32>
    %159 = tpu.matmul %156, %158, %cst_65 {dimension_numbers = #tpu.dot_dimension_numbers<[1], [0], [0], [1], [0, 0, 1, 1], [], []>} : vector<256x192xbf16>, vector<192x64xbf16>, vector<256x64xf32> -> vector<256x64xf32>
    %160 = arith.addf %155, %159 : vector<256x64xf32>
    %c64_66 = arith.constant 64 : index
    %c0_67 = arith.constant 0 : index
    %161 = vector.load %arg7[%c64_66, %c0_67] : memref<576x192xbf16, #tpu.memory_space<vmem>>, vector<256x192xbf16>
    %c2 = arith.constant 2 : index
    %c0_68 = arith.constant 0 : index
    %c0_69 = arith.constant 0 : index
    %162 = vector.load %arg2[%c2, %c0_68, %c0_69] : memref<3x192x64xbf16, #tpu.memory_space<vmem>>, vector<1x192x64xbf16>
    %163 = vector.shape_cast %162 : vector<1x192x64xbf16> to vector<192x64xbf16>
    %cst_70 = arith.constant dense<0.000000e+00> : vector<256x64xf32>
    %164 = tpu.matmul %161, %163, %cst_70 {dimension_numbers = #tpu.dot_dimension_numbers<[1], [0], [0], [1], [0, 0, 1, 1], [], []>} : vector<256x192xbf16>, vector<192x64xbf16>, vector<256x64xf32> -> vector<256x64xf32>
    %165 = arith.addf %160, %164 : vector<256x64xf32>
    %c0_71 = arith.constant 0 : index
    %c0_72 = arith.constant 0 : index
    %166 = vector.load %arg3[%c0_71, %c0_72] : memref<256x1xf32, #tpu.memory_space<vmem>>, vector<256x1xf32>
    %167 = vector.broadcast %166 : vector<256x1xf32> to vector<256x64xf32>
    %168 = arith.mulf %165, %167 : vector<256x64xf32>
    %cst_73 = arith.constant dense<0.000000e+00> : vector<64xf32>
    %169 = vector.multi_reduction <add>, %168, %cst_73 [0] : vector<256x64xf32> to vector<64xf32>
    %170 = vector.shape_cast %169 : vector<64xf32> to vector<1x64xf32>
    %171 = arith.addf %150, %170 : vector<1x64xf32>
    %172 = arith.mulf %168, %165 : vector<256x64xf32>
    %cst_74 = arith.constant dense<0.000000e+00> : vector<64xf32>
    %173 = vector.multi_reduction <add>, %172, %cst_74 [0] : vector<256x64xf32> to vector<64xf32>
    %174 = vector.shape_cast %173 : vector<64xf32> to vector<1x64xf32>
    %175 = arith.addf %151, %174 : vector<1x64xf32>
    %176 = vector.extract_strided_slice %165 {offsets = [0, 0], sizes = [16, 64], strides = [1, 1]} : vector<256x64xf32> to vector<16x64xf32>
    %177 = arith.truncf %176 : vector<16x64xf32> to vector<16x64xbf16>
    %c0_75 = arith.constant 0 : index
    %c0_76 = arith.constant 0 : index
    %c0_77 = arith.constant 0 : index
    %c0_78 = arith.constant 0 : index
    %178 = vector.load %arg4[%c0_75, %c0_76, %c0_77, %c0_78] : memref<1x16x16x64xbf16, #tpu.memory_space<vmem>>, vector<1x1x16x64xbf16>
    %179 = vector.shape_cast %178 : vector<1x1x16x64xbf16> to vector<16x64xbf16>
    %180 = vector.shape_cast %177 : vector<16x64xbf16> to vector<1x1x16x64xbf16>
    tpu.vector_store %arg4[%c0_75, %c0_76, %c0_77, %c0_78], %180 {strides = array<i32>} : memref<1x16x16x64xbf16, #tpu.memory_space<vmem>>, vector<1x1x16x64xbf16>,
    %181 = vector.extract_strided_slice %165 {offsets = [32, 0], sizes = [16, 64], strides = [1, 1]} : vector<256x64xf32> to vector<16x64xf32>
    %182 = arith.truncf %181 : vector<16x64xf32> to vector<16x64xbf16>
    %c0_79 = arith.constant 0 : index
    %c1_80 = arith.constant 1 : index
    %c0_81 = arith.constant 0 : index
    %c0_82 = arith.constant 0 : index
    %183 = vector.load %arg4[%c0_79, %c1_80, %c0_81, %c0_82] : memref<1x16x16x64xbf16, #tpu.memory_space<vmem>>, vector<1x1x16x64xbf16>
    %184 = vector.shape_cast %183 : vector<1x1x16x64xbf16> to vector<16x64xbf16>
    %185 = vector.shape_cast %182 : vector<16x64xbf16> to vector<1x1x16x64xbf16>
    tpu.vector_store %arg4[%c0_79, %c1_80, %c0_81, %c0_82], %185 {strides = array<i32>} : memref<1x16x16x64xbf16, #tpu.memory_space<vmem>>, vector<1x1x16x64xbf16>,
    %186 = vector.extract_strided_slice %165 {offsets = [64, 0], sizes = [16, 64], strides = [1, 1]} : vector<256x64xf32> to vector<16x64xf32>
    %187 = arith.truncf %186 : vector<16x64xf32> to vector<16x64xbf16>
    %c0_83 = arith.constant 0 : index
    %c2_84 = arith.constant 2 : index
    %c0_85 = arith.constant 0 : index
    %c0_86 = arith.constant 0 : index
    %188 = vector.load %arg4[%c0_83, %c2_84, %c0_85, %c0_86] : memref<1x16x16x64xbf16, #tpu.memory_space<vmem>>, vector<1x1x16x64xbf16>
    %189 = vector.shape_cast %188 : vector<1x1x16x64xbf16> to vector<16x64xbf16>
    %190 = vector.shape_cast %187 : vector<16x64xbf16> to vector<1x1x16x64xbf16>
    tpu.vector_store %arg4[%c0_83, %c2_84, %c0_85, %c0_86], %190 {strides = array<i32>} : memref<1x16x16x64xbf16, #tpu.memory_space<vmem>>, vector<1x1x16x64xbf16>,
    %191 = vector.extract_strided_slice %165 {offsets = [96, 0], sizes = [16, 64], strides = [1, 1]} : vector<256x64xf32> to vector<16x64xf32>
    %192 = arith.truncf %191 : vector<16x64xf32> to vector<16x64xbf16>
    %c0_87 = arith.constant 0 : index
    %c3 = arith.constant 3 : index
    %c0_88 = arith.constant 0 : index
    %c0_89 = arith.constant 0 : index
    %193 = vector.load %arg4[%c0_87, %c3, %c0_88, %c0_89] : memref<1x16x16x64xbf16, #tpu.memory_space<vmem>>, vector<1x1x16x64xbf16>
    %194 = vector.shape_cast %193 : vector<1x1x16x64xbf16> to vector<16x64xbf16>
    %195 = vector.shape_cast %192 : vector<16x64xbf16> to vector<1x1x16x64xbf16>
    tpu.vector_store %arg4[%c0_87, %c3, %c0_88, %c0_89], %195 {strides = array<i32>} : memref<1x16x16x64xbf16, #tpu.memory_space<vmem>>, vector<1x1x16x64xbf16>,
    %196 = vector.extract_strided_slice %165 {offsets = [128, 0], sizes = [16, 64], strides = [1, 1]} : vector<256x64xf32> to vector<16x64xf32>
    %197 = arith.truncf %196 : vector<16x64xf32> to vector<16x64xbf16>
    %c0_90 = arith.constant 0 : index
    %c4 = arith.constant 4 : index
    %c0_91 = arith.constant 0 : index
    %c0_92 = arith.constant 0 : index
    %198 = vector.load %arg4[%c0_90, %c4, %c0_91, %c0_92] : memref<1x16x16x64xbf16, #tpu.memory_space<vmem>>, vector<1x1x16x64xbf16>
    %199 = vector.shape_cast %198 : vector<1x1x16x64xbf16> to vector<16x64xbf16>
    %200 = vector.shape_cast %197 : vector<16x64xbf16> to vector<1x1x16x64xbf16>
    tpu.vector_store %arg4[%c0_90, %c4, %c0_91, %c0_92], %200 {strides = array<i32>} : memref<1x16x16x64xbf16, #tpu.memory_space<vmem>>, vector<1x1x16x64xbf16>,
    %201 = vector.extract_strided_slice %165 {offsets = [160, 0], sizes = [16, 64], strides = [1, 1]} : vector<256x64xf32> to vector<16x64xf32>
    %202 = arith.truncf %201 : vector<16x64xf32> to vector<16x64xbf16>
    %c0_93 = arith.constant 0 : index
    %c5 = arith.constant 5 : index
    %c0_94 = arith.constant 0 : index
    %c0_95 = arith.constant 0 : index
    %203 = vector.load %arg4[%c0_93, %c5, %c0_94, %c0_95] : memref<1x16x16x64xbf16, #tpu.memory_space<vmem>>, vector<1x1x16x64xbf16>
    %204 = vector.shape_cast %203 : vector<1x1x16x64xbf16> to vector<16x64xbf16>
    %205 = vector.shape_cast %202 : vector<16x64xbf16> to vector<1x1x16x64xbf16>
    tpu.vector_store %arg4[%c0_93, %c5, %c0_94, %c0_95], %205 {strides = array<i32>} : memref<1x16x16x64xbf16, #tpu.memory_space<vmem>>, vector<1x1x16x64xbf16>,
    %206 = vector.extract_strided_slice %165 {offsets = [192, 0], sizes = [16, 64], strides = [1, 1]} : vector<256x64xf32> to vector<16x64xf32>
    %207 = arith.truncf %206 : vector<16x64xf32> to vector<16x64xbf16>
    %c0_96 = arith.constant 0 : index
    %c6 = arith.constant 6 : index
    %c0_97 = arith.constant 0 : index
    %c0_98 = arith.constant 0 : index
    %208 = vector.load %arg4[%c0_96, %c6, %c0_97, %c0_98] : memref<1x16x16x64xbf16, #tpu.memory_space<vmem>>, vector<1x1x16x64xbf16>
    %209 = vector.shape_cast %208 : vector<1x1x16x64xbf16> to vector<16x64xbf16>
    %210 = vector.shape_cast %207 : vector<16x64xbf16> to vector<1x1x16x64xbf16>
    tpu.vector_store %arg4[%c0_96, %c6, %c0_97, %c0_98], %210 {strides = array<i32>} : memref<1x16x16x64xbf16, #tpu.memory_space<vmem>>, vector<1x1x16x64xbf16>,
    %211 = vector.extract_strided_slice %165 {offsets = [224, 0], sizes = [16, 64], strides = [1, 1]} : vector<256x64xf32> to vector<16x64xf32>
    %212 = arith.truncf %211 : vector<16x64xf32> to vector<16x64xbf16>
    %c0_99 = arith.constant 0 : index
    %c7 = arith.constant 7 : index
    %c0_100 = arith.constant 0 : index
    %c0_101 = arith.constant 0 : index
    %213 = vector.load %arg4[%c0_99, %c7, %c0_100, %c0_101] : memref<1x16x16x64xbf16, #tpu.memory_space<vmem>>, vector<1x1x16x64xbf16>
    %214 = vector.shape_cast %213 : vector<1x1x16x64xbf16> to vector<16x64xbf16>
    %215 = vector.shape_cast %212 : vector<16x64xbf16> to vector<1x1x16x64xbf16>
    tpu.vector_store %arg4[%c0_99, %c7, %c0_100, %c0_101], %215 {strides = array<i32>} : memref<1x16x16x64xbf16, #tpu.memory_space<vmem>>, vector<1x1x16x64xbf16>,
    %c256_102 = arith.constant 256 : index
    %c0_103 = arith.constant 0 : index
    %216 = vector.load %arg7[%c256_102, %c0_103] : memref<576x192xbf16, #tpu.memory_space<vmem>>, vector<256x192xbf16>
    %c0_104 = arith.constant 0 : index
    %c0_105 = arith.constant 0 : index
    %c0_106 = arith.constant 0 : index
    %217 = vector.load %arg2[%c0_104, %c0_105, %c0_106] : memref<3x192x64xbf16, #tpu.memory_space<vmem>>, vector<1x192x64xbf16>
    %218 = vector.shape_cast %217 : vector<1x192x64xbf16> to vector<192x64xbf16>
    %cst_107 = arith.constant dense<0.000000e+00> : vector<256x64xf32>
    %219 = tpu.matmul %216, %218, %cst_107 {dimension_numbers = #tpu.dot_dimension_numbers<[1], [0], [0], [1], [0, 0, 1, 1], [], []>} : vector<256x192xbf16>, vector<192x64xbf16>, vector<256x64xf32> -> vector<256x64xf32>
    %c288_108 = arith.constant 288 : index
    %c0_109 = arith.constant 0 : index
    %220 = vector.load %arg7[%c288_108, %c0_109] : memref<576x192xbf16, #tpu.memory_space<vmem>>, vector<256x192xbf16>
    %c1_110 = arith.constant 1 : index
    %c0_111 = arith.constant 0 : index
    %c0_112 = arith.constant 0 : index
    %221 = vector.load %arg2[%c1_110, %c0_111, %c0_112] : memref<3x192x64xbf16, #tpu.memory_space<vmem>>, vector<1x192x64xbf16>
    %222 = vector.shape_cast %221 : vector<1x192x64xbf16> to vector<192x64xbf16>
    %cst_113 = arith.constant dense<0.000000e+00> : vector<256x64xf32>
    %223 = tpu.matmul %220, %222, %cst_113 {dimension_numbers = #tpu.dot_dimension_numbers<[1], [0], [0], [1], [0, 0, 1, 1], [], []>} : vector<256x192xbf16>, vector<192x64xbf16>, vector<256x64xf32> -> vector<256x64xf32>
    %224 = arith.addf %219, %223 : vector<256x64xf32>
    %c320_114 = arith.constant 320 : index
    %c0_115 = arith.constant 0 : index
    %225 = vector.load %arg7[%c320_114, %c0_115] : memref<576x192xbf16, #tpu.memory_space<vmem>>, vector<256x192xbf16>
    %c2_116 = arith.constant 2 : index
    %c0_117 = arith.constant 0 : index
    %c0_118 = arith.constant 0 : index
    %226 = vector.load %arg2[%c2_116, %c0_117, %c0_118] : memref<3x192x64xbf16, #tpu.memory_space<vmem>>, vector<1x192x64xbf16>
    %227 = vector.shape_cast %226 : vector<1x192x64xbf16> to vector<192x64xbf16>
    %cst_119 = arith.constant dense<0.000000e+00> : vector<256x64xf32>
    %228 = tpu.matmul %225, %227, %cst_119 {dimension_numbers = #tpu.dot_dimension_numbers<[1], [0], [0], [1], [0, 0, 1, 1], [], []>} : vector<256x192xbf16>, vector<192x64xbf16>, vector<256x64xf32> -> vector<256x64xf32>
    %229 = arith.addf %224, %228 : vector<256x64xf32>
    %c0_120 = arith.constant 0 : index
    %c0_121 = arith.constant 0 : index
    %230 = vector.load %arg3[%c0_120, %c0_121] : memref<256x1xf32, #tpu.memory_space<vmem>>, vector<256x1xf32>
    %231 = vector.broadcast %230 : vector<256x1xf32> to vector<256x64xf32>
    %232 = arith.mulf %229, %231 : vector<256x64xf32>
    %cst_122 = arith.constant dense<0.000000e+00> : vector<64xf32>
    %233 = vector.multi_reduction <add>, %232, %cst_122 [0] : vector<256x64xf32> to vector<64xf32>
    %234 = vector.shape_cast %233 : vector<64xf32> to vector<1x64xf32>
    %235 = arith.addf %171, %234 : vector<1x64xf32>
    %236 = arith.mulf %232, %229 : vector<256x64xf32>
    %cst_123 = arith.constant dense<0.000000e+00> : vector<64xf32>
    %237 = vector.multi_reduction <add>, %236, %cst_123 [0] : vector<256x64xf32> to vector<64xf32>
    %238 = vector.shape_cast %237 : vector<64xf32> to vector<1x64xf32>
    %239 = arith.addf %175, %238 : vector<1x64xf32>
    %240 = vector.extract_strided_slice %229 {offsets = [0, 0], sizes = [16, 64], strides = [1, 1]} : vector<256x64xf32> to vector<16x64xf32>
    %241 = arith.truncf %240 : vector<16x64xf32> to vector<16x64xbf16>
    %c0_124 = arith.constant 0 : index
    %c8 = arith.constant 8 : index
    %c0_125 = arith.constant 0 : index
    %c0_126 = arith.constant 0 : index
    %242 = vector.load %arg4[%c0_124, %c8, %c0_125, %c0_126] : memref<1x16x16x64xbf16, #tpu.memory_space<vmem>>, vector<1x1x16x64xbf16>
    %243 = vector.shape_cast %242 : vector<1x1x16x64xbf16> to vector<16x64xbf16>
    %244 = vector.shape_cast %241 : vector<16x64xbf16> to vector<1x1x16x64xbf16>
    tpu.vector_store %arg4[%c0_124, %c8, %c0_125, %c0_126], %244 {strides = array<i32>} : memref<1x16x16x64xbf16, #tpu.memory_space<vmem>>, vector<1x1x16x64xbf16>,
    %245 = vector.extract_strided_slice %229 {offsets = [32, 0], sizes = [16, 64], strides = [1, 1]} : vector<256x64xf32> to vector<16x64xf32>
    %246 = arith.truncf %245 : vector<16x64xf32> to vector<16x64xbf16>
    %c0_127 = arith.constant 0 : index
    %c9 = arith.constant 9 : index
    %c0_128 = arith.constant 0 : index
    %c0_129 = arith.constant 0 : index
    %247 = vector.load %arg4[%c0_127, %c9, %c0_128, %c0_129] : memref<1x16x16x64xbf16, #tpu.memory_space<vmem>>, vector<1x1x16x64xbf16>
    %248 = vector.shape_cast %247 : vector<1x1x16x64xbf16> to vector<16x64xbf16>
    %249 = vector.shape_cast %246 : vector<16x64xbf16> to vector<1x1x16x64xbf16>
    tpu.vector_store %arg4[%c0_127, %c9, %c0_128, %c0_129], %249 {strides = array<i32>} : memref<1x16x16x64xbf16, #tpu.memory_space<vmem>>, vector<1x1x16x64xbf16>,
    %250 = vector.extract_strided_slice %229 {offsets = [64, 0], sizes = [16, 64], strides = [1, 1]} : vector<256x64xf32> to vector<16x64xf32>
    %251 = arith.truncf %250 : vector<16x64xf32> to vector<16x64xbf16>
    %c0_130 = arith.constant 0 : index
    %c10 = arith.constant 10 : index
    %c0_131 = arith.constant 0 : index
    %c0_132 = arith.constant 0 : index
    %252 = vector.load %arg4[%c0_130, %c10, %c0_131, %c0_132] : memref<1x16x16x64xbf16, #tpu.memory_space<vmem>>, vector<1x1x16x64xbf16>
    %253 = vector.shape_cast %252 : vector<1x1x16x64xbf16> to vector<16x64xbf16>
    %254 = vector.shape_cast %251 : vector<16x64xbf16> to vector<1x1x16x64xbf16>
    tpu.vector_store %arg4[%c0_130, %c10, %c0_131, %c0_132], %254 {strides = array<i32>} : memref<1x16x16x64xbf16, #tpu.memory_space<vmem>>, vector<1x1x16x64xbf16>,
    %255 = vector.extract_strided_slice %229 {offsets = [96, 0], sizes = [16, 64], strides = [1, 1]} : vector<256x64xf32> to vector<16x64xf32>
    %256 = arith.truncf %255 : vector<16x64xf32> to vector<16x64xbf16>
    %c0_133 = arith.constant 0 : index
    %c11 = arith.constant 11 : index
    %c0_134 = arith.constant 0 : index
    %c0_135 = arith.constant 0 : index
    %257 = vector.load %arg4[%c0_133, %c11, %c0_134, %c0_135] : memref<1x16x16x64xbf16, #tpu.memory_space<vmem>>, vector<1x1x16x64xbf16>
    %258 = vector.shape_cast %257 : vector<1x1x16x64xbf16> to vector<16x64xbf16>
    %259 = vector.shape_cast %256 : vector<16x64xbf16> to vector<1x1x16x64xbf16>
    tpu.vector_store %arg4[%c0_133, %c11, %c0_134, %c0_135], %259 {strides = array<i32>} : memref<1x16x16x64xbf16, #tpu.memory_space<vmem>>, vector<1x1x16x64xbf16>,
    %260 = vector.extract_strided_slice %229 {offsets = [128, 0], sizes = [16, 64], strides = [1, 1]} : vector<256x64xf32> to vector<16x64xf32>
    %261 = arith.truncf %260 : vector<16x64xf32> to vector<16x64xbf16>
    %c0_136 = arith.constant 0 : index
    %c12 = arith.constant 12 : index
    %c0_137 = arith.constant 0 : index
    %c0_138 = arith.constant 0 : index
    %262 = vector.load %arg4[%c0_136, %c12, %c0_137, %c0_138] : memref<1x16x16x64xbf16, #tpu.memory_space<vmem>>, vector<1x1x16x64xbf16>
    %263 = vector.shape_cast %262 : vector<1x1x16x64xbf16> to vector<16x64xbf16>
    %264 = vector.shape_cast %261 : vector<16x64xbf16> to vector<1x1x16x64xbf16>
    tpu.vector_store %arg4[%c0_136, %c12, %c0_137, %c0_138], %264 {strides = array<i32>} : memref<1x16x16x64xbf16, #tpu.memory_space<vmem>>, vector<1x1x16x64xbf16>,
    %265 = vector.extract_strided_slice %229 {offsets = [160, 0], sizes = [16, 64], strides = [1, 1]} : vector<256x64xf32> to vector<16x64xf32>
    %266 = arith.truncf %265 : vector<16x64xf32> to vector<16x64xbf16>
    %c0_139 = arith.constant 0 : index
    %c13 = arith.constant 13 : index
    %c0_140 = arith.constant 0 : index
    %c0_141 = arith.constant 0 : index
    %267 = vector.load %arg4[%c0_139, %c13, %c0_140, %c0_141] : memref<1x16x16x64xbf16, #tpu.memory_space<vmem>>, vector<1x1x16x64xbf16>
    %268 = vector.shape_cast %267 : vector<1x1x16x64xbf16> to vector<16x64xbf16>
    %269 = vector.shape_cast %266 : vector<16x64xbf16> to vector<1x1x16x64xbf16>
    tpu.vector_store %arg4[%c0_139, %c13, %c0_140, %c0_141], %269 {strides = array<i32>} : memref<1x16x16x64xbf16, #tpu.memory_space<vmem>>, vector<1x1x16x64xbf16>,
    %270 = vector.extract_strided_slice %229 {offsets = [192, 0], sizes = [16, 64], strides = [1, 1]} : vector<256x64xf32> to vector<16x64xf32>
    %271 = arith.truncf %270 : vector<16x64xf32> to vector<16x64xbf16>
    %c0_142 = arith.constant 0 : index
    %c14 = arith.constant 14 : index
    %c0_143 = arith.constant 0 : index
    %c0_144 = arith.constant 0 : index
    %272 = vector.load %arg4[%c0_142, %c14, %c0_143, %c0_144] : memref<1x16x16x64xbf16, #tpu.memory_space<vmem>>, vector<1x1x16x64xbf16>
    %273 = vector.shape_cast %272 : vector<1x1x16x64xbf16> to vector<16x64xbf16>
    %274 = vector.shape_cast %271 : vector<16x64xbf16> to vector<1x1x16x64xbf16>
    tpu.vector_store %arg4[%c0_142, %c14, %c0_143, %c0_144], %274 {strides = array<i32>} : memref<1x16x16x64xbf16, #tpu.memory_space<vmem>>, vector<1x1x16x64xbf16>,
    %275 = vector.extract_strided_slice %229 {offsets = [224, 0], sizes = [16, 64], strides = [1, 1]} : vector<256x64xf32> to vector<16x64xf32>
    %276 = arith.truncf %275 : vector<16x64xf32> to vector<16x64xbf16>
    %c0_145 = arith.constant 0 : index
    %c15 = arith.constant 15 : index
    %c0_146 = arith.constant 0 : index
    %c0_147 = arith.constant 0 : index
    %277 = vector.load %arg4[%c0_145, %c15, %c0_146, %c0_147] : memref<1x16x16x64xbf16, #tpu.memory_space<vmem>>, vector<1x1x16x64xbf16>
    %278 = vector.shape_cast %277 : vector<1x1x16x64xbf16> to vector<16x64xbf16>
    %279 = vector.shape_cast %276 : vector<16x64xbf16> to vector<1x1x16x64xbf16>
    tpu.vector_store %arg4[%c0_145, %c15, %c0_146, %c0_147], %279 {strides = array<i32>} : memref<1x16x16x64xbf16, #tpu.memory_space<vmem>>, vector<1x1x16x64xbf16>,
    %c0_148 = arith.constant 0 : index
    %c0_149 = arith.constant 0 : index
    %c0_150 = arith.constant 0 : index
    %280 = vector.load %arg5[%c0_148, %c0_149, %c0_150] : memref<1x1x64xf32, #tpu.memory_space<vmem>>, vector<1x1x64xf32>
    %281 = vector.shape_cast %280 : vector<1x1x64xf32> to vector<1x64xf32>
    %282 = vector.shape_cast %235 : vector<1x64xf32> to vector<1x1x64xf32>
    tpu.vector_store %arg5[%c0_148, %c0_149, %c0_150], %282 {strides = array<i32>} : memref<1x1x64xf32, #tpu.memory_space<vmem>>, vector<1x1x64xf32>,
    %c0_151 = arith.constant 0 : index
    %c0_152 = arith.constant 0 : index
    %c0_153 = arith.constant 0 : index
    %283 = vector.load %arg6[%c0_151, %c0_152, %c0_153] : memref<1x1x64xf32, #tpu.memory_space<vmem>>, vector<1x1x64xf32>
    %284 = vector.shape_cast %283 : vector<1x1x64xf32> to vector<1x64xf32>
    %285 = vector.shape_cast %239 : vector<1x64xf32> to vector<1x1x64xf32>
    tpu.vector_store %arg6[%c0_151, %c0_152, %c0_153], %285 {strides = array<i32>} : memref<1x1x64xf32, #tpu.memory_space<vmem>>, vector<1x1x64xf32>,
    return
  }
  func.func @transform_0(%arg0: i32) -> (i32, i32, i32, i32) {
    %c0_i32 = arith.constant 0 : i32
    %c0_i32_0 = arith.constant 0 : i32
    %c0_i32_1 = arith.constant 0 : i32
    %c0_i32_2 = arith.constant 0 : i32
    return %arg0, %c0_i32, %c0_i32_0, %c0_i32_1 : i32, i32, i32, i32
  }
  func.func @transform_1(%arg0: i32) -> (i32, i32, i32) {
    %c0_i32 = arith.constant 0 : i32
    %c0_i32_0 = arith.constant 0 : i32
    %c0_i32_1 = arith.constant 0 : i32
    %c0_i32_2 = arith.constant 0 : i32
    return %c0_i32, %c0_i32_0, %c0_i32_1 : i32, i32, i32
  }
  func.func @transform_2(%arg0: i32) -> (i32, i32) {
    %c0_i32 = arith.constant 0 : i32
    %c0_i32_0 = arith.constant 0 : i32
    %c0_i32_1 = arith.constant 0 : i32
    return %c0_i32, %c0_i32_0 : i32, i32
  }
  func.func @transform_3(%arg0: i32) -> (i32, i32, i32, i32) {
    %c0_i32 = arith.constant 0 : i32
    %c0_i32_0 = arith.constant 0 : i32
    %c0_i32_1 = arith.constant 0 : i32
    %c0_i32_2 = arith.constant 0 : i32
    return %arg0, %c0_i32, %c0_i32_0, %c0_i32_1 : i32, i32, i32, i32
  }
  func.func @transform_4(%arg0: i32) -> (i32, i32, i32) {
    %c0_i32 = arith.constant 0 : i32
    %c0_i32_0 = arith.constant 0 : i32
    %c0_i32_1 = arith.constant 0 : i32
    return %arg0, %c0_i32, %c0_i32_0 : i32, i32, i32
  }
  func.func @transform_5(%arg0: i32) -> (i32, i32, i32) {
    %c0_i32 = arith.constant 0 : i32
    %c0_i32_0 = arith.constant 0 : i32
    %c0_i32_1 = arith.constant 0 : i32
    return %arg0, %c0_i32, %c0_i32_0 : i32, i32, i32
  }
}

module attributes {stable_mosaic.version = 11 : i64} {
  func.func @_bn_add_relu_kernel(%arg0: i32, %arg1: memref<1x16x16x64xbf16, #tpu.memory_space<vmem>>, %arg2: memref<1x16x16x64xbf16, #tpu.memory_space<vmem>>, %arg3: memref<1x64xf32, #tpu.memory_space<vmem>>, %arg4: memref<1x64xf32, #tpu.memory_space<vmem>>, %arg5: memref<1x16x16x64xbf16, #tpu.memory_space<vmem>>) attributes {dimension_semantics = [#tpu.dimension_semantics<parallel>], iteration_bounds = array<i64: 2>, scalar_prefetch = 0 : i64, scratch_operands = 0 : i64, tpu.core_type = #tpu.core_type<tc>, window_params = [{transform_indices = @transform_0, window_bounds = array<i64: 1, 16, 16, 64>}, {transform_indices = @transform_1, window_bounds = array<i64: 1, 16, 16, 64>}, {pipeline_mode = #tpu.pipeline_mode<synchronous>, transform_indices = @transform_2, window_bounds = array<i64: 1, 64>}, {pipeline_mode = #tpu.pipeline_mode<synchronous>, transform_indices = @transform_3, window_bounds = array<i64: 1, 64>}, {transform_indices = @transform_4, window_bounds = array<i64: 1, 16, 16, 64>}]} {
    %c0 = arith.constant 0 : index
    %c0_0 = arith.constant 0 : index
    %c0_1 = arith.constant 0 : index
    %c0_2 = arith.constant 0 : index
    %0 = vector.load %arg1[%c0, %c0_0, %c0_1, %c0_2] : memref<1x16x16x64xbf16, #tpu.memory_space<vmem>>, vector<1x16x16x64xbf16>
    %1 = vector.shape_cast %0 : vector<1x16x16x64xbf16> to vector<16x16x64xbf16>
    %2 = arith.extf %1 : vector<16x16x64xbf16> to vector<16x16x64xf32>
    %c0_3 = arith.constant 0 : index
    %c0_4 = arith.constant 0 : index
    %3 = vector.load %arg3[%c0_3, %c0_4] : memref<1x64xf32, #tpu.memory_space<vmem>>, vector<1x64xf32>
    %4 = vector.shape_cast %3 : vector<1x64xf32> to vector<1x1x64xf32>
    %5 = vector.broadcast %4 : vector<1x1x64xf32> to vector<16x16x64xf32>
    %6 = arith.mulf %2, %5 : vector<16x16x64xf32>
    %c0_5 = arith.constant 0 : index
    %c0_6 = arith.constant 0 : index
    %7 = vector.load %arg4[%c0_5, %c0_6] : memref<1x64xf32, #tpu.memory_space<vmem>>, vector<1x64xf32>
    %8 = vector.shape_cast %7 : vector<1x64xf32> to vector<1x1x64xf32>
    %9 = vector.broadcast %8 : vector<1x1x64xf32> to vector<16x16x64xf32>
    %10 = arith.addf %6, %9 : vector<16x16x64xf32>
    %c0_7 = arith.constant 0 : index
    %c0_8 = arith.constant 0 : index
    %c0_9 = arith.constant 0 : index
    %c0_10 = arith.constant 0 : index
    %11 = vector.load %arg2[%c0_7, %c0_8, %c0_9, %c0_10] : memref<1x16x16x64xbf16, #tpu.memory_space<vmem>>, vector<1x16x16x64xbf16>
    %12 = vector.shape_cast %11 : vector<1x16x16x64xbf16> to vector<16x16x64xbf16>
    %13 = arith.extf %12 : vector<16x16x64xbf16> to vector<16x16x64xf32>
    %14 = arith.addf %10, %13 : vector<16x16x64xf32>
    %cst = arith.constant 0.000000e+00 : f32
    %15 = vector.broadcast %cst : f32 to vector<16x16x64xf32>
    %16 = arith.maximumf %14, %15 : vector<16x16x64xf32>
    %17 = arith.truncf %16 : vector<16x16x64xf32> to vector<16x16x64xbf16>
    %c0_11 = arith.constant 0 : index
    %c0_12 = arith.constant 0 : index
    %c0_13 = arith.constant 0 : index
    %c0_14 = arith.constant 0 : index
    %18 = vector.load %arg5[%c0_11, %c0_12, %c0_13, %c0_14] : memref<1x16x16x64xbf16, #tpu.memory_space<vmem>>, vector<1x16x16x64xbf16>
    %19 = vector.shape_cast %18 : vector<1x16x16x64xbf16> to vector<16x16x64xbf16>
    %20 = vector.shape_cast %17 : vector<16x16x64xbf16> to vector<1x16x16x64xbf16>
    tpu.vector_store %arg5[%c0_11, %c0_12, %c0_13, %c0_14], %20 {strides = array<i32>} : memref<1x16x16x64xbf16, #tpu.memory_space<vmem>>, vector<1x16x16x64xbf16>,
    return
  }
  func.func @transform_0(%arg0: i32) -> (i32, i32, i32, i32) {
    %c0_i32 = arith.constant 0 : i32
    %c0_i32_0 = arith.constant 0 : i32
    %c0_i32_1 = arith.constant 0 : i32
    %c0_i32_2 = arith.constant 0 : i32
    return %arg0, %c0_i32, %c0_i32_0, %c0_i32_1 : i32, i32, i32, i32
  }
  func.func @transform_1(%arg0: i32) -> (i32, i32, i32, i32) {
    %c0_i32 = arith.constant 0 : i32
    %c0_i32_0 = arith.constant 0 : i32
    %c0_i32_1 = arith.constant 0 : i32
    %c0_i32_2 = arith.constant 0 : i32
    return %arg0, %c0_i32, %c0_i32_0, %c0_i32_1 : i32, i32, i32, i32
  }
  func.func @transform_2(%arg0: i32) -> (i32, i32) {
    %c0_i32 = arith.constant 0 : i32
    %c0_i32_0 = arith.constant 0 : i32
    %c0_i32_1 = arith.constant 0 : i32
    return %c0_i32, %c0_i32_0 : i32, i32
  }
  func.func @transform_3(%arg0: i32) -> (i32, i32) {
    %c0_i32 = arith.constant 0 : i32
    %c0_i32_0 = arith.constant 0 : i32
    %c0_i32_1 = arith.constant 0 : i32
    return %c0_i32, %c0_i32_0 : i32, i32
  }
  func.func @transform_4(%arg0: i32) -> (i32, i32, i32, i32) {
    %c0_i32 = arith.constant 0 : i32
    %c0_i32_0 = arith.constant 0 : i32
    %c0_i32_1 = arith.constant 0 : i32
    %c0_i32_2 = arith.constant 0 : i32
    return %arg0, %c0_i32, %c0_i32_0, %c0_i32_1 : i32, i32, i32, i32
  }
}

module attributes {stable_mosaic.version = 11 : i64} {
  func.func @_conv3x3_bn_stats_kernel(%arg0: i32, %arg1: memref<1x16x16x64xbf16, #tpu.memory_space<vmem>>, %arg2: memref<1x64xf32, #tpu.memory_space<vmem>>, %arg3: memref<1x64xf32, #tpu.memory_space<vmem>>, %arg4: memref<3x192x64xbf16, #tpu.memory_space<vmem>>, %arg5: memref<256x1xf32, #tpu.memory_space<vmem>>, %arg6: memref<1x16x16x64xbf16, #tpu.memory_space<vmem>>, %arg7: memref<1x1x64xf32, #tpu.memory_space<vmem>>, %arg8: memref<1x1x64xf32, #tpu.memory_space<vmem>>, %arg9: memref<576x192xbf16, #tpu.memory_space<vmem>>) attributes {dimension_semantics = [#tpu.dimension_semantics<parallel>], iteration_bounds = array<i64: 2>, scalar_prefetch = 0 : i64, scratch_operands = 1 : i64, tpu.core_type = #tpu.core_type<tc>, window_params = [{transform_indices = @transform_0, window_bounds = array<i64: 1, 16, 16, 64>}, {pipeline_mode = #tpu.pipeline_mode<synchronous>, transform_indices = @transform_1, window_bounds = array<i64: 1, 64>}, {pipeline_mode = #tpu.pipeline_mode<synchronous>, transform_indices = @transform_2, window_bounds = array<i64: 1, 64>}, {pipeline_mode = #tpu.pipeline_mode<synchronous>, transform_indices = @transform_3, window_bounds = array<i64: 3, 192, 64>}, {pipeline_mode = #tpu.pipeline_mode<synchronous>, transform_indices = @transform_4, window_bounds = array<i64: 256, 1>}, {transform_indices = @transform_5, window_bounds = array<i64: 1, 16, 16, 64>}, {transform_indices = @transform_6, window_bounds = array<i64: 1, 1, 64>}, {transform_indices = @transform_7, window_bounds = array<i64: 1, 1, 64>}]} {
    %c0 = arith.constant 0 : index
    %c0_0 = arith.constant 0 : index
    %c0_1 = arith.constant 0 : index
    %c0_2 = arith.constant 0 : index
    %0 = vector.load %arg1[%c0, %c0_0, %c0_1, %c0_2] : memref<1x16x16x64xbf16, #tpu.memory_space<vmem>>, vector<1x16x16x64xbf16>
    %1 = vector.shape_cast %0 : vector<1x16x16x64xbf16> to vector<16x16x64xbf16>
    %2 = arith.extf %1 : vector<16x16x64xbf16> to vector<16x16x64xf32>
    %c0_3 = arith.constant 0 : index
    %c0_4 = arith.constant 0 : index
    %3 = vector.load %arg2[%c0_3, %c0_4] : memref<1x64xf32, #tpu.memory_space<vmem>>, vector<1x64xf32>
    %4 = vector.shape_cast %3 : vector<1x64xf32> to vector<1x1x64xf32>
    %5 = vector.broadcast %4 : vector<1x1x64xf32> to vector<16x16x64xf32>
    %6 = arith.mulf %2, %5 : vector<16x16x64xf32>
    %c0_5 = arith.constant 0 : index
    %c0_6 = arith.constant 0 : index
    %7 = vector.load %arg3[%c0_5, %c0_6] : memref<1x64xf32, #tpu.memory_space<vmem>>, vector<1x64xf32>
    %8 = vector.shape_cast %7 : vector<1x64xf32> to vector<1x1x64xf32>
    %9 = vector.broadcast %8 : vector<1x1x64xf32> to vector<16x16x64xf32>
    %10 = arith.addf %6, %9 : vector<16x16x64xf32>
    %cst = arith.constant 0.000000e+00 : f32
    %11 = vector.broadcast %cst : f32 to vector<16x16x64xf32>
    %12 = arith.maximumf %10, %11 : vector<16x16x64xf32>
    %13 = arith.truncf %12 : vector<16x16x64xf32> to vector<16x16x64xbf16>
    %cst_7 = arith.constant 0.000000e+00 : bf16
    %14 = vector.broadcast %cst_7 : bf16 to vector<576x192xbf16>
    %c0_8 = arith.constant 0 : index
    %c0_9 = arith.constant 0 : index
    %15 = vector.load %arg9[%c0_8, %c0_9] : memref<576x192xbf16, #tpu.memory_space<vmem>>, vector<576x192xbf16>
    tpu.vector_store %arg9[%c0_8, %c0_9], %14 {strides = array<i32>} : memref<576x192xbf16, #tpu.memory_space<vmem>>, vector<576x192xbf16>,
    %16 = vector.extract_strided_slice %13 {offsets = [0, 0, 0], sizes = [1, 16, 64], strides = [1, 1, 1]} : vector<16x16x64xbf16> to vector<1x16x64xbf16>
    %17 = vector.shape_cast %16 : vector<1x16x64xbf16> to vector<16x64xbf16>
    %c33 = arith.constant 33 : index
    %c0_10 = arith.constant 0 : index
    %18 = vector.load %arg9[%c33, %c0_10] : memref<576x192xbf16, #tpu.memory_space<vmem>>, vector<16x64xbf16>
    tpu.vector_store %arg9[%c33, %c0_10], %17 {strides = array<i32>} : memref<576x192xbf16, #tpu.memory_space<vmem>>, vector<16x64xbf16>,
    %19 = vector.extract_strided_slice %13 {offsets = [1, 0, 0], sizes = [1, 16, 64], strides = [1, 1, 1]} : vector<16x16x64xbf16> to vector<1x16x64xbf16>
    %20 = vector.shape_cast %19 : vector<1x16x64xbf16> to vector<16x64xbf16>
    %c65 = arith.constant 65 : index
    %c0_11 = arith.constant 0 : index
    %21 = vector.load %arg9[%c65, %c0_11] : memref<576x192xbf16, #tpu.memory_space<vmem>>, vector<16x64xbf16>
    tpu.vector_store %arg9[%c65, %c0_11], %20 {strides = array<i32>} : memref<576x192xbf16, #tpu.memory_space<vmem>>, vector<16x64xbf16>,
    %22 = vector.extract_strided_slice %13 {offsets = [2, 0, 0], sizes = [1, 16, 64], strides = [1, 1, 1]} : vector<16x16x64xbf16> to vector<1x16x64xbf16>
    %23 = vector.shape_cast %22 : vector<1x16x64xbf16> to vector<16x64xbf16>
    %c97 = arith.constant 97 : index
    %c0_12 = arith.constant 0 : index
    %24 = vector.load %arg9[%c97, %c0_12] : memref<576x192xbf16, #tpu.memory_space<vmem>>, vector<16x64xbf16>
    tpu.vector_store %arg9[%c97, %c0_12], %23 {strides = array<i32>} : memref<576x192xbf16, #tpu.memory_space<vmem>>, vector<16x64xbf16>,
    %25 = vector.extract_strided_slice %13 {offsets = [3, 0, 0], sizes = [1, 16, 64], strides = [1, 1, 1]} : vector<16x16x64xbf16> to vector<1x16x64xbf16>
    %26 = vector.shape_cast %25 : vector<1x16x64xbf16> to vector<16x64xbf16>
    %c129 = arith.constant 129 : index
    %c0_13 = arith.constant 0 : index
    %27 = vector.load %arg9[%c129, %c0_13] : memref<576x192xbf16, #tpu.memory_space<vmem>>, vector<16x64xbf16>
    tpu.vector_store %arg9[%c129, %c0_13], %26 {strides = array<i32>} : memref<576x192xbf16, #tpu.memory_space<vmem>>, vector<16x64xbf16>,
    %28 = vector.extract_strided_slice %13 {offsets = [4, 0, 0], sizes = [1, 16, 64], strides = [1, 1, 1]} : vector<16x16x64xbf16> to vector<1x16x64xbf16>
    %29 = vector.shape_cast %28 : vector<1x16x64xbf16> to vector<16x64xbf16>
    %c161 = arith.constant 161 : index
    %c0_14 = arith.constant 0 : index
    %30 = vector.load %arg9[%c161, %c0_14] : memref<576x192xbf16, #tpu.memory_space<vmem>>, vector<16x64xbf16>
    tpu.vector_store %arg9[%c161, %c0_14], %29 {strides = array<i32>} : memref<576x192xbf16, #tpu.memory_space<vmem>>, vector<16x64xbf16>,
    %31 = vector.extract_strided_slice %13 {offsets = [5, 0, 0], sizes = [1, 16, 64], strides = [1, 1, 1]} : vector<16x16x64xbf16> to vector<1x16x64xbf16>
    %32 = vector.shape_cast %31 : vector<1x16x64xbf16> to vector<16x64xbf16>
    %c193 = arith.constant 193 : index
    %c0_15 = arith.constant 0 : index
    %33 = vector.load %arg9[%c193, %c0_15] : memref<576x192xbf16, #tpu.memory_space<vmem>>, vector<16x64xbf16>
    tpu.vector_store %arg9[%c193, %c0_15], %32 {strides = array<i32>} : memref<576x192xbf16, #tpu.memory_space<vmem>>, vector<16x64xbf16>,
    %34 = vector.extract_strided_slice %13 {offsets = [6, 0, 0], sizes = [1, 16, 64], strides = [1, 1, 1]} : vector<16x16x64xbf16> to vector<1x16x64xbf16>
    %35 = vector.shape_cast %34 : vector<1x16x64xbf16> to vector<16x64xbf16>
    %c225 = arith.constant 225 : index
    %c0_16 = arith.constant 0 : index
    %36 = vector.load %arg9[%c225, %c0_16] : memref<576x192xbf16, #tpu.memory_space<vmem>>, vector<16x64xbf16>
    tpu.vector_store %arg9[%c225, %c0_16], %35 {strides = array<i32>} : memref<576x192xbf16, #tpu.memory_space<vmem>>, vector<16x64xbf16>,
    %37 = vector.extract_strided_slice %13 {offsets = [7, 0, 0], sizes = [1, 16, 64], strides = [1, 1, 1]} : vector<16x16x64xbf16> to vector<1x16x64xbf16>
    %38 = vector.shape_cast %37 : vector<1x16x64xbf16> to vector<16x64xbf16>
    %c257 = arith.constant 257 : index
    %c0_17 = arith.constant 0 : index
    %39 = vector.load %arg9[%c257, %c0_17] : memref<576x192xbf16, #tpu.memory_space<vmem>>, vector<16x64xbf16>
    tpu.vector_store %arg9[%c257, %c0_17], %38 {strides = array<i32>} : memref<576x192xbf16, #tpu.memory_space<vmem>>, vector<16x64xbf16>,
    %40 = vector.extract_strided_slice %13 {offsets = [8, 0, 0], sizes = [1, 16, 64], strides = [1, 1, 1]} : vector<16x16x64xbf16> to vector<1x16x64xbf16>
    %41 = vector.shape_cast %40 : vector<1x16x64xbf16> to vector<16x64xbf16>
    %c289 = arith.constant 289 : index
    %c0_18 = arith.constant 0 : index
    %42 = vector.load %arg9[%c289, %c0_18] : memref<576x192xbf16, #tpu.memory_space<vmem>>, vector<16x64xbf16>
    tpu.vector_store %arg9[%c289, %c0_18], %41 {strides = array<i32>} : memref<576x192xbf16, #tpu.memory_space<vmem>>, vector<16x64xbf16>,
    %43 = vector.extract_strided_slice %13 {offsets = [9, 0, 0], sizes = [1, 16, 64], strides = [1, 1, 1]} : vector<16x16x64xbf16> to vector<1x16x64xbf16>
    %44 = vector.shape_cast %43 : vector<1x16x64xbf16> to vector<16x64xbf16>
    %c321 = arith.constant 321 : index
    %c0_19 = arith.constant 0 : index
    %45 = vector.load %arg9[%c321, %c0_19] : memref<576x192xbf16, #tpu.memory_space<vmem>>, vector<16x64xbf16>
    tpu.vector_store %arg9[%c321, %c0_19], %44 {strides = array<i32>} : memref<576x192xbf16, #tpu.memory_space<vmem>>, vector<16x64xbf16>,
    %46 = vector.extract_strided_slice %13 {offsets = [10, 0, 0], sizes = [1, 16, 64], strides = [1, 1, 1]} : vector<16x16x64xbf16> to vector<1x16x64xbf16>
    %47 = vector.shape_cast %46 : vector<1x16x64xbf16> to vector<16x64xbf16>
    %c353 = arith.constant 353 : index
    %c0_20 = arith.constant 0 : index
    %48 = vector.load %arg9[%c353, %c0_20] : memref<576x192xbf16, #tpu.memory_space<vmem>>, vector<16x64xbf16>
    tpu.vector_store %arg9[%c353, %c0_20], %47 {strides = array<i32>} : memref<576x192xbf16, #tpu.memory_space<vmem>>, vector<16x64xbf16>,
    %49 = vector.extract_strided_slice %13 {offsets = [11, 0, 0], sizes = [1, 16, 64], strides = [1, 1, 1]} : vector<16x16x64xbf16> to vector<1x16x64xbf16>
    %50 = vector.shape_cast %49 : vector<1x16x64xbf16> to vector<16x64xbf16>
    %c385 = arith.constant 385 : index
    %c0_21 = arith.constant 0 : index
    %51 = vector.load %arg9[%c385, %c0_21] : memref<576x192xbf16, #tpu.memory_space<vmem>>, vector<16x64xbf16>
    tpu.vector_store %arg9[%c385, %c0_21], %50 {strides = array<i32>} : memref<576x192xbf16, #tpu.memory_space<vmem>>, vector<16x64xbf16>,
    %52 = vector.extract_strided_slice %13 {offsets = [12, 0, 0], sizes = [1, 16, 64], strides = [1, 1, 1]} : vector<16x16x64xbf16> to vector<1x16x64xbf16>
    %53 = vector.shape_cast %52 : vector<1x16x64xbf16> to vector<16x64xbf16>
    %c417 = arith.constant 417 : index
    %c0_22 = arith.constant 0 : index
    %54 = vector.load %arg9[%c417, %c0_22] : memref<576x192xbf16, #tpu.memory_space<vmem>>, vector<16x64xbf16>
    tpu.vector_store %arg9[%c417, %c0_22], %53 {strides = array<i32>} : memref<576x192xbf16, #tpu.memory_space<vmem>>, vector<16x64xbf16>,
    %55 = vector.extract_strided_slice %13 {offsets = [13, 0, 0], sizes = [1, 16, 64], strides = [1, 1, 1]} : vector<16x16x64xbf16> to vector<1x16x64xbf16>
    %56 = vector.shape_cast %55 : vector<1x16x64xbf16> to vector<16x64xbf16>
    %c449 = arith.constant 449 : index
    %c0_23 = arith.constant 0 : index
    %57 = vector.load %arg9[%c449, %c0_23] : memref<576x192xbf16, #tpu.memory_space<vmem>>, vector<16x64xbf16>
    tpu.vector_store %arg9[%c449, %c0_23], %56 {strides = array<i32>} : memref<576x192xbf16, #tpu.memory_space<vmem>>, vector<16x64xbf16>,
    %58 = vector.extract_strided_slice %13 {offsets = [14, 0, 0], sizes = [1, 16, 64], strides = [1, 1, 1]} : vector<16x16x64xbf16> to vector<1x16x64xbf16>
    %59 = vector.shape_cast %58 : vector<1x16x64xbf16> to vector<16x64xbf16>
    %c481 = arith.constant 481 : index
    %c0_24 = arith.constant 0 : index
    %60 = vector.load %arg9[%c481, %c0_24] : memref<576x192xbf16, #tpu.memory_space<vmem>>, vector<16x64xbf16>
    tpu.vector_store %arg9[%c481, %c0_24], %59 {strides = array<i32>} : memref<576x192xbf16, #tpu.memory_space<vmem>>, vector<16x64xbf16>,
    %61 = vector.extract_strided_slice %13 {offsets = [15, 0, 0], sizes = [1, 16, 64], strides = [1, 1, 1]} : vector<16x16x64xbf16> to vector<1x16x64xbf16>
    %62 = vector.shape_cast %61 : vector<1x16x64xbf16> to vector<16x64xbf16>
    %c513 = arith.constant 513 : index
    %c0_25 = arith.constant 0 : index
    %63 = vector.load %arg9[%c513, %c0_25] : memref<576x192xbf16, #tpu.memory_space<vmem>>, vector<16x64xbf16>
    tpu.vector_store %arg9[%c513, %c0_25], %62 {strides = array<i32>} : memref<576x192xbf16, #tpu.memory_space<vmem>>, vector<16x64xbf16>,
    %64 = vector.extract_strided_slice %13 {offsets = [0, 0, 0], sizes = [1, 16, 64], strides = [1, 1, 1]} : vector<16x16x64xbf16> to vector<1x16x64xbf16>
    %65 = vector.shape_cast %64 : vector<1x16x64xbf16> to vector<16x64xbf16>
    %c32 = arith.constant 32 : index
    %c64 = arith.constant 64 : index
    %66 = vector.load %arg9[%c32, %c64] : memref<576x192xbf16, #tpu.memory_space<vmem>>, vector<16x64xbf16>
    tpu.vector_store %arg9[%c32, %c64], %65 {strides = array<i32>} : memref<576x192xbf16, #tpu.memory_space<vmem>>, vector<16x64xbf16>,
    %67 = vector.extract_strided_slice %13 {offsets = [1, 0, 0], sizes = [1, 16, 64], strides = [1, 1, 1]} : vector<16x16x64xbf16> to vector<1x16x64xbf16>
    %68 = vector.shape_cast %67 : vector<1x16x64xbf16> to vector<16x64xbf16>
    %c64_26 = arith.constant 64 : index
    %c64_27 = arith.constant 64 : index
    %69 = vector.load %arg9[%c64_26, %c64_27] : memref<576x192xbf16, #tpu.memory_space<vmem>>, vector<16x64xbf16>
    tpu.vector_store %arg9[%c64_26, %c64_27], %68 {strides = array<i32>} : memref<576x192xbf16, #tpu.memory_space<vmem>>, vector<16x64xbf16>,
    %70 = vector.extract_strided_slice %13 {offsets = [2, 0, 0], sizes = [1, 16, 64], strides = [1, 1, 1]} : vector<16x16x64xbf16> to vector<1x16x64xbf16>
    %71 = vector.shape_cast %70 : vector<1x16x64xbf16> to vector<16x64xbf16>
    %c96 = arith.constant 96 : index
    %c64_28 = arith.constant 64 : index
    %72 = vector.load %arg9[%c96, %c64_28] : memref<576x192xbf16, #tpu.memory_space<vmem>>, vector<16x64xbf16>
    tpu.vector_store %arg9[%c96, %c64_28], %71 {strides = array<i32>} : memref<576x192xbf16, #tpu.memory_space<vmem>>, vector<16x64xbf16>,
    %73 = vector.extract_strided_slice %13 {offsets = [3, 0, 0], sizes = [1, 16, 64], strides = [1, 1, 1]} : vector<16x16x64xbf16> to vector<1x16x64xbf16>
    %74 = vector.shape_cast %73 : vector<1x16x64xbf16> to vector<16x64xbf16>
    %c128 = arith.constant 128 : index
    %c64_29 = arith.constant 64 : index
    %75 = vector.load %arg9[%c128, %c64_29] : memref<576x192xbf16, #tpu.memory_space<vmem>>, vector<16x64xbf16>
    tpu.vector_store %arg9[%c128, %c64_29], %74 {strides = array<i32>} : memref<576x192xbf16, #tpu.memory_space<vmem>>, vector<16x64xbf16>,
    %76 = vector.extract_strided_slice %13 {offsets = [4, 0, 0], sizes = [1, 16, 64], strides = [1, 1, 1]} : vector<16x16x64xbf16> to vector<1x16x64xbf16>
    %77 = vector.shape_cast %76 : vector<1x16x64xbf16> to vector<16x64xbf16>
    %c160 = arith.constant 160 : index
    %c64_30 = arith.constant 64 : index
    %78 = vector.load %arg9[%c160, %c64_30] : memref<576x192xbf16, #tpu.memory_space<vmem>>, vector<16x64xbf16>
    tpu.vector_store %arg9[%c160, %c64_30], %77 {strides = array<i32>} : memref<576x192xbf16, #tpu.memory_space<vmem>>, vector<16x64xbf16>,
    %79 = vector.extract_strided_slice %13 {offsets = [5, 0, 0], sizes = [1, 16, 64], strides = [1, 1, 1]} : vector<16x16x64xbf16> to vector<1x16x64xbf16>
    %80 = vector.shape_cast %79 : vector<1x16x64xbf16> to vector<16x64xbf16>
    %c192 = arith.constant 192 : index
    %c64_31 = arith.constant 64 : index
    %81 = vector.load %arg9[%c192, %c64_31] : memref<576x192xbf16, #tpu.memory_space<vmem>>, vector<16x64xbf16>
    tpu.vector_store %arg9[%c192, %c64_31], %80 {strides = array<i32>} : memref<576x192xbf16, #tpu.memory_space<vmem>>, vector<16x64xbf16>,
    %82 = vector.extract_strided_slice %13 {offsets = [6, 0, 0], sizes = [1, 16, 64], strides = [1, 1, 1]} : vector<16x16x64xbf16> to vector<1x16x64xbf16>
    %83 = vector.shape_cast %82 : vector<1x16x64xbf16> to vector<16x64xbf16>
    %c224 = arith.constant 224 : index
    %c64_32 = arith.constant 64 : index
    %84 = vector.load %arg9[%c224, %c64_32] : memref<576x192xbf16, #tpu.memory_space<vmem>>, vector<16x64xbf16>
    tpu.vector_store %arg9[%c224, %c64_32], %83 {strides = array<i32>} : memref<576x192xbf16, #tpu.memory_space<vmem>>, vector<16x64xbf16>,
    %85 = vector.extract_strided_slice %13 {offsets = [7, 0, 0], sizes = [1, 16, 64], strides = [1, 1, 1]} : vector<16x16x64xbf16> to vector<1x16x64xbf16>
    %86 = vector.shape_cast %85 : vector<1x16x64xbf16> to vector<16x64xbf16>
    %c256 = arith.constant 256 : index
    %c64_33 = arith.constant 64 : index
    %87 = vector.load %arg9[%c256, %c64_33] : memref<576x192xbf16, #tpu.memory_space<vmem>>, vector<16x64xbf16>
    tpu.vector_store %arg9[%c256, %c64_33], %86 {strides = array<i32>} : memref<576x192xbf16, #tpu.memory_space<vmem>>, vector<16x64xbf16>,
    %88 = vector.extract_strided_slice %13 {offsets = [8, 0, 0], sizes = [1, 16, 64], strides = [1, 1, 1]} : vector<16x16x64xbf16> to vector<1x16x64xbf16>
    %89 = vector.shape_cast %88 : vector<1x16x64xbf16> to vector<16x64xbf16>
    %c288 = arith.constant 288 : index
    %c64_34 = arith.constant 64 : index
    %90 = vector.load %arg9[%c288, %c64_34] : memref<576x192xbf16, #tpu.memory_space<vmem>>, vector<16x64xbf16>
    tpu.vector_store %arg9[%c288, %c64_34], %89 {strides = array<i32>} : memref<576x192xbf16, #tpu.memory_space<vmem>>, vector<16x64xbf16>,
    %91 = vector.extract_strided_slice %13 {offsets = [9, 0, 0], sizes = [1, 16, 64], strides = [1, 1, 1]} : vector<16x16x64xbf16> to vector<1x16x64xbf16>
    %92 = vector.shape_cast %91 : vector<1x16x64xbf16> to vector<16x64xbf16>
    %c320 = arith.constant 320 : index
    %c64_35 = arith.constant 64 : index
    %93 = vector.load %arg9[%c320, %c64_35] : memref<576x192xbf16, #tpu.memory_space<vmem>>, vector<16x64xbf16>
    tpu.vector_store %arg9[%c320, %c64_35], %92 {strides = array<i32>} : memref<576x192xbf16, #tpu.memory_space<vmem>>, vector<16x64xbf16>,
    %94 = vector.extract_strided_slice %13 {offsets = [10, 0, 0], sizes = [1, 16, 64], strides = [1, 1, 1]} : vector<16x16x64xbf16> to vector<1x16x64xbf16>
    %95 = vector.shape_cast %94 : vector<1x16x64xbf16> to vector<16x64xbf16>
    %c352 = arith.constant 352 : index
    %c64_36 = arith.constant 64 : index
    %96 = vector.load %arg9[%c352, %c64_36] : memref<576x192xbf16, #tpu.memory_space<vmem>>, vector<16x64xbf16>
    tpu.vector_store %arg9[%c352, %c64_36], %95 {strides = array<i32>} : memref<576x192xbf16, #tpu.memory_space<vmem>>, vector<16x64xbf16>,
    %97 = vector.extract_strided_slice %13 {offsets = [11, 0, 0], sizes = [1, 16, 64], strides = [1, 1, 1]} : vector<16x16x64xbf16> to vector<1x16x64xbf16>
    %98 = vector.shape_cast %97 : vector<1x16x64xbf16> to vector<16x64xbf16>
    %c384 = arith.constant 384 : index
    %c64_37 = arith.constant 64 : index
    %99 = vector.load %arg9[%c384, %c64_37] : memref<576x192xbf16, #tpu.memory_space<vmem>>, vector<16x64xbf16>
    tpu.vector_store %arg9[%c384, %c64_37], %98 {strides = array<i32>} : memref<576x192xbf16, #tpu.memory_space<vmem>>, vector<16x64xbf16>,
    %100 = vector.extract_strided_slice %13 {offsets = [12, 0, 0], sizes = [1, 16, 64], strides = [1, 1, 1]} : vector<16x16x64xbf16> to vector<1x16x64xbf16>
    %101 = vector.shape_cast %100 : vector<1x16x64xbf16> to vector<16x64xbf16>
    %c416 = arith.constant 416 : index
    %c64_38 = arith.constant 64 : index
    %102 = vector.load %arg9[%c416, %c64_38] : memref<576x192xbf16, #tpu.memory_space<vmem>>, vector<16x64xbf16>
    tpu.vector_store %arg9[%c416, %c64_38], %101 {strides = array<i32>} : memref<576x192xbf16, #tpu.memory_space<vmem>>, vector<16x64xbf16>,
    %103 = vector.extract_strided_slice %13 {offsets = [13, 0, 0], sizes = [1, 16, 64], strides = [1, 1, 1]} : vector<16x16x64xbf16> to vector<1x16x64xbf16>
    %104 = vector.shape_cast %103 : vector<1x16x64xbf16> to vector<16x64xbf16>
    %c448 = arith.constant 448 : index
    %c64_39 = arith.constant 64 : index
    %105 = vector.load %arg9[%c448, %c64_39] : memref<576x192xbf16, #tpu.memory_space<vmem>>, vector<16x64xbf16>
    tpu.vector_store %arg9[%c448, %c64_39], %104 {strides = array<i32>} : memref<576x192xbf16, #tpu.memory_space<vmem>>, vector<16x64xbf16>,
    %106 = vector.extract_strided_slice %13 {offsets = [14, 0, 0], sizes = [1, 16, 64], strides = [1, 1, 1]} : vector<16x16x64xbf16> to vector<1x16x64xbf16>
    %107 = vector.shape_cast %106 : vector<1x16x64xbf16> to vector<16x64xbf16>
    %c480 = arith.constant 480 : index
    %c64_40 = arith.constant 64 : index
    %108 = vector.load %arg9[%c480, %c64_40] : memref<576x192xbf16, #tpu.memory_space<vmem>>, vector<16x64xbf16>
    tpu.vector_store %arg9[%c480, %c64_40], %107 {strides = array<i32>} : memref<576x192xbf16, #tpu.memory_space<vmem>>, vector<16x64xbf16>,
    %109 = vector.extract_strided_slice %13 {offsets = [15, 0, 0], sizes = [1, 16, 64], strides = [1, 1, 1]} : vector<16x16x64xbf16> to vector<1x16x64xbf16>
    %110 = vector.shape_cast %109 : vector<1x16x64xbf16> to vector<16x64xbf16>
    %c512 = arith.constant 512 : index
    %c64_41 = arith.constant 64 : index
    %111 = vector.load %arg9[%c512, %c64_41] : memref<576x192xbf16, #tpu.memory_space<vmem>>, vector<16x64xbf16>
    tpu.vector_store %arg9[%c512, %c64_41], %110 {strides = array<i32>} : memref<576x192xbf16, #tpu.memory_space<vmem>>, vector<16x64xbf16>,
    %112 = vector.extract_strided_slice %13 {offsets = [0, 0, 0], sizes = [1, 16, 64], strides = [1, 1, 1]} : vector<16x16x64xbf16> to vector<1x16x64xbf16>
    %113 = vector.shape_cast %112 : vector<1x16x64xbf16> to vector<16x64xbf16>
    %c31 = arith.constant 31 : index
    %c128_42 = arith.constant 128 : index
    %114 = vector.load %arg9[%c31, %c128_42] : memref<576x192xbf16, #tpu.memory_space<vmem>>, vector<16x64xbf16>
    tpu.vector_store %arg9[%c31, %c128_42], %113 {strides = array<i32>} : memref<576x192xbf16, #tpu.memory_space<vmem>>, vector<16x64xbf16>,
    %115 = vector.extract_strided_slice %13 {offsets = [1, 0, 0], sizes = [1, 16, 64], strides = [1, 1, 1]} : vector<16x16x64xbf16> to vector<1x16x64xbf16>
    %116 = vector.shape_cast %115 : vector<1x16x64xbf16> to vector<16x64xbf16>
    %c63 = arith.constant 63 : index
    %c128_43 = arith.constant 128 : index
    %117 = vector.load %arg9[%c63, %c128_43] : memref<576x192xbf16, #tpu.memory_space<vmem>>, vector<16x64xbf16>
    tpu.vector_store %arg9[%c63, %c128_43], %116 {strides = array<i32>} : memref<576x192xbf16, #tpu.memory_space<vmem>>, vector<16x64xbf16>,
    %118 = vector.extract_strided_slice %13 {offsets = [2, 0, 0], sizes = [1, 16, 64], strides = [1, 1, 1]} : vector<16x16x64xbf16> to vector<1x16x64xbf16>
    %119 = vector.shape_cast %118 : vector<1x16x64xbf16> to vector<16x64xbf16>
    %c95 = arith.constant 95 : index
    %c128_44 = arith.constant 128 : index
    %120 = vector.load %arg9[%c95, %c128_44] : memref<576x192xbf16, #tpu.memory_space<vmem>>, vector<16x64xbf16>
    tpu.vector_store %arg9[%c95, %c128_44], %119 {strides = array<i32>} : memref<576x192xbf16, #tpu.memory_space<vmem>>, vector<16x64xbf16>,
    %121 = vector.extract_strided_slice %13 {offsets = [3, 0, 0], sizes = [1, 16, 64], strides = [1, 1, 1]} : vector<16x16x64xbf16> to vector<1x16x64xbf16>
    %122 = vector.shape_cast %121 : vector<1x16x64xbf16> to vector<16x64xbf16>
    %c127 = arith.constant 127 : index
    %c128_45 = arith.constant 128 : index
    %123 = vector.load %arg9[%c127, %c128_45] : memref<576x192xbf16, #tpu.memory_space<vmem>>, vector<16x64xbf16>
    tpu.vector_store %arg9[%c127, %c128_45], %122 {strides = array<i32>} : memref<576x192xbf16, #tpu.memory_space<vmem>>, vector<16x64xbf16>,
    %124 = vector.extract_strided_slice %13 {offsets = [4, 0, 0], sizes = [1, 16, 64], strides = [1, 1, 1]} : vector<16x16x64xbf16> to vector<1x16x64xbf16>
    %125 = vector.shape_cast %124 : vector<1x16x64xbf16> to vector<16x64xbf16>
    %c159 = arith.constant 159 : index
    %c128_46 = arith.constant 128 : index
    %126 = vector.load %arg9[%c159, %c128_46] : memref<576x192xbf16, #tpu.memory_space<vmem>>, vector<16x64xbf16>
    tpu.vector_store %arg9[%c159, %c128_46], %125 {strides = array<i32>} : memref<576x192xbf16, #tpu.memory_space<vmem>>, vector<16x64xbf16>,
    %127 = vector.extract_strided_slice %13 {offsets = [5, 0, 0], sizes = [1, 16, 64], strides = [1, 1, 1]} : vector<16x16x64xbf16> to vector<1x16x64xbf16>
    %128 = vector.shape_cast %127 : vector<1x16x64xbf16> to vector<16x64xbf16>
    %c191 = arith.constant 191 : index
    %c128_47 = arith.constant 128 : index
    %129 = vector.load %arg9[%c191, %c128_47] : memref<576x192xbf16, #tpu.memory_space<vmem>>, vector<16x64xbf16>
    tpu.vector_store %arg9[%c191, %c128_47], %128 {strides = array<i32>} : memref<576x192xbf16, #tpu.memory_space<vmem>>, vector<16x64xbf16>,
    %130 = vector.extract_strided_slice %13 {offsets = [6, 0, 0], sizes = [1, 16, 64], strides = [1, 1, 1]} : vector<16x16x64xbf16> to vector<1x16x64xbf16>
    %131 = vector.shape_cast %130 : vector<1x16x64xbf16> to vector<16x64xbf16>
    %c223 = arith.constant 223 : index
    %c128_48 = arith.constant 128 : index
    %132 = vector.load %arg9[%c223, %c128_48] : memref<576x192xbf16, #tpu.memory_space<vmem>>, vector<16x64xbf16>
    tpu.vector_store %arg9[%c223, %c128_48], %131 {strides = array<i32>} : memref<576x192xbf16, #tpu.memory_space<vmem>>, vector<16x64xbf16>,
    %133 = vector.extract_strided_slice %13 {offsets = [7, 0, 0], sizes = [1, 16, 64], strides = [1, 1, 1]} : vector<16x16x64xbf16> to vector<1x16x64xbf16>
    %134 = vector.shape_cast %133 : vector<1x16x64xbf16> to vector<16x64xbf16>
    %c255 = arith.constant 255 : index
    %c128_49 = arith.constant 128 : index
    %135 = vector.load %arg9[%c255, %c128_49] : memref<576x192xbf16, #tpu.memory_space<vmem>>, vector<16x64xbf16>
    tpu.vector_store %arg9[%c255, %c128_49], %134 {strides = array<i32>} : memref<576x192xbf16, #tpu.memory_space<vmem>>, vector<16x64xbf16>,
    %136 = vector.extract_strided_slice %13 {offsets = [8, 0, 0], sizes = [1, 16, 64], strides = [1, 1, 1]} : vector<16x16x64xbf16> to vector<1x16x64xbf16>
    %137 = vector.shape_cast %136 : vector<1x16x64xbf16> to vector<16x64xbf16>
    %c287 = arith.constant 287 : index
    %c128_50 = arith.constant 128 : index
    %138 = vector.load %arg9[%c287, %c128_50] : memref<576x192xbf16, #tpu.memory_space<vmem>>, vector<16x64xbf16>
    tpu.vector_store %arg9[%c287, %c128_50], %137 {strides = array<i32>} : memref<576x192xbf16, #tpu.memory_space<vmem>>, vector<16x64xbf16>,
    %139 = vector.extract_strided_slice %13 {offsets = [9, 0, 0], sizes = [1, 16, 64], strides = [1, 1, 1]} : vector<16x16x64xbf16> to vector<1x16x64xbf16>
    %140 = vector.shape_cast %139 : vector<1x16x64xbf16> to vector<16x64xbf16>
    %c319 = arith.constant 319 : index
    %c128_51 = arith.constant 128 : index
    %141 = vector.load %arg9[%c319, %c128_51] : memref<576x192xbf16, #tpu.memory_space<vmem>>, vector<16x64xbf16>
    tpu.vector_store %arg9[%c319, %c128_51], %140 {strides = array<i32>} : memref<576x192xbf16, #tpu.memory_space<vmem>>, vector<16x64xbf16>,
    %142 = vector.extract_strided_slice %13 {offsets = [10, 0, 0], sizes = [1, 16, 64], strides = [1, 1, 1]} : vector<16x16x64xbf16> to vector<1x16x64xbf16>
    %143 = vector.shape_cast %142 : vector<1x16x64xbf16> to vector<16x64xbf16>
    %c351 = arith.constant 351 : index
    %c128_52 = arith.constant 128 : index
    %144 = vector.load %arg9[%c351, %c128_52] : memref<576x192xbf16, #tpu.memory_space<vmem>>, vector<16x64xbf16>
    tpu.vector_store %arg9[%c351, %c128_52], %143 {strides = array<i32>} : memref<576x192xbf16, #tpu.memory_space<vmem>>, vector<16x64xbf16>,
    %145 = vector.extract_strided_slice %13 {offsets = [11, 0, 0], sizes = [1, 16, 64], strides = [1, 1, 1]} : vector<16x16x64xbf16> to vector<1x16x64xbf16>
    %146 = vector.shape_cast %145 : vector<1x16x64xbf16> to vector<16x64xbf16>
    %c383 = arith.constant 383 : index
    %c128_53 = arith.constant 128 : index
    %147 = vector.load %arg9[%c383, %c128_53] : memref<576x192xbf16, #tpu.memory_space<vmem>>, vector<16x64xbf16>
    tpu.vector_store %arg9[%c383, %c128_53], %146 {strides = array<i32>} : memref<576x192xbf16, #tpu.memory_space<vmem>>, vector<16x64xbf16>,
    %148 = vector.extract_strided_slice %13 {offsets = [12, 0, 0], sizes = [1, 16, 64], strides = [1, 1, 1]} : vector<16x16x64xbf16> to vector<1x16x64xbf16>
    %149 = vector.shape_cast %148 : vector<1x16x64xbf16> to vector<16x64xbf16>
    %c415 = arith.constant 415 : index
    %c128_54 = arith.constant 128 : index
    %150 = vector.load %arg9[%c415, %c128_54] : memref<576x192xbf16, #tpu.memory_space<vmem>>, vector<16x64xbf16>
    tpu.vector_store %arg9[%c415, %c128_54], %149 {strides = array<i32>} : memref<576x192xbf16, #tpu.memory_space<vmem>>, vector<16x64xbf16>,
    %151 = vector.extract_strided_slice %13 {offsets = [13, 0, 0], sizes = [1, 16, 64], strides = [1, 1, 1]} : vector<16x16x64xbf16> to vector<1x16x64xbf16>
    %152 = vector.shape_cast %151 : vector<1x16x64xbf16> to vector<16x64xbf16>
    %c447 = arith.constant 447 : index
    %c128_55 = arith.constant 128 : index
    %153 = vector.load %arg9[%c447, %c128_55] : memref<576x192xbf16, #tpu.memory_space<vmem>>, vector<16x64xbf16>
    tpu.vector_store %arg9[%c447, %c128_55], %152 {strides = array<i32>} : memref<576x192xbf16, #tpu.memory_space<vmem>>, vector<16x64xbf16>,
    %154 = vector.extract_strided_slice %13 {offsets = [14, 0, 0], sizes = [1, 16, 64], strides = [1, 1, 1]} : vector<16x16x64xbf16> to vector<1x16x64xbf16>
    %155 = vector.shape_cast %154 : vector<1x16x64xbf16> to vector<16x64xbf16>
    %c479 = arith.constant 479 : index
    %c128_56 = arith.constant 128 : index
    %156 = vector.load %arg9[%c479, %c128_56] : memref<576x192xbf16, #tpu.memory_space<vmem>>, vector<16x64xbf16>
    tpu.vector_store %arg9[%c479, %c128_56], %155 {strides = array<i32>} : memref<576x192xbf16, #tpu.memory_space<vmem>>, vector<16x64xbf16>,
    %157 = vector.extract_strided_slice %13 {offsets = [15, 0, 0], sizes = [1, 16, 64], strides = [1, 1, 1]} : vector<16x16x64xbf16> to vector<1x16x64xbf16>
    %158 = vector.shape_cast %157 : vector<1x16x64xbf16> to vector<16x64xbf16>
    %c511 = arith.constant 511 : index
    %c128_57 = arith.constant 128 : index
    %159 = vector.load %arg9[%c511, %c128_57] : memref<576x192xbf16, #tpu.memory_space<vmem>>, vector<16x64xbf16>
    tpu.vector_store %arg9[%c511, %c128_57], %158 {strides = array<i32>} : memref<576x192xbf16, #tpu.memory_space<vmem>>, vector<16x64xbf16>,
    %cst_58 = arith.constant 0.000000e+00 : f32
    %160 = vector.broadcast %cst_58 : f32 to vector<1x64xf32>
    %cst_59 = arith.constant 0.000000e+00 : f32
    %161 = vector.broadcast %cst_59 : f32 to vector<1x64xf32>
    %c0_60 = arith.constant 0 : index
    %c0_61 = arith.constant 0 : index
    %162 = vector.load %arg9[%c0_60, %c0_61] : memref<576x192xbf16, #tpu.memory_space<vmem>>, vector<256x192xbf16>
    %c0_62 = arith.constant 0 : index
    %c0_63 = arith.constant 0 : index
    %c0_64 = arith.constant 0 : index
    %163 = vector.load %arg4[%c0_62, %c0_63, %c0_64] : memref<3x192x64xbf16, #tpu.memory_space<vmem>>, vector<1x192x64xbf16>
    %164 = vector.shape_cast %163 : vector<1x192x64xbf16> to vector<192x64xbf16>
    %cst_65 = arith.constant dense<0.000000e+00> : vector<256x64xf32>
    %165 = tpu.matmul %162, %164, %cst_65 {dimension_numbers = #tpu.dot_dimension_numbers<[1], [0], [0], [1], [0, 0, 1, 1], [], []>} : vector<256x192xbf16>, vector<192x64xbf16>, vector<256x64xf32> -> vector<256x64xf32>
    %c32_66 = arith.constant 32 : index
    %c0_67 = arith.constant 0 : index
    %166 = vector.load %arg9[%c32_66, %c0_67] : memref<576x192xbf16, #tpu.memory_space<vmem>>, vector<256x192xbf16>
    %c1 = arith.constant 1 : index
    %c0_68 = arith.constant 0 : index
    %c0_69 = arith.constant 0 : index
    %167 = vector.load %arg4[%c1, %c0_68, %c0_69] : memref<3x192x64xbf16, #tpu.memory_space<vmem>>, vector<1x192x64xbf16>
    %168 = vector.shape_cast %167 : vector<1x192x64xbf16> to vector<192x64xbf16>
    %cst_70 = arith.constant dense<0.000000e+00> : vector<256x64xf32>
    %169 = tpu.matmul %166, %168, %cst_70 {dimension_numbers = #tpu.dot_dimension_numbers<[1], [0], [0], [1], [0, 0, 1, 1], [], []>} : vector<256x192xbf16>, vector<192x64xbf16>, vector<256x64xf32> -> vector<256x64xf32>
    %170 = arith.addf %165, %169 : vector<256x64xf32>
    %c64_71 = arith.constant 64 : index
    %c0_72 = arith.constant 0 : index
    %171 = vector.load %arg9[%c64_71, %c0_72] : memref<576x192xbf16, #tpu.memory_space<vmem>>, vector<256x192xbf16>
    %c2 = arith.constant 2 : index
    %c0_73 = arith.constant 0 : index
    %c0_74 = arith.constant 0 : index
    %172 = vector.load %arg4[%c2, %c0_73, %c0_74] : memref<3x192x64xbf16, #tpu.memory_space<vmem>>, vector<1x192x64xbf16>
    %173 = vector.shape_cast %172 : vector<1x192x64xbf16> to vector<192x64xbf16>
    %cst_75 = arith.constant dense<0.000000e+00> : vector<256x64xf32>
    %174 = tpu.matmul %171, %173, %cst_75 {dimension_numbers = #tpu.dot_dimension_numbers<[1], [0], [0], [1], [0, 0, 1, 1], [], []>} : vector<256x192xbf16>, vector<192x64xbf16>, vector<256x64xf32> -> vector<256x64xf32>
    %175 = arith.addf %170, %174 : vector<256x64xf32>
    %c0_76 = arith.constant 0 : index
    %c0_77 = arith.constant 0 : index
    %176 = vector.load %arg5[%c0_76, %c0_77] : memref<256x1xf32, #tpu.memory_space<vmem>>, vector<256x1xf32>
    %177 = vector.broadcast %176 : vector<256x1xf32> to vector<256x64xf32>
    %178 = arith.mulf %175, %177 : vector<256x64xf32>
    %cst_78 = arith.constant dense<0.000000e+00> : vector<64xf32>
    %179 = vector.multi_reduction <add>, %178, %cst_78 [0] : vector<256x64xf32> to vector<64xf32>
    %180 = vector.shape_cast %179 : vector<64xf32> to vector<1x64xf32>
    %181 = arith.addf %160, %180 : vector<1x64xf32>
    %182 = arith.mulf %178, %175 : vector<256x64xf32>
    %cst_79 = arith.constant dense<0.000000e+00> : vector<64xf32>
    %183 = vector.multi_reduction <add>, %182, %cst_79 [0] : vector<256x64xf32> to vector<64xf32>
    %184 = vector.shape_cast %183 : vector<64xf32> to vector<1x64xf32>
    %185 = arith.addf %161, %184 : vector<1x64xf32>
    %186 = vector.extract_strided_slice %175 {offsets = [0, 0], sizes = [16, 64], strides = [1, 1]} : vector<256x64xf32> to vector<16x64xf32>
    %187 = arith.truncf %186 : vector<16x64xf32> to vector<16x64xbf16>
    %c0_80 = arith.constant 0 : index
    %c0_81 = arith.constant 0 : index
    %c0_82 = arith.constant 0 : index
    %c0_83 = arith.constant 0 : index
    %188 = vector.load %arg6[%c0_80, %c0_81, %c0_82, %c0_83] : memref<1x16x16x64xbf16, #tpu.memory_space<vmem>>, vector<1x1x16x64xbf16>
    %189 = vector.shape_cast %188 : vector<1x1x16x64xbf16> to vector<16x64xbf16>
    %190 = vector.shape_cast %187 : vector<16x64xbf16> to vector<1x1x16x64xbf16>
    tpu.vector_store %arg6[%c0_80, %c0_81, %c0_82, %c0_83], %190 {strides = array<i32>} : memref<1x16x16x64xbf16, #tpu.memory_space<vmem>>, vector<1x1x16x64xbf16>,
    %191 = vector.extract_strided_slice %175 {offsets = [32, 0], sizes = [16, 64], strides = [1, 1]} : vector<256x64xf32> to vector<16x64xf32>
    %192 = arith.truncf %191 : vector<16x64xf32> to vector<16x64xbf16>
    %c0_84 = arith.constant 0 : index
    %c1_85 = arith.constant 1 : index
    %c0_86 = arith.constant 0 : index
    %c0_87 = arith.constant 0 : index
    %193 = vector.load %arg6[%c0_84, %c1_85, %c0_86, %c0_87] : memref<1x16x16x64xbf16, #tpu.memory_space<vmem>>, vector<1x1x16x64xbf16>
    %194 = vector.shape_cast %193 : vector<1x1x16x64xbf16> to vector<16x64xbf16>
    %195 = vector.shape_cast %192 : vector<16x64xbf16> to vector<1x1x16x64xbf16>
    tpu.vector_store %arg6[%c0_84, %c1_85, %c0_86, %c0_87], %195 {strides = array<i32>} : memref<1x16x16x64xbf16, #tpu.memory_space<vmem>>, vector<1x1x16x64xbf16>,
    %196 = vector.extract_strided_slice %175 {offsets = [64, 0], sizes = [16, 64], strides = [1, 1]} : vector<256x64xf32> to vector<16x64xf32>
    %197 = arith.truncf %196 : vector<16x64xf32> to vector<16x64xbf16>
    %c0_88 = arith.constant 0 : index
    %c2_89 = arith.constant 2 : index
    %c0_90 = arith.constant 0 : index
    %c0_91 = arith.constant 0 : index
    %198 = vector.load %arg6[%c0_88, %c2_89, %c0_90, %c0_91] : memref<1x16x16x64xbf16, #tpu.memory_space<vmem>>, vector<1x1x16x64xbf16>
    %199 = vector.shape_cast %198 : vector<1x1x16x64xbf16> to vector<16x64xbf16>
    %200 = vector.shape_cast %197 : vector<16x64xbf16> to vector<1x1x16x64xbf16>
    tpu.vector_store %arg6[%c0_88, %c2_89, %c0_90, %c0_91], %200 {strides = array<i32>} : memref<1x16x16x64xbf16, #tpu.memory_space<vmem>>, vector<1x1x16x64xbf16>,
    %201 = vector.extract_strided_slice %175 {offsets = [96, 0], sizes = [16, 64], strides = [1, 1]} : vector<256x64xf32> to vector<16x64xf32>
    %202 = arith.truncf %201 : vector<16x64xf32> to vector<16x64xbf16>
    %c0_92 = arith.constant 0 : index
    %c3 = arith.constant 3 : index
    %c0_93 = arith.constant 0 : index
    %c0_94 = arith.constant 0 : index
    %203 = vector.load %arg6[%c0_92, %c3, %c0_93, %c0_94] : memref<1x16x16x64xbf16, #tpu.memory_space<vmem>>, vector<1x1x16x64xbf16>
    %204 = vector.shape_cast %203 : vector<1x1x16x64xbf16> to vector<16x64xbf16>
    %205 = vector.shape_cast %202 : vector<16x64xbf16> to vector<1x1x16x64xbf16>
    tpu.vector_store %arg6[%c0_92, %c3, %c0_93, %c0_94], %205 {strides = array<i32>} : memref<1x16x16x64xbf16, #tpu.memory_space<vmem>>, vector<1x1x16x64xbf16>,
    %206 = vector.extract_strided_slice %175 {offsets = [128, 0], sizes = [16, 64], strides = [1, 1]} : vector<256x64xf32> to vector<16x64xf32>
    %207 = arith.truncf %206 : vector<16x64xf32> to vector<16x64xbf16>
    %c0_95 = arith.constant 0 : index
    %c4 = arith.constant 4 : index
    %c0_96 = arith.constant 0 : index
    %c0_97 = arith.constant 0 : index
    %208 = vector.load %arg6[%c0_95, %c4, %c0_96, %c0_97] : memref<1x16x16x64xbf16, #tpu.memory_space<vmem>>, vector<1x1x16x64xbf16>
    %209 = vector.shape_cast %208 : vector<1x1x16x64xbf16> to vector<16x64xbf16>
    %210 = vector.shape_cast %207 : vector<16x64xbf16> to vector<1x1x16x64xbf16>
    tpu.vector_store %arg6[%c0_95, %c4, %c0_96, %c0_97], %210 {strides = array<i32>} : memref<1x16x16x64xbf16, #tpu.memory_space<vmem>>, vector<1x1x16x64xbf16>,
    %211 = vector.extract_strided_slice %175 {offsets = [160, 0], sizes = [16, 64], strides = [1, 1]} : vector<256x64xf32> to vector<16x64xf32>
    %212 = arith.truncf %211 : vector<16x64xf32> to vector<16x64xbf16>
    %c0_98 = arith.constant 0 : index
    %c5 = arith.constant 5 : index
    %c0_99 = arith.constant 0 : index
    %c0_100 = arith.constant 0 : index
    %213 = vector.load %arg6[%c0_98, %c5, %c0_99, %c0_100] : memref<1x16x16x64xbf16, #tpu.memory_space<vmem>>, vector<1x1x16x64xbf16>
    %214 = vector.shape_cast %213 : vector<1x1x16x64xbf16> to vector<16x64xbf16>
    %215 = vector.shape_cast %212 : vector<16x64xbf16> to vector<1x1x16x64xbf16>
    tpu.vector_store %arg6[%c0_98, %c5, %c0_99, %c0_100], %215 {strides = array<i32>} : memref<1x16x16x64xbf16, #tpu.memory_space<vmem>>, vector<1x1x16x64xbf16>,
    %216 = vector.extract_strided_slice %175 {offsets = [192, 0], sizes = [16, 64], strides = [1, 1]} : vector<256x64xf32> to vector<16x64xf32>
    %217 = arith.truncf %216 : vector<16x64xf32> to vector<16x64xbf16>
    %c0_101 = arith.constant 0 : index
    %c6 = arith.constant 6 : index
    %c0_102 = arith.constant 0 : index
    %c0_103 = arith.constant 0 : index
    %218 = vector.load %arg6[%c0_101, %c6, %c0_102, %c0_103] : memref<1x16x16x64xbf16, #tpu.memory_space<vmem>>, vector<1x1x16x64xbf16>
    %219 = vector.shape_cast %218 : vector<1x1x16x64xbf16> to vector<16x64xbf16>
    %220 = vector.shape_cast %217 : vector<16x64xbf16> to vector<1x1x16x64xbf16>
    tpu.vector_store %arg6[%c0_101, %c6, %c0_102, %c0_103], %220 {strides = array<i32>} : memref<1x16x16x64xbf16, #tpu.memory_space<vmem>>, vector<1x1x16x64xbf16>,
    %221 = vector.extract_strided_slice %175 {offsets = [224, 0], sizes = [16, 64], strides = [1, 1]} : vector<256x64xf32> to vector<16x64xf32>
    %222 = arith.truncf %221 : vector<16x64xf32> to vector<16x64xbf16>
    %c0_104 = arith.constant 0 : index
    %c7 = arith.constant 7 : index
    %c0_105 = arith.constant 0 : index
    %c0_106 = arith.constant 0 : index
    %223 = vector.load %arg6[%c0_104, %c7, %c0_105, %c0_106] : memref<1x16x16x64xbf16, #tpu.memory_space<vmem>>, vector<1x1x16x64xbf16>
    %224 = vector.shape_cast %223 : vector<1x1x16x64xbf16> to vector<16x64xbf16>
    %225 = vector.shape_cast %222 : vector<16x64xbf16> to vector<1x1x16x64xbf16>
    tpu.vector_store %arg6[%c0_104, %c7, %c0_105, %c0_106], %225 {strides = array<i32>} : memref<1x16x16x64xbf16, #tpu.memory_space<vmem>>, vector<1x1x16x64xbf16>,
    %c256_107 = arith.constant 256 : index
    %c0_108 = arith.constant 0 : index
    %226 = vector.load %arg9[%c256_107, %c0_108] : memref<576x192xbf16, #tpu.memory_space<vmem>>, vector<256x192xbf16>
    %c0_109 = arith.constant 0 : index
    %c0_110 = arith.constant 0 : index
    %c0_111 = arith.constant 0 : index
    %227 = vector.load %arg4[%c0_109, %c0_110, %c0_111] : memref<3x192x64xbf16, #tpu.memory_space<vmem>>, vector<1x192x64xbf16>
    %228 = vector.shape_cast %227 : vector<1x192x64xbf16> to vector<192x64xbf16>
    %cst_112 = arith.constant dense<0.000000e+00> : vector<256x64xf32>
    %229 = tpu.matmul %226, %228, %cst_112 {dimension_numbers = #tpu.dot_dimension_numbers<[1], [0], [0], [1], [0, 0, 1, 1], [], []>} : vector<256x192xbf16>, vector<192x64xbf16>, vector<256x64xf32> -> vector<256x64xf32>
    %c288_113 = arith.constant 288 : index
    %c0_114 = arith.constant 0 : index
    %230 = vector.load %arg9[%c288_113, %c0_114] : memref<576x192xbf16, #tpu.memory_space<vmem>>, vector<256x192xbf16>
    %c1_115 = arith.constant 1 : index
    %c0_116 = arith.constant 0 : index
    %c0_117 = arith.constant 0 : index
    %231 = vector.load %arg4[%c1_115, %c0_116, %c0_117] : memref<3x192x64xbf16, #tpu.memory_space<vmem>>, vector<1x192x64xbf16>
    %232 = vector.shape_cast %231 : vector<1x192x64xbf16> to vector<192x64xbf16>
    %cst_118 = arith.constant dense<0.000000e+00> : vector<256x64xf32>
    %233 = tpu.matmul %230, %232, %cst_118 {dimension_numbers = #tpu.dot_dimension_numbers<[1], [0], [0], [1], [0, 0, 1, 1], [], []>} : vector<256x192xbf16>, vector<192x64xbf16>, vector<256x64xf32> -> vector<256x64xf32>
    %234 = arith.addf %229, %233 : vector<256x64xf32>
    %c320_119 = arith.constant 320 : index
    %c0_120 = arith.constant 0 : index
    %235 = vector.load %arg9[%c320_119, %c0_120] : memref<576x192xbf16, #tpu.memory_space<vmem>>, vector<256x192xbf16>
    %c2_121 = arith.constant 2 : index
    %c0_122 = arith.constant 0 : index
    %c0_123 = arith.constant 0 : index
    %236 = vector.load %arg4[%c2_121, %c0_122, %c0_123] : memref<3x192x64xbf16, #tpu.memory_space<vmem>>, vector<1x192x64xbf16>
    %237 = vector.shape_cast %236 : vector<1x192x64xbf16> to vector<192x64xbf16>
    %cst_124 = arith.constant dense<0.000000e+00> : vector<256x64xf32>
    %238 = tpu.matmul %235, %237, %cst_124 {dimension_numbers = #tpu.dot_dimension_numbers<[1], [0], [0], [1], [0, 0, 1, 1], [], []>} : vector<256x192xbf16>, vector<192x64xbf16>, vector<256x64xf32> -> vector<256x64xf32>
    %239 = arith.addf %234, %238 : vector<256x64xf32>
    %c0_125 = arith.constant 0 : index
    %c0_126 = arith.constant 0 : index
    %240 = vector.load %arg5[%c0_125, %c0_126] : memref<256x1xf32, #tpu.memory_space<vmem>>, vector<256x1xf32>
    %241 = vector.broadcast %240 : vector<256x1xf32> to vector<256x64xf32>
    %242 = arith.mulf %239, %241 : vector<256x64xf32>
    %cst_127 = arith.constant dense<0.000000e+00> : vector<64xf32>
    %243 = vector.multi_reduction <add>, %242, %cst_127 [0] : vector<256x64xf32> to vector<64xf32>
    %244 = vector.shape_cast %243 : vector<64xf32> to vector<1x64xf32>
    %245 = arith.addf %181, %244 : vector<1x64xf32>
    %246 = arith.mulf %242, %239 : vector<256x64xf32>
    %cst_128 = arith.constant dense<0.000000e+00> : vector<64xf32>
    %247 = vector.multi_reduction <add>, %246, %cst_128 [0] : vector<256x64xf32> to vector<64xf32>
    %248 = vector.shape_cast %247 : vector<64xf32> to vector<1x64xf32>
    %249 = arith.addf %185, %248 : vector<1x64xf32>
    %250 = vector.extract_strided_slice %239 {offsets = [0, 0], sizes = [16, 64], strides = [1, 1]} : vector<256x64xf32> to vector<16x64xf32>
    %251 = arith.truncf %250 : vector<16x64xf32> to vector<16x64xbf16>
    %c0_129 = arith.constant 0 : index
    %c8 = arith.constant 8 : index
    %c0_130 = arith.constant 0 : index
    %c0_131 = arith.constant 0 : index
    %252 = vector.load %arg6[%c0_129, %c8, %c0_130, %c0_131] : memref<1x16x16x64xbf16, #tpu.memory_space<vmem>>, vector<1x1x16x64xbf16>
    %253 = vector.shape_cast %252 : vector<1x1x16x64xbf16> to vector<16x64xbf16>
    %254 = vector.shape_cast %251 : vector<16x64xbf16> to vector<1x1x16x64xbf16>
    tpu.vector_store %arg6[%c0_129, %c8, %c0_130, %c0_131], %254 {strides = array<i32>} : memref<1x16x16x64xbf16, #tpu.memory_space<vmem>>, vector<1x1x16x64xbf16>,
    %255 = vector.extract_strided_slice %239 {offsets = [32, 0], sizes = [16, 64], strides = [1, 1]} : vector<256x64xf32> to vector<16x64xf32>
    %256 = arith.truncf %255 : vector<16x64xf32> to vector<16x64xbf16>
    %c0_132 = arith.constant 0 : index
    %c9 = arith.constant 9 : index
    %c0_133 = arith.constant 0 : index
    %c0_134 = arith.constant 0 : index
    %257 = vector.load %arg6[%c0_132, %c9, %c0_133, %c0_134] : memref<1x16x16x64xbf16, #tpu.memory_space<vmem>>, vector<1x1x16x64xbf16>
    %258 = vector.shape_cast %257 : vector<1x1x16x64xbf16> to vector<16x64xbf16>
    %259 = vector.shape_cast %256 : vector<16x64xbf16> to vector<1x1x16x64xbf16>
    tpu.vector_store %arg6[%c0_132, %c9, %c0_133, %c0_134], %259 {strides = array<i32>} : memref<1x16x16x64xbf16, #tpu.memory_space<vmem>>, vector<1x1x16x64xbf16>,
    %260 = vector.extract_strided_slice %239 {offsets = [64, 0], sizes = [16, 64], strides = [1, 1]} : vector<256x64xf32> to vector<16x64xf32>
    %261 = arith.truncf %260 : vector<16x64xf32> to vector<16x64xbf16>
    %c0_135 = arith.constant 0 : index
    %c10 = arith.constant 10 : index
    %c0_136 = arith.constant 0 : index
    %c0_137 = arith.constant 0 : index
    %262 = vector.load %arg6[%c0_135, %c10, %c0_136, %c0_137] : memref<1x16x16x64xbf16, #tpu.memory_space<vmem>>, vector<1x1x16x64xbf16>
    %263 = vector.shape_cast %262 : vector<1x1x16x64xbf16> to vector<16x64xbf16>
    %264 = vector.shape_cast %261 : vector<16x64xbf16> to vector<1x1x16x64xbf16>
    tpu.vector_store %arg6[%c0_135, %c10, %c0_136, %c0_137], %264 {strides = array<i32>} : memref<1x16x16x64xbf16, #tpu.memory_space<vmem>>, vector<1x1x16x64xbf16>,
    %265 = vector.extract_strided_slice %239 {offsets = [96, 0], sizes = [16, 64], strides = [1, 1]} : vector<256x64xf32> to vector<16x64xf32>
    %266 = arith.truncf %265 : vector<16x64xf32> to vector<16x64xbf16>
    %c0_138 = arith.constant 0 : index
    %c11 = arith.constant 11 : index
    %c0_139 = arith.constant 0 : index
    %c0_140 = arith.constant 0 : index
    %267 = vector.load %arg6[%c0_138, %c11, %c0_139, %c0_140] : memref<1x16x16x64xbf16, #tpu.memory_space<vmem>>, vector<1x1x16x64xbf16>
    %268 = vector.shape_cast %267 : vector<1x1x16x64xbf16> to vector<16x64xbf16>
    %269 = vector.shape_cast %266 : vector<16x64xbf16> to vector<1x1x16x64xbf16>
    tpu.vector_store %arg6[%c0_138, %c11, %c0_139, %c0_140], %269 {strides = array<i32>} : memref<1x16x16x64xbf16, #tpu.memory_space<vmem>>, vector<1x1x16x64xbf16>,
    %270 = vector.extract_strided_slice %239 {offsets = [128, 0], sizes = [16, 64], strides = [1, 1]} : vector<256x64xf32> to vector<16x64xf32>
    %271 = arith.truncf %270 : vector<16x64xf32> to vector<16x64xbf16>
    %c0_141 = arith.constant 0 : index
    %c12 = arith.constant 12 : index
    %c0_142 = arith.constant 0 : index
    %c0_143 = arith.constant 0 : index
    %272 = vector.load %arg6[%c0_141, %c12, %c0_142, %c0_143] : memref<1x16x16x64xbf16, #tpu.memory_space<vmem>>, vector<1x1x16x64xbf16>
    %273 = vector.shape_cast %272 : vector<1x1x16x64xbf16> to vector<16x64xbf16>
    %274 = vector.shape_cast %271 : vector<16x64xbf16> to vector<1x1x16x64xbf16>
    tpu.vector_store %arg6[%c0_141, %c12, %c0_142, %c0_143], %274 {strides = array<i32>} : memref<1x16x16x64xbf16, #tpu.memory_space<vmem>>, vector<1x1x16x64xbf16>,
    %275 = vector.extract_strided_slice %239 {offsets = [160, 0], sizes = [16, 64], strides = [1, 1]} : vector<256x64xf32> to vector<16x64xf32>
    %276 = arith.truncf %275 : vector<16x64xf32> to vector<16x64xbf16>
    %c0_144 = arith.constant 0 : index
    %c13 = arith.constant 13 : index
    %c0_145 = arith.constant 0 : index
    %c0_146 = arith.constant 0 : index
    %277 = vector.load %arg6[%c0_144, %c13, %c0_145, %c0_146] : memref<1x16x16x64xbf16, #tpu.memory_space<vmem>>, vector<1x1x16x64xbf16>
    %278 = vector.shape_cast %277 : vector<1x1x16x64xbf16> to vector<16x64xbf16>
    %279 = vector.shape_cast %276 : vector<16x64xbf16> to vector<1x1x16x64xbf16>
    tpu.vector_store %arg6[%c0_144, %c13, %c0_145, %c0_146], %279 {strides = array<i32>} : memref<1x16x16x64xbf16, #tpu.memory_space<vmem>>, vector<1x1x16x64xbf16>,
    %280 = vector.extract_strided_slice %239 {offsets = [192, 0], sizes = [16, 64], strides = [1, 1]} : vector<256x64xf32> to vector<16x64xf32>
    %281 = arith.truncf %280 : vector<16x64xf32> to vector<16x64xbf16>
    %c0_147 = arith.constant 0 : index
    %c14 = arith.constant 14 : index
    %c0_148 = arith.constant 0 : index
    %c0_149 = arith.constant 0 : index
    %282 = vector.load %arg6[%c0_147, %c14, %c0_148, %c0_149] : memref<1x16x16x64xbf16, #tpu.memory_space<vmem>>, vector<1x1x16x64xbf16>
    %283 = vector.shape_cast %282 : vector<1x1x16x64xbf16> to vector<16x64xbf16>
    %284 = vector.shape_cast %281 : vector<16x64xbf16> to vector<1x1x16x64xbf16>
    tpu.vector_store %arg6[%c0_147, %c14, %c0_148, %c0_149], %284 {strides = array<i32>} : memref<1x16x16x64xbf16, #tpu.memory_space<vmem>>, vector<1x1x16x64xbf16>,
    %285 = vector.extract_strided_slice %239 {offsets = [224, 0], sizes = [16, 64], strides = [1, 1]} : vector<256x64xf32> to vector<16x64xf32>
    %286 = arith.truncf %285 : vector<16x64xf32> to vector<16x64xbf16>
    %c0_150 = arith.constant 0 : index
    %c15 = arith.constant 15 : index
    %c0_151 = arith.constant 0 : index
    %c0_152 = arith.constant 0 : index
    %287 = vector.load %arg6[%c0_150, %c15, %c0_151, %c0_152] : memref<1x16x16x64xbf16, #tpu.memory_space<vmem>>, vector<1x1x16x64xbf16>
    %288 = vector.shape_cast %287 : vector<1x1x16x64xbf16> to vector<16x64xbf16>
    %289 = vector.shape_cast %286 : vector<16x64xbf16> to vector<1x1x16x64xbf16>
    tpu.vector_store %arg6[%c0_150, %c15, %c0_151, %c0_152], %289 {strides = array<i32>} : memref<1x16x16x64xbf16, #tpu.memory_space<vmem>>, vector<1x1x16x64xbf16>,
    %c0_153 = arith.constant 0 : index
    %c0_154 = arith.constant 0 : index
    %c0_155 = arith.constant 0 : index
    %290 = vector.load %arg7[%c0_153, %c0_154, %c0_155] : memref<1x1x64xf32, #tpu.memory_space<vmem>>, vector<1x1x64xf32>
    %291 = vector.shape_cast %290 : vector<1x1x64xf32> to vector<1x64xf32>
    %292 = vector.shape_cast %245 : vector<1x64xf32> to vector<1x1x64xf32>
    tpu.vector_store %arg7[%c0_153, %c0_154, %c0_155], %292 {strides = array<i32>} : memref<1x1x64xf32, #tpu.memory_space<vmem>>, vector<1x1x64xf32>,
    %c0_156 = arith.constant 0 : index
    %c0_157 = arith.constant 0 : index
    %c0_158 = arith.constant 0 : index
    %293 = vector.load %arg8[%c0_156, %c0_157, %c0_158] : memref<1x1x64xf32, #tpu.memory_space<vmem>>, vector<1x1x64xf32>
    %294 = vector.shape_cast %293 : vector<1x1x64xf32> to vector<1x64xf32>
    %295 = vector.shape_cast %249 : vector<1x64xf32> to vector<1x1x64xf32>
    tpu.vector_store %arg8[%c0_156, %c0_157, %c0_158], %295 {strides = array<i32>} : memref<1x1x64xf32, #tpu.memory_space<vmem>>, vector<1x1x64xf32>,
    return
  }
  func.func @transform_0(%arg0: i32) -> (i32, i32, i32, i32) {
    %c0_i32 = arith.constant 0 : i32
    %c0_i32_0 = arith.constant 0 : i32
    %c0_i32_1 = arith.constant 0 : i32
    %c0_i32_2 = arith.constant 0 : i32
    return %arg0, %c0_i32, %c0_i32_0, %c0_i32_1 : i32, i32, i32, i32
  }
  func.func @transform_1(%arg0: i32) -> (i32, i32) {
    %c0_i32 = arith.constant 0 : i32
    %c0_i32_0 = arith.constant 0 : i32
    %c0_i32_1 = arith.constant 0 : i32
    return %c0_i32, %c0_i32_0 : i32, i32
  }
  func.func @transform_2(%arg0: i32) -> (i32, i32) {
    %c0_i32 = arith.constant 0 : i32
    %c0_i32_0 = arith.constant 0 : i32
    %c0_i32_1 = arith.constant 0 : i32
    return %c0_i32, %c0_i32_0 : i32, i32
  }
  func.func @transform_3(%arg0: i32) -> (i32, i32, i32) {
    %c0_i32 = arith.constant 0 : i32
    %c0_i32_0 = arith.constant 0 : i32
    %c0_i32_1 = arith.constant 0 : i32
    %c0_i32_2 = arith.constant 0 : i32
    return %c0_i32, %c0_i32_0, %c0_i32_1 : i32, i32, i32
  }
  func.func @transform_4(%arg0: i32) -> (i32, i32) {
    %c0_i32 = arith.constant 0 : i32
    %c0_i32_0 = arith.constant 0 : i32
    %c0_i32_1 = arith.constant 0 : i32
    return %c0_i32, %c0_i32_0 : i32, i32
  }
  func.func @transform_5(%arg0: i32) -> (i32, i32, i32, i32) {
    %c0_i32 = arith.constant 0 : i32
    %c0_i32_0 = arith.constant 0 : i32
    %c0_i32_1 = arith.constant 0 : i32
    %c0_i32_2 = arith.constant 0 : i32
    return %arg0, %c0_i32, %c0_i32_0, %c0_i32_1 : i32, i32, i32, i32
  }
  func.func @transform_6(%arg0: i32) -> (i32, i32, i32) {
    %c0_i32 = arith.constant 0 : i32
    %c0_i32_0 = arith.constant 0 : i32
    %c0_i32_1 = arith.constant 0 : i32
    return %arg0, %c0_i32, %c0_i32_0 : i32, i32, i32
  }
  func.func @transform_7(%arg0: i32) -> (i32, i32, i32) {
    %c0_i32 = arith.constant 0 : i32
    %c0_i32_0 = arith.constant 0 : i32
    %c0_i32_1 = arith.constant 0 : i32
    return %arg0, %c0_i32, %c0_i32_0 : i32, i32, i32
  }
}

</mosaic_0001>

<llo_original>
// kernel: basic_block_res_forward.5
$region0: #{basic_block_res_forward.5}
  #allocation0 [shape = 'u32[]', space=smem, size = 0x4, offset = 0x4, fixed_abs, tag = 'smem constant byte address 0x4 - core index']
  #allocation1 [shape = 'u32[72,128]{1,0:T(1,128)}', space=vmem, size = 0x9000, scoped, tag = 'internal scratch']
  %s0 = inlined_call_operand.vmem [shape: bf16[2,16,16,64], index: 0, kind: input, shape index: {}]
  %s1 = inlined_call_operand.vmem [shape: bf16[2,16,16,64], index: 1, kind: input, shape index: {}]
  %s2 = inlined_call_operand.vmem [shape: f32[1,64], index: 2, kind: input, shape index: {}]
  %s3 = inlined_call_operand.vmem [shape: f32[1,64], index: 3, kind: input, shape index: {}]
  %s4 = inlined_call_operand.vmem [shape: bf16[2,16,16,64], index: 4, kind: output, shape index: {}]
  %s5 = sld [smem:[#allocation0]]
  $region49: #{basic_block_res_forward.5} parent=0
    _
  %s7 = ssub.s32 1, %s5
  %s8 = scalar_select 0, %s7, %s5
  loop: start=0, step=1, limit=4
  $region2: #{basic_block_res_forward.5} parent=0 // loop_pre_header
    _
  $region3: #{basic_block_res_forward.5} parent=0 // loop_header
    %s10 = sphi 0, %s14
    %p11 = scmp.ge.s32.totalorder %s10, 4
    %s20 = sphi 0, %s22
    %s23 = sphi 0, %s20
    %s24 = sphi 0, %s23
    %s40 = sphi 0, %s24
    %s46 = sphi 0, %s48
    %s49 = sphi 0, %s46
    %s50 = sphi 0, %s49
    %s66 = sphi 0, %s50
    %s70 = sphi 0, %s70
    %s72 = sphi 0, %s70
    %s73 = sphi 0, %s72
    %s87 = sphi 0, %s73
    %s91 = sphi 0, %s91
    %s93 = sphi 0, %s91
    %s94 = sphi 0, %s93
    %s108 = sphi 0, %s94
    %s114 = sphi 0, %s116
    %s117 = sphi 0, %s114
    %s118 = sphi 0, %s117
    %s134 = sphi 0, %s118
  $region4: #{basic_block_res_forward.5} parent=0 // loop_header_branch
    %13 = sbr.rel (%p11) target = $region8
  $region5: #{basic_block_res_forward.5} parent=0 // loop_body
    %s15 = ssub.s32 %s10, 1
    %s16 = ssub.s32 %s10, 2
    %s17 = sadd.s32 %s10, 1
    %s18 = ssub.s32 %s10, %s17
    %p19 = scmp.eq.s32.totalorder %s18, 0
    %s21 = sadd.s32 %s20, 1
    %s22 = scalar_select %p19, %s20, %s21
    %p25 = pneg %p19
    %p26 = scmp.eq.s32.totalorder %s10, 1
    %p27 = por %p25, %p26
    %p28 = scmp.ne.s32.totalorder %s20, %s23
    %p29 = scmp.eq.s32.totalorder %s10, 0
    %p30 = por %p28, %p29
    %p31 = scmp.ne.s32.totalorder %s20, %s23
    %p32 = scmp.eq.s32.totalorder %s15, 1
    %p33 = por %p31, %p32
    %p34 = scmp.ne.s32.totalorder %s23, %s24
    %p35 = scmp.eq.s32.totalorder %s15, 0
    %p36 = por %p34, %p35
    %p37 = scmp.ne.s32.totalorder %s23, %s24
    %p38 = scmp.eq.s32.totalorder %s16, 1
    %p39 = por %p37, %p38
    %p41 = scmp.ne.s32.totalorder %s24, %s40
    %p42 = scmp.eq.s32.totalorder %s16, 0
    %p43 = por %p41, %p42
    %s44 = ssub.s32 %s10, %s17
    %p45 = scmp.eq.s32.totalorder %s44, 0
    %s47 = sadd.s32 %s46, 1
    %s48 = scalar_select %p45, %s46, %s47
    %p51 = pneg %p45
    %p52 = scmp.eq.s32.totalorder %s10, 1
    %p53 = por %p51, %p52
    %p54 = scmp.ne.s32.totalorder %s46, %s49
    %p55 = scmp.eq.s32.totalorder %s10, 0
    %p56 = por %p54, %p55
    %p57 = scmp.ne.s32.totalorder %s46, %s49
    %p58 = scmp.eq.s32.totalorder %s15, 1
    %p59 = por %p57, %p58
    %p60 = scmp.ne.s32.totalorder %s49, %s50
    %p61 = scmp.eq.s32.totalorder %s15, 0
    %p62 = por %p60, %p61
    %p63 = scmp.ne.s32.totalorder %s49, %s50
    %p64 = scmp.eq.s32.totalorder %s16, 1
    %p65 = por %p63, %p64
    %p67 = scmp.ne.s32.totalorder %s50, %s66
    %p68 = scmp.eq.s32.totalorder %s16, 0
    %p69 = por %p67, %p68
    %s71 = sadd.s32 %s70, 1
    %p74 = scmp.eq.s32.totalorder %s10, 1
    %p75 = scmp.ne.s32.totalorder %s70, %s72
    %p76 = scmp.eq.s32.totalorder %s10, 0
    %p77 = por %p75, %p76
    %p78 = scmp.ne.s32.totalorder %s70, %s72
    %p79 = scmp.eq.s32.totalorder %s15, 1
    %p80 = por %p78, %p79
    %p81 = scmp.ne.s32.totalorder %s72, %s73
    %p82 = scmp.eq.s32.totalorder %s15, 0
    %p83 = por %p81, %p82
    %p84 = scmp.ne.s32.totalorder %s72, %s73
    %p85 = scmp.eq.s32.totalorder %s16, 1
    %p86 = por %p84, %p85
    %p88 = scmp.ne.s32.totalorder %s73, %s87
    %p89 = scmp.eq.s32.totalorder %s16, 0
    %p90 = por %p88, %p89
    %s92 = sadd.s32 %s91, 1
    %p95 = scmp.eq.s32.totalorder %s10, 1
    %p96 = scmp.ne.s32.totalorder %s91, %s93
    %p97 = scmp.eq.s32.totalorder %s10, 0
    %p98 = por %p96, %p97
    %p99 = scmp.ne.s32.totalorder %s91, %s93
    %p100 = scmp.eq.s32.totalorder %s15, 1
    %p101 = por %p99, %p100
    %p102 = scmp.ne.s32.totalorder %s93, %s94
    %p103 = scmp.eq.s32.totalorder %s15, 0
    %p104 = por %p102, %p103
    %p105 = scmp.ne.s32.totalorder %s93, %s94
    %p106 = scmp.eq.s32.totalorder %s16, 1
    %p107 = por %p105, %p106
    %p109 = scmp.ne.s32.totalorder %s94, %s108
    %p110 = scmp.eq.s32.totalorder %s16, 0
    %p111 = por %p109, %p110
    %s112 = ssub.s32 %s10, %s17
    %p113 = scmp.eq.s32.totalorder %s112, 0
    %s115 = sadd.s32 %s114, 1
    %s116 = scalar_select %p113, %s114, %s115
    %p119 = pneg %p113
    %p120 = scmp.eq.s32.totalorder %s10, 1
    %p121 = por %p119, %p120
    %p122 = scmp.ne.s32.totalorder %s114, %s117
    %p123 = scmp.eq.s32.totalorder %s10, 0
    %p124 = por %p122, %p123
    %p125 = scmp.ne.s32.totalorder %s114, %s117
    %p126 = scmp.eq.s32.totalorder %s15, 1
    %p127 = por %p125, %p126
    %p128 = scmp.ne.s32.totalorder %s117, %s118
    %p129 = scmp.eq.s32.totalorder %s15, 0
    %p130 = por %p128, %p129
    %p131 = scmp.ne.s32.totalorder %s117, %s118
    %p132 = scmp.eq.s32.totalorder %s16, 1
    %p133 = por %p131, %p132
    %p135 = scmp.ne.s32.totalorder %s118, %s134
    %p136 = scmp.eq.s32.totalorder %s16, 0
    %p137 = por %p135, %p136
    %p138 = scmp.le.s32.totalorder 1, %s10
    %p139 = scmp.lt.s32.totalorder %s10, 3
    %p140 = pnand %p138, %p139
    %p141 = pneg %p140
    // Predicated region
    $region9: #{basic_block_res_forward.5} parent=5 // pred_check
      _
    $region10: #{basic_block_res_forward.5} parent=5 // pred_check_branch
      %143 = sbr.rel (%p140) target = $region12
    $region11: #{basic_block_res_forward.5} parent=5 // pred_region
      %s144 = ssub.s32 %s10, 1
      // Predicated region
      $region13: #{basic_block_res_forward.5} parent=11 // pred_check
        %p145 = pneg %p83
      $region14: #{basic_block_res_forward.5} parent=11 // pred_check_branch
        %147 = sbr.rel (%p145) target = $region16
      $region15: #{basic_block_res_forward.5} parent=11 // pred_region
        _
      $region16: #{basic_block_res_forward.5} parent=11 // pred_fallthru
        _
      // Predicated region
      $region17: #{basic_block_res_forward.5} parent=11 // pred_check
        %p148 = pneg %p104
      $region18: #{basic_block_res_forward.5} parent=11 // pred_check_branch
        %150 = sbr.rel (%p148) target = $region20
      $region19: #{basic_block_res_forward.5} parent=11 // pred_region
        _
      $region20: #{basic_block_res_forward.5} parent=11 // pred_fallthru
        _
    $region12: #{basic_block_res_forward.5} parent=5 // pred_fallthru
      _
    %p151 = scmp.lt.s32.totalorder %s10, 2
    // Predicated region
    $region21: #{basic_block_res_forward.5} parent=5 // pred_check
      %p152 = pneg %p151
    $region22: #{basic_block_res_forward.5} parent=5 // pred_check_branch
      %154 = sbr.rel (%p152) target = $region24
    $region23: #{basic_block_res_forward.5} parent=5 // pred_region
      // Predicated region
      $region25: #{basic_block_res_forward.5} parent=23 // pred_check
        %p155 = pneg %p30
      $region26: #{basic_block_res_forward.5} parent=23 // pred_check_branch
        %157 = sbr.rel (%p155) target = $region28
      $region27: #{basic_block_res_forward.5} parent=23 // pred_region
        %p158 = scmp.lt.s32.totalorder %s10, 1
        %s159 = scalar_select %p158, %s10, 1
        %s160 = smul.addr %s159, 32
        %s161 = smul.addr %s160, 4
        %s162 = scalar_lea.vmem %s0, %s161
      $region28: #{basic_block_res_forward.5} parent=23 // pred_fallthru
        _
      // Predicated region
      $region29: #{basic_block_res_forward.5} parent=23 // pred_check
        %p163 = pneg %p56
      $region30: #{basic_block_res_forward.5} parent=23 // pred_check_branch
        %165 = sbr.rel (%p163) target = $region32
      $region31: #{basic_block_res_forward.5} parent=23 // pred_region
        %p166 = scmp.lt.s32.totalorder %s10, 1
        %s167 = scalar_select %p166, %s10, 1
        %s168 = smul.addr %s167, 32
        %s169 = smul.addr %s168, 4
        %s170 = scalar_lea.vmem %s1, %s169
      $region32: #{basic_block_res_forward.5} parent=23 // pred_fallthru
        _
    $region24: #{basic_block_res_forward.5} parent=5 // pred_fallthru
      _
    %p171 = scmp.le.s32.totalorder 1, %s10
    %p172 = scmp.lt.s32.totalorder %s10, 3
    %p173 = pnand %p171, %p172
    %p174 = pneg %p173
    // Predicated region
    $region33: #{basic_block_res_forward.5} parent=5 // pred_check
      _
    $region34: #{basic_block_res_forward.5} parent=5 // pred_check_branch
      %176 = sbr.rel (%p173) target = $region36
    $region35: #{basic_block_res_forward.5} parent=5 // pred_region
      %s177 = ssub.s32 %s10, 1
      %p178 = scmp.lt.s32.totalorder %s15, 1
      %s179 = scalar_select %p178, %s15, 1
      %s180 = smul.addr %s179, 32
      %s181 = smul.addr %s180, 4
      %s182 = scalar_lea.vmem %s0, %s181
      %p183 = pneg %p36
      %p184 = pneg %p33
      %p185 = scmp.lt.s32.totalorder %s15, 1
      %s186 = scalar_select %p185, %s15, 1
      %s187 = smul.addr %s186, 32
      %s188 = smul.addr %s187, 4
      %s189 = scalar_lea.vmem %s1, %s188
      %p190 = pneg %p62
      %p191 = pneg %p59
      %p192 = pneg %p83
      %p193 = pneg %p80
      %p194 = pneg %p104
      %p195 = pneg %p101
      %p196 = pneg %p130
      %p197 = pneg %p127
      %p198 = scmp.lt.s32.totalorder %s15, 1
      %s199 = scalar_select %p198, %s15, 1
      %s200 = smul.addr %s199, 32
      %s201 = smul.addr %s200, 4
      %s202 = scalar_lea.vmem %s4, %s201
      %p203 = scmp.lt.s32.totalorder %s15, 1
      %s204 = scalar_select %p203, %s15, 1
      %s205 = smul.addr %s204, 32
      %s206 = smul.addr %s205, 4
      %s207 = scalar_lea.vmem %s0, %s206
      %p208 = scmp.lt.s32.totalorder %s15, 1
      %s209 = scalar_select %p208, %s15, 1
      %s210 = smul.addr %s209, 32
      %s211 = smul.addr %s210, 4
      %s212 = scalar_lea.vmem %s1, %s211
      %p213 = scmp.lt.s32.totalorder %s15, 1
      %s214 = scalar_select %p213, %s15, 1
      %s215 = smul.addr %s214, 32
      %s216 = smul.addr %s215, 4
      %s217 = scalar_lea.vmem %s4, %s216
      %v218 = vld [vmem:[%s207] sm:$0xf]
      %v219 = vld [vmem:[%s207 + $0x4] sm:$0xf]
      %v220 = vld [vmem:[%s207 + $0x8] sm:$0xf]
      %v221 = vld [vmem:[%s207 + $0xc] sm:$0xf]
      %v222 = vld [vmem:[%s207 + $0x10] sm:$0xf]
      %v223 = vld [vmem:[%s207 + $0x14] sm:$0xf]
      %v224 = vld [vmem:[%s207 + $0x18] sm:$0xf]
      %v225 = vld [vmem:[%s207 + $0x1c] sm:$0xf]
      %v226 = vld [vmem:[%s207 + $0x20] sm:$0xf]
      %v227 = vld [vmem:[%s207 + $0x24] sm:$0xf]
      %v228 = vld [vmem:[%s207 + $0x28] sm:$0xf]
      %v229 = vld [vmem:[%s207 + $0x2c] sm:$0xf]
      %v230 = vld [vmem:[%s207 + $0x30] sm:$0xf]
      %v231 = vld [vmem:[%s207 + $0x34] sm:$0xf]
      %v232 = vld [vmem:[%s207 + $0x38] sm:$0xf]
      %v233 = vld [vmem:[%s207 + $0x3c] sm:$0xf]
      %v234 = vld [vmem:[%s207 + $0x40] sm:$0xf]
      %v235 = vld [vmem:[%s207 + $0x44] sm:$0xf]
      %v236 = vld [vmem:[%s207 + $0x48] sm:$0xf]
      %v237 = vld [vmem:[%s207 + $0x4c] sm:$0xf]
      %v238 = vld [vmem:[%s207 + $0x50] sm:$0xf]
      %v239 = vld [vmem:[%s207 + $0x54] sm:$0xf]
      %v240 = vld [vmem:[%s207 + $0x58] sm:$0xf]
      %v241 = vld [vmem:[%s207 + $0x5c] sm:$0xf]
      %v242 = vld [vmem:[%s207 + $0x60] sm:$0xf]
      %v243 = vld [vmem:[%s207 + $0x64] sm:$0xf]
      %v244 = vld [vmem:[%s207 + $0x68] sm:$0xf]
      %v245 = vld [vmem:[%s207 + $0x6c] sm:$0xf]
      %v246 = vld [vmem:[%s207 + $0x70] sm:$0xf]
      %v247 = vld [vmem:[%s207 + $0x74] sm:$0xf]
      %v248 = vld [vmem:[%s207 + $0x78] sm:$0xf]
      %v249 = vld [vmem:[%s207 + $0x7c] sm:$0xf]
      %v250 = vunpack.c.l.bf16 %v218
      %v251 = vunpack.c.l.bf16 %v219
      %v252 = vunpack.c.l.bf16 %v220
      %v253 = vunpack.c.l.bf16 %v221
      %v254 = vunpack.c.l.bf16 %v222
      %v255 = vunpack.c.l.bf16 %v223
      %v256 = vunpack.c.l.bf16 %v224
      %v257 = vunpack.c.l.bf16 %v225
      %v258 = vunpack.c.l.bf16 %v226
      %v259 = vunpack.c.l.bf16 %v227
      %v260 = vunpack.c.l.bf16 %v228
      %v261 = vunpack.c.l.bf16 %v229
      %v262 = vunpack.c.l.bf16 %v230
      %v263 = vunpack.c.l.bf16 %v231
      %v264 = vunpack.c.l.bf16 %v232
      %v265 = vunpack.c.l.bf16 %v233
      %v266 = vunpack.c.l.bf16 %v234
      %v267 = vunpack.c.l.bf16 %v235
      %v268 = vunpack.c.l.bf16 %v236
      %v269 = vunpack.c.l.bf16 %v237
      %v270 = vunpack.c.l.bf16 %v238
      %v271 = vunpack.c.l.bf16 %v239
      %v272 = vunpack.c.l.bf16 %v240
      %v273 = vunpack.c.l.bf16 %v241
      %v274 = vunpack.c.l.bf16 %v242
      %v275 = vunpack.c.l.bf16 %v243
      %v276 = vunpack.c.l.bf16 %v244
      %v277 = vunpack.c.l.bf16 %v245
      %v278 = vunpack.c.l.bf16 %v246
      %v279 = vunpack.c.l.bf16 %v247
      %v280 = vunpack.c.l.bf16 %v248
      %v281 = vunpack.c.l.bf16 %v249
      %v282 = vld [vmem:[%s2] sm:$0x1]
      %v284 = vperm.slane %v282, 0
      %v286 = vmul.f32 %v250, %v284
      %v287 = vmul.f32 %v251, %v284
      %v288 = vmul.f32 %v252, %v284
      %v289 = vmul.f32 %v253, %v284
      %v290 = vmul.f32 %v254, %v284
      %v291 = vmul.f32 %v255, %v284
      %v292 = vmul.f32 %v256, %v284
      %v293 = vmul.f32 %v257, %v284
      %v294 = vmul.f32 %v258, %v284
      %v295 = vmul.f32 %v259, %v284
      %v296 = vmul.f32 %v260, %v284
      %v297 = vmul.f32 %v261, %v284
      %v298 = vmul.f32 %v262, %v284
      %v299 = vmul.f32 %v263, %v284
      %v300 = vmul.f32 %v264, %v284
      %v301 = vmul.f32 %v265, %v284
      %v302 = vmul.f32 %v266, %v284
      %v303 = vmul.f32 %v267, %v284
      %v304 = vmul.f32 %v268, %v284
      %v305 = vmul.f32 %v269, %v284
      %v306 = vmul.f32 %v270, %v284
      %v307 = vmul.f32 %v271, %v284
      %v308 = vmul.f32 %v272, %v284
      %v309 = vmul.f32 %v273, %v284
      %v310 = vmul.f32 %v274, %v284
      %v311 = vmul.f32 %v275, %v284
      %v312 = vmul.f32 %v276, %v284
      %v313 = vmul.f32 %v277, %v284
      %v314 = vmul.f32 %v278, %v284
      %v315 = vmul.f32 %v279, %v284
      %v316 = vmul.f32 %v280, %v284
      %v317 = vmul.f32 %v281, %v284
      %v318 = vld [vmem:[%s3] sm:$0x1]
      %v320 = vperm.slane %v318, 0
      %v322 = vadd.f32 %v286, %v320
      %v323 = vadd.f32 %v287, %v320
      %v324 = vadd.f32 %v288, %v320
      %v325 = vadd.f32 %v289, %v320
      %v326 = vadd.f32 %v290, %v320
      %v327 = vadd.f32 %v291, %v320
      %v328 = vadd.f32 %v292, %v320
      %v329 = vadd.f32 %v293, %v320
      %v330 = vadd.f32 %v294, %v320
      %v331 = vadd.f32 %v295, %v320
      %v332 = vadd.f32 %v296, %v320
      %v333 = vadd.f32 %v297, %v320
      %v334 = vadd.f32 %v298, %v320
      %v335 = vadd.f32 %v299, %v320
      %v336 = vadd.f32 %v300, %v320
      %v337 = vadd.f32 %v301, %v320
      %v338 = vadd.f32 %v302, %v320
      %v339 = vadd.f32 %v303, %v320
      %v340 = vadd.f32 %v304, %v320
      %v341 = vadd.f32 %v305, %v320
      %v342 = vadd.f32 %v306, %v320
      %v343 = vadd.f32 %v307, %v320
      %v344 = vadd.f32 %v308, %v320
      %v345 = vadd.f32 %v309, %v320
      %v346 = vadd.f32 %v310, %v320
      %v347 = vadd.f32 %v311, %v320
      %v348 = vadd.f32 %v312, %v320
      %v349 = vadd.f32 %v313, %v320
      %v350 = vadd.f32 %v314, %v320
      %v351 = vadd.f32 %v315, %v320
      %v352 = vadd.f32 %v316, %v320
      %v353 = vadd.f32 %v317, %v320
      %v354 = vld [vmem:[%s212] sm:$0xf]
      %v355 = vld [vmem:[%s212 + $0x4] sm:$0xf]
      %v356 = vld [vmem:[%s212 + $0x8] sm:$0xf]
      %v357 = vld [vmem:[%s212 + $0xc] sm:$0xf]
      %v358 = vld [vmem:[%s212 + $0x10] sm:$0xf]
      %v359 = vld [vmem:[%s212 + $0x14] sm:$0xf]
      %v360 = vld [vmem:[%s212 + $0x18] sm:$0xf]
      %v361 = vld [vmem:[%s212 + $0x1c] sm:$0xf]
      %v362 = vld [vmem:[%s212 + $0x20] sm:$0xf]
      %v363 = vld [vmem:[%s212 + $0x24] sm:$0xf]
      %v364 = vld [vmem:[%s212 + $0x28] sm:$0xf]
      %v365 = vld [vmem:[%s212 + $0x2c] sm:$0xf]
      %v366 = vld [vmem:[%s212 + $0x30] sm:$0xf]
      %v367 = vld [vmem:[%s212 + $0x34] sm:$0xf]
      %v368 = vld [vmem:[%s212 + $0x38] sm:$0xf]
      %v369 = vld [vmem:[%s212 + $0x3c] sm:$0xf]
      %v370 = vld [vmem:[%s212 + $0x40] sm:$0xf]
      %v371 = vld [vmem:[%s212 + $0x44] sm:$0xf]
      %v372 = vld [vmem:[%s212 + $0x48] sm:$0xf]
      %v373 = vld [vmem:[%s212 + $0x4c] sm:$0xf]
      %v374 = vld [vmem:[%s212 + $0x50] sm:$0xf]
      %v375 = vld [vmem:[%s212 + $0x54] sm:$0xf]
      %v376 = vld [vmem:[%s212 + $0x58] sm:$0xf]
      %v377 = vld [vmem:[%s212 + $0x5c] sm:$0xf]
      %v378 = vld [vmem:[%s212 + $0x60] sm:$0xf]
      %v379 = vld [vmem:[%s212 + $0x64] sm:$0xf]
      %v380 = vld [vmem:[%s212 + $0x68] sm:$0xf]
      %v381 = vld [vmem:[%s212 + $0x6c] sm:$0xf]
      %v382 = vld [vmem:[%s212 + $0x70] sm:$0xf]
      %v383 = vld [vmem:[%s212 + $0x74] sm:$0xf]
      %v384 = vld [vmem:[%s212 + $0x78] sm:$0xf]
      %v385 = vld [vmem:[%s212 + $0x7c] sm:$0xf]
      %v386 = vunpack.c.l.bf16 %v354
      %v387 = vunpack.c.l.bf16 %v355
      %v388 = vunpack.c.l.bf16 %v356
      %v389 = vunpack.c.l.bf16 %v357
      %v390 = vunpack.c.l.bf16 %v358
      %v391 = vunpack.c.l.bf16 %v359
      %v392 = vunpack.c.l.bf16 %v360
      %v393 = vunpack.c.l.bf16 %v361
      %v394 = vunpack.c.l.bf16 %v362
      %v395 = vunpack.c.l.bf16 %v363
      %v396 = vunpack.c.l.bf16 %v364
      %v397 = vunpack.c.l.bf16 %v365
      %v398 = vunpack.c.l.bf16 %v366
      %v399 = vunpack.c.l.bf16 %v367
      %v400 = vunpack.c.l.bf16 %v368
      %v401 = vunpack.c.l.bf16 %v369
      %v402 = vunpack.c.l.bf16 %v370
      %v403 = vunpack.c.l.bf16 %v371
      %v404 = vunpack.c.l.bf16 %v372
      %v405 = vunpack.c.l.bf16 %v373
      %v406 = vunpack.c.l.bf16 %v374
      %v407 = vunpack.c.l.bf16 %v375
      %v408 = vunpack.c.l.bf16 %v376
      %v409 = vunpack.c.l.bf16 %v377
      %v410 = vunpack.c.l.bf16 %v378
      %v411 = vunpack.c.l.bf16 %v379
      %v412 = vunpack.c.l.bf16 %v380
      %v413 = vunpack.c.l.bf16 %v381
      %v414 = vunpack.c.l.bf16 %v382
      %v415 = vunpack.c.l.bf16 %v383
      %v416 = vunpack.c.l.bf16 %v384
      %v417 = vunpack.c.l.bf16 %v385
      %v418 = vadd.f32 %v322, %v386
      %v419 = vadd.f32 %v323, %v387
      %v420 = vadd.f32 %v324, %v388
      %v421 = vadd.f32 %v325, %v389
      %v422 = vadd.f32 %v326, %v390
      %v423 = vadd.f32 %v327, %v391
      %v424 = vadd.f32 %v328, %v392
      %v425 = vadd.f32 %v329, %v393
      %v426 = vadd.f32 %v330, %v394
      %v427 = vadd.f32 %v331, %v395
      %v428 = vadd.f32 %v332, %v396
      %v429 = vadd.f32 %v333, %v397
      %v430 = vadd.f32 %v334, %v398
      %v431 = vadd.f32 %v335, %v399
      %v432 = vadd.f32 %v336, %v400
      %v433 = vadd.f32 %v337, %v401
      %v434 = vadd.f32 %v338, %v402
      %v435 = vadd.f32 %v339, %v403
      %v436 = vadd.f32 %v340, %v404
      %v437 = vadd.f32 %v341, %v405
      %v438 = vadd.f32 %v342, %v406
      %v439 = vadd.f32 %v343, %v407
      %v440 = vadd.f32 %v344, %v408
      %v441 = vadd.f32 %v345, %v409
      %v442 = vadd.f32 %v346, %v410
      %v443 = vadd.f32 %v347, %v411
      %v444 = vadd.f32 %v348, %v412
      %v445 = vadd.f32 %v349, %v413
      %v446 = vadd.f32 %v350, %v414
      %v447 = vadd.f32 %v351, %v415
      %v448 = vadd.f32 %v352, %v416
      %v449 = vadd.f32 %v353, %v417
      %v450 = vmax.f32 %v418, 0.0
      %v451 = vmax.f32 %v419, 0.0
      %v452 = vmax.f32 %v420, 0.0
      %v453 = vmax.f32 %v421, 0.0
      %v454 = vmax.f32 %v422, 0.0
      %v455 = vmax.f32 %v423, 0.0
      %v456 = vmax.f32 %v424, 0.0
      %v457 = vmax.f32 %v425, 0.0
      %v458 = vmax.f32 %v426, 0.0
      %v459 = vmax.f32 %v427, 0.0
      %v460 = vmax.f32 %v428, 0.0
      %v461 = vmax.f32 %v429, 0.0
      %v462 = vmax.f32 %v430, 0.0
      %v463 = vmax.f32 %v431, 0.0
      %v464 = vmax.f32 %v432, 0.0
      %v465 = vmax.f32 %v433, 0.0
      %v466 = vmax.f32 %v434, 0.0
      %v467 = vmax.f32 %v435, 0.0
      %v468 = vmax.f32 %v436, 0.0
      %v469 = vmax.f32 %v437, 0.0
      %v470 = vmax.f32 %v438, 0.0
      %v471 = vmax.f32 %v439, 0.0
      %v472 = vmax.f32 %v440, 0.0
      %v473 = vmax.f32 %v441, 0.0
      %v474 = vmax.f32 %v442, 0.0
      %v475 = vmax.f32 %v443, 0.0
      %v476 = vmax.f32 %v444, 0.0
      %v477 = vmax.f32 %v445, 0.0
      %v478 = vmax.f32 %v446, 0.0
      %v479 = vmax.f32 %v447, 0.0
      %v480 = vmax.f32 %v448, 0.0
      %v481 = vmax.f32 %v449, 0.0
      %v482 = vpack.c.bf16 %v450, %v450
      %v483 = vpack.c.bf16 %v451, %v451
      %v484 = vpack.c.bf16 %v452, %v452
      %v485 = vpack.c.bf16 %v453, %v453
      %v486 = vpack.c.bf16 %v454, %v454
      %v487 = vpack.c.bf16 %v455, %v455
      %v488 = vpack.c.bf16 %v456, %v456
      %v489 = vpack.c.bf16 %v457, %v457
      %v490 = vpack.c.bf16 %v458, %v458
      %v491 = vpack.c.bf16 %v459, %v459
      %v492 = vpack.c.bf16 %v460, %v460
      %v493 = vpack.c.bf16 %v461, %v461
      %v494 = vpack.c.bf16 %v462, %v462
      %v495 = vpack.c.bf16 %v463, %v463
      %v496 = vpack.c.bf16 %v464, %v464
      %v497 = vpack.c.bf16 %v465, %v465
      %v498 = vpack.c.bf16 %v466, %v466
      %v499 = vpack.c.bf16 %v467, %v467
      %v500 = vpack.c.bf16 %v468, %v468
      %v501 = vpack.c.bf16 %v469, %v469
      %v502 = vpack.c.bf16 %v470, %v470
      %v503 = vpack.c.bf16 %v471, %v471
      %v504 = vpack.c.bf16 %v472, %v472
      %v505 = vpack.c.bf16 %v473, %v473
      %v506 = vpack.c.bf16 %v474, %v474
      %v507 = vpack.c.bf16 %v475, %v475
      %v508 = vpack.c.bf16 %v476, %v476
      %v509 = vpack.c.bf16 %v477, %v477
      %v510 = vpack.c.bf16 %v478, %v478
      %v511 = vpack.c.bf16 %v479, %v479
      %v512 = vpack.c.bf16 %v480, %v480
      %v513 = vpack.c.bf16 %v481, %v481
      %vm514 = vcmask 519168
      %515 = vst.msk [vmem:[%s217] sm:$0xf] %vm514, %v482
      %516 = vst.msk [vmem:[%s217 + $0x4] sm:$0xf] %vm514, %v483
      %517 = vst.msk [vmem:[%s217 + $0x8] sm:$0xf] %vm514, %v484
      %518 = vst.msk [vmem:[%s217 + $0xc] sm:$0xf] %vm514, %v485
      %519 = vst.msk [vmem:[%s217 + $0x10] sm:$0xf] %vm514, %v486
      %520 = vst.msk [vmem:[%s217 + $0x14] sm:$0xf] %vm514, %v487
      %521 = vst.msk [vmem:[%s217 + $0x18] sm:$0xf] %vm514, %v488
      %522 = vst.msk [vmem:[%s217 + $0x1c] sm:$0xf] %vm514, %v489
      %523 = vst.msk [vmem:[%s217 + $0x20] sm:$0xf] %vm514, %v490
      %524 = vst.msk [vmem:[%s217 + $0x24] sm:$0xf] %vm514, %v491
      %525 = vst.msk [vmem:[%s217 + $0x28] sm:$0xf] %vm514, %v492
      %526 = vst.msk [vmem:[%s217 + $0x2c] sm:$0xf] %vm514, %v493
      %527 = vst.msk [vmem:[%s217 + $0x30] sm:$0xf] %vm514, %v494
      %528 = vst.msk [vmem:[%s217 + $0x34] sm:$0xf] %vm514, %v495
      %529 = vst.msk [vmem:[%s217 + $0x38] sm:$0xf] %vm514, %v496
      %530 = vst.msk [vmem:[%s217 + $0x3c] sm:$0xf] %vm514, %v497
      %531 = vst.msk [vmem:[%s217 + $0x40] sm:$0xf] %vm514, %v498
      %532 = vst.msk [vmem:[%s217 + $0x44] sm:$0xf] %vm514, %v499
      %533 = vst.msk [vmem:[%s217 + $0x48] sm:$0xf] %vm514, %v500
      %534 = vst.msk [vmem:[%s217 + $0x4c] sm:$0xf] %vm514, %v501
      %535 = vst.msk [vmem:[%s217 + $0x50] sm:$0xf] %vm514, %v502
      %536 = vst.msk [vmem:[%s217 + $0x54] sm:$0xf] %vm514, %v503
      %537 = vst.msk [vmem:[%s217 + $0x58] sm:$0xf] %vm514, %v504
      %538 = vst.msk [vmem:[%s217 + $0x5c] sm:$0xf] %vm514, %v505
      %539 = vst.msk [vmem:[%s217 + $0x60] sm:$0xf] %vm514, %v506
      %540 = vst.msk [vmem:[%s217 + $0x64] sm:$0xf] %vm514, %v507
      %541 = vst.msk [vmem:[%s217 + $0x68] sm:$0xf] %vm514, %v508
      %542 = vst.msk [vmem:[%s217 + $0x6c] sm:$0xf] %vm514, %v509
      %543 = vst.msk [vmem:[%s217 + $0x70] sm:$0xf] %vm514, %v510
      %544 = vst.msk [vmem:[%s217 + $0x74] sm:$0xf] %vm514, %v511
      %545 = vst.msk [vmem:[%s217 + $0x78] sm:$0xf] %vm514, %v512
      %546 = vst.msk [vmem:[%s217 + $0x7c] sm:$0xf] %vm514, %v513
      %p547 = scmp.lt.s32.totalorder %s15, 1
      %s548 = scalar_select %p547, %s15, 1
      %s549 = smul.addr %s548, 32
      %s550 = smul.addr %s549, 4
      %s551 = scalar_lea.vmem %s4, %s550
      // Predicated region
      $region37: #{basic_block_res_forward.5} parent=35 // pred_check
        %p552 = pneg %p127
      $region38: #{basic_block_res_forward.5} parent=35 // pred_check_branch
        %554 = sbr.rel (%p552) target = $region40
      $region39: #{basic_block_res_forward.5} parent=35 // pred_region
        _
      $region40: #{basic_block_res_forward.5} parent=35 // pred_fallthru
        _
    $region36: #{basic_block_res_forward.5} parent=5 // pred_fallthru
      _
    %p555 = scmp.le.s32.totalorder 2, %s10
    // Predicated region
    $region41: #{basic_block_res_forward.5} parent=5 // pred_check
      %p556 = pneg %p555
    $region42: #{basic_block_res_forward.5} parent=5 // pred_check_branch
      %558 = sbr.rel (%p556) target = $region44
    $region43: #{basic_block_res_forward.5} parent=5 // pred_region
      %s559 = ssub.s32 %s10, 2
      // Predicated region
      $region45: #{basic_block_res_forward.5} parent=43 // pred_check
        %p560 = pneg %p133
      $region46: #{basic_block_res_forward.5} parent=43 // pred_check_branch
        %562 = sbr.rel (%p560) target = $region48
      $region47: #{basic_block_res_forward.5} parent=43 // pred_region
        %p563 = scmp.lt.s32.totalorder %s16, 1
        %s564 = scalar_select %p563, %s16, 1
        %s565 = smul.addr %s564, 32
        %s566 = smul.addr %s565, 4
        %s567 = scalar_lea.vmem %s4, %s566
      $region48: #{basic_block_res_forward.5} parent=43 // pred_fallthru
        _
    $region44: #{basic_block_res_forward.5} parent=5 // pred_fallthru
      _
  $region6: #{basic_block_res_forward.5} parent=0 // loop_footer
    %s14 = sadd.s32 1, %s10
  $region7: #{basic_block_res_forward.5} parent=0 // loop_footer_branch
    %9 = sbr.rel target = $region3
  $region8: #{basic_block_res_forward.5} parent=0 // loop_exit
    _

// kernel: basic_block_res_forward.3
$region0: #{basic_block_res_forward.3}
  #allocation0 [shape = 'u32[]', space=smem, size = 0x4, offset = 0x4, fixed_abs, tag = 'smem constant byte address 0x4 - core index']
  #allocation1 [shape = 'u32[72,128]{1,0:T(1,128)}', space=vmem, size = 0x9000, scoped, tag = 'internal scratch']
  #allocation2 [shape = 'bf16[576,192]{1,0:T(8,128)(2,1)}', space=vmem, size = 0x48000, scoped, tag = 'scratch operand']
  %s0 = inlined_call_operand.vmem [shape: bf16[2,16,16,64], index: 0, kind: input, shape index: {}]
  %s1 = inlined_call_operand.vmem [shape: bf16[3,192,64], index: 1, kind: input, shape index: {}]
  %s2 = inlined_call_operand.vmem [shape: f32[256,1], index: 2, kind: input, shape index: {}]
  %s3 = inlined_call_operand.vmem [shape: bf16[2,16,16,64], index: 3, kind: output, shape index: {0}]
  %s4 = inlined_call_operand.vmem [shape: f32[2,1,64], index: 4, kind: output, shape index: {1}]
  %s5 = inlined_call_operand.vmem [shape: f32[2,1,64], index: 5, kind: output, shape index: {2}]
  %6 = xla_tuple %s3, %s4, %s5
  %s7 = sld [smem:[#allocation0]]
  $region61: #{basic_block_res_forward.3} parent=0
    _
  %s9 = ssub.s32 1, %s7
  %s10 = scalar_select 0, %s9, %s7
  loop: start=0, step=1, limit=4
  $region2: #{basic_block_res_forward.3} parent=0 // loop_pre_header
    _
  $region3: #{basic_block_res_forward.3} parent=0 // loop_header
    %s12 = sphi 0, %s16
    %p13 = scmp.ge.s32.totalorder %s12, 4
    %s22 = sphi 0, %s24
    %s25 = sphi 0, %s22
    %s26 = sphi 0, %s25
    %s42 = sphi 0, %s26
    %s46 = sphi 0, %s46
    %s48 = sphi 0, %s46
    %s49 = sphi 0, %s48
    %s63 = sphi 0, %s49
    %s67 = sphi 0, %s67
    %s69 = sphi 0, %s67
    %s70 = sphi 0, %s69
    %s84 = sphi 0, %s70
    %s90 = sphi 0, %s92
    %s93 = sphi 0, %s90
    %s94 = sphi 0, %s93
    %s110 = sphi 0, %s94
    %s116 = sphi 0, %s118
    %s119 = sphi 0, %s116
    %s120 = sphi 0, %s119
    %s136 = sphi 0, %s120
    %s142 = sphi 0, %s144
    %s145 = sphi 0, %s142
    %s146 = sphi 0, %s145
    %s162 = sphi 0, %s146
  $region4: #{basic_block_res_forward.3} parent=0 // loop_header_branch
    %15 = sbr.rel (%p13) target = $region8
  $region5: #{basic_block_res_forward.3} parent=0 // loop_body
    %s17 = ssub.s32 %s12, 1
    %s18 = ssub.s32 %s12, 2
    %s19 = sadd.s32 %s12, 1
    %s20 = ssub.s32 %s12, %s19
    %p21 = scmp.eq.s32.totalorder %s20, 0
    %s23 = sadd.s32 %s22, 1
    %s24 = scalar_select %p21, %s22, %s23
    %p27 = pneg %p21
    %p28 = scmp.eq.s32.totalorder %s12, 1
    %p29 = por %p27, %p28
    %p30 = scmp.ne.s32.totalorder %s22, %s25
    %p31 = scmp.eq.s32.totalorder %s12, 0
    %p32 = por %p30, %p31
    %p33 = scmp.ne.s32.totalorder %s22, %s25
    %p34 = scmp.eq.s32.totalorder %s17, 1
    %p35 = por %p33, %p34
    %p36 = scmp.ne.s32.totalorder %s25, %s26
    %p37 = scmp.eq.s32.totalorder %s17, 0
    %p38 = por %p36, %p37
    %p39 = scmp.ne.s32.totalorder %s25, %s26
    %p40 = scmp.eq.s32.totalorder %s18, 1
    %p41 = por %p39, %p40
    %p43 = scmp.ne.s32.totalorder %s26, %s42
    %p44 = scmp.eq.s32.totalorder %s18, 0
    %p45 = por %p43, %p44
    %s47 = sadd.s32 %s46, 1
    %p50 = scmp.eq.s32.totalorder %s12, 1
    %p51 = scmp.ne.s32.totalorder %s46, %s48
    %p52 = scmp.eq.s32.totalorder %s12, 0
    %p53 = por %p51, %p52
    %p54 = scmp.ne.s32.totalorder %s46, %s48
    %p55 = scmp.eq.s32.totalorder %s17, 1
    %p56 = por %p54, %p55
    %p57 = scmp.ne.s32.totalorder %s48, %s49
    %p58 = scmp.eq.s32.totalorder %s17, 0
    %p59 = por %p57, %p58
    %p60 = scmp.ne.s32.totalorder %s48, %s49
    %p61 = scmp.eq.s32.totalorder %s18, 1
    %p62 = por %p60, %p61
    %p64 = scmp.ne.s32.totalorder %s49, %s63
    %p65 = scmp.eq.s32.totalorder %s18, 0
    %p66 = por %p64, %p65
    %s68 = sadd.s32 %s67, 1
    %p71 = scmp.eq.s32.totalorder %s12, 1
    %p72 = scmp.ne.s32.totalorder %s67, %s69
    %p73 = scmp.eq.s32.totalorder %s12, 0
    %p74 = por %p72, %p73
    %p75 = scmp.ne.s32.totalorder %s67, %s69
    %p76 = scmp.eq.s32.totalorder %s17, 1
    %p77 = por %p75, %p76
    %p78 = scmp.ne.s32.totalorder %s69, %s70
    %p79 = scmp.eq.s32.totalorder %s17, 0
    %p80 = por %p78, %p79
    %p81 = scmp.ne.s32.totalorder %s69, %s70
    %p82 = scmp.eq.s32.totalorder %s18, 1
    %p83 = por %p81, %p82
    %p85 = scmp.ne.s32.totalorder %s70, %s84
    %p86 = scmp.eq.s32.totalorder %s18, 0
    %p87 = por %p85, %p86
    %s88 = ssub.s32 %s12, %s19
    %p89 = scmp.eq.s32.totalorder %s88, 0
    %s91 = sadd.s32 %s90, 1
    %s92 = scalar_select %p89, %s90, %s91
    %p95 = pneg %p89
    %p96 = scmp.eq.s32.totalorder %s12, 1
    %p97 = por %p95, %p96
    %p98 = scmp.ne.s32.totalorder %s90, %s93
    %p99 = scmp.eq.s32.totalorder %s12, 0
    %p100 = por %p98, %p99
    %p101 = scmp.ne.s32.totalorder %s90, %s93
    %p102 = scmp.eq.s32.totalorder %s17, 1
    %p103 = por %p101, %p102
    %p104 = scmp.ne.s32.totalorder %s93, %s94
    %p105 = scmp.eq.s32.totalorder %s17, 0
    %p106 = por %p104, %p105
    %p107 = scmp.ne.s32.totalorder %s93, %s94
    %p108 = scmp.eq.s32.totalorder %s18, 1
    %p109 = por %p107, %p108
    %p111 = scmp.ne.s32.totalorder %s94, %s110
    %p112 = scmp.eq.s32.totalorder %s18, 0
    %p113 = por %p111, %p112
    %s114 = ssub.s32 %s12, %s19
    %p115 = scmp.eq.s32.totalorder %s114, 0
    %s117 = sadd.s32 %s116, 1
    %s118 = scalar_select %p115, %s116, %s117
    %p121 = pneg %p115
    %p122 = scmp.eq.s32.totalorder %s12, 1
    %p123 = por %p121, %p122
    %p124 = scmp.ne.s32.totalorder %s116, %s119
    %p125 = scmp.eq.s32.totalorder %s12, 0
    %p126 = por %p124, %p125
    %p127 = scmp.ne.s32.totalorder %s116, %s119
    %p128 = scmp.eq.s32.totalorder %s17, 1
    %p129 = por %p127, %p128
    %p130 = scmp.ne.s32.totalorder %s119, %s120
    %p131 = scmp.eq.s32.totalorder %s17, 0
    %p132 = por %p130, %p131
    %p133 = scmp.ne.s32.totalorder %s119, %s120
    %p134 = scmp.eq.s32.totalorder %s18, 1
    %p135 = por %p133, %p134
    %p137 = scmp.ne.s32.totalorder %s120, %s136
    %p138 = scmp.eq.s32.totalorder %s18, 0
    %p139 = por %p137, %p138
    %s140 = ssub.s32 %s12, %s19
    %p141 = scmp.eq.s32.totalorder %s140, 0
    %s143 = sadd.s32 %s142, 1
    %s144 = scalar_select %p141, %s142, %s143
    %p147 = pneg %p141
    %p148 = scmp.eq.s32.totalorder %s12, 1
    %p149 = por %p147, %p148
    %p150 = scmp.ne.s32.totalorder %s142, %s145
    %p151 = scmp.eq.s32.totalorder %s12, 0
    %p152 = por %p150, %p151
    %p153 = scmp.ne.s32.totalorder %s142, %s145
    %p154 = scmp.eq.s32.totalorder %s17, 1
    %p155 = por %p153, %p154
    %p156 = scmp.ne.s32.totalorder %s145, %s146
    %p157 = scmp.eq.s32.totalorder %s17, 0
    %p158 = por %p156, %p157
    %p159 = scmp.ne.s32.totalorder %s145, %s146
    %p160 = scmp.eq.s32.totalorder %s18, 1
    %p161 = por %p159, %p160
    %p163 = scmp.ne.s32.totalorder %s146, %s162
    %p164 = scmp.eq.s32.totalorder %s18, 0
    %p165 = por %p163, %p164
    %p166 = scmp.le.s32.totalorder 1, %s12
    %p167 = scmp.lt.s32.totalorder %s12, 3
    %p168 = pnand %p166, %p167
    %p169 = pneg %p168
    // Predicated region
    $region9: #{basic_block_res_forward.3} parent=5 // pred_check
      _
    $region10: #{basic_block_res_forward.3} parent=5 // pred_check_branch
      %171 = sbr.rel (%p168) target = $region12
    $region11: #{basic_block_res_forward.3} parent=5 // pred_region
      %s172 = ssub.s32 %s12, 1
      // Predicated region
      $region13: #{basic_block_res_forward.3} parent=11 // pred_check
        %p173 = pneg %p59
      $region14: #{basic_block_res_forward.3} parent=11 // pred_check_branch
        %175 = sbr.rel (%p173) target = $region16
      $region15: #{basic_block_res_forward.3} parent=11 // pred_region
        _
      $region16: #{basic_block_res_forward.3} parent=11 // pred_fallthru
        _
      // Predicated region
      $region17: #{basic_block_res_forward.3} parent=11 // pred_check
        %p176 = pneg %p80
      $region18: #{basic_block_res_forward.3} parent=11 // pred_check_branch
        %178 = sbr.rel (%p176) target = $region20
      $region19: #{basic_block_res_forward.3} parent=11 // pred_region
        _
      $region20: #{basic_block_res_forward.3} parent=11 // pred_fallthru
        _
    $region12: #{basic_block_res_forward.3} parent=5 // pred_fallthru
      _
    %p179 = scmp.lt.s32.totalorder %s12, 2
    // Predicated region
    $region21: #{basic_block_res_forward.3} parent=5 // pred_check
      %p180 = pneg %p179
    $region22: #{basic_block_res_forward.3} parent=5 // pred_check_branch
      %182 = sbr.rel (%p180) target = $region24
    $region23: #{basic_block_res_forward.3} parent=5 // pred_region
      // Predicated region
      $region25: #{basic_block_res_forward.3} parent=23 // pred_check
        %p183 = pneg %p32
      $region26: #{basic_block_res_forward.3} parent=23 // pred_check_branch
        %185 = sbr.rel (%p183) target = $region28
      $region27: #{basic_block_res_forward.3} parent=23 // pred_region
        %p186 = scmp.lt.s32.totalorder %s12, 1
        %s187 = scalar_select %p186, %s12, 1
        %s188 = smul.addr %s187, 32
        %s189 = smul.addr %s188, 4
        %s190 = scalar_lea.vmem %s0, %s189
      $region28: #{basic_block_res_forward.3} parent=23 // pred_fallthru
        _
    $region24: #{basic_block_res_forward.3} parent=5 // pred_fallthru
      _
    %p191 = scmp.le.s32.totalorder 1, %s12
    %p192 = scmp.lt.s32.totalorder %s12, 3
    %p193 = pnand %p191, %p192
    %p194 = pneg %p193
    // Predicated region
    $region29: #{basic_block_res_forward.3} parent=5 // pred_check
      _
    $region30: #{basic_block_res_forward.3} parent=5 // pred_check_branch
      %196 = sbr.rel (%p193) target = $region32
    $region31: #{basic_block_res_forward.3} parent=5 // pred_region
      %s197 = ssub.s32 %s12, 1
      %p198 = scmp.lt.s32.totalorder %s17, 1
      %s199 = scalar_select %p198, %s17, 1
      %s200 = smul.addr %s199, 32
      %s201 = smul.addr %s200, 4
      %s202 = scalar_lea.vmem %s0, %s201
      %p203 = pneg %p38
      %p204 = pneg %p35
      %p205 = pneg %p59
      %p206 = pneg %p56
      %p207 = pneg %p80
      %p208 = pneg %p77
      %p209 = pneg %p106
      %p210 = pneg %p103
      %p211 = scmp.lt.s32.totalorder %s17, 1
      %s212 = scalar_select %p211, %s17, 1
      %s213 = smul.addr %s212, 32
      %s214 = smul.addr %s213, 4
      %s215 = scalar_lea.vmem %s3, %s214
      %p216 = pneg %p132
      %p217 = pneg %p129
      %p218 = scmp.lt.s32.totalorder %s17, 1
      %s219 = scalar_select %p218, %s17, 1
      %s220 = scalar_lea.vmem %s4, %s219
      %p221 = pneg %p158
      %p222 = pneg %p155
      %p223 = scmp.lt.s32.totalorder %s17, 1
      %s224 = scalar_select %p223, %s17, 1
      %s225 = scalar_lea.vmem %s5, %s224
      %p226 = scmp.lt.s32.totalorder %s17, 1
      %s227 = scalar_select %p226, %s17, 1
      %s228 = smul.addr %s227, 32
      %s229 = smul.addr %s228, 4
      %s230 = scalar_lea.vmem %s0, %s229
      %p231 = scmp.lt.s32.totalorder %s17, 1
      %s232 = scalar_select %p231, %s17, 1
      %s233 = smul.addr %s232, 32
      %s234 = smul.addr %s233, 4
      %s235 = scalar_lea.vmem %s3, %s234
      %p236 = scmp.lt.s32.totalorder %s17, 1
      %s237 = scalar_select %p236, %s17, 1
      %s238 = scalar_lea.vmem %s4, %s237
      %p239 = scmp.lt.s32.totalorder %s17, 1
      %s240 = scalar_select %p239, %s17, 1
      %s241 = scalar_lea.vmem %s5, %s240
      %v243 = vld [vmem:[%s230] sm:$0xf]
      %v244 = vld [vmem:[%s230 + $0x4] sm:$0xf]
      %v245 = vld [vmem:[%s230 + $0x8] sm:$0xf]
      %v246 = vld [vmem:[%s230 + $0xc] sm:$0xf]
      %v247 = vld [vmem:[%s230 + $0x10] sm:$0xf]
      %v248 = vld [vmem:[%s230 + $0x14] sm:$0xf]
      %v249 = vld [vmem:[%s230 + $0x18] sm:$0xf]
      %v250 = vld [vmem:[%s230 + $0x1c] sm:$0xf]
      %v251 = vld [vmem:[%s230 + $0x20] sm:$0xf]
      %v252 = vld [vmem:[%s230 + $0x24] sm:$0xf]
      %v253 = vld [vmem:[%s230 + $0x28] sm:$0xf]
      %v254 = vld [vmem:[%s230 + $0x2c] sm:$0xf]
      %v255 = vld [vmem:[%s230 + $0x30] sm:$0xf]
      %v256 = vld [vmem:[%s230 + $0x34] sm:$0xf]
      %v257 = vld [vmem:[%s230 + $0x38] sm:$0xf]
      %v258 = vld [vmem:[%s230 + $0x3c] sm:$0xf]
      %v259 = vld [vmem:[%s230 + $0x40] sm:$0xf]
      %v260 = vld [vmem:[%s230 + $0x44] sm:$0xf]
      %v261 = vld [vmem:[%s230 + $0x48] sm:$0xf]
      %v262 = vld [vmem:[%s230 + $0x4c] sm:$0xf]
      %v263 = vld [vmem:[%s230 + $0x50] sm:$0xf]
      %v264 = vld [vmem:[%s230 + $0x54] sm:$0xf]
      %v265 = vld [vmem:[%s230 + $0x58] sm:$0xf]
      %v266 = vld [vmem:[%s230 + $0x5c] sm:$0xf]
      %v267 = vld [vmem:[%s230 + $0x60] sm:$0xf]
      %v268 = vld [vmem:[%s230 + $0x64] sm:$0xf]
      %v269 = vld [vmem:[%s230 + $0x68] sm:$0xf]
      %v270 = vld [vmem:[%s230 + $0x6c] sm:$0xf]
      %v271 = vld [vmem:[%s230 + $0x70] sm:$0xf]
      %v272 = vld [vmem:[%s230 + $0x74] sm:$0xf]
      %v273 = vld [vmem:[%s230 + $0x78] sm:$0xf]
      %v274 = vld [vmem:[%s230 + $0x7c] sm:$0xf]
      %vm275 = vcmask 1043456
      %vm276 = vcmask 523268
      %vm277 = vmor %vm276, %vm275
      %278 = vst.msk [vmem:[#allocation2] sm:$0xff] %vm277, 0
      %279 = vst.msk [vmem:[#allocation2 + $0x8] sm:$0xff] %vm277, 0
      %280 = vst.msk [vmem:[#allocation2 + $0x10] sm:$0xff] %vm277, 0
      %281 = vst.msk [vmem:[#allocation2 + $0x18] sm:$0xff] %vm277, 0
      %282 = vst.msk [vmem:[#allocation2 + $0x20] sm:$0xff] %vm277, 0
      %283 = vst.msk [vmem:[#allocation2 + $0x28] sm:$0xff] %vm277, 0
      %284 = vst.msk [vmem:[#allocation2 + $0x30] sm:$0xff] %vm277, 0
      %285 = vst.msk [vmem:[#allocation2 + $0x38] sm:$0xff] %vm277, 0
      %286 = vst.msk [vmem:[#allocation2 + $0x40] sm:$0xff] %vm277, 0
      %287 = vst.msk [vmem:[#allocation2 + $0x48] sm:$0xff] %vm277, 0
      %288 = vst.msk [vmem:[#allocation2 + $0x50] sm:$0xff] %vm277, 0
      %289 = vst.msk [vmem:[#allocation2 + $0x58] sm:$0xff] %vm277, 0
      %290 = vst.msk [vmem:[#allocation2 + $0x60] sm:$0xff] %vm277, 0
      %291 = vst.msk [vmem:[#allocation2 + $0x68] sm:$0xff] %vm277, 0
      %292 = vst.msk [vmem:[#allocation2 + $0x70] sm:$0xff] %vm277, 0
      %293 = vst.msk [vmem:[#allocation2 + $0x78] sm:$0xff] %vm277, 0
      %294 = vst.msk [vmem:[#allocation2 + $0x80] sm:$0xff] %vm277, 0
      %295 = vst.msk [vmem:[#allocation2 + $0x88] sm:$0xff] %vm277, 0
      %296 = vst.msk [vmem:[#allocation2 + $0x90] sm:$0xff] %vm277, 0
      %297 = vst.msk [vmem:[#allocation2 + $0x98] sm:$0xff] %vm277, 0
      %298 = vst.msk [vmem:[#allocation2 + $0xa0] sm:$0xff] %vm277, 0
      %299 = vst.msk [vmem:[#allocation2 + $0xa8] sm:$0xff] %vm277, 0
      %300 = vst.msk [vmem:[#allocation2 + $0xb0] sm:$0xff] %vm277, 0
      %301 = vst.msk [vmem:[#allocation2 + $0xb8] sm:$0xff] %vm277, 0
      %302 = vst.msk [vmem:[#allocation2 + $0xc0] sm:$0xff] %vm277, 0
      %303 = vst.msk [vmem:[#allocation2 + $0xc8] sm:$0xff] %vm277, 0
      %304 = vst.msk [vmem:[#allocation2 + $0xd0] sm:$0xff] %vm277, 0
      %305 = vst.msk [vmem:[#allocation2 + $0xd8] sm:$0xff] %vm277, 0
      %306 = vst.msk [vmem:[#allocation2 + $0xe0] sm:$0xff] %vm277, 0
      %307 = vst.msk [vmem:[#allocation2 + $0xe8] sm:$0xff] %vm277, 0
      %308 = vst.msk [vmem:[#allocation2 + $0xf0] sm:$0xff] %vm277, 0
      %309 = vst.msk [vmem:[#allocation2 + $0xf8] sm:$0xff] %vm277, 0
      %310 = vst.msk [vmem:[#allocation2 + $0x100] sm:$0xff] %vm277, 0
      %311 = vst.msk [vmem:[#allocation2 + $0x108] sm:$0xff] %vm277, 0
      %312 = vst.msk [vmem:[#allocation2 + $0x110] sm:$0xff] %vm277, 0
      %313 = vst.msk [vmem:[#allocation2 + $0x118] sm:$0xff] %vm277, 0
      %314 = vst.msk [vmem:[#allocation2 + $0x120] sm:$0xff] %vm277, 0
      %315 = vst.msk [vmem:[#allocation2 + $0x128] sm:$0xff] %vm277, 0
      %316 = vst.msk [vmem:[#allocation2 + $0x130] sm:$0xff] %vm277, 0
      %317 = vst.msk [vmem:[#allocation2 + $0x138] sm:$0xff] %vm277, 0
      %318 = vst.msk [vmem:[#allocation2 + $0x140] sm:$0xff] %vm277, 0
      %319 = vst.msk [vmem:[#allocation2 + $0x148] sm:$0xff] %vm277, 0
      %320 = vst.msk [vmem:[#allocation2 + $0x150] sm:$0xff] %vm277, 0
      %321 = vst.msk [vmem:[#allocation2 + $0x158] sm:$0xff] %vm277, 0
      %322 = vst.msk [vmem:[#allocation2 + $0x160] sm:$0xff] %vm277, 0
      %323 = vst.msk [vmem:[#allocation2 + $0x168] sm:$0xff] %vm277, 0
      %324 = vst.msk [vmem:[#allocation2 + $0x170] sm:$0xff] %vm277, 0
      %325 = vst.msk [vmem:[#allocation2 + $0x178] sm:$0xff] %vm277, 0
      %326 = vst.msk [vmem:[#allocation2 + $0x180] sm:$0xff] %vm277, 0
      %327 = vst.msk [vmem:[#allocation2 + $0x188] sm:$0xff] %vm277, 0
      %328 = vst.msk [vmem:[#allocation2 + $0x190] sm:$0xff] %vm277, 0
      %329 = vst.msk [vmem:[#allocation2 + $0x198] sm:$0xff] %vm277, 0
      %330 = vst.msk [vmem:[#allocation2 + $0x1a0] sm:$0xff] %vm277, 0
      %331 = vst.msk [vmem:[#allocation2 + $0x1a8] sm:$0xff] %vm277, 0
      %332 = vst.msk [vmem:[#allocation2 + $0x1b0] sm:$0xff] %vm277, 0
      %333 = vst.msk [vmem:[#allocation2 + $0x1b8] sm:$0xff] %vm277, 0
      %334 = vst.msk [vmem:[#allocation2 + $0x1c0] sm:$0xff] %vm277, 0
      %335 = vst.msk [vmem:[#allocation2 + $0x1c8] sm:$0xff] %vm277, 0
      %336 = vst.msk [vmem:[#allocation2 + $0x1d0] sm:$0xff] %vm277, 0
      %337 = vst.msk [vmem:[#allocation2 + $0x1d8] sm:$0xff] %vm277, 0
      %338 = vst.msk [vmem:[#allocation2 + $0x1e0] sm:$0xff] %vm277, 0
      %339 = vst.msk [vmem:[#allocation2 + $0x1e8] sm:$0xff] %vm277, 0
      %340 = vst.msk [vmem:[#allocation2 + $0x1f0] sm:$0xff] %vm277, 0
      %341 = vst.msk [vmem:[#allocation2 + $0x1f8] sm:$0xff] %vm277, 0
      %342 = vst.msk [vmem:[#allocation2 + $0x200] sm:$0xff] %vm277, 0
      %343 = vst.msk [vmem:[#allocation2 + $0x208] sm:$0xff] %vm277, 0
      %344 = vst.msk [vmem:[#allocation2 + $0x210] sm:$0xff] %vm277, 0
      %345 = vst.msk [vmem:[#allocation2 + $0x218] sm:$0xff] %vm277, 0
      %346 = vst.msk [vmem:[#allocation2 + $0x220] sm:$0xff] %vm277, 0
      %347 = vst.msk [vmem:[#allocation2 + $0x228] sm:$0xff] %vm277, 0
      %348 = vst.msk [vmem:[#allocation2 + $0x230] sm:$0xff] %vm277, 0
      %349 = vst.msk [vmem:[#allocation2 + $0x238] sm:$0xff] %vm277, 0
      %vm350 = vsmask.f32 256
      %vm351 = vsmask.f32 4368
      %vm352 = vmor %vm350, %vm351
      %v354 = vshrl.u32 %v243, 16
      %v356 = vrot.slane %v354, 7
      %v357 = vshll.u32 %v243, 16
      %v359 = vor.u32 %v356, %v357
      %v360 = vrot.slane %v356, 4
      %v362 = vshrl.u32 %v244, 16
      %v364 = vrot.slane %v362, 7
      %v365 = vshll.u32 %v244, 16
      %v367 = vor.u32 %v364, %v365
      %v368 = vsel %vm352, %v360, %v367
      %v369 = vrot.slane %v364, 4
      %vm373 = vcmask 519168
      %vm374 = vsmask.f32 7938
      %vm375 = vmand %vm373, %vm374
      %v376 = vld [vmem:[#allocation2 + $0x20] sm:$0xf]
      %v377 = vsel %vm375, %v359, %v376
      %378 = vst [vmem:[#allocation2 + $0x20] sm:$0xf] %v377
      %vm379 = vcmask 519168
      %380 = vst.msk [vmem:[#allocation2 + $0x28] sm:$0xf] %vm379, %v368
      %vm381 = vcmask 516096
      %vm382 = vmand %vm381, %vm350
      %v383 = vld [vmem:[#allocation2 + $0x30] sm:$0x1]
      %v384 = vsel %vm382, %v369, %v383
      %385 = vst [vmem:[#allocation2 + $0x30] sm:$0x1] %v384
      %v387 = vshrl.u32 %v245, 16
      %v389 = vrot.slane %v387, 7
      %v390 = vshll.u32 %v245, 16
      %v392 = vor.u32 %v389, %v390
      %v393 = vrot.slane %v389, 4
      %v395 = vshrl.u32 %v246, 16
      %v397 = vrot.slane %v395, 7
      %v398 = vshll.u32 %v246, 16
      %v400 = vor.u32 %v397, %v398
      %v401 = vsel %vm352, %v393, %v400
      %v402 = vrot.slane %v397, 4
      %v406 = vld [vmem:[#allocation2 + $0x40] sm:$0xf]
      %v407 = vsel %vm375, %v392, %v406
      %408 = vst [vmem:[#allocation2 + $0x40] sm:$0xf] %v407
      %409 = vst.msk [vmem:[#allocation2 + $0x48] sm:$0xf] %vm379, %v401
      %v410 = vld [vmem:[#allocation2 + $0x50] sm:$0x1]
      %v411 = vsel %vm382, %v402, %v410
      %412 = vst [vmem:[#allocation2 + $0x50] sm:$0x1] %v411
      %v414 = vshrl.u32 %v247, 16
      %v416 = vrot.slane %v414, 7
      %v417 = vshll.u32 %v247, 16
      %v419 = vor.u32 %v416, %v417
      %v420 = vrot.slane %v416, 4
      %v422 = vshrl.u32 %v248, 16
      %v424 = vrot.slane %v422, 7
      %v425 = vshll.u32 %v248, 16
      %v427 = vor.u32 %v424, %v425
      %v428 = vsel %vm352, %v420, %v427
      %v429 = vrot.slane %v424, 4
      %v433 = vld [vmem:[#allocation2 + $0x60] sm:$0xf]
      %v434 = vsel %vm375, %v419, %v433
      %435 = vst [vmem:[#allocation2 + $0x60] sm:$0xf] %v434
      %436 = vst.msk [vmem:[#allocation2 + $0x68] sm:$0xf] %vm379, %v428
      %v437 = vld [vmem:[#allocation2 + $0x70] sm:$0x1]
      %v438 = vsel %vm382, %v429, %v437
      %439 = vst [vmem:[#allocation2 + $0x70] sm:$0x1] %v438
      %v441 = vshrl.u32 %v249, 16
      %v443 = vrot.slane %v441, 7
      %v444 = vshll.u32 %v249, 16
      %v446 = vor.u32 %v443, %v444
      %v447 = vrot.slane %v443, 4
      %v449 = vshrl.u32 %v250, 16
      %v451 = vrot.slane %v449, 7
      %v452 = vshll.u32 %v250, 16
      %v454 = vor.u32 %v451, %v452
      %v455 = vsel %vm352, %v447, %v454
      %v456 = vrot.slane %v451, 4
      %v460 = vld [vmem:[#allocation2 + $0x80] sm:$0xf]
      %v461 = vsel %vm375, %v446, %v460
      %462 = vst [vmem:[#allocation2 + $0x80] sm:$0xf] %v461
      %463 = vst.msk [vmem:[#allocation2 + $0x88] sm:$0xf] %vm379, %v455
      %v464 = vld [vmem:[#allocation2 + $0x90] sm:$0x1]
      %v465 = vsel %vm382, %v456, %v464
      %466 = vst [vmem:[#allocation2 + $0x90] sm:$0x1] %v465
      %v468 = vshrl.u32 %v251, 16
      %v470 = vrot.slane %v468, 7
      %v471 = vshll.u32 %v251, 16
      %v473 = vor.u32 %v470, %v471
      %v474 = vrot.slane %v470, 4
      %v476 = vshrl.u32 %v252, 16
      %v478 = vrot.slane %v476, 7
      %v479 = vshll.u32 %v252, 16
      %v481 = vor.u32 %v478, %v479
      %v482 = vsel %vm352, %v474, %v481
      %v483 = vrot.slane %v478, 4
      %v487 = vld [vmem:[#allocation2 + $0xa0] sm:$0xf]
      %v488 = vsel %vm375, %v473, %v487
      %489 = vst [vmem:[#allocation2 + $0xa0] sm:$0xf] %v488
      %490 = vst.msk [vmem:[#allocation2 + $0xa8] sm:$0xf] %vm379, %v482
      %v491 = vld [vmem:[#allocation2 + $0xb0] sm:$0x1]
      %v492 = vsel %vm382, %v483, %v491
      %493 = vst [vmem:[#allocation2 + $0xb0] sm:$0x1] %v492
      %v495 = vshrl.u32 %v253, 16
      %v497 = vrot.slane %v495, 7
      %v498 = vshll.u32 %v253, 16
      %v500 = vor.u32 %v497, %v498
      %v501 = vrot.slane %v497, 4
      %v503 = vshrl.u32 %v254, 16
      %v505 = vrot.slane %v503, 7
      %v506 = vshll.u32 %v254, 16
      %v508 = vor.u32 %v505, %v506
      %v509 = vsel %vm352, %v501, %v508
      %v510 = vrot.slane %v505, 4
      %v514 = vld [vmem:[#allocation2 + $0xc0] sm:$0xf]
      %v515 = vsel %vm375, %v500, %v514
      %516 = vst [vmem:[#allocation2 + $0xc0] sm:$0xf] %v515
      %517 = vst.msk [vmem:[#allocation2 + $0xc8] sm:$0xf] %vm379, %v509
      %v518 = vld [vmem:[#allocation2 + $0xd0] sm:$0x1]
      %v519 = vsel %vm382, %v510, %v518
      %520 = vst [vmem:[#allocation2 + $0xd0] sm:$0x1] %v519
      %v522 = vshrl.u32 %v255, 16
      %v524 = vrot.slane %v522, 7
      %v525 = vshll.u32 %v255, 16
      %v527 = vor.u32 %v524, %v525
      %v528 = vrot.slane %v524, 4
      %v530 = vshrl.u32 %v256, 16
      %v532 = vrot.slane %v530, 7
      %v533 = vshll.u32 %v256, 16
      %v535 = vor.u32 %v532, %v533
      %v536 = vsel %vm352, %v528, %v535
      %v537 = vrot.slane %v532, 4
      %v541 = vld [vmem:[#allocation2 + $0xe0] sm:$0xf]
      %v542 = vsel %vm375, %v527, %v541
      %543 = vst [vmem:[#allocation2 + $0xe0] sm:$0xf] %v542
      %544 = vst.msk [vmem:[#allocation2 + $0xe8] sm:$0xf] %vm379, %v536
      %v545 = vld [vmem:[#allocation2 + $0xf0] sm:$0x1]
      %v546 = vsel %vm382, %v537, %v545
      %547 = vst [vmem:[#allocation2 + $0xf0] sm:$0x1] %v546
      %v549 = vshrl.u32 %v257, 16
      %v551 = vrot.slane %v549, 7
      %v552 = vshll.u32 %v257, 16
      %v554 = vor.u32 %v551, %v552
      %v555 = vrot.slane %v551, 4
      %v557 = vshrl.u32 %v258, 16
      %v559 = vrot.slane %v557, 7
      %v560 = vshll.u32 %v258, 16
      %v562 = vor.u32 %v559, %v560
      %v563 = vsel %vm352, %v555, %v562
      %v564 = vrot.slane %v559, 4
      %v568 = vld [vmem:[#allocation2 + $0x100] sm:$0xf]
      %v569 = vsel %vm375, %v554, %v568
      %570 = vst [vmem:[#allocation2 + $0x100] sm:$0xf] %v569
      %571 = vst.msk [vmem:[#allocation2 + $0x108] sm:$0xf] %vm379, %v563
      %v572 = vld [vmem:[#allocation2 + $0x110] sm:$0x1]
      %v573 = vsel %vm382, %v564, %v572
      %574 = vst [vmem:[#allocation2 + $0x110] sm:$0x1] %v573
      %v576 = vshrl.u32 %v259, 16
      %v578 = vrot.slane %v576, 7
      %v579 = vshll.u32 %v259, 16
      %v581 = vor.u32 %v578, %v579
      %v582 = vrot.slane %v578, 4
      %v584 = vshrl.u32 %v260, 16
      %v586 = vrot.slane %v584, 7
      %v587 = vshll.u32 %v260, 16
      %v589 = vor.u32 %v586, %v587
      %v590 = vsel %vm352, %v582, %v589
      %v591 = vrot.slane %v586, 4
      %v595 = vld [vmem:[#allocation2 + $0x120] sm:$0xf]
      %v596 = vsel %vm375, %v581, %v595
      %597 = vst [vmem:[#allocation2 + $0x120] sm:$0xf] %v596
      %598 = vst.msk [vmem:[#allocation2 + $0x128] sm:$0xf] %vm379, %v590
      %v599 = vld [vmem:[#allocation2 + $0x130] sm:$0x1]
      %v600 = vsel %vm382, %v591, %v599
      %601 = vst [vmem:[#allocation2 + $0x130] sm:$0x1] %v600
      %v603 = vshrl.u32 %v261, 16
      %v605 = vrot.slane %v603, 7
      %v606 = vshll.u32 %v261, 16
      %v608 = vor.u32 %v605, %v606
      %v609 = vrot.slane %v605, 4
      %v611 = vshrl.u32 %v262, 16
      %v613 = vrot.slane %v611, 7
      %v614 = vshll.u32 %v262, 16
      %v616 = vor.u32 %v613, %v614
      %v617 = vsel %vm352, %v609, %v616
      %v618 = vrot.slane %v613, 4
      %v622 = vld [vmem:[#allocation2 + $0x140] sm:$0xf]
      %v623 = vsel %vm375, %v608, %v622
      %624 = vst [vmem:[#allocation2 + $0x140] sm:$0xf] %v623
      %625 = vst.msk [vmem:[#allocation2 + $0x148] sm:$0xf] %vm379, %v617
      %v626 = vld [vmem:[#allocation2 + $0x150] sm:$0x1]
      %v627 = vsel %vm382, %v618, %v626
      %628 = vst [vmem:[#allocation2 + $0x150] sm:$0x1] %v627
      %v630 = vshrl.u32 %v263, 16
      %v632 = vrot.slane %v630, 7
      %v633 = vshll.u32 %v263, 16
      %v635 = vor.u32 %v632, %v633
      %v636 = vrot.slane %v632, 4
      %v638 = vshrl.u32 %v264, 16
      %v640 = vrot.slane %v638, 7
      %v641 = vshll.u32 %v264, 16
      %v643 = vor.u32 %v640, %v641
      %v644 = vsel %vm352, %v636, %v643
      %v645 = vrot.slane %v640, 4
      %v649 = vld [vmem:[#allocation2 + $0x160] sm:$0xf]
      %v650 = vsel %vm375, %v635, %v649
      %651 = vst [vmem:[#allocation2 + $0x160] sm:$0xf] %v650
      %652 = vst.msk [vmem:[#allocation2 + $0x168] sm:$0xf] %vm379, %v644
      %v653 = vld [vmem:[#allocation2 + $0x170] sm:$0x1]
      %v654 = vsel %vm382, %v645, %v653
      %655 = vst [vmem:[#allocation2 + $0x170] sm:$0x1] %v654
      %v657 = vshrl.u32 %v265, 16
      %v659 = vrot.slane %v657, 7
      %v660 = vshll.u32 %v265, 16
      %v662 = vor.u32 %v659, %v660
      %v663 = vrot.slane %v659, 4
      %v665 = vshrl.u32 %v266, 16
      %v667 = vrot.slane %v665, 7
      %v668 = vshll.u32 %v266, 16
      %v670 = vor.u32 %v667, %v668
      %v671 = vsel %vm352, %v663, %v670
      %v672 = vrot.slane %v667, 4
      %v676 = vld [vmem:[#allocation2 + $0x180] sm:$0xf]
      %v677 = vsel %vm375, %v662, %v676
      %678 = vst [vmem:[#allocation2 + $0x180] sm:$0xf] %v677
      %679 = vst.msk [vmem:[#allocation2 + $0x188] sm:$0xf] %vm379, %v671
      %v680 = vld [vmem:[#allocation2 + $0x190] sm:$0x1]
      %v681 = vsel %vm382, %v672, %v680
      %682 = vst [vmem:[#allocation2 + $0x190] sm:$0x1] %v681
      %v684 = vshrl.u32 %v267, 16
      %v686 = vrot.slane %v684, 7
      %v687 = vshll.u32 %v267, 16
      %v689 = vor.u32 %v686, %v687
      %v690 = vrot.slane %v686, 4
      %v692 = vshrl.u32 %v268, 16
      %v694 = vrot.slane %v692, 7
      %v695 = vshll.u32 %v268, 16
      %v697 = vor.u32 %v694, %v695
      %v698 = vsel %vm352, %v690, %v697
      %v699 = vrot.slane %v694, 4
      %v703 = vld [vmem:[#allocation2 + $0x1a0] sm:$0xf]
      %v704 = vsel %vm375, %v689, %v703
      %705 = vst [vmem:[#allocation2 + $0x1a0] sm:$0xf] %v704
      %706 = vst.msk [vmem:[#allocation2 + $0x1a8] sm:$0xf] %vm379, %v698
      %v707 = vld [vmem:[#allocation2 + $0x1b0] sm:$0x1]
      %v708 = vsel %vm382, %v699, %v707
      %709 = vst [vmem:[#allocation2 + $0x1b0] sm:$0x1] %v708
      %v711 = vshrl.u32 %v269, 16
      %v713 = vrot.slane %v711, 7
      %v714 = vshll.u32 %v269, 16
      %v716 = vor.u32 %v713, %v714
      %v717 = vrot.slane %v713, 4
      %v719 = vshrl.u32 %v270, 16
      %v721 = vrot.slane %v719, 7
      %v722 = vshll.u32 %v270, 16
      %v724 = vor.u32 %v721, %v722
      %v725 = vsel %vm352, %v717, %v724
      %v726 = vrot.slane %v721, 4
      %v730 = vld [vmem:[#allocation2 + $0x1c0] sm:$0xf]
      %v731 = vsel %vm375, %v716, %v730
      %732 = vst [vmem:[#allocation2 + $0x1c0] sm:$0xf] %v731
      %733 = vst.msk [vmem:[#allocation2 + $0x1c8] sm:$0xf] %vm379, %v725
      %v734 = vld [vmem:[#allocation2 + $0x1d0] sm:$0x1]
      %v735 = vsel %vm382, %v726, %v734
      %736 = vst [vmem:[#allocation2 + $0x1d0] sm:$0x1] %v735
      %v738 = vshrl.u32 %v271, 16
      %v740 = vrot.slane %v738, 7
      %v741 = vshll.u32 %v271, 16
      %v743 = vor.u32 %v740, %v741
      %v744 = vrot.slane %v740, 4
      %v746 = vshrl.u32 %v272, 16
      %v748 = vrot.slane %v746, 7
      %v749 = vshll.u32 %v272, 16
      %v751 = vor.u32 %v748, %v749
      %v752 = vsel %vm352, %v744, %v751
      %v753 = vrot.slane %v748, 4
      %v757 = vld [vmem:[#allocation2 + $0x1e0] sm:$0xf]
      %v758 = vsel %vm375, %v743, %v757
      %759 = vst [vmem:[#allocation2 + $0x1e0] sm:$0xf] %v758
      %760 = vst.msk [vmem:[#allocation2 + $0x1e8] sm:$0xf] %vm379, %v752
      %v761 = vld [vmem:[#allocation2 + $0x1f0] sm:$0x1]
      %v762 = vsel %vm382, %v753, %v761
      %763 = vst [vmem:[#allocation2 + $0x1f0] sm:$0x1] %v762
      %v765 = vshrl.u32 %v273, 16
      %v767 = vrot.slane %v765, 7
      %v768 = vshll.u32 %v273, 16
      %v770 = vor.u32 %v767, %v768
      %v771 = vrot.slane %v767, 4
      %v773 = vshrl.u32 %v274, 16
      %v775 = vrot.slane %v773, 7
      %v776 = vshll.u32 %v274, 16
      %v778 = vor.u32 %v775, %v776
      %v779 = vsel %vm352, %v771, %v778
      %v780 = vrot.slane %v775, 4
      %v784 = vld [vmem:[#allocation2 + $0x200] sm:$0xf]
      %v785 = vsel %vm375, %v770, %v784
      %786 = vst [vmem:[#allocation2 + $0x200] sm:$0xf] %v785
      %787 = vst.msk [vmem:[#allocation2 + $0x208] sm:$0xf] %vm379, %v779
      %v788 = vld [vmem:[#allocation2 + $0x210] sm:$0x1]
      %v789 = vsel %vm382, %v780, %v788
      %790 = vst [vmem:[#allocation2 + $0x210] sm:$0x1] %v789
      %793 = vrot.lane.b32.xlu0 %v243, 64
      %v794 = vpop.permute.xlu0 %793
      %795 = vrot.lane.b32.xlu0 %v244, 64
      %v796 = vpop.permute.xlu0 %795
      %vm799 = vcmask 1043968
      %800 = vst.msk [vmem:[#allocation2 + $0x20] sm:$0xf] %vm799, %v794
      %801 = vst.msk [vmem:[#allocation2 + $0x28] sm:$0xf] %vm799, %v796
      %804 = vrot.lane.b32.xlu0 %v245, 64
      %v805 = vpop.permute.xlu0 %804
      %806 = vrot.lane.b32.xlu0 %v246, 64
      %v807 = vpop.permute.xlu0 %806
      %810 = vst.msk [vmem:[#allocation2 + $0x40] sm:$0xf] %vm799, %v805
      %811 = vst.msk [vmem:[#allocation2 + $0x48] sm:$0xf] %vm799, %v807
      %814 = vrot.lane.b32.xlu0 %v247, 64
      %v815 = vpop.permute.xlu0 %814
      %816 = vrot.lane.b32.xlu0 %v248, 64
      %v817 = vpop.permute.xlu0 %816
      %820 = vst.msk [vmem:[#allocation2 + $0x60] sm:$0xf] %vm799, %v815
      %821 = vst.msk [vmem:[#allocation2 + $0x68] sm:$0xf] %vm799, %v817
      %824 = vrot.lane.b32.xlu0 %v249, 64
      %v825 = vpop.permute.xlu0 %824
      %826 = vrot.lane.b32.xlu0 %v250, 64
      %v827 = vpop.permute.xlu0 %826
      %830 = vst.msk [vmem:[#allocation2 + $0x80] sm:$0xf] %vm799, %v825
      %831 = vst.msk [vmem:[#allocation2 + $0x88] sm:$0xf] %vm799, %v827
      %834 = vrot.lane.b32.xlu0 %v251, 64
      %v835 = vpop.permute.xlu0 %834
      %836 = vrot.lane.b32.xlu0 %v252, 64
      %v837 = vpop.permute.xlu0 %836
      %840 = vst.msk [vmem:[#allocation2 + $0xa0] sm:$0xf] %vm799, %v835
      %841 = vst.msk [vmem:[#allocation2 + $0xa8] sm:$0xf] %vm799, %v837
      %844 = vrot.lane.b32.xlu0 %v253, 64
      %v845 = vpop.permute.xlu0 %844
      %846 = vrot.lane.b32.xlu0 %v254, 64
      %v847 = vpop.permute.xlu0 %846
      %850 = vst.msk [vmem:[#allocation2 + $0xc0] sm:$0xf] %vm799, %v845
      %851 = vst.msk [vmem:[#allocation2 + $0xc8] sm:$0xf] %vm799, %v847
      %854 = vrot.lane.b32.xlu0 %v255, 64
      %v855 = vpop.permute.xlu0 %854
      %856 = vrot.lane.b32.xlu0 %v256, 64
      %v857 = vpop.permute.xlu0 %856
      %860 = vst.msk [vmem:[#allocation2 + $0xe0] sm:$0xf] %vm799, %v855
      %861 = vst.msk [vmem:[#allocation2 + $0xe8] sm:$0xf] %vm799, %v857
      %864 = vrot.lane.b32.xlu0 %v257, 64
      %v865 = vpop.permute.xlu0 %864
      %866 = vrot.lane.b32.xlu0 %v258, 64
      %v867 = vpop.permute.xlu0 %866
      %870 = vst.msk [vmem:[#allocation2 + $0x100] sm:$0xf] %vm799, %v865
      %871 = vst.msk [vmem:[#allocation2 + $0x108] sm:$0xf] %vm799, %v867
      %874 = vrot.lane.b32.xlu0 %v259, 64
      %v875 = vpop.permute.xlu0 %874
      %876 = vrot.lane.b32.xlu0 %v260, 64
      %v877 = vpop.permute.xlu0 %876
      %880 = vst.msk [vmem:[#allocation2 + $0x120] sm:$0xf] %vm799, %v875
      %881 = vst.msk [vmem:[#allocation2 + $0x128] sm:$0xf] %vm799, %v877
      %884 = vrot.lane.b32.xlu0 %v261, 64
      %v885 = vpop.permute.xlu0 %884
      %886 = vrot.lane.b32.xlu0 %v262, 64
      %v887 = vpop.permute.xlu0 %886
      %890 = vst.msk [vmem:[#allocation2 + $0x140] sm:$0xf] %vm799, %v885
      %891 = vst.msk [vmem:[#allocation2 + $0x148] sm:$0xf] %vm799, %v887
      %894 = vrot.lane.b32.xlu0 %v263, 64
      %v895 = vpop.permute.xlu0 %894
      %896 = vrot.lane.b32.xlu0 %v264, 64
      %v897 = vpop.permute.xlu0 %896
      %900 = vst.msk [vmem:[#allocation2 + $0x160] sm:$0xf] %vm799, %v895
      %901 = vst.msk [vmem:[#allocation2 + $0x168] sm:$0xf] %vm799, %v897
      %904 = vrot.lane.b32.xlu0 %v265, 64
      %v905 = vpop.permute.xlu0 %904
      %906 = vrot.lane.b32.xlu0 %v266, 64
      %v907 = vpop.permute.xlu0 %906
      %910 = vst.msk [vmem:[#allocation2 + $0x180] sm:$0xf] %vm799, %v905
      %911 = vst.msk [vmem:[#allocation2 + $0x188] sm:$0xf] %vm799, %v907
      %914 = vrot.lane.b32.xlu0 %v267, 64
      %v915 = vpop.permute.xlu0 %914
      %916 = vrot.lane.b32.xlu0 %v268, 64
      %v917 = vpop.permute.xlu0 %916
      %920 = vst.msk [vmem:[#allocation2 + $0x1a0] sm:$0xf] %vm799, %v915
      %921 = vst.msk [vmem:[#allocation2 + $0x1a8] sm:$0xf] %vm799, %v917
      %924 = vrot.lane.b32.xlu0 %v269, 64
      %v925 = vpop.permute.xlu0 %924
      %926 = vrot.lane.b32.xlu0 %v270, 64
      %v927 = vpop.permute.xlu0 %926
      %930 = vst.msk [vmem:[#allocation2 + $0x1c0] sm:$0xf] %vm799, %v925
      %931 = vst.msk [vmem:[#allocation2 + $0x1c8] sm:$0xf] %vm799, %v927
      %934 = vrot.lane.b32.xlu0 %v271, 64
      %v935 = vpop.permute.xlu0 %934
      %936 = vrot.lane.b32.xlu0 %v272, 64
      %v937 = vpop.permute.xlu0 %936
      %940 = vst.msk [vmem:[#allocation2 + $0x1e0] sm:$0xf] %vm799, %v935
      %941 = vst.msk [vmem:[#allocation2 + $0x1e8] sm:$0xf] %vm799, %v937
      %944 = vrot.lane.b32.xlu0 %v273, 64
      %v945 = vpop.permute.xlu0 %944
      %946 = vrot.lane.b32.xlu0 %v274, 64
      %v947 = vpop.permute.xlu0 %946
      %950 = vst.msk [vmem:[#allocation2 + $0x200] sm:$0xf] %vm799, %v945
      %951 = vst.msk [vmem:[#allocation2 + $0x208] sm:$0xf] %vm799, %v947
      %vm952 = vsmask.f32 3328
      %vm953 = vsmask.f32 7440
      %vm954 = vmor %vm952, %vm953
      %v955 = vrot.slane %v357, 5
      %v956 = vrot.slane %v354, 4
      %v957 = vor.u32 %v956, %v955
      %v958 = vrot.slane %v957, 4
      %v959 = vrot.slane %v365, 5
      %v960 = vsel %vm954, %v958, %v959
      %v961 = vrot.slane %v362, 4
      %v962 = vor.u32 %v961, %v959
      %v963 = vrot.slane %v962, 4
      %vm967 = vcmask 519171
      %vm968 = vsmask.f32 7950
      %vm969 = vmand %vm967, %vm968
      %v970 = vld [vmem:[#allocation2 + $0x1c] sm:$0x8]
      %v971 = vsel %vm969, %v955, %v970
      %972 = vst [vmem:[#allocation2 + $0x1c] sm:$0x8] %v971
      %973 = vst.msk [vmem:[#allocation2 + $0x24] sm:$0xf] %vm379, %v960
      %vm974 = vmand %vm373, %vm952
      %v975 = vld [vmem:[#allocation2 + $0x2c] sm:$0xf]
      %v976 = vsel %vm974, %v963, %v975
      %977 = vst [vmem:[#allocation2 + $0x2c] sm:$0xf] %v976
      %v978 = vrot.slane %v390, 5
      %v979 = vrot.slane %v387, 4
      %v980 = vor.u32 %v979, %v978
      %v981 = vrot.slane %v980, 4
      %v982 = vrot.slane %v398, 5
      %v983 = vsel %vm954, %v981, %v982
      %v984 = vrot.slane %v395, 4
      %v985 = vor.u32 %v984, %v982
      %v986 = vrot.slane %v985, 4
      %v990 = vld [vmem:[#allocation2 + $0x3c] sm:$0x8]
      %v991 = vsel %vm969, %v978, %v990
      %992 = vst [vmem:[#allocation2 + $0x3c] sm:$0x8] %v991
      %993 = vst.msk [vmem:[#allocation2 + $0x44] sm:$0xf] %vm379, %v983
      %v994 = vld [vmem:[#allocation2 + $0x4c] sm:$0xf]
      %v995 = vsel %vm974, %v986, %v994
      %996 = vst [vmem:[#allocation2 + $0x4c] sm:$0xf] %v995
      %v997 = vrot.slane %v417, 5
      %v998 = vrot.slane %v414, 4
      %v999 = vor.u32 %v998, %v997
      %v1000 = vrot.slane %v999, 4
      %v1001 = vrot.slane %v425, 5
      %v1002 = vsel %vm954, %v1000, %v1001
      %v1003 = vrot.slane %v422, 4
      %v1004 = vor.u32 %v1003, %v1001
      %v1005 = vrot.slane %v1004, 4
      %v1009 = vld [vmem:[#allocation2 + $0x5c] sm:$0x8]
      %v1010 = vsel %vm969, %v997, %v1009
      %1011 = vst [vmem:[#allocation2 + $0x5c] sm:$0x8] %v1010
      %1012 = vst.msk [vmem:[#allocation2 + $0x64] sm:$0xf] %vm379, %v1002
      %v1013 = vld [vmem:[#allocation2 + $0x6c] sm:$0xf]
      %v1014 = vsel %vm974, %v1005, %v1013
      %1015 = vst [vmem:[#allocation2 + $0x6c] sm:$0xf] %v1014
      %v1016 = vrot.slane %v444, 5
      %v1017 = vrot.slane %v441, 4
      %v1018 = vor.u32 %v1017, %v1016
      %v1019 = vrot.slane %v1018, 4
      %v1020 = vrot.slane %v452, 5
      %v1021 = vsel %vm954, %v1019, %v1020
      %v1022 = vrot.slane %v449, 4
      %v1023 = vor.u32 %v1022, %v1020
      %v1024 = vrot.slane %v1023, 4
      %v1028 = vld [vmem:[#allocation2 + $0x7c] sm:$0x8]
      %v1029 = vsel %vm969, %v1016, %v1028
      %1030 = vst [vmem:[#allocation2 + $0x7c] sm:$0x8] %v1029
      %1031 = vst.msk [vmem:[#allocation2 + $0x84] sm:$0xf] %vm379, %v1021
      %v1032 = vld [vmem:[#allocation2 + $0x8c] sm:$0xf]
      %v1033 = vsel %vm974, %v1024, %v1032
      %1034 = vst [vmem:[#allocation2 + $0x8c] sm:$0xf] %v1033
      %v1035 = vrot.slane %v471, 5
      %v1036 = vrot.slane %v468, 4
      %v1037 = vor.u32 %v1036, %v1035
      %v1038 = vrot.slane %v1037, 4
      %v1039 = vrot.slane %v479, 5
      %v1040 = vsel %vm954, %v1038, %v1039
      %v1041 = vrot.slane %v476, 4
      %v1042 = vor.u32 %v1041, %v1039
      %v1043 = vrot.slane %v1042, 4
      %v1047 = vld [vmem:[#allocation2 + $0x9c] sm:$0x8]
      %v1048 = vsel %vm969, %v1035, %v1047
      %1049 = vst [vmem:[#allocation2 + $0x9c] sm:$0x8] %v1048
      %1050 = vst.msk [vmem:[#allocation2 + $0xa4] sm:$0xf] %vm379, %v1040
      %v1051 = vld [vmem:[#allocation2 + $0xac] sm:$0xf]
      %v1052 = vsel %vm974, %v1043, %v1051
      %1053 = vst [vmem:[#allocation2 + $0xac] sm:$0xf] %v1052
      %v1054 = vrot.slane %v498, 5
      %v1055 = vrot.slane %v495, 4
      %v1056 = vor.u32 %v1055, %v1054
      %v1057 = vrot.slane %v1056, 4
      %v1058 = vrot.slane %v506, 5
      %v1059 = vsel %vm954, %v1057, %v1058
      %v1060 = vrot.slane %v503, 4
      %v1061 = vor.u32 %v1060, %v1058
      %v1062 = vrot.slane %v1061, 4
      %v1066 = vld [vmem:[#allocation2 + $0xbc] sm:$0x8]
      %v1067 = vsel %vm969, %v1054, %v1066
      %1068 = vst [vmem:[#allocation2 + $0xbc] sm:$0x8] %v1067
      %1069 = vst.msk [vmem:[#allocation2 + $0xc4] sm:$0xf] %vm379, %v1059
      %v1070 = vld [vmem:[#allocation2 + $0xcc] sm:$0xf]
      %v1071 = vsel %vm974, %v1062, %v1070
      %1072 = vst [vmem:[#allocation2 + $0xcc] sm:$0xf] %v1071
      %v1073 = vrot.slane %v525, 5
      %v1074 = vrot.slane %v522, 4
      %v1075 = vor.u32 %v1074, %v1073
      %v1076 = vrot.slane %v1075, 4
      %v1077 = vrot.slane %v533, 5
      %v1078 = vsel %vm954, %v1076, %v1077
      %v1079 = vrot.slane %v530, 4
      %v1080 = vor.u32 %v1079, %v1077
      %v1081 = vrot.slane %v1080, 4
      %v1085 = vld [vmem:[#allocation2 + $0xdc] sm:$0x8]
      %v1086 = vsel %vm969, %v1073, %v1085
      %1087 = vst [vmem:[#allocation2 + $0xdc] sm:$0x8] %v1086
      %1088 = vst.msk [vmem:[#allocation2 + $0xe4] sm:$0xf] %vm379, %v1078
      %v1089 = vld [vmem:[#allocation2 + $0xec] sm:$0xf]
      %v1090 = vsel %vm974, %v1081, %v1089
      %1091 = vst [vmem:[#allocation2 + $0xec] sm:$0xf] %v1090
      %v1092 = vrot.slane %v552, 5
      %v1093 = vrot.slane %v549, 4
      %v1094 = vor.u32 %v1093, %v1092
      %v1095 = vrot.slane %v1094, 4
      %v1096 = vrot.slane %v560, 5
      %v1097 = vsel %vm954, %v1095, %v1096
      %v1098 = vrot.slane %v557, 4
      %v1099 = vor.u32 %v1098, %v1096
      %v1100 = vrot.slane %v1099, 4
      %v1104 = vld [vmem:[#allocation2 + $0xfc] sm:$0x8]
      %v1105 = vsel %vm969, %v1092, %v1104
      %1106 = vst [vmem:[#allocation2 + $0xfc] sm:$0x8] %v1105
      %1107 = vst.msk [vmem:[#allocation2 + $0x104] sm:$0xf] %vm379, %v1097
      %v1108 = vld [vmem:[#allocation2 + $0x10c] sm:$0xf]
      %v1109 = vsel %vm974, %v1100, %v1108
      %1110 = vst [vmem:[#allocation2 + $0x10c] sm:$0xf] %v1109
      %v1111 = vrot.slane %v579, 5
      %v1112 = vrot.slane %v576, 4
      %v1113 = vor.u32 %v1112, %v1111
      %v1114 = vrot.slane %v1113, 4
      %v1115 = vrot.slane %v587, 5
      %v1116 = vsel %vm954, %v1114, %v1115
      %v1117 = vrot.slane %v584, 4
      %v1118 = vor.u32 %v1117, %v1115
      %v1119 = vrot.slane %v1118, 4
      %v1123 = vld [vmem:[#allocation2 + $0x11c] sm:$0x8]
      %v1124 = vsel %vm969, %v1111, %v1123
      %1125 = vst [vmem:[#allocation2 + $0x11c] sm:$0x8] %v1124
      %1126 = vst.msk [vmem:[#allocation2 + $0x124] sm:$0xf] %vm379, %v1116
      %v1127 = vld [vmem:[#allocation2 + $0x12c] sm:$0xf]
      %v1128 = vsel %vm974, %v1119, %v1127
      %1129 = vst [vmem:[#allocation2 + $0x12c] sm:$0xf] %v1128
      %v1130 = vrot.slane %v606, 5
      %v1131 = vrot.slane %v603, 4
      %v1132 = vor.u32 %v1131, %v1130
      %v1133 = vrot.slane %v1132, 4
      %v1134 = vrot.slane %v614, 5
      %v1135 = vsel %vm954, %v1133, %v1134
      %v1136 = vrot.slane %v611, 4
      %v1137 = vor.u32 %v1136, %v1134
      %v1138 = vrot.slane %v1137, 4
      %v1142 = vld [vmem:[#allocation2 + $0x13c] sm:$0x8]
      %v1143 = vsel %vm969, %v1130, %v1142
      %1144 = vst [vmem:[#allocation2 + $0x13c] sm:$0x8] %v1143
      %1145 = vst.msk [vmem:[#allocation2 + $0x144] sm:$0xf] %vm379, %v1135
      %v1146 = vld [vmem:[#allocation2 + $0x14c] sm:$0xf]
      %v1147 = vsel %vm974, %v1138, %v1146
      %1148 = vst [vmem:[#allocation2 + $0x14c] sm:$0xf] %v1147
      %v1149 = vrot.slane %v633, 5
      %v1150 = vrot.slane %v630, 4
      %v1151 = vor.u32 %v1150, %v1149
      %v1152 = vrot.slane %v1151, 4
      %v1153 = vrot.slane %v641, 5
      %v1154 = vsel %vm954, %v1152, %v1153
      %v1155 = vrot.slane %v638, 4
      %v1156 = vor.u32 %v1155, %v1153
      %v1157 = vrot.slane %v1156, 4
      %v1161 = vld [vmem:[#allocation2 + $0x15c] sm:$0x8]
      %v1162 = vsel %vm969, %v1149, %v1161
      %1163 = vst [vmem:[#allocation2 + $0x15c] sm:$0x8] %v1162
      %1164 = vst.msk [vmem:[#allocation2 + $0x164] sm:$0xf] %vm379, %v1154
      %v1165 = vld [vmem:[#allocation2 + $0x16c] sm:$0xf]
      %v1166 = vsel %vm974, %v1157, %v1165
      %1167 = vst [vmem:[#allocation2 + $0x16c] sm:$0xf] %v1166
      %v1168 = vrot.slane %v660, 5
      %v1169 = vrot.slane %v657, 4
      %v1170 = vor.u32 %v1169, %v1168
      %v1171 = vrot.slane %v1170, 4
      %v1172 = vrot.slane %v668, 5
      %v1173 = vsel %vm954, %v1171, %v1172
      %v1174 = vrot.slane %v665, 4
      %v1175 = vor.u32 %v1174, %v1172
      %v1176 = vrot.slane %v1175, 4
      %v1180 = vld [vmem:[#allocation2 + $0x17c] sm:$0x8]
      %v1181 = vsel %vm969, %v1168, %v1180
      %1182 = vst [vmem:[#allocation2 + $0x17c] sm:$0x8] %v1181
      %1183 = vst.msk [vmem:[#allocation2 + $0x184] sm:$0xf] %vm379, %v1173
      %v1184 = vld [vmem:[#allocation2 + $0x18c] sm:$0xf]
      %v1185 = vsel %vm974, %v1176, %v1184
      %1186 = vst [vmem:[#allocation2 + $0x18c] sm:$0xf] %v1185
      %v1187 = vrot.slane %v687, 5
      %v1188 = vrot.slane %v684, 4
      %v1189 = vor.u32 %v1188, %v1187
      %v1190 = vrot.slane %v1189, 4
      %v1191 = vrot.slane %v695, 5
      %v1192 = vsel %vm954, %v1190, %v1191
      %v1193 = vrot.slane %v692, 4
      %v1194 = vor.u32 %v1193, %v1191
      %v1195 = vrot.slane %v1194, 4
      %v1199 = vld [vmem:[#allocation2 + $0x19c] sm:$0x8]
      %v1200 = vsel %vm969, %v1187, %v1199
      %1201 = vst [vmem:[#allocation2 + $0x19c] sm:$0x8] %v1200
      %1202 = vst.msk [vmem:[#allocation2 + $0x1a4] sm:$0xf] %vm379, %v1192
      %v1203 = vld [vmem:[#allocation2 + $0x1ac] sm:$0xf]
      %v1204 = vsel %vm974, %v1195, %v1203
      %1205 = vst [vmem:[#allocation2 + $0x1ac] sm:$0xf] %v1204
      %v1206 = vrot.slane %v714, 5
      %v1207 = vrot.slane %v711, 4
      %v1208 = vor.u32 %v1207, %v1206
      %v1209 = vrot.slane %v1208, 4
      %v1210 = vrot.slane %v722, 5
      %v1211 = vsel %vm954, %v1209, %v1210
      %v1212 = vrot.slane %v719, 4
      %v1213 = vor.u32 %v1212, %v1210
      %v1214 = vrot.slane %v1213, 4
      %v1218 = vld [vmem:[#allocation2 + $0x1bc] sm:$0x8]
      %v1219 = vsel %vm969, %v1206, %v1218
      %1220 = vst [vmem:[#allocation2 + $0x1bc] sm:$0x8] %v1219
      %1221 = vst.msk [vmem:[#allocation2 + $0x1c4] sm:$0xf] %vm379, %v1211
      %v1222 = vld [vmem:[#allocation2 + $0x1cc] sm:$0xf]
      %v1223 = vsel %vm974, %v1214, %v1222
      %1224 = vst [vmem:[#allocation2 + $0x1cc] sm:$0xf] %v1223
      %v1225 = vrot.slane %v741, 5
      %v1226 = vrot.slane %v738, 4
      %v1227 = vor.u32 %v1226, %v1225
      %v1228 = vrot.slane %v1227, 4
      %v1229 = vrot.slane %v749, 5
      %v1230 = vsel %vm954, %v1228, %v1229
      %v1231 = vrot.slane %v746, 4
      %v1232 = vor.u32 %v1231, %v1229
      %v1233 = vrot.slane %v1232, 4
      %v1237 = vld [vmem:[#allocation2 + $0x1dc] sm:$0x8]
      %v1238 = vsel %vm969, %v1225, %v1237
      %1239 = vst [vmem:[#allocation2 + $0x1dc] sm:$0x8] %v1238
      %1240 = vst.msk [vmem:[#allocation2 + $0x1e4] sm:$0xf] %vm379, %v1230
      %v1241 = vld [vmem:[#allocation2 + $0x1ec] sm:$0xf]
      %v1242 = vsel %vm974, %v1233, %v1241
      %1243 = vst [vmem:[#allocation2 + $0x1ec] sm:$0xf] %v1242
      %v1244 = vrot.slane %v768, 5
      %v1245 = vrot.slane %v765, 4
      %v1246 = vor.u32 %v1245, %v1244
      %v1247 = vrot.slane %v1246, 4
      %v1248 = vrot.slane %v776, 5
      %v1249 = vsel %vm954, %v1247, %v1248
      %v1250 = vrot.slane %v773, 4
      %v1251 = vor.u32 %v1250, %v1248
      %v1252 = vrot.slane %v1251, 4
      %v1256 = vld [vmem:[#allocation2 + $0x1fc] sm:$0x8]
      %v1257 = vsel %vm969, %v1244, %v1256
      %1258 = vst [vmem:[#allocation2 + $0x1fc] sm:$0x8] %v1257
      %1259 = vst.msk [vmem:[#allocation2 + $0x204] sm:$0xf] %vm379, %v1249
      %v1260 = vld [vmem:[#allocation2 + $0x20c] sm:$0xf]
      %v1261 = vsel %vm974, %v1252, %v1260
      %1262 = vst [vmem:[#allocation2 + $0x20c] sm:$0xf] %v1261
      %v1263 = vld [vmem:[#allocation2] sm:$0xff]
      %v1264 = vld [vmem:[#allocation2 + $0x8] sm:$0xff]
      %v1265 = vld [vmem:[#allocation2 + $0x10] sm:$0xff]
      %v1266 = vld [vmem:[#allocation2 + $0x18] sm:$0xff]
      %v1267 = vld [vmem:[#allocation2 + $0x20] sm:$0xff]
      %v1268 = vld [vmem:[#allocation2 + $0x28] sm:$0xff]
      %v1269 = vld [vmem:[#allocation2 + $0x30] sm:$0xff]
      %v1270 = vld [vmem:[#allocation2 + $0x38] sm:$0xff]
      %v1271 = vld [vmem:[#allocation2 + $0x40] sm:$0xff]
      %v1272 = vld [vmem:[#allocation2 + $0x48] sm:$0xff]
      %v1273 = vld [vmem:[#allocation2 + $0x50] sm:$0xff]
      %v1274 = vld [vmem:[#allocation2 + $0x58] sm:$0xff]
      %v1275 = vld [vmem:[#allocation2 + $0x60] sm:$0xff]
      %v1276 = vld [vmem:[#allocation2 + $0x68] sm:$0xff]
      %v1277 = vld [vmem:[#allocation2 + $0x70] sm:$0xff]
      %v1278 = vld [vmem:[#allocation2 + $0x78] sm:$0xff]
      %v1279 = vld [vmem:[#allocation2 + $0x80] sm:$0xff]
      %v1280 = vld [vmem:[#allocation2 + $0x88] sm:$0xff]
      %v1281 = vld [vmem:[#allocation2 + $0x90] sm:$0xff]
      %v1282 = vld [vmem:[#allocation2 + $0x98] sm:$0xff]
      %v1283 = vld [vmem:[#allocation2 + $0xa0] sm:$0xff]
      %v1284 = vld [vmem:[#allocation2 + $0xa8] sm:$0xff]
      %v1285 = vld [vmem:[#allocation2 + $0xb0] sm:$0xff]
      %v1286 = vld [vmem:[#allocation2 + $0xb8] sm:$0xff]
      %v1287 = vld [vmem:[#allocation2 + $0xc0] sm:$0xff]
      %v1288 = vld [vmem:[#allocation2 + $0xc8] sm:$0xff]
      %v1289 = vld [vmem:[#allocation2 + $0xd0] sm:$0xff]
      %v1290 = vld [vmem:[#allocation2 + $0xd8] sm:$0xff]
      %v1291 = vld [vmem:[#allocation2 + $0xe0] sm:$0xff]
      %v1292 = vld [vmem:[#allocation2 + $0xe8] sm:$0xff]
      %v1293 = vld [vmem:[#allocation2 + $0xf0] sm:$0xff]
      %v1294 = vld [vmem:[#allocation2 + $0xf8] sm:$0xff]
      %v1295 = vld [vmem:[%s1] sm:$0xf]
      %v1296 = vld [vmem:[%s1 + $0x4] sm:$0xf]
      %v1297 = vld [vmem:[%s1 + $0x8] sm:$0xf]
      %v1298 = vld [vmem:[%s1 + $0xc] sm:$0xf]
      %v1299 = vld [vmem:[%s1 + $0x10] sm:$0xf]
      %v1300 = vld [vmem:[%s1 + $0x14] sm:$0xf]
      %v1301 = vld [vmem:[%s1 + $0x18] sm:$0xf]
      %v1302 = vld [vmem:[%s1 + $0x1c] sm:$0xf]
      %v1303 = vld [vmem:[%s1 + $0x20] sm:$0xf]
      %v1304 = vld [vmem:[%s1 + $0x24] sm:$0xf]
      %v1305 = vld [vmem:[%s1 + $0x28] sm:$0xf]
      %v1306 = vld [vmem:[%s1 + $0x2c] sm:$0xf]
      %v1307 = vld [vmem:[%s1 + $0x30] sm:$0xf]
      %v1308 = vld [vmem:[%s1 + $0x34] sm:$0xf]
      %v1309 = vld [vmem:[%s1 + $0x38] sm:$0xf]
      %v1310 = vld [vmem:[%s1 + $0x3c] sm:$0xf]
      %v1311 = vld [vmem:[%s1 + $0x40] sm:$0xf]
      %v1312 = vld [vmem:[%s1 + $0x44] sm:$0xf]
      %v1313 = vld [vmem:[%s1 + $0x48] sm:$0xf]
      %v1314 = vld [vmem:[%s1 + $0x4c] sm:$0xf]
      %v1315 = vld [vmem:[%s1 + $0x50] sm:$0xf]
      %v1316 = vld [vmem:[%s1 + $0x54] sm:$0xf]
      %v1317 = vld [vmem:[%s1 + $0x58] sm:$0xf]
      %v1318 = vld [vmem:[%s1 + $0x5c] sm:$0xf]
      %v1319 = vld [vmem:[#allocation2 + $0x100] sm:$0xff]
      %v1320 = vld [vmem:[#allocation2 + $0x108] sm:$0xff]
      %v1321 = vld [vmem:[#allocation2 + $0x110] sm:$0xff]
      %v1322 = vld [vmem:[#allocation2 + $0x118] sm:$0xff]
      %s1323 = scalar_lea.vmem %s1, 96
      %v1324 = vld [vmem:[%s1323] sm:$0xf]
      %v1325 = vld [vmem:[%s1323 + $0x4] sm:$0xf]
      %v1326 = vld [vmem:[%s1323 + $0x8] sm:$0xf]
      %v1327 = vld [vmem:[%s1323 + $0xc] sm:$0xf]
      %v1328 = vld [vmem:[%s1323 + $0x10] sm:$0xf]
      %v1329 = vld [vmem:[%s1323 + $0x14] sm:$0xf]
      %v1330 = vld [vmem:[%s1323 + $0x18] sm:$0xf]
      %v1331 = vld [vmem:[%s1323 + $0x1c] sm:$0xf]
      %v1332 = vld [vmem:[%s1323 + $0x20] sm:$0xf]
      %v1333 = vld [vmem:[%s1323 + $0x24] sm:$0xf]
      %v1334 = vld [vmem:[%s1323 + $0x28] sm:$0xf]
      %v1335 = vld [vmem:[%s1323 + $0x2c] sm:$0xf]
      %v1336 = vld [vmem:[%s1323 + $0x30] sm:$0xf]
      %v1337 = vld [vmem:[%s1323 + $0x34] sm:$0xf]
      %v1338 = vld [vmem:[%s1323 + $0x38] sm:$0xf]
      %v1339 = vld [vmem:[%s1323 + $0x3c] sm:$0xf]
      %v1340 = vld [vmem:[%s1323 + $0x40] sm:$0xf]
      %v1341 = vld [vmem:[%s1323 + $0x44] sm:$0xf]
      %v1342 = vld [vmem:[%s1323 + $0x48] sm:$0xf]
      %v1343 = vld [vmem:[%s1323 + $0x4c] sm:$0xf]
      %v1344 = vld [vmem:[%s1323 + $0x50] sm:$0xf]
      %v1345 = vld [vmem:[%s1323 + $0x54] sm:$0xf]
      %v1346 = vld [vmem:[%s1323 + $0x58] sm:$0xf]
      %v1347 = vld [vmem:[%s1323 + $0x5c] sm:$0xf]
      %v1380 = vunpack.c.l.b16 %v1267
      %v1381 = vunpack.c.h.b16 %v1267
      %v1382 = vunpack.c.l.b16 %v1268
      %v1383 = vunpack.c.h.b16 %v1268
      %v1384 = vunpack.c.l.b16 %v1269
      %v1385 = vunpack.c.h.b16 %v1269
      %v1386 = vunpack.c.l.b16 %v1270
      %v1387 = vunpack.c.h.b16 %v1270
      %v1388 = vunpack.c.l.b16 %v1271
      %v1389 = vunpack.c.h.b16 %v1271
      %v1390 = vunpack.c.l.b16 %v1272
      %v1391 = vunpack.c.h.b16 %v1272
      %v1392 = vunpack.c.l.b16 %v1273
      %v1393 = vunpack.c.h.b16 %v1273
      %v1394 = vunpack.c.l.b16 %v1274
      %v1395 = vunpack.c.h.b16 %v1274
      %v1396 = vunpack.c.l.b16 %v1275
      %v1397 = vunpack.c.h.b16 %v1275
      %v1398 = vunpack.c.l.b16 %v1276
      %v1399 = vunpack.c.h.b16 %v1276
      %v1400 = vunpack.c.l.b16 %v1277
      %v1401 = vunpack.c.h.b16 %v1277
      %v1402 = vunpack.c.l.b16 %v1278
      %v1403 = vunpack.c.h.b16 %v1278
      %v1404 = vunpack.c.l.b16 %v1279
      %v1405 = vunpack.c.h.b16 %v1279
      %v1406 = vunpack.c.l.b16 %v1280
      %v1407 = vunpack.c.h.b16 %v1280
      %v1408 = vunpack.c.l.b16 %v1281
      %v1409 = vunpack.c.h.b16 %v1281
      %v1410 = vunpack.c.l.b16 %v1282
      %v1411 = vunpack.c.h.b16 %v1282
      %v1412 = vunpack.c.l.b16 %v1283
      %v1413 = vunpack.c.h.b16 %v1283
      %v1414 = vunpack.c.l.b16 %v1284
      %v1415 = vunpack.c.h.b16 %v1284
      %v1416 = vunpack.c.l.b16 %v1285
      %v1417 = vunpack.c.h.b16 %v1285
      %v1418 = vunpack.c.l.b16 %v1286
      %v1419 = vunpack.c.h.b16 %v1286
      %v1420 = vunpack.c.l.b16 %v1287
      %v1421 = vunpack.c.h.b16 %v1287
      %v1422 = vunpack.c.l.b16 %v1288
      %v1423 = vunpack.c.h.b16 %v1288
      %v1424 = vunpack.c.l.b16 %v1289
      %v1425 = vunpack.c.h.b16 %v1289
      %v1426 = vunpack.c.l.b16 %v1290
      %v1427 = vunpack.c.h.b16 %v1290
      %v1428 = vunpack.c.l.b16 %v1291
      %v1429 = vunpack.c.h.b16 %v1291
      %v1430 = vunpack.c.l.b16 %v1292
      %v1431 = vunpack.c.h.b16 %v1292
      %v1432 = vunpack.c.l.b16 %v1293
      %v1433 = vunpack.c.h.b16 %v1293
      %v1434 = vunpack.c.l.b16 %v1294
      %v1435 = vunpack.c.h.b16 %v1294
      %v1436 = vunpack.c.l.b16 %v1319
      %v1437 = vunpack.c.h.b16 %v1319
      %v1438 = vunpack.c.l.b16 %v1320
      %v1439 = vunpack.c.h.b16 %v1320
      %v1440 = vunpack.c.l.b16 %v1321
      %v1441 = vunpack.c.h.b16 %v1321
      %v1442 = vunpack.c.l.b16 %v1322
      %v1443 = vunpack.c.h.b16 %v1322
      %v1444 = vpack.c.b16 %v1382, %v1380
      %v1445 = vpack.c.b16 %v1383, %v1381
      %v1446 = vpack.c.b16 %v1386, %v1384
      %v1447 = vpack.c.b16 %v1387, %v1385
      %v1448 = vpack.c.b16 %v1390, %v1388
      %v1449 = vpack.c.b16 %v1391, %v1389
      %v1450 = vpack.c.b16 %v1394, %v1392
      %v1451 = vpack.c.b16 %v1395, %v1393
      %v1452 = vpack.c.b16 %v1398, %v1396
      %v1453 = vpack.c.b16 %v1399, %v1397
      %v1454 = vpack.c.b16 %v1402, %v1400
      %v1455 = vpack.c.b16 %v1403, %v1401
      %v1456 = vpack.c.b16 %v1406, %v1404
      %v1457 = vpack.c.b16 %v1407, %v1405
      %v1458 = vpack.c.b16 %v1410, %v1408
      %v1459 = vpack.c.b16 %v1411, %v1409
      %v1460 = vpack.c.b16 %v1414, %v1412
      %v1461 = vpack.c.b16 %v1415, %v1413
      %v1462 = vpack.c.b16 %v1418, %v1416
      %v1463 = vpack.c.b16 %v1419, %v1417
      %v1464 = vpack.c.b16 %v1422, %v1420
      %v1465 = vpack.c.b16 %v1423, %v1421
      %v1466 = vpack.c.b16 %v1426, %v1424
      %v1467 = vpack.c.b16 %v1427, %v1425
      %v1468 = vpack.c.b16 %v1430, %v1428
      %v1469 = vpack.c.b16 %v1431, %v1429
      %v1470 = vpack.c.b16 %v1434, %v1432
      %v1471 = vpack.c.b16 %v1435, %v1433
      %v1472 = vpack.c.b16 %v1438, %v1436
      %v1473 = vpack.c.b16 %v1439, %v1437
      %v1474 = vpack.c.b16 %v1442, %v1440
      %v1475 = vpack.c.b16 %v1443, %v1441
      %v1516 = vunpack.c.l.b16 %v1324
      %v1517 = vunpack.c.l.b16 %v1325
      %v1518 = vunpack.c.l.b16 %v1326
      %v1519 = vunpack.c.l.b16 %v1327
      %v1520 = vunpack.c.l.b16 %v1328
      %v1521 = vunpack.c.l.b16 %v1329
      %v1522 = vunpack.c.l.b16 %v1330
      %v1523 = vunpack.c.l.b16 %v1331
      %v1524 = vunpack.c.l.b16 %v1332
      %v1525 = vunpack.c.l.b16 %v1333
      %v1526 = vunpack.c.l.b16 %v1334
      %v1527 = vunpack.c.l.b16 %v1335
      %v1528 = vunpack.c.l.b16 %v1336
      %v1529 = vunpack.c.l.b16 %v1337
      %v1530 = vunpack.c.l.b16 %v1338
      %v1531 = vunpack.c.l.b16 %v1339
      %v1532 = vunpack.c.l.b16 %v1340
      %v1533 = vunpack.c.l.b16 %v1341
      %v1534 = vunpack.c.l.b16 %v1342
      %v1535 = vunpack.c.l.b16 %v1343
      %v1536 = vunpack.c.l.b16 %v1344
      %v1537 = vunpack.c.l.b16 %v1345
      %v1538 = vunpack.c.l.b16 %v1346
      %v1539 = vunpack.c.l.b16 %v1347
      %v1540 = vpack.c.b16 %v1517, %v1516
      %v1541 = vpack.c.b16 %v1519, %v1518
      %v1542 = vpack.c.b16 %v1521, %v1520
      %v1543 = vpack.c.b16 %v1523, %v1522
      %v1544 = vpack.c.b16 %v1525, %v1524
      %v1545 = vpack.c.b16 %v1527, %v1526
      %v1546 = vpack.c.b16 %v1529, %v1528
      %v1547 = vpack.c.b16 %v1531, %v1530
      %v1548 = vpack.c.b16 %v1533, %v1532
      %v1549 = vpack.c.b16 %v1535, %v1534
      %v1550 = vpack.c.b16 %v1537, %v1536
      %v1551 = vpack.c.b16 %v1539, %v1538
      %vm1564 = vcmask 523264
      %v1566 = vsel %vm1564, %v1445, 0
      %v1569 = vsel %vm1564, %v1447, 0
      %v1572 = vsel %vm1564, %v1449, 0
      %v1575 = vsel %vm1564, %v1451, 0
      %v1578 = vsel %vm1564, %v1453, 0
      %v1581 = vsel %vm1564, %v1455, 0
      %v1584 = vsel %vm1564, %v1457, 0
      %v1587 = vsel %vm1564, %v1459, 0
      %v1590 = vsel %vm1564, %v1461, 0
      %v1593 = vsel %vm1564, %v1463, 0
      %v1596 = vsel %vm1564, %v1465, 0
      %v1599 = vsel %vm1564, %v1467, 0
      %v1602 = vsel %vm1564, %v1469, 0
      %v1605 = vsel %vm1564, %v1471, 0
      %v1608 = vsel %vm1564, %v1473, 0
      %v1611 = vsel %vm1564, %v1475, 0
      %1613 = vmatpush.bf16.msra.mxu0 %v1547
      %1614 = vmatpush.bf16.msra.mxu0 %v1546
      %1615 = vmatpush.bf16.msra.mxu0 %v1545
      %1616 = vmatpush.bf16.msra.mxu0 %v1544
      %1617 = vmatpush.bf16.msra.mxu0 %v1543
      %1618 = vmatpush.bf16.msra.mxu0 %v1542
      %1619 = vmatpush.bf16.msra.mxu0 %v1541
      %1620 = vmatpush.bf16.msra.mxu0 %v1540
      %1621 = vmatmul.bf16.gmra.mxu0 %v1444
      %v1622 = vpop.f32.mrf.mxu0
      %v1623 = vadd.f32 0.0, %v1622
      %v1624 = vpop.f32.mrf.mxu0
      %v1625 = vadd.f32 0.0, %v1624
      %1626 = vmatmul.bf16.gmra.mxu0 %v1446
      %v1627 = vpop.f32.mrf.mxu0
      %v1628 = vadd.f32 0.0, %v1627
      %v1629 = vpop.f32.mrf.mxu0
      %v1630 = vadd.f32 0.0, %v1629
      %1631 = vmatmul.bf16.gmra.mxu0 %v1448
      %v1632 = vpop.f32.mrf.mxu0
      %v1633 = vadd.f32 0.0, %v1632
      %v1634 = vpop.f32.mrf.mxu0
      %v1635 = vadd.f32 0.0, %v1634
      %1636 = vmatmul.bf16.gmra.mxu0 %v1450
      %v1637 = vpop.f32.mrf.mxu0
      %v1638 = vadd.f32 0.0, %v1637
      %v1639 = vpop.f32.mrf.mxu0
      %v1640 = vadd.f32 0.0, %v1639
      %1641 = vmatmul.bf16.gmra.mxu0 %v1452
      %v1642 = vpop.f32.mrf.mxu0
      %v1643 = vadd.f32 0.0, %v1642
      %v1644 = vpop.f32.mrf.mxu0
      %v1645 = vadd.f32 0.0, %v1644
      %1646 = vmatmul.bf16.gmra.mxu0 %v1454
      %v1647 = vpop.f32.mrf.mxu0
      %v1648 = vadd.f32 0.0, %v1647
      %v1649 = vpop.f32.mrf.mxu0
      %v1650 = vadd.f32 0.0, %v1649
      %1651 = vmatmul.bf16.gmra.mxu0 %v1456
      %v1652 = vpop.f32.mrf.mxu0
      %v1653 = vadd.f32 0.0, %v1652
      %v1654 = vpop.f32.mrf.mxu0
      %v1655 = vadd.f32 0.0, %v1654
      %1656 = vmatmul.bf16.gmra.mxu0 %v1458
      %v1657 = vpop.f32.mrf.mxu0
      %v1658 = vadd.f32 0.0, %v1657
      %v1659 = vpop.f32.mrf.mxu0
      %v1660 = vadd.f32 0.0, %v1659
      %1661 = vmatmul.bf16.gmra.mxu0 %v1460
      %v1662 = vpop.f32.mrf.mxu0
      %v1663 = vadd.f32 0.0, %v1662
      %v1664 = vpop.f32.mrf.mxu0
      %v1665 = vadd.f32 0.0, %v1664
      %1666 = vmatmul.bf16.gmra.mxu0 %v1462
      %v1667 = vpop.f32.mrf.mxu0
      %v1668 = vadd.f32 0.0, %v1667
      %v1669 = vpop.f32.mrf.mxu0
      %v1670 = vadd.f32 0.0, %v1669
      %1671 = vmatmul.bf16.gmra.mxu0 %v1464
      %v1672 = vpop.f32.mrf.mxu0
      %v1673 = vadd.f32 0.0, %v1672
      %v1674 = vpop.f32.mrf.mxu0
      %v1675 = vadd.f32 0.0, %v1674
      %1676 = vmatmul.bf16.gmra.mxu0 %v1466
      %v1677 = vpop.f32.mrf.mxu0
      %v1678 = vadd.f32 0.0, %v1677
      %v1679 = vpop.f32.mrf.mxu0
      %v1680 = vadd.f32 0.0, %v1679
      %1681 = vmatmul.bf16.gmra.mxu0 %v1468
      %v1682 = vpop.f32.mrf.mxu0
      %v1683 = vadd.f32 0.0, %v1682
      %v1684 = vpop.f32.mrf.mxu0
      %v1685 = vadd.f32 0.0, %v1684
      %1686 = vmatmul.bf16.gmra.mxu0 %v1470
      %v1687 = vpop.f32.mrf.mxu0
      %v1688 = vadd.f32 0.0, %v1687
      %v1689 = vpop.f32.mrf.mxu0
      %v1690 = vadd.f32 0.0, %v1689
      %1691 = vmatmul.bf16.gmra.mxu0 %v1472
      %v1692 = vpop.f32.mrf.mxu0
      %v1693 = vadd.f32 0.0, %v1692
      %v1694 = vpop.f32.mrf.mxu0
      %v1695 = vadd.f32 0.0, %v1694
      %1696 = vmatmul.bf16.gmra.mxu0 %v1474
      %v1697 = vpop.f32.mrf.mxu0
      %v1698 = vadd.f32 0.0, %v1697
      %v1699 = vpop.f32.mrf.mxu0
      %v1700 = vadd.f32 0.0, %v1699
      %1701 = vdwg.mxu0
      %1702 = vmatpush.bf16.msra.mxu0 0
      %1703 = vmatpush.bf16.msra.mxu0 0
      %1704 = vmatpush.bf16.msra.mxu0 0
      %1705 = vmatpush.bf16.msra.mxu0 0
      %1706 = vmatpush.bf16.msra.mxu0 %v1551
      %1707 = vmatpush.bf16.msra.mxu0 %v1550
      %1708 = vmatpush.bf16.msra.mxu0 %v1549
      %1709 = vmatpush.bf16.msra.mxu0 %v1548
      %1710 = vmatmul.bf16.gmra.mxu0 %v1566
      %v1711 = vpop.f32.mrf.mxu0
      %v1712 = vadd.f32 %v1623, %v1711
      %v1713 = vpop.f32.mrf.mxu0
      %v1714 = vadd.f32 %v1625, %v1713
      %1715 = vmatmul.bf16.gmra.mxu0 %v1569
      %v1716 = vpop.f32.mrf.mxu0
      %v1717 = vadd.f32 %v1628, %v1716
      %v1718 = vpop.f32.mrf.mxu0
      %v1719 = vadd.f32 %v1630, %v1718
      %1720 = vmatmul.bf16.gmra.mxu0 %v1572
      %v1721 = vpop.f32.mrf.mxu0
      %v1722 = vadd.f32 %v1633, %v1721
      %v1723 = vpop.f32.mrf.mxu0
      %v1724 = vadd.f32 %v1635, %v1723
      %1725 = vmatmul.bf16.gmra.mxu0 %v1575
      %v1726 = vpop.f32.mrf.mxu0
      %v1727 = vadd.f32 %v1638, %v1726
      %v1728 = vpop.f32.mrf.mxu0
      %v1729 = vadd.f32 %v1640, %v1728
      %1730 = vmatmul.bf16.gmra.mxu0 %v1578
      %v1731 = vpop.f32.mrf.mxu0
      %v1732 = vadd.f32 %v1643, %v1731
      %v1733 = vpop.f32.mrf.mxu0
      %v1734 = vadd.f32 %v1645, %v1733
      %1735 = vmatmul.bf16.gmra.mxu0 %v1581
      %v1736 = vpop.f32.mrf.mxu0
      %v1737 = vadd.f32 %v1648, %v1736
      %v1738 = vpop.f32.mrf.mxu0
      %v1739 = vadd.f32 %v1650, %v1738
      %1740 = vmatmul.bf16.gmra.mxu0 %v1584
      %v1741 = vpop.f32.mrf.mxu0
      %v1742 = vadd.f32 %v1653, %v1741
      %v1743 = vpop.f32.mrf.mxu0
      %v1744 = vadd.f32 %v1655, %v1743
      %1745 = vmatmul.bf16.gmra.mxu0 %v1587
      %v1746 = vpop.f32.mrf.mxu0
      %v1747 = vadd.f32 %v1658, %v1746
      %v1748 = vpop.f32.mrf.mxu0
      %v1749 = vadd.f32 %v1660, %v1748
      %1750 = vmatmul.bf16.gmra.mxu0 %v1590
      %v1751 = vpop.f32.mrf.mxu0
      %v1752 = vadd.f32 %v1663, %v1751
      %v1753 = vpop.f32.mrf.mxu0
      %v1754 = vadd.f32 %v1665, %v1753
      %1755 = vmatmul.bf16.gmra.mxu0 %v1593
      %v1756 = vpop.f32.mrf.mxu0
      %v1757 = vadd.f32 %v1668, %v1756
      %v1758 = vpop.f32.mrf.mxu0
      %v1759 = vadd.f32 %v1670, %v1758
      %1760 = vmatmul.bf16.gmra.mxu0 %v1596
      %v1761 = vpop.f32.mrf.mxu0
      %v1762 = vadd.f32 %v1673, %v1761
      %v1763 = vpop.f32.mrf.mxu0
      %v1764 = vadd.f32 %v1675, %v1763
      %1765 = vmatmul.bf16.gmra.mxu0 %v1599
      %v1766 = vpop.f32.mrf.mxu0
      %v1767 = vadd.f32 %v1678, %v1766
      %v1768 = vpop.f32.mrf.mxu0
      %v1769 = vadd.f32 %v1680, %v1768
      %1770 = vmatmul.bf16.gmra.mxu0 %v1602
      %v1771 = vpop.f32.mrf.mxu0
      %v1772 = vadd.f32 %v1683, %v1771
      %v1773 = vpop.f32.mrf.mxu0
      %v1774 = vadd.f32 %v1685, %v1773
      %1775 = vmatmul.bf16.gmra.mxu0 %v1605
      %v1776 = vpop.f32.mrf.mxu0
      %v1777 = vadd.f32 %v1688, %v1776
      %v1778 = vpop.f32.mrf.mxu0
      %v1779 = vadd.f32 %v1690, %v1778
      %1780 = vmatmul.bf16.gmra.mxu0 %v1608
      %v1781 = vpop.f32.mrf.mxu0
      %v1782 = vadd.f32 %v1693, %v1781
      %v1783 = vpop.f32.mrf.mxu0
      %v1784 = vadd.f32 %v1695, %v1783
      %1785 = vmatmul.bf16.gmra.mxu0 %v1611
      %v1786 = vpop.f32.mrf.mxu0
      %v1787 = vadd.f32 %v1698, %v1786
      %v1788 = vpop.f32.mrf.mxu0
      %v1789 = vadd.f32 %v1700, %v1788
      %1790 = vdwg.mxu0
      %v1795 = vunpack.c.l.b16 %v1263
      %v1796 = vunpack.c.h.b16 %v1263
      %v1797 = vunpack.c.l.b16 %v1264
      %v1798 = vunpack.c.h.b16 %v1264
      %v1799 = vunpack.c.l.b16 %v1265
      %v1800 = vunpack.c.h.b16 %v1265
      %v1801 = vunpack.c.l.b16 %v1266
      %v1802 = vunpack.c.h.b16 %v1266
      %v1803 = vpack.c.b16 %v1797, %v1795
      %v1804 = vpack.c.b16 %v1798, %v1796
      %v1805 = vpack.c.b16 %v1801, %v1799
      %v1806 = vpack.c.b16 %v1802, %v1800
      %v1833 = vunpack.c.l.b16 %v1295
      %v1834 = vunpack.c.l.b16 %v1296
      %v1835 = vunpack.c.l.b16 %v1297
      %v1836 = vunpack.c.l.b16 %v1298
      %v1837 = vunpack.c.l.b16 %v1299
      %v1838 = vunpack.c.l.b16 %v1300
      %v1839 = vunpack.c.l.b16 %v1301
      %v1840 = vunpack.c.l.b16 %v1302
      %v1841 = vunpack.c.l.b16 %v1303
      %v1842 = vunpack.c.l.b16 %v1304
      %v1843 = vunpack.c.l.b16 %v1305
      %v1844 = vunpack.c.l.b16 %v1306
      %v1845 = vunpack.c.l.b16 %v1307
      %v1846 = vunpack.c.l.b16 %v1308
      %v1847 = vunpack.c.l.b16 %v1309
      %v1848 = vunpack.c.l.b16 %v1310
      %v1849 = vunpack.c.l.b16 %v1311
      %v1850 = vunpack.c.l.b16 %v1312
      %v1851 = vunpack.c.l.b16 %v1313
      %v1852 = vunpack.c.l.b16 %v1314
      %v1853 = vunpack.c.l.b16 %v1315
      %v1854 = vunpack.c.l.b16 %v1316
      %v1855 = vunpack.c.l.b16 %v1317
      %v1856 = vunpack.c.l.b16 %v1318
      %v1857 = vpack.c.b16 %v1834, %v1833
      %v1858 = vpack.c.b16 %v1836, %v1835
      %v1859 = vpack.c.b16 %v1838, %v1837
      %v1860 = vpack.c.b16 %v1840, %v1839
      %v1861 = vpack.c.b16 %v1842, %v1841
      %v1862 = vpack.c.b16 %v1844, %v1843
      %v1863 = vpack.c.b16 %v1846, %v1845
      %v1864 = vpack.c.b16 %v1848, %v1847
      %v1865 = vpack.c.b16 %v1850, %v1849
      %v1866 = vpack.c.b16 %v1852, %v1851
      %v1867 = vpack.c.b16 %v1854, %v1853
      %v1868 = vpack.c.b16 %v1856, %v1855
      %v1882 = vsel %vm1564, %v1804, 0
      %v1885 = vsel %vm1564, %v1806, 0
      %1887 = vmatpush.bf16.msra.mxu0 %v1864
      %1888 = vmatpush.bf16.msra.mxu0 %v1863
      %1889 = vmatpush.bf16.msra.mxu0 %v1862
      %1890 = vmatpush.bf16.msra.mxu0 %v1861
      %1891 = vmatpush.bf16.msra.mxu0 %v1860
      %1892 = vmatpush.bf16.msra.mxu0 %v1859
      %1893 = vmatpush.bf16.msra.mxu0 %v1858
      %1894 = vmatpush.bf16.msra.mxu0 %v1857
      %1895 = vmatmul.bf16.gmra.mxu0 %v1803
      %v1896 = vpop.f32.mrf.mxu0
      %v1897 = vadd.f32 %v1712, %v1896
      %v1898 = vpop.f32.mrf.mxu0
      %v1899 = vadd.f32 %v1714, %v1898
      %1900 = vmatmul.bf16.gmra.mxu0 %v1805
      %v1901 = vpop.f32.mrf.mxu0
      %v1902 = vadd.f32 %v1717, %v1901
      %v1903 = vpop.f32.mrf.mxu0
      %v1904 = vadd.f32 %v1719, %v1903
      %1905 = vmatmul.bf16.gmra.mxu0 %v1444
      %v1906 = vpop.f32.mrf.mxu0
      %v1907 = vadd.f32 %v1722, %v1906
      %v1908 = vpop.f32.mrf.mxu0
      %v1909 = vadd.f32 %v1724, %v1908
      %1910 = vmatmul.bf16.gmra.mxu0 %v1446
      %v1911 = vpop.f32.mrf.mxu0
      %v1912 = vadd.f32 %v1727, %v1911
      %v1913 = vpop.f32.mrf.mxu0
      %v1914 = vadd.f32 %v1729, %v1913
      %1915 = vmatmul.bf16.gmra.mxu0 %v1448
      %v1916 = vpop.f32.mrf.mxu0
      %v1917 = vadd.f32 %v1732, %v1916
      %v1918 = vpop.f32.mrf.mxu0
      %v1919 = vadd.f32 %v1734, %v1918
      %1920 = vmatmul.bf16.gmra.mxu0 %v1450
      %v1921 = vpop.f32.mrf.mxu0
      %v1922 = vadd.f32 %v1737, %v1921
      %v1923 = vpop.f32.mrf.mxu0
      %v1924 = vadd.f32 %v1739, %v1923
      %1925 = vmatmul.bf16.gmra.mxu0 %v1452
      %v1926 = vpop.f32.mrf.mxu0
      %v1927 = vadd.f32 %v1742, %v1926
      %v1928 = vpop.f32.mrf.mxu0
      %v1929 = vadd.f32 %v1744, %v1928
      %1930 = vmatmul.bf16.gmra.mxu0 %v1454
      %v1931 = vpop.f32.mrf.mxu0
      %v1932 = vadd.f32 %v1747, %v1931
      %v1933 = vpop.f32.mrf.mxu0
      %v1934 = vadd.f32 %v1749, %v1933
      %1935 = vmatmul.bf16.gmra.mxu0 %v1456
      %v1936 = vpop.f32.mrf.mxu0
      %v1937 = vadd.f32 %v1752, %v1936
      %v1938 = vpop.f32.mrf.mxu0
      %v1939 = vadd.f32 %v1754, %v1938
      %1940 = vmatmul.bf16.gmra.mxu0 %v1458
      %v1941 = vpop.f32.mrf.mxu0
      %v1942 = vadd.f32 %v1757, %v1941
      %v1943 = vpop.f32.mrf.mxu0
      %v1944 = vadd.f32 %v1759, %v1943
      %1945 = vmatmul.bf16.gmra.mxu0 %v1460
      %v1946 = vpop.f32.mrf.mxu0
      %v1947 = vadd.f32 %v1762, %v1946
      %v1948 = vpop.f32.mrf.mxu0
      %v1949 = vadd.f32 %v1764, %v1948
      %1950 = vmatmul.bf16.gmra.mxu0 %v1462
      %v1951 = vpop.f32.mrf.mxu0
      %v1952 = vadd.f32 %v1767, %v1951
      %v1953 = vpop.f32.mrf.mxu0
      %v1954 = vadd.f32 %v1769, %v1953
      %1955 = vmatmul.bf16.gmra.mxu0 %v1464
      %v1956 = vpop.f32.mrf.mxu0
      %v1957 = vadd.f32 %v1772, %v1956
      %v1958 = vpop.f32.mrf.mxu0
      %v1959 = vadd.f32 %v1774, %v1958
      %1960 = vmatmul.bf16.gmra.mxu0 %v1466
      %v1961 = vpop.f32.mrf.mxu0
      %v1962 = vadd.f32 %v1777, %v1961
      %v1963 = vpop.f32.mrf.mxu0
      %v1964 = vadd.f32 %v1779, %v1963
      %1965 = vmatmul.bf16.gmra.mxu0 %v1468
      %v1966 = vpop.f32.mrf.mxu0
      %v1967 = vadd.f32 %v1782, %v1966
      %v1968 = vpop.f32.mrf.mxu0
      %v1969 = vadd.f32 %v1784, %v1968
      %1970 = vmatmul.bf16.gmra.mxu0 %v1470
      %v1971 = vpop.f32.mrf.mxu0
      %v1972 = vadd.f32 %v1787, %v1971
      %v1973 = vpop.f32.mrf.mxu0
      %v1974 = vadd.f32 %v1789, %v1973
      %1975 = vdwg.mxu0
      %1976 = vmatpush.bf16.msra.mxu0 0
      %1977 = vmatpush.bf16.msra.mxu0 0
      %1978 = vmatpush.bf16.msra.mxu0 0
      %1979 = vmatpush.bf16.msra.mxu0 0
      %1980 = vmatpush.bf16.msra.mxu0 %v1868
      %1981 = vmatpush.bf16.msra.mxu0 %v1867
      %1982 = vmatpush.bf16.msra.mxu0 %v1866
      %1983 = vmatpush.bf16.msra.mxu0 %v1865
      %1984 = vmatmul.bf16.gmra.mxu0 %v1882
      %v1985 = vpop.f32.mrf.mxu0
      %v1986 = vadd.f32 %v1897, %v1985
      %v1987 = vpop.f32.mrf.mxu0
      %v1988 = vadd.f32 %v1899, %v1987
      %1989 = vmatmul.bf16.gmra.mxu0 %v1885
      %v1990 = vpop.f32.mrf.mxu0
      %v1991 = vadd.f32 %v1902, %v1990
      %v1992 = vpop.f32.mrf.mxu0
      %v1993 = vadd.f32 %v1904, %v1992
      %1994 = vmatmul.bf16.gmra.mxu0 %v1566
      %v1995 = vpop.f32.mrf.mxu0
      %v1996 = vadd.f32 %v1907, %v1995
      %v1997 = vpop.f32.mrf.mxu0
      %v1998 = vadd.f32 %v1909, %v1997
      %1999 = vmatmul.bf16.gmra.mxu0 %v1569
      %v2000 = vpop.f32.mrf.mxu0
      %v2001 = vadd.f32 %v1912, %v2000
      %v2002 = vpop.f32.mrf.mxu0
      %v2003 = vadd.f32 %v1914, %v2002
      %2004 = vmatmul.bf16.gmra.mxu0 %v1572
      %v2005 = vpop.f32.mrf.mxu0
      %v2006 = vadd.f32 %v1917, %v2005
      %v2007 = vpop.f32.mrf.mxu0
      %v2008 = vadd.f32 %v1919, %v2007
      %2009 = vmatmul.bf16.gmra.mxu0 %v1575
      %v2010 = vpop.f32.mrf.mxu0
      %v2011 = vadd.f32 %v1922, %v2010
      %v2012 = vpop.f32.mrf.mxu0
      %v2013 = vadd.f32 %v1924, %v2012
      %2014 = vmatmul.bf16.gmra.mxu0 %v1578
      %v2015 = vpop.f32.mrf.mxu0
      %v2016 = vadd.f32 %v1927, %v2015
      %v2017 = vpop.f32.mrf.mxu0
      %v2018 = vadd.f32 %v1929, %v2017
      %2019 = vmatmul.bf16.gmra.mxu0 %v1581
      %v2020 = vpop.f32.mrf.mxu0
      %v2021 = vadd.f32 %v1932, %v2020
      %v2022 = vpop.f32.mrf.mxu0
      %v2023 = vadd.f32 %v1934, %v2022
      %2024 = vmatmul.bf16.gmra.mxu0 %v1584
      %v2025 = vpop.f32.mrf.mxu0
      %v2026 = vadd.f32 %v1937, %v2025
      %v2027 = vpop.f32.mrf.mxu0
      %v2028 = vadd.f32 %v1939, %v2027
      %2029 = vmatmul.bf16.gmra.mxu0 %v1587
      %v2030 = vpop.f32.mrf.mxu0
      %v2031 = vadd.f32 %v1942, %v2030
      %v2032 = vpop.f32.mrf.mxu0
      %v2033 = vadd.f32 %v1944, %v2032
      %2034 = vmatmul.bf16.gmra.mxu0 %v1590
      %v2035 = vpop.f32.mrf.mxu0
      %v2036 = vadd.f32 %v1947, %v2035
      %v2037 = vpop.f32.mrf.mxu0
      %v2038 = vadd.f32 %v1949, %v2037
      %2039 = vmatmul.bf16.gmra.mxu0 %v1593
      %v2040 = vpop.f32.mrf.mxu0
      %v2041 = vadd.f32 %v1952, %v2040
      %v2042 = vpop.f32.mrf.mxu0
      %v2043 = vadd.f32 %v1954, %v2042
      %2044 = vmatmul.bf16.gmra.mxu0 %v1596
      %v2045 = vpop.f32.mrf.mxu0
      %v2046 = vadd.f32 %v1957, %v2045
      %v2047 = vpop.f32.mrf.mxu0
      %v2048 = vadd.f32 %v1959, %v2047
      %2049 = vmatmul.bf16.gmra.mxu0 %v1599
      %v2050 = vpop.f32.mrf.mxu0
      %v2051 = vadd.f32 %v1962, %v2050
      %v2052 = vpop.f32.mrf.mxu0
      %v2053 = vadd.f32 %v1964, %v2052
      %2054 = vmatmul.bf16.gmra.mxu0 %v1602
      %v2055 = vpop.f32.mrf.mxu0
      %v2056 = vadd.f32 %v1967, %v2055
      %v2057 = vpop.f32.mrf.mxu0
      %v2058 = vadd.f32 %v1969, %v2057
      %2059 = vmatmul.bf16.gmra.mxu0 %v1605
      %v2060 = vpop.f32.mrf.mxu0
      %v2061 = vadd.f32 %v1972, %v2060
      %v2062 = vpop.f32.mrf.mxu0
      %v2063 = vadd.f32 %v1974, %v2062
      %2064 = vdwg.mxu0
      %v2065 = vld [vmem:[#allocation2 + $0x40] sm:$0xff]
      %v2066 = vld [vmem:[#allocation2 + $0x48] sm:$0xff]
      %v2067 = vld [vmem:[#allocation2 + $0x50] sm:$0xff]
      %v2068 = vld [vmem:[#allocation2 + $0x58] sm:$0xff]
      %v2069 = vld [vmem:[#allocation2 + $0x60] sm:$0xff]
      %v2070 = vld [vmem:[#allocation2 + $0x68] sm:$0xff]
      %v2071 = vld [vmem:[#allocation2 + $0x70] sm:$0xff]
      %v2072 = vld [vmem:[#allocation2 + $0x78] sm:$0xff]
      %v2073 = vld [vmem:[#allocation2 + $0x80] sm:$0xff]
      %v2074 = vld [vmem:[#allocation2 + $0x88] sm:$0xff]
      %v2075 = vld [vmem:[#allocation2 + $0x90] sm:$0xff]
      %v2076 = vld [vmem:[#allocation2 + $0x98] sm:$0xff]
      %v2077 = vld [vmem:[#allocation2 + $0xa0] sm:$0xff]
      %v2078 = vld [vmem:[#allocation2 + $0xa8] sm:$0xff]
      %v2079 = vld [vmem:[#allocation2 + $0xb0] sm:$0xff]
      %v2080 = vld [vmem:[#allocation2 + $0xb8] sm:$0xff]
      %v2081 = vld [vmem:[#allocation2 + $0xc0] sm:$0xff]
      %v2082 = vld [vmem:[#allocation2 + $0xc8] sm:$0xff]
      %v2083 = vld [vmem:[#allocation2 + $0xd0] sm:$0xff]
      %v2084 = vld [vmem:[#allocation2 + $0xd8] sm:$0xff]
      %v2085 = vld [vmem:[#allocation2 + $0xe0] sm:$0xff]
      %v2086 = vld [vmem:[#allocation2 + $0xe8] sm:$0xff]
      %v2087 = vld [vmem:[#allocation2 + $0xf0] sm:$0xff]
      %v2088 = vld [vmem:[#allocation2 + $0xf8] sm:$0xff]
      %v2089 = vld [vmem:[#allocation2 + $0x100] sm:$0xff]
      %v2090 = vld [vmem:[#allocation2 + $0x108] sm:$0xff]
      %v2091 = vld [vmem:[#allocation2 + $0x110] sm:$0xff]
      %v2092 = vld [vmem:[#allocation2 + $0x118] sm:$0xff]
      %v2093 = vld [vmem:[#allocation2 + $0x120] sm:$0xff]
      %v2094 = vld [vmem:[#allocation2 + $0x128] sm:$0xff]
      %v2095 = vld [vmem:[#allocation2 + $0x130] sm:$0xff]
      %v2096 = vld [vmem:[#allocation2 + $0x138] sm:$0xff]
      %s2097 = scalar_lea.vmem %s1, 192
      %v2098 = vld [vmem:[%s2097] sm:$0xf]
      %v2099 = vld [vmem:[%s2097 + $0x4] sm:$0xf]
      %v2100 = vld [vmem:[%s2097 + $0x8] sm:$0xf]
      %v2101 = vld [vmem:[%s2097 + $0xc] sm:$0xf]
      %v2102 = vld [vmem:[%s2097 + $0x10] sm:$0xf]
      %v2103 = vld [vmem:[%s2097 + $0x14] sm:$0xf]
      %v2104 = vld [vmem:[%s2097 + $0x18] sm:$0xf]
      %v2105 = vld [vmem:[%s2097 + $0x1c] sm:$0xf]
      %v2106 = vld [vmem:[%s2097 + $0x20] sm:$0xf]
      %v2107 = vld [vmem:[%s2097 + $0x24] sm:$0xf]
      %v2108 = vld [vmem:[%s2097 + $0x28] sm:$0xf]
      %v2109 = vld [vmem:[%s2097 + $0x2c] sm:$0xf]
      %v2110 = vld [vmem:[%s2097 + $0x30] sm:$0xf]
      %v2111 = vld [vmem:[%s2097 + $0x34] sm:$0xf]
      %v2112 = vld [vmem:[%s2097 + $0x38] sm:$0xf]
      %v2113 = vld [vmem:[%s2097 + $0x3c] sm:$0xf]
      %v2114 = vld [vmem:[%s2097 + $0x40] sm:$0xf]
      %v2115 = vld [vmem:[%s2097 + $0x44] sm:$0xf]
      %v2116 = vld [vmem:[%s2097 + $0x48] sm:$0xf]
      %v2117 = vld [vmem:[%s2097 + $0x4c] sm:$0xf]
      %v2118 = vld [vmem:[%s2097 + $0x50] sm:$0xf]
      %v2119 = vld [vmem:[%s2097 + $0x54] sm:$0xf]
      %v2120 = vld [vmem:[%s2097 + $0x58] sm:$0xf]
      %v2121 = vld [vmem:[%s2097 + $0x5c] sm:$0xf]
      %v2154 = vunpack.c.l.b16 %v2065
      %v2155 = vunpack.c.h.b16 %v2065
      %v2156 = vunpack.c.l.b16 %v2066
      %v2157 = vunpack.c.h.b16 %v2066
      %v2158 = vunpack.c.l.b16 %v2067
      %v2159 = vunpack.c.h.b16 %v2067
      %v2160 = vunpack.c.l.b16 %v2068
      %v2161 = vunpack.c.h.b16 %v2068
      %v2162 = vunpack.c.l.b16 %v2069
      %v2163 = vunpack.c.h.b16 %v2069
      %v2164 = vunpack.c.l.b16 %v2070
      %v2165 = vunpack.c.h.b16 %v2070
      %v2166 = vunpack.c.l.b16 %v2071
      %v2167 = vunpack.c.h.b16 %v2071
      %v2168 = vunpack.c.l.b16 %v2072
      %v2169 = vunpack.c.h.b16 %v2072
      %v2170 = vunpack.c.l.b16 %v2073
      %v2171 = vunpack.c.h.b16 %v2073
      %v2172 = vunpack.c.l.b16 %v2074
      %v2173 = vunpack.c.h.b16 %v2074
      %v2174 = vunpack.c.l.b16 %v2075
      %v2175 = vunpack.c.h.b16 %v2075
      %v2176 = vunpack.c.l.b16 %v2076
      %v2177 = vunpack.c.h.b16 %v2076
      %v2178 = vunpack.c.l.b16 %v2077
      %v2179 = vunpack.c.h.b16 %v2077
      %v2180 = vunpack.c.l.b16 %v2078
      %v2181 = vunpack.c.h.b16 %v2078
      %v2182 = vunpack.c.l.b16 %v2079
      %v2183 = vunpack.c.h.b16 %v2079
      %v2184 = vunpack.c.l.b16 %v2080
      %v2185 = vunpack.c.h.b16 %v2080
      %v2186 = vunpack.c.l.b16 %v2081
      %v2187 = vunpack.c.h.b16 %v2081
      %v2188 = vunpack.c.l.b16 %v2082
      %v2189 = vunpack.c.h.b16 %v2082
      %v2190 = vunpack.c.l.b16 %v2083
      %v2191 = vunpack.c.h.b16 %v2083
      %v2192 = vunpack.c.l.b16 %v2084
      %v2193 = vunpack.c.h.b16 %v2084
      %v2194 = vunpack.c.l.b16 %v2085
      %v2195 = vunpack.c.h.b16 %v2085
      %v2196 = vunpack.c.l.b16 %v2086
      %v2197 = vunpack.c.h.b16 %v2086
      %v2198 = vunpack.c.l.b16 %v2087
      %v2199 = vunpack.c.h.b16 %v2087
      %v2200 = vunpack.c.l.b16 %v2088
      %v2201 = vunpack.c.h.b16 %v2088
      %v2202 = vunpack.c.l.b16 %v2089
      %v2203 = vunpack.c.h.b16 %v2089
      %v2204 = vunpack.c.l.b16 %v2090
      %v2205 = vunpack.c.h.b16 %v2090
      %v2206 = vunpack.c.l.b16 %v2091
      %v2207 = vunpack.c.h.b16 %v2091
      %v2208 = vunpack.c.l.b16 %v2092
      %v2209 = vunpack.c.h.b16 %v2092
      %v2210 = vunpack.c.l.b16 %v2093
      %v2211 = vunpack.c.h.b16 %v2093
      %v2212 = vunpack.c.l.b16 %v2094
      %v2213 = vunpack.c.h.b16 %v2094
      %v2214 = vunpack.c.l.b16 %v2095
      %v2215 = vunpack.c.h.b16 %v2095
      %v2216 = vunpack.c.l.b16 %v2096
      %v2217 = vunpack.c.h.b16 %v2096
      %v2218 = vpack.c.b16 %v2156, %v2154
      %v2219 = vpack.c.b16 %v2157, %v2155
      %v2220 = vpack.c.b16 %v2160, %v2158
      %v2221 = vpack.c.b16 %v2161, %v2159
      %v2222 = vpack.c.b16 %v2164, %v2162
      %v2223 = vpack.c.b16 %v2165, %v2163
      %v2224 = vpack.c.b16 %v2168, %v2166
      %v2225 = vpack.c.b16 %v2169, %v2167
      %v2226 = vpack.c.b16 %v2172, %v2170
      %v2227 = vpack.c.b16 %v2173, %v2171
      %v2228 = vpack.c.b16 %v2176, %v2174
      %v2229 = vpack.c.b16 %v2177, %v2175
      %v2230 = vpack.c.b16 %v2180, %v2178
      %v2231 = vpack.c.b16 %v2181, %v2179
      %v2232 = vpack.c.b16 %v2184, %v2182
      %v2233 = vpack.c.b16 %v2185, %v2183
      %v2234 = vpack.c.b16 %v2188, %v2186
      %v2235 = vpack.c.b16 %v2189, %v2187
      %v2236 = vpack.c.b16 %v2192, %v2190
      %v2237 = vpack.c.b16 %v2193, %v2191
      %v2238 = vpack.c.b16 %v2196, %v2194
      %v2239 = vpack.c.b16 %v2197, %v2195
      %v2240 = vpack.c.b16 %v2200, %v2198
      %v2241 = vpack.c.b16 %v2201, %v2199
      %v2242 = vpack.c.b16 %v2204, %v2202
      %v2243 = vpack.c.b16 %v2205, %v2203
      %v2244 = vpack.c.b16 %v2208, %v2206
      %v2245 = vpack.c.b16 %v2209, %v2207
      %v2246 = vpack.c.b16 %v2212, %v2210
      %v2247 = vpack.c.b16 %v2213, %v2211
      %v2248 = vpack.c.b16 %v2216, %v2214
      %v2249 = vpack.c.b16 %v2217, %v2215
      %v2290 = vunpack.c.l.b16 %v2098
      %v2291 = vunpack.c.l.b16 %v2099
      %v2292 = vunpack.c.l.b16 %v2100
      %v2293 = vunpack.c.l.b16 %v2101
      %v2294 = vunpack.c.l.b16 %v2102
      %v2295 = vunpack.c.l.b16 %v2103
      %v2296 = vunpack.c.l.b16 %v2104
      %v2297 = vunpack.c.l.b16 %v2105
      %v2298 = vunpack.c.l.b16 %v2106
      %v2299 = vunpack.c.l.b16 %v2107
      %v2300 = vunpack.c.l.b16 %v2108
      %v2301 = vunpack.c.l.b16 %v2109
      %v2302 = vunpack.c.l.b16 %v2110
      %v2303 = vunpack.c.l.b16 %v2111
      %v2304 = vunpack.c.l.b16 %v2112
      %v2305 = vunpack.c.l.b16 %v2113
      %v2306 = vunpack.c.l.b16 %v2114
      %v2307 = vunpack.c.l.b16 %v2115
      %v2308 = vunpack.c.l.b16 %v2116
      %v2309 = vunpack.c.l.b16 %v2117
      %v2310 = vunpack.c.l.b16 %v2118
      %v2311 = vunpack.c.l.b16 %v2119
      %v2312 = vunpack.c.l.b16 %v2120
      %v2313 = vunpack.c.l.b16 %v2121
      %v2314 = vpack.c.b16 %v2291, %v2290
      %v2315 = vpack.c.b16 %v2293, %v2292
      %v2316 = vpack.c.b16 %v2295, %v2294
      %v2317 = vpack.c.b16 %v2297, %v2296
      %v2318 = vpack.c.b16 %v2299, %v2298
      %v2319 = vpack.c.b16 %v2301, %v2300
      %v2320 = vpack.c.b16 %v2303, %v2302
      %v2321 = vpack.c.b16 %v2305, %v2304
      %v2322 = vpack.c.b16 %v2307, %v2306
      %v2323 = vpack.c.b16 %v2309, %v2308
      %v2324 = vpack.c.b16 %v2311, %v2310
      %v2325 = vpack.c.b16 %v2313, %v2312
      %v2339 = vsel %vm1564, %v2219, 0
      %v2342 = vsel %vm1564, %v2221, 0
      %v2345 = vsel %vm1564, %v2223, 0
      %v2348 = vsel %vm1564, %v2225, 0
      %v2351 = vsel %vm1564, %v2227, 0
      %v2354 = vsel %vm1564, %v2229, 0
      %v2357 = vsel %vm1564, %v2231, 0
      %v2360 = vsel %vm1564, %v2233, 0
      %v2363 = vsel %vm1564, %v2235, 0
      %v2366 = vsel %vm1564, %v2237, 0
      %v2369 = vsel %vm1564, %v2239, 0
      %v2372 = vsel %vm1564, %v2241, 0
      %v2375 = vsel %vm1564, %v2243, 0
      %v2378 = vsel %vm1564, %v2245, 0
      %v2381 = vsel %vm1564, %v2247, 0
      %v2384 = vsel %vm1564, %v2249, 0
      %2386 = vmatpush.bf16.msra.mxu0 %v2321
      %2387 = vmatpush.bf16.msra.mxu0 %v2320
      %2388 = vmatpush.bf16.msra.mxu0 %v2319
      %2389 = vmatpush.bf16.msra.mxu0 %v2318
      %2390 = vmatpush.bf16.msra.mxu0 %v2317
      %2391 = vmatpush.bf16.msra.mxu0 %v2316
      %2392 = vmatpush.bf16.msra.mxu0 %v2315
      %2393 = vmatpush.bf16.msra.mxu0 %v2314
      %2394 = vmatmul.bf16.gmra.mxu0 %v2218
      %v2395 = vpop.f32.mrf.mxu0
      %v2396 = vadd.f32 0.0, %v2395
      %v2397 = vpop.f32.mrf.mxu0
      %v2398 = vadd.f32 0.0, %v2397
      %2399 = vmatmul.bf16.gmra.mxu0 %v2220
      %v2400 = vpop.f32.mrf.mxu0
      %v2401 = vadd.f32 0.0, %v2400
      %v2402 = vpop.f32.mrf.mxu0
      %v2403 = vadd.f32 0.0, %v2402
      %2404 = vmatmul.bf16.gmra.mxu0 %v2222
      %v2405 = vpop.f32.mrf.mxu0
      %v2406 = vadd.f32 0.0, %v2405
      %v2407 = vpop.f32.mrf.mxu0
      %v2408 = vadd.f32 0.0, %v2407
      %2409 = vmatmul.bf16.gmra.mxu0 %v2224
      %v2410 = vpop.f32.mrf.mxu0
      %v2411 = vadd.f32 0.0, %v2410
      %v2412 = vpop.f32.mrf.mxu0
      %v2413 = vadd.f32 0.0, %v2412
      %2414 = vmatmul.bf16.gmra.mxu0 %v2226
      %v2415 = vpop.f32.mrf.mxu0
      %v2416 = vadd.f32 0.0, %v2415
      %v2417 = vpop.f32.mrf.mxu0
      %v2418 = vadd.f32 0.0, %v2417
      %2419 = vmatmul.bf16.gmra.mxu0 %v2228
      %v2420 = vpop.f32.mrf.mxu0
      %v2421 = vadd.f32 0.0, %v2420
      %v2422 = vpop.f32.mrf.mxu0
      %v2423 = vadd.f32 0.0, %v2422
      %2424 = vmatmul.bf16.gmra.mxu0 %v2230
      %v2425 = vpop.f32.mrf.mxu0
      %v2426 = vadd.f32 0.0, %v2425
      %v2427 = vpop.f32.mrf.mxu0
      %v2428 = vadd.f32 0.0, %v2427
      %2429 = vmatmul.bf16.gmra.mxu0 %v2232
      %v2430 = vpop.f32.mrf.mxu0
      %v2431 = vadd.f32 0.0, %v2430
      %v2432 = vpop.f32.mrf.mxu0
      %v2433 = vadd.f32 0.0, %v2432
      %2434 = vmatmul.bf16.gmra.mxu0 %v2234
      %v2435 = vpop.f32.mrf.mxu0
      %v2436 = vadd.f32 0.0, %v2435
      %v2437 = vpop.f32.mrf.mxu0
      %v2438 = vadd.f32 0.0, %v2437
      %2439 = vmatmul.bf16.gmra.mxu0 %v2236
      %v2440 = vpop.f32.mrf.mxu0
      %v2441 = vadd.f32 0.0, %v2440
      %v2442 = vpop.f32.mrf.mxu0
      %v2443 = vadd.f32 0.0, %v2442
      %2444 = vmatmul.bf16.gmra.mxu0 %v2238
      %v2445 = vpop.f32.mrf.mxu0
      %v2446 = vadd.f32 0.0, %v2445
      %v2447 = vpop.f32.mrf.mxu0
      %v2448 = vadd.f32 0.0, %v2447
      %2449 = vmatmul.bf16.gmra.mxu0 %v2240
      %v2450 = vpop.f32.mrf.mxu0
      %v2451 = vadd.f32 0.0, %v2450
      %v2452 = vpop.f32.mrf.mxu0
      %v2453 = vadd.f32 0.0, %v2452
      %2454 = vmatmul.bf16.gmra.mxu0 %v2242
      %v2455 = vpop.f32.mrf.mxu0
      %v2456 = vadd.f32 0.0, %v2455
      %v2457 = vpop.f32.mrf.mxu0
      %v2458 = vadd.f32 0.0, %v2457
      %2459 = vmatmul.bf16.gmra.mxu0 %v2244
      %v2460 = vpop.f32.mrf.mxu0
      %v2461 = vadd.f32 0.0, %v2460
      %v2462 = vpop.f32.mrf.mxu0
      %v2463 = vadd.f32 0.0, %v2462
      %2464 = vmatmul.bf16.gmra.mxu0 %v2246
      %v2465 = vpop.f32.mrf.mxu0
      %v2466 = vadd.f32 0.0, %v2465
      %v2467 = vpop.f32.mrf.mxu0
      %v2468 = vadd.f32 0.0, %v2467
      %2469 = vmatmul.bf16.gmra.mxu0 %v2248
      %v2470 = vpop.f32.mrf.mxu0
      %v2471 = vadd.f32 0.0, %v2470
      %v2472 = vpop.f32.mrf.mxu0
      %v2473 = vadd.f32 0.0, %v2472
      %2474 = vdwg.mxu0
      %2475 = vmatpush.bf16.msra.mxu0 0
      %2476 = vmatpush.bf16.msra.mxu0 0
      %2477 = vmatpush.bf16.msra.mxu0 0
      %2478 = vmatpush.bf16.msra.mxu0 0
      %2479 = vmatpush.bf16.msra.mxu0 %v2325
      %2480 = vmatpush.bf16.msra.mxu0 %v2324
      %2481 = vmatpush.bf16.msra.mxu0 %v2323
      %2482 = vmatpush.bf16.msra.mxu0 %v2322
      %2483 = vmatmul.bf16.gmra.mxu0 %v2339
      %v2484 = vpop.f32.mrf.mxu0
      %v2485 = vadd.f32 %v2396, %v2484
      %v2486 = vpop.f32.mrf.mxu0
      %v2487 = vadd.f32 %v2398, %v2486
      %2488 = vmatmul.bf16.gmra.mxu0 %v2342
      %v2489 = vpop.f32.mrf.mxu0
      %v2490 = vadd.f32 %v2401, %v2489
      %v2491 = vpop.f32.mrf.mxu0
      %v2492 = vadd.f32 %v2403, %v2491
      %2493 = vmatmul.bf16.gmra.mxu0 %v2345
      %v2494 = vpop.f32.mrf.mxu0
      %v2495 = vadd.f32 %v2406, %v2494
      %v2496 = vpop.f32.mrf.mxu0
      %v2497 = vadd.f32 %v2408, %v2496
      %2498 = vmatmul.bf16.gmra.mxu0 %v2348
      %v2499 = vpop.f32.mrf.mxu0
      %v2500 = vadd.f32 %v2411, %v2499
      %v2501 = vpop.f32.mrf.mxu0
      %v2502 = vadd.f32 %v2413, %v2501
      %2503 = vmatmul.bf16.gmra.mxu0 %v2351
      %v2504 = vpop.f32.mrf.mxu0
      %v2505 = vadd.f32 %v2416, %v2504
      %v2506 = vpop.f32.mrf.mxu0
      %v2507 = vadd.f32 %v2418, %v2506
      %2508 = vmatmul.bf16.gmra.mxu0 %v2354
      %v2509 = vpop.f32.mrf.mxu0
      %v2510 = vadd.f32 %v2421, %v2509
      %v2511 = vpop.f32.mrf.mxu0
      %v2512 = vadd.f32 %v2423, %v2511
      %2513 = vmatmul.bf16.gmra.mxu0 %v2357
      %v2514 = vpop.f32.mrf.mxu0
      %v2515 = vadd.f32 %v2426, %v2514
      %v2516 = vpop.f32.mrf.mxu0
      %v2517 = vadd.f32 %v2428, %v2516
      %2518 = vmatmul.bf16.gmra.mxu0 %v2360
      %v2519 = vpop.f32.mrf.mxu0
      %v2520 = vadd.f32 %v2431, %v2519
      %v2521 = vpop.f32.mrf.mxu0
      %v2522 = vadd.f32 %v2433, %v2521
      %2523 = vmatmul.bf16.gmra.mxu0 %v2363
      %v2524 = vpop.f32.mrf.mxu0
      %v2525 = vadd.f32 %v2436, %v2524
      %v2526 = vpop.f32.mrf.mxu0
      %v2527 = vadd.f32 %v2438, %v2526
      %2528 = vmatmul.bf16.gmra.mxu0 %v2366
      %v2529 = vpop.f32.mrf.mxu0
      %v2530 = vadd.f32 %v2441, %v2529
      %v2531 = vpop.f32.mrf.mxu0
      %v2532 = vadd.f32 %v2443, %v2531
      %2533 = vmatmul.bf16.gmra.mxu0 %v2369
      %v2534 = vpop.f32.mrf.mxu0
      %v2535 = vadd.f32 %v2446, %v2534
      %v2536 = vpop.f32.mrf.mxu0
      %v2537 = vadd.f32 %v2448, %v2536
      %2538 = vmatmul.bf16.gmra.mxu0 %v2372
      %v2539 = vpop.f32.mrf.mxu0
      %v2540 = vadd.f32 %v2451, %v2539
      %v2541 = vpop.f32.mrf.mxu0
      %v2542 = vadd.f32 %v2453, %v2541
      %2543 = vmatmul.bf16.gmra.mxu0 %v2375
      %v2544 = vpop.f32.mrf.mxu0
      %v2545 = vadd.f32 %v2456, %v2544
      %v2546 = vpop.f32.mrf.mxu0
      %v2547 = vadd.f32 %v2458, %v2546
      %2548 = vmatmul.bf16.gmra.mxu0 %v2378
      %v2549 = vpop.f32.mrf.mxu0
      %v2550 = vadd.f32 %v2461, %v2549
      %v2551 = vpop.f32.mrf.mxu0
      %v2552 = vadd.f32 %v2463, %v2551
      %2553 = vmatmul.bf16.gmra.mxu0 %v2381
      %v2554 = vpop.f32.mrf.mxu0
      %v2555 = vadd.f32 %v2466, %v2554
      %v2556 = vpop.f32.mrf.mxu0
      %v2557 = vadd.f32 %v2468, %v2556
      %2558 = vmatmul.bf16.gmra.mxu0 %v2384
      %v2559 = vpop.f32.mrf.mxu0
      %v2560 = vadd.f32 %v2471, %v2559
      %v2561 = vpop.f32.mrf.mxu0
      %v2562 = vadd.f32 %v2473, %v2561
      %2563 = vdwg.mxu0
      %v2564 = vadd.f32 %v1986, %v2485
      %v2565 = vadd.f32 %v1988, %v2487
      %v2566 = vadd.f32 %v1991, %v2490
      %v2567 = vadd.f32 %v1993, %v2492
      %v2568 = vadd.f32 %v1996, %v2495
      %v2569 = vadd.f32 %v1998, %v2497
      %v2570 = vadd.f32 %v2001, %v2500
      %v2571 = vadd.f32 %v2003, %v2502
      %v2572 = vadd.f32 %v2006, %v2505
      %v2573 = vadd.f32 %v2008, %v2507
      %v2574 = vadd.f32 %v2011, %v2510
      %v2575 = vadd.f32 %v2013, %v2512
      %v2576 = vadd.f32 %v2016, %v2515
      %v2577 = vadd.f32 %v2018, %v2517
      %v2578 = vadd.f32 %v2021, %v2520
      %v2579 = vadd.f32 %v2023, %v2522
      %v2580 = vadd.f32 %v2026, %v2525
      %v2581 = vadd.f32 %v2028, %v2527
      %v2582 = vadd.f32 %v2031, %v2530
      %v2583 = vadd.f32 %v2033, %v2532
      %v2584 = vadd.f32 %v2036, %v2535
      %v2585 = vadd.f32 %v2038, %v2537
      %v2586 = vadd.f32 %v2041, %v2540
      %v2587 = vadd.f32 %v2043, %v2542
      %v2588 = vadd.f32 %v2046, %v2545
      %v2589 = vadd.f32 %v2048, %v2547
      %v2590 = vadd.f32 %v2051, %v2550
      %v2591 = vadd.f32 %v2053, %v2552
      %v2592 = vadd.f32 %v2056, %v2555
      %v2593 = vadd.f32 %v2058, %v2557
      %v2594 = vadd.f32 %v2061, %v2560
      %v2595 = vadd.f32 %v2063, %v2562
      %v2596 = vld [vmem:[%s2] sm:$0xff]
      %v2597 = vld [vmem:[%s2 + $0x8] sm:$0xff]
      %v2598 = vld [vmem:[%s2 + $0x10] sm:$0xff]
      %v2599 = vld [vmem:[%s2 + $0x18] sm:$0xff]
      %v2600 = vld [vmem:[%s2 + $0x20] sm:$0xff]
      %v2601 = vld [vmem:[%s2 + $0x28] sm:$0xff]
      %v2602 = vld [vmem:[%s2 + $0x30] sm:$0xff]
      %v2603 = vld [vmem:[%s2 + $0x38] sm:$0xff]
      %v2604 = vld [vmem:[%s2 + $0x40] sm:$0xff]
      %v2605 = vld [vmem:[%s2 + $0x48] sm:$0xff]
      %v2606 = vld [vmem:[%s2 + $0x50] sm:$0xff]
      %v2607 = vld [vmem:[%s2 + $0x58] sm:$0xff]
      %v2608 = vld [vmem:[%s2 + $0x60] sm:$0xff]
      %v2609 = vld [vmem:[%s2 + $0x68] sm:$0xff]
      %v2610 = vld [vmem:[%s2 + $0x70] sm:$0xff]
      %v2611 = vld [vmem:[%s2 + $0x78] sm:$0xff]
      %v2612 = vld [vmem:[%s2 + $0x80] sm:$0xff]
      %v2613 = vld [vmem:[%s2 + $0x88] sm:$0xff]
      %v2614 = vld [vmem:[%s2 + $0x90] sm:$0xff]
      %v2615 = vld [vmem:[%s2 + $0x98] sm:$0xff]
      %v2616 = vld [vmem:[%s2 + $0xa0] sm:$0xff]
      %v2617 = vld [vmem:[%s2 + $0xa8] sm:$0xff]
      %v2618 = vld [vmem:[%s2 + $0xb0] sm:$0xff]
      %v2619 = vld [vmem:[%s2 + $0xb8] sm:$0xff]
      %v2620 = vld [vmem:[%s2 + $0xc0] sm:$0xff]
      %v2621 = vld [vmem:[%s2 + $0xc8] sm:$0xff]
      %v2622 = vld [vmem:[%s2 + $0xd0] sm:$0xff]
      %v2623 = vld [vmem:[%s2 + $0xd8] sm:$0xff]
      %v2624 = vld [vmem:[%s2 + $0xe0] sm:$0xff]
      %v2625 = vld [vmem:[%s2 + $0xe8] sm:$0xff]
      %v2626 = vld [vmem:[%s2 + $0xf0] sm:$0xff]
      %v2627 = vld [vmem:[%s2 + $0xf8] sm:$0xff]
      %2629 = vset.pattern.permute.xlu0 0
      %2630 = vperm.xlu0 %2629, %v2596
      %v2631 = vpop.permute.xlu0 %2630
      %2634 = vset.pattern.permute.xlu0 0
      %2635 = vperm.xlu0 %2634, %v2597
      %v2636 = vpop.permute.xlu0 %2635
      %2639 = vset.pattern.permute.xlu0 0
      %2640 = vperm.xlu0 %2639, %v2598
      %v2641 = vpop.permute.xlu0 %2640
      %2644 = vset.pattern.permute.xlu0 0
      %2645 = vperm.xlu0 %2644, %v2599
      %v2646 = vpop.permute.xlu0 %2645
      %2649 = vset.pattern.permute.xlu0 0
      %2650 = vperm.xlu0 %2649, %v2600
      %v2651 = vpop.permute.xlu0 %2650
      %2654 = vset.pattern.permute.xlu0 0
      %2655 = vperm.xlu0 %2654, %v2601
      %v2656 = vpop.permute.xlu0 %2655
      %2659 = vset.pattern.permute.xlu0 0
      %2660 = vperm.xlu0 %2659, %v2602
      %v2661 = vpop.permute.xlu0 %2660
      %2664 = vset.pattern.permute.xlu0 0
      %2665 = vperm.xlu0 %2664, %v2603
      %v2666 = vpop.permute.xlu0 %2665
      %2669 = vset.pattern.permute.xlu0 0
      %2670 = vperm.xlu0 %2669, %v2604
      %v2671 = vpop.permute.xlu0 %2670
      %2674 = vset.pattern.permute.xlu0 0
      %2675 = vperm.xlu0 %2674, %v2605
      %v2676 = vpop.permute.xlu0 %2675
      %2679 = vset.pattern.permute.xlu0 0
      %2680 = vperm.xlu0 %2679, %v2606
      %v2681 = vpop.permute.xlu0 %2680
      %2684 = vset.pattern.permute.xlu0 0
      %2685 = vperm.xlu0 %2684, %v2607
      %v2686 = vpop.permute.xlu0 %2685
      %2689 = vset.pattern.permute.xlu0 0
      %2690 = vperm.xlu0 %2689, %v2608
      %v2691 = vpop.permute.xlu0 %2690
      %2694 = vset.pattern.permute.xlu0 0
      %2695 = vperm.xlu0 %2694, %v2609
      %v2696 = vpop.permute.xlu0 %2695
      %2699 = vset.pattern.permute.xlu0 0
      %2700 = vperm.xlu0 %2699, %v2610
      %v2701 = vpop.permute.xlu0 %2700
      %2704 = vset.pattern.permute.xlu0 0
      %2705 = vperm.xlu0 %2704, %v2611
      %v2706 = vpop.permute.xlu0 %2705
      %2709 = vset.pattern.permute.xlu0 0
      %2710 = vperm.xlu0 %2709, %v2612
      %v2711 = vpop.permute.xlu0 %2710
      %2714 = vset.pattern.permute.xlu0 0
      %2715 = vperm.xlu0 %2714, %v2613
      %v2716 = vpop.permute.xlu0 %2715
      %2719 = vset.pattern.permute.xlu0 0
      %2720 = vperm.xlu0 %2719, %v2614
      %v2721 = vpop.permute.xlu0 %2720
      %2724 = vset.pattern.permute.xlu0 0
      %2725 = vperm.xlu0 %2724, %v2615
      %v2726 = vpop.permute.xlu0 %2725
      %2729 = vset.pattern.permute.xlu0 0
      %2730 = vperm.xlu0 %2729, %v2616
      %v2731 = vpop.permute.xlu0 %2730
      %2734 = vset.pattern.permute.xlu0 0
      %2735 = vperm.xlu0 %2734, %v2617
      %v2736 = vpop.permute.xlu0 %2735
      %2739 = vset.pattern.permute.xlu0 0
      %2740 = vperm.xlu0 %2739, %v2618
      %v2741 = vpop.permute.xlu0 %2740
      %2744 = vset.pattern.permute.xlu0 0
      %2745 = vperm.xlu0 %2744, %v2619
      %v2746 = vpop.permute.xlu0 %2745
      %2749 = vset.pattern.permute.xlu0 0
      %2750 = vperm.xlu0 %2749, %v2620
      %v2751 = vpop.permute.xlu0 %2750
      %2754 = vset.pattern.permute.xlu0 0
      %2755 = vperm.xlu0 %2754, %v2621
      %v2756 = vpop.permute.xlu0 %2755
      %2759 = vset.pattern.permute.xlu0 0
      %2760 = vperm.xlu0 %2759, %v2622
      %v2761 = vpop.permute.xlu0 %2760
      %2764 = vset.pattern.permute.xlu0 0
      %2765 = vperm.xlu0 %2764, %v2623
      %v2766 = vpop.permute.xlu0 %2765
      %2769 = vset.pattern.permute.xlu0 0
      %2770 = vperm.xlu0 %2769, %v2624
      %v2771 = vpop.permute.xlu0 %2770
      %2774 = vset.pattern.permute.xlu0 0
      %2775 = vperm.xlu0 %2774, %v2625
      %v2776 = vpop.permute.xlu0 %2775
      %2779 = vset.pattern.permute.xlu0 0
      %2780 = vperm.xlu0 %2779, %v2626
      %v2781 = vpop.permute.xlu0 %2780
      %2784 = vset.pattern.permute.xlu0 0
      %2785 = vperm.xlu0 %2784, %v2627
      %v2786 = vpop.permute.xlu0 %2785
      %v2788 = vmul.f32 %v2564, %v2631
      %v2789 = vmul.f32 %v2565, %v2636
      %v2790 = vmul.f32 %v2566, %v2641
      %v2791 = vmul.f32 %v2567, %v2646
      %v2792 = vmul.f32 %v2568, %v2651
      %v2793 = vmul.f32 %v2569, %v2656
      %v2794 = vmul.f32 %v2570, %v2661
      %v2795 = vmul.f32 %v2571, %v2666
      %v2796 = vmul.f32 %v2572, %v2671
      %v2797 = vmul.f32 %v2573, %v2676
      %v2798 = vmul.f32 %v2574, %v2681
      %v2799 = vmul.f32 %v2575, %v2686
      %v2800 = vmul.f32 %v2576, %v2691
      %v2801 = vmul.f32 %v2577, %v2696
      %v2802 = vmul.f32 %v2578, %v2701
      %v2803 = vmul.f32 %v2579, %v2706
      %v2804 = vmul.f32 %v2580, %v2711
      %v2805 = vmul.f32 %v2581, %v2716
      %v2806 = vmul.f32 %v2582, %v2721
      %v2807 = vmul.f32 %v2583, %v2726
      %v2808 = vmul.f32 %v2584, %v2731
      %v2809 = vmul.f32 %v2585, %v2736
      %v2810 = vmul.f32 %v2586, %v2741
      %v2811 = vmul.f32 %v2587, %v2746
      %v2812 = vmul.f32 %v2588, %v2751
      %v2813 = vmul.f32 %v2589, %v2756
      %v2814 = vmul.f32 %v2590, %v2761
      %v2815 = vmul.f32 %v2591, %v2766
      %v2816 = vmul.f32 %v2592, %v2771
      %v2817 = vmul.f32 %v2593, %v2776
      %v2818 = vmul.f32 %v2594, %v2781
      %v2819 = vmul.f32 %v2595, %v2786
      %v2820 = vsel %vm1564, %v2788, 0.0
      %v2821 = vsel %vm1564, %v2789, 0.0
      %v2822 = vadd.f32 %v2820, %v2821
      %v2823 = vsel %vm1564, %v2790, 0.0
      %v2824 = vadd.f32 %v2822, %v2823
      %v2825 = vsel %vm1564, %v2791, 0.0
      %v2826 = vadd.f32 %v2824, %v2825
      %v2827 = vsel %vm1564, %v2792, 0.0
      %v2828 = vadd.f32 %v2826, %v2827
      %v2829 = vsel %vm1564, %v2793, 0.0
      %v2830 = vadd.f32 %v2828, %v2829
      %v2831 = vsel %vm1564, %v2794, 0.0
      %v2832 = vadd.f32 %v2830, %v2831
      %v2833 = vsel %vm1564, %v2795, 0.0
      %v2834 = vadd.f32 %v2832, %v2833
      %v2835 = vsel %vm1564, %v2796, 0.0
      %v2836 = vadd.f32 %v2834, %v2835
      %v2837 = vsel %vm1564, %v2797, 0.0
      %v2838 = vadd.f32 %v2836, %v2837
      %v2839 = vsel %vm1564, %v2798, 0.0
      %v2840 = vadd.f32 %v2838, %v2839
      %v2841 = vsel %vm1564, %v2799, 0.0
      %v2842 = vadd.f32 %v2840, %v2841
      %v2843 = vsel %vm1564, %v2800, 0.0
      %v2844 = vadd.f32 %v2842, %v2843
      %v2845 = vsel %vm1564, %v2801, 0.0
      %v2846 = vadd.f32 %v2844, %v2845
      %v2847 = vsel %vm1564, %v2802, 0.0
      %v2848 = vadd.f32 %v2846, %v2847
      %v2849 = vsel %vm1564, %v2803, 0.0
      %v2850 = vadd.f32 %v2848, %v2849
      %v2851 = vsel %vm1564, %v2804, 0.0
      %v2852 = vadd.f32 %v2850, %v2851
      %v2853 = vsel %vm1564, %v2805, 0.0
      %v2854 = vadd.f32 %v2852, %v2853
      %v2855 = vsel %vm1564, %v2806, 0.0
      %v2856 = vadd.f32 %v2854, %v2855
      %v2857 = vsel %vm1564, %v2807, 0.0
      %v2858 = vadd.f32 %v2856, %v2857
      %v2859 = vsel %vm1564, %v2808, 0.0
      %v2860 = vadd.f32 %v2858, %v2859
      %v2861 = vsel %vm1564, %v2809, 0.0
      %v2862 = vadd.f32 %v2860, %v2861
      %v2863 = vsel %vm1564, %v2810, 0.0
      %v2864 = vadd.f32 %v2862, %v2863
      %v2865 = vsel %vm1564, %v2811, 0.0
      %v2866 = vadd.f32 %v2864, %v2865
      %v2867 = vsel %vm1564, %v2812, 0.0
      %v2868 = vadd.f32 %v2866, %v2867
      %v2869 = vsel %vm1564, %v2813, 0.0
      %v2870 = vadd.f32 %v2868, %v2869
      %v2871 = vsel %vm1564, %v2814, 0.0
      %v2872 = vadd.f32 %v2870, %v2871
      %v2873 = vsel %vm1564, %v2815, 0.0
      %v2874 = vadd.f32 %v2872, %v2873
      %v2875 = vsel %vm1564, %v2816, 0.0
      %v2876 = vadd.f32 %v2874, %v2875
      %v2877 = vsel %vm1564, %v2817, 0.0
      %v2878 = vadd.f32 %v2876, %v2877
      %v2879 = vsel %vm1564, %v2818, 0.0
      %v2880 = vadd.f32 %v2878, %v2879
      %v2881 = vsel %vm1564, %v2819, 0.0
      %v2882 = vadd.f32 %v2880, %v2881
      %v2883 = vrot.slane %v2882, 4
      %v2884 = vadd.f32 %v2882, %v2883
      %v2885 = vrot.slane %v2884, 2
      %v2886 = vadd.f32 %v2884, %v2885
      %v2887 = vrot.slane %v2886, 1
      %v2888 = vadd.f32 %v2886, %v2887
      %v2889 = vadd.f32 %v2888, 0.0
      %v2890 = vmul.f32 %v2788, %v2564
      %v2891 = vmul.f32 %v2789, %v2565
      %v2892 = vmul.f32 %v2790, %v2566
      %v2893 = vmul.f32 %v2791, %v2567
      %v2894 = vmul.f32 %v2792, %v2568
      %v2895 = vmul.f32 %v2793, %v2569
      %v2896 = vmul.f32 %v2794, %v2570
      %v2897 = vmul.f32 %v2795, %v2571
      %v2898 = vmul.f32 %v2796, %v2572
      %v2899 = vmul.f32 %v2797, %v2573
      %v2900 = vmul.f32 %v2798, %v2574
      %v2901 = vmul.f32 %v2799, %v2575
      %v2902 = vmul.f32 %v2800, %v2576
      %v2903 = vmul.f32 %v2801, %v2577
      %v2904 = vmul.f32 %v2802, %v2578
      %v2905 = vmul.f32 %v2803, %v2579
      %v2906 = vmul.f32 %v2804, %v2580
      %v2907 = vmul.f32 %v2805, %v2581
      %v2908 = vmul.f32 %v2806, %v2582
      %v2909 = vmul.f32 %v2807, %v2583
      %v2910 = vmul.f32 %v2808, %v2584
      %v2911 = vmul.f32 %v2809, %v2585
      %v2912 = vmul.f32 %v2810, %v2586
      %v2913 = vmul.f32 %v2811, %v2587
      %v2914 = vmul.f32 %v2812, %v2588
      %v2915 = vmul.f32 %v2813, %v2589
      %v2916 = vmul.f32 %v2814, %v2590
      %v2917 = vmul.f32 %v2815, %v2591
      %v2918 = vmul.f32 %v2816, %v2592
      %v2919 = vmul.f32 %v2817, %v2593
      %v2920 = vmul.f32 %v2818, %v2594
      %v2921 = vmul.f32 %v2819, %v2595
      %v2922 = vsel %vm1564, %v2890, 0.0
      %v2923 = vsel %vm1564, %v2891, 0.0
      %v2924 = vadd.f32 %v2922, %v2923
      %v2925 = vsel %vm1564, %v2892, 0.0
      %v2926 = vadd.f32 %v2924, %v2925
      %v2927 = vsel %vm1564, %v2893, 0.0
      %v2928 = vadd.f32 %v2926, %v2927
      %v2929 = vsel %vm1564, %v2894, 0.0
      %v2930 = vadd.f32 %v2928, %v2929
      %v2931 = vsel %vm1564, %v2895, 0.0
      %v2932 = vadd.f32 %v2930, %v2931
      %v2933 = vsel %vm1564, %v2896, 0.0
      %v2934 = vadd.f32 %v2932, %v2933
      %v2935 = vsel %vm1564, %v2897, 0.0
      %v2936 = vadd.f32 %v2934, %v2935
      %v2937 = vsel %vm1564, %v2898, 0.0
      %v2938 = vadd.f32 %v2936, %v2937
      %v2939 = vsel %vm1564, %v2899, 0.0
      %v2940 = vadd.f32 %v2938, %v2939
      %v2941 = vsel %vm1564, %v2900, 0.0
      %v2942 = vadd.f32 %v2940, %v2941
      %v2943 = vsel %vm1564, %v2901, 0.0
      %v2944 = vadd.f32 %v2942, %v2943
      %v2945 = vsel %vm1564, %v2902, 0.0
      %v2946 = vadd.f32 %v2944, %v2945
      %v2947 = vsel %vm1564, %v2903, 0.0
      %v2948 = vadd.f32 %v2946, %v2947
      %v2949 = vsel %vm1564, %v2904, 0.0
      %v2950 = vadd.f32 %v2948, %v2949
      %v2951 = vsel %vm1564, %v2905, 0.0
      %v2952 = vadd.f32 %v2950, %v2951
      %v2953 = vsel %vm1564, %v2906, 0.0
      %v2954 = vadd.f32 %v2952, %v2953
      %v2955 = vsel %vm1564, %v2907, 0.0
      %v2956 = vadd.f32 %v2954, %v2955
      %v2957 = vsel %vm1564, %v2908, 0.0
      %v2958 = vadd.f32 %v2956, %v2957
      %v2959 = vsel %vm1564, %v2909, 0.0
      %v2960 = vadd.f32 %v2958, %v2959
      %v2961 = vsel %vm1564, %v2910, 0.0
      %v2962 = vadd.f32 %v2960, %v2961
      %v2963 = vsel %vm1564, %v2911, 0.0
      %v2964 = vadd.f32 %v2962, %v2963
      %v2965 = vsel %vm1564, %v2912, 0.0
      %v2966 = vadd.f32 %v2964, %v2965
      %v2967 = vsel %vm1564, %v2913, 0.0
      %v2968 = vadd.f32 %v2966, %v2967
      %v2969 = vsel %vm1564, %v2914, 0.0
      %v2970 = vadd.f32 %v2968, %v2969
      %v2971 = vsel %vm1564, %v2915, 0.0
      %v2972 = vadd.f32 %v2970, %v2971
      %v2973 = vsel %vm1564, %v2916, 0.0
      %v2974 = vadd.f32 %v2972, %v2973
      %v2975 = vsel %vm1564, %v2917, 0.0
      %v2976 = vadd.f32 %v2974, %v2975
      %v2977 = vsel %vm1564, %v2918, 0.0
      %v2978 = vadd.f32 %v2976, %v2977
      %v2979 = vsel %vm1564, %v2919, 0.0
      %v2980 = vadd.f32 %v2978, %v2979
      %v2981 = vsel %vm1564, %v2920, 0.0
      %v2982 = vadd.f32 %v2980, %v2981
      %v2983 = vsel %vm1564, %v2921, 0.0
      %v2984 = vadd.f32 %v2982, %v2983
      %v2985 = vrot.slane %v2984, 4
      %v2986 = vadd.f32 %v2984, %v2985
      %v2987 = vrot.slane %v2986, 2
      %v2988 = vadd.f32 %v2986, %v2987
      %v2989 = vrot.slane %v2988, 1
      %v2990 = vadd.f32 %v2988, %v2989
      %v2991 = vadd.f32 %v2990, 0.0
      %v2992 = vpack.c.bf16 %v2564, %v2564
      %v2993 = vpack.c.bf16 %v2565, %v2565
      %2994 = vst.msk [vmem:[%s235] sm:$0xf] %vm379, %v2992
      %2995 = vst.msk [vmem:[%s235 + $0x4] sm:$0xf] %vm379, %v2993
      %v2996 = vpack.c.bf16 %v2568, %v2568
      %v2997 = vpack.c.bf16 %v2569, %v2569
      %s2998 = scalar_lea.vmem %s235, 8
      %2999 = vst.msk [vmem:[%s2998] sm:$0xf] %vm379, %v2996
      %3000 = vst.msk [vmem:[%s2998 + $0x4] sm:$0xf] %vm379, %v2997
      %v3001 = vpack.c.bf16 %v2572, %v2572
      %v3002 = vpack.c.bf16 %v2573, %v2573
      %s3003 = scalar_lea.vmem %s235, 16
      %3004 = vst.msk [vmem:[%s3003] sm:$0xf] %vm379, %v3001
      %3005 = vst.msk [vmem:[%s3003 + $0x4] sm:$0xf] %vm379, %v3002
      %v3006 = vpack.c.bf16 %v2576, %v2576
      %v3007 = vpack.c.bf16 %v2577, %v2577
      %s3008 = scalar_lea.vmem %s235, 24
      %3009 = vst.msk [vmem:[%s3008] sm:$0xf] %vm379, %v3006
      %3010 = vst.msk [vmem:[%s3008 + $0x4] sm:$0xf] %vm379, %v3007
      %v3011 = vpack.c.bf16 %v2580, %v2580
      %v3012 = vpack.c.bf16 %v2581, %v2581
      %s3013 = scalar_lea.vmem %s235, 32
      %3014 = vst.msk [vmem:[%s3013] sm:$0xf] %vm379, %v3011
      %3015 = vst.msk [vmem:[%s3013 + $0x4] sm:$0xf] %vm379, %v3012
      %v3016 = vpack.c.bf16 %v2584, %v2584
      %v3017 = vpack.c.bf16 %v2585, %v2585
      %s3018 = scalar_lea.vmem %s235, 40
      %3019 = vst.msk [vmem:[%s3018] sm:$0xf] %vm379, %v3016
      %3020 = vst.msk [vmem:[%s3018 + $0x4] sm:$0xf] %vm379, %v3017
      %v3021 = vpack.c.bf16 %v2588, %v2588
      %v3022 = vpack.c.bf16 %v2589, %v2589
      %s3023 = scalar_lea.vmem %s235, 48
      %3024 = vst.msk [vmem:[%s3023] sm:$0xf] %vm379, %v3021
      %3025 = vst.msk [vmem:[%s3023 + $0x4] sm:$0xf] %vm379, %v3022
      %v3026 = vpack.c.bf16 %v2592, %v2592
      %v3027 = vpack.c.bf16 %v2593, %v2593
      %s3028 = scalar_lea.vmem %s235, 56
      %3029 = vst.msk [vmem:[%s3028] sm:$0xf] %vm379, %v3026
      %3030 = vst.msk [vmem:[%s3028 + $0x4] sm:$0xf] %vm379, %v3027
      %v3031 = vld [vmem:[#allocation2 + $0x100] sm:$0xff]
      %v3032 = vld [vmem:[#allocation2 + $0x108] sm:$0xff]
      %v3033 = vld [vmem:[#allocation2 + $0x110] sm:$0xff]
      %v3034 = vld [vmem:[#allocation2 + $0x118] sm:$0xff]
      %v3035 = vld [vmem:[#allocation2 + $0x120] sm:$0xff]
      %v3036 = vld [vmem:[#allocation2 + $0x128] sm:$0xff]
      %v3037 = vld [vmem:[#allocation2 + $0x130] sm:$0xff]
      %v3038 = vld [vmem:[#allocation2 + $0x138] sm:$0xff]
      %v3039 = vld [vmem:[#allocation2 + $0x140] sm:$0xff]
      %v3040 = vld [vmem:[#allocation2 + $0x148] sm:$0xff]
      %v3041 = vld [vmem:[#allocation2 + $0x150] sm:$0xff]
      %v3042 = vld [vmem:[#allocation2 + $0x158] sm:$0xff]
      %v3043 = vld [vmem:[#allocation2 + $0x160] sm:$0xff]
      %v3044 = vld [vmem:[#allocation2 + $0x168] sm:$0xff]
      %v3045 = vld [vmem:[#allocation2 + $0x170] sm:$0xff]
      %v3046 = vld [vmem:[#allocation2 + $0x178] sm:$0xff]
      %v3047 = vld [vmem:[#allocation2 + $0x180] sm:$0xff]
      %v3048 = vld [vmem:[#allocation2 + $0x188] sm:$0xff]
      %v3049 = vld [vmem:[#allocation2 + $0x190] sm:$0xff]
      %v3050 = vld [vmem:[#allocation2 + $0x198] sm:$0xff]
      %v3051 = vld [vmem:[#allocation2 + $0x1a0] sm:$0xff]
      %v3052 = vld [vmem:[#allocation2 + $0x1a8] sm:$0xff]
      %v3053 = vld [vmem:[#allocation2 + $0x1b0] sm:$0xff]
      %v3054 = vld [vmem:[#allocation2 + $0x1b8] sm:$0xff]
      %v3055 = vld [vmem:[#allocation2 + $0x1c0] sm:$0xff]
      %v3056 = vld [vmem:[#allocation2 + $0x1c8] sm:$0xff]
      %v3057 = vld [vmem:[#allocation2 + $0x1d0] sm:$0xff]
      %v3058 = vld [vmem:[#allocation2 + $0x1d8] sm:$0xff]
      %v3059 = vld [vmem:[#allocation2 + $0x1e0] sm:$0xff]
      %v3060 = vld [vmem:[#allocation2 + $0x1e8] sm:$0xff]
      %v3061 = vld [vmem:[#allocation2 + $0x1f0] sm:$0xff]
      %v3062 = vld [vmem:[#allocation2 + $0x1f8] sm:$0xff]
      %v3063 = vld [vmem:[%s1] sm:$0xf]
      %v3064 = vld [vmem:[%s1 + $0x4] sm:$0xf]
      %v3065 = vld [vmem:[%s1 + $0x8] sm:$0xf]
      %v3066 = vld [vmem:[%s1 + $0xc] sm:$0xf]
      %v3067 = vld [vmem:[%s1 + $0x10] sm:$0xf]
      %v3068 = vld [vmem:[%s1 + $0x14] sm:$0xf]
      %v3069 = vld [vmem:[%s1 + $0x18] sm:$0xf]
      %v3070 = vld [vmem:[%s1 + $0x1c] sm:$0xf]
      %v3071 = vld [vmem:[%s1 + $0x20] sm:$0xf]
      %v3072 = vld [vmem:[%s1 + $0x24] sm:$0xf]
      %v3073 = vld [vmem:[%s1 + $0x28] sm:$0xf]
      %v3074 = vld [vmem:[%s1 + $0x2c] sm:$0xf]
      %v3075 = vld [vmem:[%s1 + $0x30] sm:$0xf]
      %v3076 = vld [vmem:[%s1 + $0x34] sm:$0xf]
      %v3077 = vld [vmem:[%s1 + $0x38] sm:$0xf]
      %v3078 = vld [vmem:[%s1 + $0x3c] sm:$0xf]
      %v3079 = vld [vmem:[%s1 + $0x40] sm:$0xf]
      %v3080 = vld [vmem:[%s1 + $0x44] sm:$0xf]
      %v3081 = vld [vmem:[%s1 + $0x48] sm:$0xf]
      %v3082 = vld [vmem:[%s1 + $0x4c] sm:$0xf]
      %v3083 = vld [vmem:[%s1 + $0x50] sm:$0xf]
      %v3084 = vld [vmem:[%s1 + $0x54] sm:$0xf]
      %v3085 = vld [vmem:[%s1 + $0x58] sm:$0xf]
      %v3086 = vld [vmem:[%s1 + $0x5c] sm:$0xf]
      %v3087 = vld [vmem:[#allocation2 + $0x200] sm:$0xff]
      %v3088 = vld [vmem:[#allocation2 + $0x208] sm:$0xff]
      %v3089 = vld [vmem:[#allocation2 + $0x210] sm:$0xff]
      %v3090 = vld [vmem:[#allocation2 + $0x218] sm:$0xff]
      %v3091 = vld [vmem:[%s1323] sm:$0xf]
      %v3092 = vld [vmem:[%s1323 + $0x4] sm:$0xf]
      %v3093 = vld [vmem:[%s1323 + $0x8] sm:$0xf]
      %v3094 = vld [vmem:[%s1323 + $0xc] sm:$0xf]
      %v3095 = vld [vmem:[%s1323 + $0x10] sm:$0xf]
      %v3096 = vld [vmem:[%s1323 + $0x14] sm:$0xf]
      %v3097 = vld [vmem:[%s1323 + $0x18] sm:$0xf]
      %v3098 = vld [vmem:[%s1323 + $0x1c] sm:$0xf]
      %v3099 = vld [vmem:[%s1323 + $0x20] sm:$0xf]
      %v3100 = vld [vmem:[%s1323 + $0x24] sm:$0xf]
      %v3101 = vld [vmem:[%s1323 + $0x28] sm:$0xf]
      %v3102 = vld [vmem:[%s1323 + $0x2c] sm:$0xf]
      %v3103 = vld [vmem:[%s1323 + $0x30] sm:$0xf]
      %v3104 = vld [vmem:[%s1323 + $0x34] sm:$0xf]
      %v3105 = vld [vmem:[%s1323 + $0x38] sm:$0xf]
      %v3106 = vld [vmem:[%s1323 + $0x3c] sm:$0xf]
      %v3107 = vld [vmem:[%s1323 + $0x40] sm:$0xf]
      %v3108 = vld [vmem:[%s1323 + $0x44] sm:$0xf]
      %v3109 = vld [vmem:[%s1323 + $0x48] sm:$0xf]
      %v3110 = vld [vmem:[%s1323 + $0x4c] sm:$0xf]
      %v3111 = vld [vmem:[%s1323 + $0x50] sm:$0xf]
      %v3112 = vld [vmem:[%s1323 + $0x54] sm:$0xf]
      %v3113 = vld [vmem:[%s1323 + $0x58] sm:$0xf]
      %v3114 = vld [vmem:[%s1323 + $0x5c] sm:$0xf]
      %v3147 = vunpack.c.l.b16 %v3035
      %v3148 = vunpack.c.h.b16 %v3035
      %v3149 = vunpack.c.l.b16 %v3036
      %v3150 = vunpack.c.h.b16 %v3036
      %v3151 = vunpack.c.l.b16 %v3037
      %v3152 = vunpack.c.h.b16 %v3037
      %v3153 = vunpack.c.l.b16 %v3038
      %v3154 = vunpack.c.h.b16 %v3038
      %v3155 = vunpack.c.l.b16 %v3039
      %v3156 = vunpack.c.h.b16 %v3039
      %v3157 = vunpack.c.l.b16 %v3040
      %v3158 = vunpack.c.h.b16 %v3040
      %v3159 = vunpack.c.l.b16 %v3041
      %v3160 = vunpack.c.h.b16 %v3041
      %v3161 = vunpack.c.l.b16 %v3042
      %v3162 = vunpack.c.h.b16 %v3042
      %v3163 = vunpack.c.l.b16 %v3043
      %v3164 = vunpack.c.h.b16 %v3043
      %v3165 = vunpack.c.l.b16 %v3044
      %v3166 = vunpack.c.h.b16 %v3044
      %v3167 = vunpack.c.l.b16 %v3045
      %v3168 = vunpack.c.h.b16 %v3045
      %v3169 = vunpack.c.l.b16 %v3046
      %v3170 = vunpack.c.h.b16 %v3046
      %v3171 = vunpack.c.l.b16 %v3047
      %v3172 = vunpack.c.h.b16 %v3047
      %v3173 = vunpack.c.l.b16 %v3048
      %v3174 = vunpack.c.h.b16 %v3048
      %v3175 = vunpack.c.l.b16 %v3049
      %v3176 = vunpack.c.h.b16 %v3049
      %v3177 = vunpack.c.l.b16 %v3050
      %v3178 = vunpack.c.h.b16 %v3050
      %v3179 = vunpack.c.l.b16 %v3051
      %v3180 = vunpack.c.h.b16 %v3051
      %v3181 = vunpack.c.l.b16 %v3052
      %v3182 = vunpack.c.h.b16 %v3052
      %v3183 = vunpack.c.l.b16 %v3053
      %v3184 = vunpack.c.h.b16 %v3053
      %v3185 = vunpack.c.l.b16 %v3054
      %v3186 = vunpack.c.h.b16 %v3054
      %v3187 = vunpack.c.l.b16 %v3055
      %v3188 = vunpack.c.h.b16 %v3055
      %v3189 = vunpack.c.l.b16 %v3056
      %v3190 = vunpack.c.h.b16 %v3056
      %v3191 = vunpack.c.l.b16 %v3057
      %v3192 = vunpack.c.h.b16 %v3057
      %v3193 = vunpack.c.l.b16 %v3058
      %v3194 = vunpack.c.h.b16 %v3058
      %v3195 = vunpack.c.l.b16 %v3059
      %v3196 = vunpack.c.h.b16 %v3059
      %v3197 = vunpack.c.l.b16 %v3060
      %v3198 = vunpack.c.h.b16 %v3060
      %v3199 = vunpack.c.l.b16 %v3061
      %v3200 = vunpack.c.h.b16 %v3061
      %v3201 = vunpack.c.l.b16 %v3062
      %v3202 = vunpack.c.h.b16 %v3062
      %v3203 = vunpack.c.l.b16 %v3087
      %v3204 = vunpack.c.h.b16 %v3087
      %v3205 = vunpack.c.l.b16 %v3088
      %v3206 = vunpack.c.h.b16 %v3088
      %v3207 = vunpack.c.l.b16 %v3089
      %v3208 = vunpack.c.h.b16 %v3089
      %v3209 = vunpack.c.l.b16 %v3090
      %v3210 = vunpack.c.h.b16 %v3090
      %v3211 = vpack.c.b16 %v3149, %v3147
      %v3212 = vpack.c.b16 %v3150, %v3148
      %v3213 = vpack.c.b16 %v3153, %v3151
      %v3214 = vpack.c.b16 %v3154, %v3152
      %v3215 = vpack.c.b16 %v3157, %v3155
      %v3216 = vpack.c.b16 %v3158, %v3156
      %v3217 = vpack.c.b16 %v3161, %v3159
      %v3218 = vpack.c.b16 %v3162, %v3160
      %v3219 = vpack.c.b16 %v3165, %v3163
      %v3220 = vpack.c.b16 %v3166, %v3164
      %v3221 = vpack.c.b16 %v3169, %v3167
      %v3222 = vpack.c.b16 %v3170, %v3168
      %v3223 = vpack.c.b16 %v3173, %v3171
      %v3224 = vpack.c.b16 %v3174, %v3172
      %v3225 = vpack.c.b16 %v3177, %v3175
      %v3226 = vpack.c.b16 %v3178, %v3176
      %v3227 = vpack.c.b16 %v3181, %v3179
      %v3228 = vpack.c.b16 %v3182, %v3180
      %v3229 = vpack.c.b16 %v3185, %v3183
      %v3230 = vpack.c.b16 %v3186, %v3184
      %v3231 = vpack.c.b16 %v3189, %v3187
      %v3232 = vpack.c.b16 %v3190, %v3188
      %v3233 = vpack.c.b16 %v3193, %v3191
      %v3234 = vpack.c.b16 %v3194, %v3192
      %v3235 = vpack.c.b16 %v3197, %v3195
      %v3236 = vpack.c.b16 %v3198, %v3196
      %v3237 = vpack.c.b16 %v3201, %v3199
      %v3238 = vpack.c.b16 %v3202, %v3200
      %v3239 = vpack.c.b16 %v3205, %v3203
      %v3240 = vpack.c.b16 %v3206, %v3204
      %v3241 = vpack.c.b16 %v3209, %v3207
      %v3242 = vpack.c.b16 %v3210, %v3208
      %v3283 = vunpack.c.l.b16 %v3091
      %v3284 = vunpack.c.l.b16 %v3092
      %v3285 = vunpack.c.l.b16 %v3093
      %v3286 = vunpack.c.l.b16 %v3094
      %v3287 = vunpack.c.l.b16 %v3095
      %v3288 = vunpack.c.l.b16 %v3096
      %v3289 = vunpack.c.l.b16 %v3097
      %v3290 = vunpack.c.l.b16 %v3098
      %v3291 = vunpack.c.l.b16 %v3099
      %v3292 = vunpack.c.l.b16 %v3100
      %v3293 = vunpack.c.l.b16 %v3101
      %v3294 = vunpack.c.l.b16 %v3102
      %v3295 = vunpack.c.l.b16 %v3103
      %v3296 = vunpack.c.l.b16 %v3104
      %v3297 = vunpack.c.l.b16 %v3105
      %v3298 = vunpack.c.l.b16 %v3106
      %v3299 = vunpack.c.l.b16 %v3107
      %v3300 = vunpack.c.l.b16 %v3108
      %v3301 = vunpack.c.l.b16 %v3109
      %v3302 = vunpack.c.l.b16 %v3110
      %v3303 = vunpack.c.l.b16 %v3111
      %v3304 = vunpack.c.l.b16 %v3112
      %v3305 = vunpack.c.l.b16 %v3113
      %v3306 = vunpack.c.l.b16 %v3114
      %v3307 = vpack.c.b16 %v3284, %v3283
      %v3308 = vpack.c.b16 %v3286, %v3285
      %v3309 = vpack.c.b16 %v3288, %v3287
      %v3310 = vpack.c.b16 %v3290, %v3289
      %v3311 = vpack.c.b16 %v3292, %v3291
      %v3312 = vpack.c.b16 %v3294, %v3293
      %v3313 = vpack.c.b16 %v3296, %v3295
      %v3314 = vpack.c.b16 %v3298, %v3297
      %v3315 = vpack.c.b16 %v3300, %v3299
      %v3316 = vpack.c.b16 %v3302, %v3301
      %v3317 = vpack.c.b16 %v3304, %v3303
      %v3318 = vpack.c.b16 %v3306, %v3305
      %v3332 = vsel %vm1564, %v3212, 0
      %v3335 = vsel %vm1564, %v3214, 0
      %v3338 = vsel %vm1564, %v3216, 0
      %v3341 = vsel %vm1564, %v3218, 0
      %v3344 = vsel %vm1564, %v3220, 0
      %v3347 = vsel %vm1564, %v3222, 0
      %v3350 = vsel %vm1564, %v3224, 0
      %v3353 = vsel %vm1564, %v3226, 0
      %v3356 = vsel %vm1564, %v3228, 0
      %v3359 = vsel %vm1564, %v3230, 0
      %v3362 = vsel %vm1564, %v3232, 0
      %v3365 = vsel %vm1564, %v3234, 0
      %v3368 = vsel %vm1564, %v3236, 0
      %v3371 = vsel %vm1564, %v3238, 0
      %v3374 = vsel %vm1564, %v3240, 0
      %v3377 = vsel %vm1564, %v3242, 0
      %3379 = vmatpush.bf16.msra.mxu0 %v3314
      %3380 = vmatpush.bf16.msra.mxu0 %v3313
      %3381 = vmatpush.bf16.msra.mxu0 %v3312
      %3382 = vmatpush.bf16.msra.mxu0 %v3311
      %3383 = vmatpush.bf16.msra.mxu0 %v3310
      %3384 = vmatpush.bf16.msra.mxu0 %v3309
      %3385 = vmatpush.bf16.msra.mxu0 %v3308
      %3386 = vmatpush.bf16.msra.mxu0 %v3307
      %3387 = vmatmul.bf16.gmra.mxu0 %v3211
      %v3388 = vpop.f32.mrf.mxu0
      %v3389 = vadd.f32 0.0, %v3388
      %v3390 = vpop.f32.mrf.mxu0
      %v3391 = vadd.f32 0.0, %v3390
      %3392 = vmatmul.bf16.gmra.mxu0 %v3213
      %v3393 = vpop.f32.mrf.mxu0
      %v3394 = vadd.f32 0.0, %v3393
      %v3395 = vpop.f32.mrf.mxu0
      %v3396 = vadd.f32 0.0, %v3395
      %3397 = vmatmul.bf16.gmra.mxu0 %v3215
      %v3398 = vpop.f32.mrf.mxu0
      %v3399 = vadd.f32 0.0, %v3398
      %v3400 = vpop.f32.mrf.mxu0
      %v3401 = vadd.f32 0.0, %v3400
      %3402 = vmatmul.bf16.gmra.mxu0 %v3217
      %v3403 = vpop.f32.mrf.mxu0
      %v3404 = vadd.f32 0.0, %v3403
      %v3405 = vpop.f32.mrf.mxu0
      %v3406 = vadd.f32 0.0, %v3405
      %3407 = vmatmul.bf16.gmra.mxu0 %v3219
      %v3408 = vpop.f32.mrf.mxu0
      %v3409 = vadd.f32 0.0, %v3408
      %v3410 = vpop.f32.mrf.mxu0
      %v3411 = vadd.f32 0.0, %v3410
      %3412 = vmatmul.bf16.gmra.mxu0 %v3221
      %v3413 = vpop.f32.mrf.mxu0
      %v3414 = vadd.f32 0.0, %v3413
      %v3415 = vpop.f32.mrf.mxu0
      %v3416 = vadd.f32 0.0, %v3415
      %3417 = vmatmul.bf16.gmra.mxu0 %v3223
      %v3418 = vpop.f32.mrf.mxu0
      %v3419 = vadd.f32 0.0, %v3418
      %v3420 = vpop.f32.mrf.mxu0
      %v3421 = vadd.f32 0.0, %v3420
      %3422 = vmatmul.bf16.gmra.mxu0 %v3225
      %v3423 = vpop.f32.mrf.mxu0
      %v3424 = vadd.f32 0.0, %v3423
      %v3425 = vpop.f32.mrf.mxu0
      %v3426 = vadd.f32 0.0, %v3425
      %3427 = vmatmul.bf16.gmra.mxu0 %v3227
      %v3428 = vpop.f32.mrf.mxu0
      %v3429 = vadd.f32 0.0, %v3428
      %v3430 = vpop.f32.mrf.mxu0
      %v3431 = vadd.f32 0.0, %v3430
      %3432 = vmatmul.bf16.gmra.mxu0 %v3229
      %v3433 = vpop.f32.mrf.mxu0
      %v3434 = vadd.f32 0.0, %v3433
      %v3435 = vpop.f32.mrf.mxu0
      %v3436 = vadd.f32 0.0, %v3435
      %3437 = vmatmul.bf16.gmra.mxu0 %v3231
      %v3438 = vpop.f32.mrf.mxu0
      %v3439 = vadd.f32 0.0, %v3438
      %v3440 = vpop.f32.mrf.mxu0
      %v3441 = vadd.f32 0.0, %v3440
      %3442 = vmatmul.bf16.gmra.mxu0 %v3233
      %v3443 = vpop.f32.mrf.mxu0
      %v3444 = vadd.f32 0.0, %v3443
      %v3445 = vpop.f32.mrf.mxu0
      %v3446 = vadd.f32 0.0, %v3445
      %3447 = vmatmul.bf16.gmra.mxu0 %v3235
      %v3448 = vpop.f32.mrf.mxu0
      %v3449 = vadd.f32 0.0, %v3448
      %v3450 = vpop.f32.mrf.mxu0
      %v3451 = vadd.f32 0.0, %v3450
      %3452 = vmatmul.bf16.gmra.mxu0 %v3237
      %v3453 = vpop.f32.mrf.mxu0
      %v3454 = vadd.f32 0.0, %v3453
      %v3455 = vpop.f32.mrf.mxu0
      %v3456 = vadd.f32 0.0, %v3455
      %3457 = vmatmul.bf16.gmra.mxu0 %v3239
      %v3458 = vpop.f32.mrf.mxu0
      %v3459 = vadd.f32 0.0, %v3458
      %v3460 = vpop.f32.mrf.mxu0
      %v3461 = vadd.f32 0.0, %v3460
      %3462 = vmatmul.bf16.gmra.mxu0 %v3241
      %v3463 = vpop.f32.mrf.mxu0
      %v3464 = vadd.f32 0.0, %v3463
      %v3465 = vpop.f32.mrf.mxu0
      %v3466 = vadd.f32 0.0, %v3465
      %3467 = vdwg.mxu0
      %3468 = vmatpush.bf16.msra.mxu0 0
      %3469 = vmatpush.bf16.msra.mxu0 0
      %3470 = vmatpush.bf16.msra.mxu0 0
      %3471 = vmatpush.bf16.msra.mxu0 0
      %3472 = vmatpush.bf16.msra.mxu0 %v3318
      %3473 = vmatpush.bf16.msra.mxu0 %v3317
      %3474 = vmatpush.bf16.msra.mxu0 %v3316
      %3475 = vmatpush.bf16.msra.mxu0 %v3315
      %3476 = vmatmul.bf16.gmra.mxu0 %v3332
      %v3477 = vpop.f32.mrf.mxu0
      %v3478 = vadd.f32 %v3389, %v3477
      %v3479 = vpop.f32.mrf.mxu0
      %v3480 = vadd.f32 %v3391, %v3479
      %3481 = vmatmul.bf16.gmra.mxu0 %v3335
      %v3482 = vpop.f32.mrf.mxu0
      %v3483 = vadd.f32 %v3394, %v3482
      %v3484 = vpop.f32.mrf.mxu0
      %v3485 = vadd.f32 %v3396, %v3484
      %3486 = vmatmul.bf16.gmra.mxu0 %v3338
      %v3487 = vpop.f32.mrf.mxu0
      %v3488 = vadd.f32 %v3399, %v3487
      %v3489 = vpop.f32.mrf.mxu0
      %v3490 = vadd.f32 %v3401, %v3489
      %3491 = vmatmul.bf16.gmra.mxu0 %v3341
      %v3492 = vpop.f32.mrf.mxu0
      %v3493 = vadd.f32 %v3404, %v3492
      %v3494 = vpop.f32.mrf.mxu0
      %v3495 = vadd.f32 %v3406, %v3494
      %3496 = vmatmul.bf16.gmra.mxu0 %v3344
      %v3497 = vpop.f32.mrf.mxu0
      %v3498 = vadd.f32 %v3409, %v3497
      %v3499 = vpop.f32.mrf.mxu0
      %v3500 = vadd.f32 %v3411, %v3499
      %3501 = vmatmul.bf16.gmra.mxu0 %v3347
      %v3502 = vpop.f32.mrf.mxu0
      %v3503 = vadd.f32 %v3414, %v3502
      %v3504 = vpop.f32.mrf.mxu0
      %v3505 = vadd.f32 %v3416, %v3504
      %3506 = vmatmul.bf16.gmra.mxu0 %v3350
      %v3507 = vpop.f32.mrf.mxu0
      %v3508 = vadd.f32 %v3419, %v3507
      %v3509 = vpop.f32.mrf.mxu0
      %v3510 = vadd.f32 %v3421, %v3509
      %3511 = vmatmul.bf16.gmra.mxu0 %v3353
      %v3512 = vpop.f32.mrf.mxu0
      %v3513 = vadd.f32 %v3424, %v3512
      %v3514 = vpop.f32.mrf.mxu0
      %v3515 = vadd.f32 %v3426, %v3514
      %3516 = vmatmul.bf16.gmra.mxu0 %v3356
      %v3517 = vpop.f32.mrf.mxu0
      %v3518 = vadd.f32 %v3429, %v3517
      %v3519 = vpop.f32.mrf.mxu0
      %v3520 = vadd.f32 %v3431, %v3519
      %3521 = vmatmul.bf16.gmra.mxu0 %v3359
      %v3522 = vpop.f32.mrf.mxu0
      %v3523 = vadd.f32 %v3434, %v3522
      %v3524 = vpop.f32.mrf.mxu0
      %v3525 = vadd.f32 %v3436, %v3524
      %3526 = vmatmul.bf16.gmra.mxu0 %v3362
      %v3527 = vpop.f32.mrf.mxu0
      %v3528 = vadd.f32 %v3439, %v3527
      %v3529 = vpop.f32.mrf.mxu0
      %v3530 = vadd.f32 %v3441, %v3529
      %3531 = vmatmul.bf16.gmra.mxu0 %v3365
      %v3532 = vpop.f32.mrf.mxu0
      %v3533 = vadd.f32 %v3444, %v3532
      %v3534 = vpop.f32.mrf.mxu0
      %v3535 = vadd.f32 %v3446, %v3534
      %3536 = vmatmul.bf16.gmra.mxu0 %v3368
      %v3537 = vpop.f32.mrf.mxu0
      %v3538 = vadd.f32 %v3449, %v3537
      %v3539 = vpop.f32.mrf.mxu0
      %v3540 = vadd.f32 %v3451, %v3539
      %3541 = vmatmul.bf16.gmra.mxu0 %v3371
      %v3542 = vpop.f32.mrf.mxu0
      %v3543 = vadd.f32 %v3454, %v3542
      %v3544 = vpop.f32.mrf.mxu0
      %v3545 = vadd.f32 %v3456, %v3544
      %3546 = vmatmul.bf16.gmra.mxu0 %v3374
      %v3547 = vpop.f32.mrf.mxu0
      %v3548 = vadd.f32 %v3459, %v3547
      %v3549 = vpop.f32.mrf.mxu0
      %v3550 = vadd.f32 %v3461, %v3549
      %3551 = vmatmul.bf16.gmra.mxu0 %v3377
      %v3552 = vpop.f32.mrf.mxu0
      %v3553 = vadd.f32 %v3464, %v3552
      %v3554 = vpop.f32.mrf.mxu0
      %v3555 = vadd.f32 %v3466, %v3554
      %3556 = vdwg.mxu0
      %v3561 = vunpack.c.l.b16 %v3031
      %v3562 = vunpack.c.h.b16 %v3031
      %v3563 = vunpack.c.l.b16 %v3032
      %v3564 = vunpack.c.h.b16 %v3032
      %v3565 = vunpack.c.l.b16 %v3033
      %v3566 = vunpack.c.h.b16 %v3033
      %v3567 = vunpack.c.l.b16 %v3034
      %v3568 = vunpack.c.h.b16 %v3034
      %v3569 = vpack.c.b16 %v3563, %v3561
      %v3570 = vpack.c.b16 %v3564, %v3562
      %v3571 = vpack.c.b16 %v3567, %v3565
      %v3572 = vpack.c.b16 %v3568, %v3566
      %v3599 = vunpack.c.l.b16 %v3063
      %v3600 = vunpack.c.l.b16 %v3064
      %v3601 = vunpack.c.l.b16 %v3065
      %v3602 = vunpack.c.l.b16 %v3066
      %v3603 = vunpack.c.l.b16 %v3067
      %v3604 = vunpack.c.l.b16 %v3068
      %v3605 = vunpack.c.l.b16 %v3069
      %v3606 = vunpack.c.l.b16 %v3070
      %v3607 = vunpack.c.l.b16 %v3071
      %v3608 = vunpack.c.l.b16 %v3072
      %v3609 = vunpack.c.l.b16 %v3073
      %v3610 = vunpack.c.l.b16 %v3074
      %v3611 = vunpack.c.l.b16 %v3075
      %v3612 = vunpack.c.l.b16 %v3076
      %v3613 = vunpack.c.l.b16 %v3077
      %v3614 = vunpack.c.l.b16 %v3078
      %v3615 = vunpack.c.l.b16 %v3079
      %v3616 = vunpack.c.l.b16 %v3080
      %v3617 = vunpack.c.l.b16 %v3081
      %v3618 = vunpack.c.l.b16 %v3082
      %v3619 = vunpack.c.l.b16 %v3083
      %v3620 = vunpack.c.l.b16 %v3084
      %v3621 = vunpack.c.l.b16 %v3085
      %v3622 = vunpack.c.l.b16 %v3086
      %v3623 = vpack.c.b16 %v3600, %v3599
      %v3624 = vpack.c.b16 %v3602, %v3601
      %v3625 = vpack.c.b16 %v3604, %v3603
      %v3626 = vpack.c.b16 %v3606, %v3605
      %v3627 = vpack.c.b16 %v3608, %v3607
      %v3628 = vpack.c.b16 %v3610, %v3609
      %v3629 = vpack.c.b16 %v3612, %v3611
      %v3630 = vpack.c.b16 %v3614, %v3613
      %v3631 = vpack.c.b16 %v3616, %v3615
      %v3632 = vpack.c.b16 %v3618, %v3617
      %v3633 = vpack.c.b16 %v3620, %v3619
      %v3634 = vpack.c.b16 %v3622, %v3621
      %v3648 = vsel %vm1564, %v3570, 0
      %v3651 = vsel %vm1564, %v3572, 0
      %3653 = vmatpush.bf16.msra.mxu0 %v3630
      %3654 = vmatpush.bf16.msra.mxu0 %v3629
      %3655 = vmatpush.bf16.msra.mxu0 %v3628
      %3656 = vmatpush.bf16.msra.mxu0 %v3627
      %3657 = vmatpush.bf16.msra.mxu0 %v3626
      %3658 = vmatpush.bf16.msra.mxu0 %v3625
      %3659 = vmatpush.bf16.msra.mxu0 %v3624
      %3660 = vmatpush.bf16.msra.mxu0 %v3623
      %3661 = vmatmul.bf16.gmra.mxu0 %v3569
      %v3662 = vpop.f32.mrf.mxu0
      %v3663 = vadd.f32 %v3478, %v3662
      %v3664 = vpop.f32.mrf.mxu0
      %v3665 = vadd.f32 %v3480, %v3664
      %3666 = vmatmul.bf16.gmra.mxu0 %v3571
      %v3667 = vpop.f32.mrf.mxu0
      %v3668 = vadd.f32 %v3483, %v3667
      %v3669 = vpop.f32.mrf.mxu0
      %v3670 = vadd.f32 %v3485, %v3669
      %3671 = vmatmul.bf16.gmra.mxu0 %v3211
      %v3672 = vpop.f32.mrf.mxu0
      %v3673 = vadd.f32 %v3488, %v3672
      %v3674 = vpop.f32.mrf.mxu0
      %v3675 = vadd.f32 %v3490, %v3674
      %3676 = vmatmul.bf16.gmra.mxu0 %v3213
      %v3677 = vpop.f32.mrf.mxu0
      %v3678 = vadd.f32 %v3493, %v3677
      %v3679 = vpop.f32.mrf.mxu0
      %v3680 = vadd.f32 %v3495, %v3679
      %3681 = vmatmul.bf16.gmra.mxu0 %v3215
      %v3682 = vpop.f32.mrf.mxu0
      %v3683 = vadd.f32 %v3498, %v3682
      %v3684 = vpop.f32.mrf.mxu0
      %v3685 = vadd.f32 %v3500, %v3684
      %3686 = vmatmul.bf16.gmra.mxu0 %v3217
      %v3687 = vpop.f32.mrf.mxu0
      %v3688 = vadd.f32 %v3503, %v3687
      %v3689 = vpop.f32.mrf.mxu0
      %v3690 = vadd.f32 %v3505, %v3689
      %3691 = vmatmul.bf16.gmra.mxu0 %v3219
      %v3692 = vpop.f32.mrf.mxu0
      %v3693 = vadd.f32 %v3508, %v3692
      %v3694 = vpop.f32.mrf.mxu0
      %v3695 = vadd.f32 %v3510, %v3694
      %3696 = vmatmul.bf16.gmra.mxu0 %v3221
      %v3697 = vpop.f32.mrf.mxu0
      %v3698 = vadd.f32 %v3513, %v3697
      %v3699 = vpop.f32.mrf.mxu0
      %v3700 = vadd.f32 %v3515, %v3699
      %3701 = vmatmul.bf16.gmra.mxu0 %v3223
      %v3702 = vpop.f32.mrf.mxu0
      %v3703 = vadd.f32 %v3518, %v3702
      %v3704 = vpop.f32.mrf.mxu0
      %v3705 = vadd.f32 %v3520, %v3704
      %3706 = vmatmul.bf16.gmra.mxu0 %v3225
      %v3707 = vpop.f32.mrf.mxu0
      %v3708 = vadd.f32 %v3523, %v3707
      %v3709 = vpop.f32.mrf.mxu0
      %v3710 = vadd.f32 %v3525, %v3709
      %3711 = vmatmul.bf16.gmra.mxu0 %v3227
      %v3712 = vpop.f32.mrf.mxu0
      %v3713 = vadd.f32 %v3528, %v3712
      %v3714 = vpop.f32.mrf.mxu0
      %v3715 = vadd.f32 %v3530, %v3714
      %3716 = vmatmul.bf16.gmra.mxu0 %v3229
      %v3717 = vpop.f32.mrf.mxu0
      %v3718 = vadd.f32 %v3533, %v3717
      %v3719 = vpop.f32.mrf.mxu0
      %v3720 = vadd.f32 %v3535, %v3719
      %3721 = vmatmul.bf16.gmra.mxu0 %v3231
      %v3722 = vpop.f32.mrf.mxu0
      %v3723 = vadd.f32 %v3538, %v3722
      %v3724 = vpop.f32.mrf.mxu0
      %v3725 = vadd.f32 %v3540, %v3724
      %3726 = vmatmul.bf16.gmra.mxu0 %v3233
      %v3727 = vpop.f32.mrf.mxu0
      %v3728 = vadd.f32 %v3543, %v3727
      %v3729 = vpop.f32.mrf.mxu0
      %v3730 = vadd.f32 %v3545, %v3729
      %3731 = vmatmul.bf16.gmra.mxu0 %v3235
      %v3732 = vpop.f32.mrf.mxu0
      %v3733 = vadd.f32 %v3548, %v3732
      %v3734 = vpop.f32.mrf.mxu0
      %v3735 = vadd.f32 %v3550, %v3734
      %3736 = vmatmul.bf16.gmra.mxu0 %v3237
      %v3737 = vpop.f32.mrf.mxu0
      %v3738 = vadd.f32 %v3553, %v3737
      %v3739 = vpop.f32.mrf.mxu0
      %v3740 = vadd.f32 %v3555, %v3739
      %3741 = vdwg.mxu0
      %3742 = vmatpush.bf16.msra.mxu0 0
      %3743 = vmatpush.bf16.msra.mxu0 0
      %3744 = vmatpush.bf16.msra.mxu0 0
      %3745 = vmatpush.bf16.msra.mxu0 0
      %3746 = vmatpush.bf16.msra.mxu0 %v3634
      %3747 = vmatpush.bf16.msra.mxu0 %v3633
      %3748 = vmatpush.bf16.msra.mxu0 %v3632
      %3749 = vmatpush.bf16.msra.mxu0 %v3631
      %3750 = vmatmul.bf16.gmra.mxu0 %v3648
      %v3751 = vpop.f32.mrf.mxu0
      %v3752 = vadd.f32 %v3663, %v3751
      %v3753 = vpop.f32.mrf.mxu0
      %v3754 = vadd.f32 %v3665, %v3753
      %3755 = vmatmul.bf16.gmra.mxu0 %v3651
      %v3756 = vpop.f32.mrf.mxu0
      %v3757 = vadd.f32 %v3668, %v3756
      %v3758 = vpop.f32.mrf.mxu0
      %v3759 = vadd.f32 %v3670, %v3758
      %3760 = vmatmul.bf16.gmra.mxu0 %v3332
      %v3761 = vpop.f32.mrf.mxu0
      %v3762 = vadd.f32 %v3673, %v3761
      %v3763 = vpop.f32.mrf.mxu0
      %v3764 = vadd.f32 %v3675, %v3763
      %3765 = vmatmul.bf16.gmra.mxu0 %v3335
      %v3766 = vpop.f32.mrf.mxu0
      %v3767 = vadd.f32 %v3678, %v3766
      %v3768 = vpop.f32.mrf.mxu0
      %v3769 = vadd.f32 %v3680, %v3768
      %3770 = vmatmul.bf16.gmra.mxu0 %v3338
      %v3771 = vpop.f32.mrf.mxu0
      %v3772 = vadd.f32 %v3683, %v3771
      %v3773 = vpop.f32.mrf.mxu0
      %v3774 = vadd.f32 %v3685, %v3773
      %3775 = vmatmul.bf16.gmra.mxu0 %v3341
      %v3776 = vpop.f32.mrf.mxu0
      %v3777 = vadd.f32 %v3688, %v3776
      %v3778 = vpop.f32.mrf.mxu0
      %v3779 = vadd.f32 %v3690, %v3778
      %3780 = vmatmul.bf16.gmra.mxu0 %v3344
      %v3781 = vpop.f32.mrf.mxu0
      %v3782 = vadd.f32 %v3693, %v3781
      %v3783 = vpop.f32.mrf.mxu0
      %v3784 = vadd.f32 %v3695, %v3783
      %3785 = vmatmul.bf16.gmra.mxu0 %v3347
      %v3786 = vpop.f32.mrf.mxu0
      %v3787 = vadd.f32 %v3698, %v3786
      %v3788 = vpop.f32.mrf.mxu0
      %v3789 = vadd.f32 %v3700, %v3788
      %3790 = vmatmul.bf16.gmra.mxu0 %v3350
      %v3791 = vpop.f32.mrf.mxu0
      %v3792 = vadd.f32 %v3703, %v3791
      %v3793 = vpop.f32.mrf.mxu0
      %v3794 = vadd.f32 %v3705, %v3793
      %3795 = vmatmul.bf16.gmra.mxu0 %v3353
      %v3796 = vpop.f32.mrf.mxu0
      %v3797 = vadd.f32 %v3708, %v3796
      %v3798 = vpop.f32.mrf.mxu0
      %v3799 = vadd.f32 %v3710, %v3798
      %3800 = vmatmul.bf16.gmra.mxu0 %v3356
      %v3801 = vpop.f32.mrf.mxu0
      %v3802 = vadd.f32 %v3713, %v3801
      %v3803 = vpop.f32.mrf.mxu0
      %v3804 = vadd.f32 %v3715, %v3803
      %3805 = vmatmul.bf16.gmra.mxu0 %v3359
      %v3806 = vpop.f32.mrf.mxu0
      %v3807 = vadd.f32 %v3718, %v3806
      %v3808 = vpop.f32.mrf.mxu0
      %v3809 = vadd.f32 %v3720, %v3808
      %3810 = vmatmul.bf16.gmra.mxu0 %v3362
      %v3811 = vpop.f32.mrf.mxu0
      %v3812 = vadd.f32 %v3723, %v3811
      %v3813 = vpop.f32.mrf.mxu0
      %v3814 = vadd.f32 %v3725, %v3813
      %3815 = vmatmul.bf16.gmra.mxu0 %v3365
      %v3816 = vpop.f32.mrf.mxu0
      %v3817 = vadd.f32 %v3728, %v3816
      %v3818 = vpop.f32.mrf.mxu0
      %v3819 = vadd.f32 %v3730, %v3818
      %3820 = vmatmul.bf16.gmra.mxu0 %v3368
      %v3821 = vpop.f32.mrf.mxu0
      %v3822 = vadd.f32 %v3733, %v3821
      %v3823 = vpop.f32.mrf.mxu0
      %v3824 = vadd.f32 %v3735, %v3823
      %3825 = vmatmul.bf16.gmra.mxu0 %v3371
      %v3826 = vpop.f32.mrf.mxu0
      %v3827 = vadd.f32 %v3738, %v3826
      %v3828 = vpop.f32.mrf.mxu0
      %v3829 = vadd.f32 %v3740, %v3828
      %3830 = vdwg.mxu0
      %v3831 = vld [vmem:[#allocation2 + $0x140] sm:$0xff]
      %v3832 = vld [vmem:[#allocation2 + $0x148] sm:$0xff]
      %v3833 = vld [vmem:[#allocation2 + $0x150] sm:$0xff]
      %v3834 = vld [vmem:[#allocation2 + $0x158] sm:$0xff]
      %v3835 = vld [vmem:[#allocation2 + $0x160] sm:$0xff]
      %v3836 = vld [vmem:[#allocation2 + $0x168] sm:$0xff]
      %v3837 = vld [vmem:[#allocation2 + $0x170] sm:$0xff]
      %v3838 = vld [vmem:[#allocation2 + $0x178] sm:$0xff]
      %v3839 = vld [vmem:[#allocation2 + $0x180] sm:$0xff]
      %v3840 = vld [vmem:[#allocation2 + $0x188] sm:$0xff]
      %v3841 = vld [vmem:[#allocation2 + $0x190] sm:$0xff]
      %v3842 = vld [vmem:[#allocation2 + $0x198] sm:$0xff]
      %v3843 = vld [vmem:[#allocation2 + $0x1a0] sm:$0xff]
      %v3844 = vld [vmem:[#allocation2 + $0x1a8] sm:$0xff]
      %v3845 = vld [vmem:[#allocation2 + $0x1b0] sm:$0xff]
      %v3846 = vld [vmem:[#allocation2 + $0x1b8] sm:$0xff]
      %v3847 = vld [vmem:[#allocation2 + $0x1c0] sm:$0xff]
      %v3848 = vld [vmem:[#allocation2 + $0x1c8] sm:$0xff]
      %v3849 = vld [vmem:[#allocation2 + $0x1d0] sm:$0xff]
      %v3850 = vld [vmem:[#allocation2 + $0x1d8] sm:$0xff]
      %v3851 = vld [vmem:[#allocation2 + $0x1e0] sm:$0xff]
      %v3852 = vld [vmem:[#allocation2 + $0x1e8] sm:$0xff]
      %v3853 = vld [vmem:[#allocation2 + $0x1f0] sm:$0xff]
      %v3854 = vld [vmem:[#allocation2 + $0x1f8] sm:$0xff]
      %v3855 = vld [vmem:[#allocation2 + $0x200] sm:$0xff]
      %v3856 = vld [vmem:[#allocation2 + $0x208] sm:$0xff]
      %v3857 = vld [vmem:[#allocation2 + $0x210] sm:$0xff]
      %v3858 = vld [vmem:[#allocation2 + $0x218] sm:$0xff]
      %v3859 = vld [vmem:[#allocation2 + $0x220] sm:$0xff]
      %v3860 = vld [vmem:[#allocation2 + $0x228] sm:$0xff]
      %v3861 = vld [vmem:[#allocation2 + $0x230] sm:$0xff]
      %v3862 = vld [vmem:[#allocation2 + $0x238] sm:$0xff]
      %v3863 = vld [vmem:[%s2097] sm:$0xf]
      %v3864 = vld [vmem:[%s2097 + $0x4] sm:$0xf]
      %v3865 = vld [vmem:[%s2097 + $0x8] sm:$0xf]
      %v3866 = vld [vmem:[%s2097 + $0xc] sm:$0xf]
      %v3867 = vld [vmem:[%s2097 + $0x10] sm:$0xf]
      %v3868 = vld [vmem:[%s2097 + $0x14] sm:$0xf]
      %v3869 = vld [vmem:[%s2097 + $0x18] sm:$0xf]
      %v3870 = vld [vmem:[%s2097 + $0x1c] sm:$0xf]
      %v3871 = vld [vmem:[%s2097 + $0x20] sm:$0xf]
      %v3872 = vld [vmem:[%s2097 + $0x24] sm:$0xf]
      %v3873 = vld [vmem:[%s2097 + $0x28] sm:$0xf]
      %v3874 = vld [vmem:[%s2097 + $0x2c] sm:$0xf]
      %v3875 = vld [vmem:[%s2097 + $0x30] sm:$0xf]
      %v3876 = vld [vmem:[%s2097 + $0x34] sm:$0xf]
      %v3877 = vld [vmem:[%s2097 + $0x38] sm:$0xf]
      %v3878 = vld [vmem:[%s2097 + $0x3c] sm:$0xf]
      %v3879 = vld [vmem:[%s2097 + $0x40] sm:$0xf]
      %v3880 = vld [vmem:[%s2097 + $0x44] sm:$0xf]
      %v3881 = vld [vmem:[%s2097 + $0x48] sm:$0xf]
      %v3882 = vld [vmem:[%s2097 + $0x4c] sm:$0xf]
      %v3883 = vld [vmem:[%s2097 + $0x50] sm:$0xf]
      %v3884 = vld [vmem:[%s2097 + $0x54] sm:$0xf]
      %v3885 = vld [vmem:[%s2097 + $0x58] sm:$0xf]
      %v3886 = vld [vmem:[%s2097 + $0x5c] sm:$0xf]
      %v3919 = vunpack.c.l.b16 %v3831
      %v3920 = vunpack.c.h.b16 %v3831
      %v3921 = vunpack.c.l.b16 %v3832
      %v3922 = vunpack.c.h.b16 %v3832
      %v3923 = vunpack.c.l.b16 %v3833
      %v3924 = vunpack.c.h.b16 %v3833
      %v3925 = vunpack.c.l.b16 %v3834
      %v3926 = vunpack.c.h.b16 %v3834
      %v3927 = vunpack.c.l.b16 %v3835
      %v3928 = vunpack.c.h.b16 %v3835
      %v3929 = vunpack.c.l.b16 %v3836
      %v3930 = vunpack.c.h.b16 %v3836
      %v3931 = vunpack.c.l.b16 %v3837
      %v3932 = vunpack.c.h.b16 %v3837
      %v3933 = vunpack.c.l.b16 %v3838
      %v3934 = vunpack.c.h.b16 %v3838
      %v3935 = vunpack.c.l.b16 %v3839
      %v3936 = vunpack.c.h.b16 %v3839
      %v3937 = vunpack.c.l.b16 %v3840
      %v3938 = vunpack.c.h.b16 %v3840
      %v3939 = vunpack.c.l.b16 %v3841
      %v3940 = vunpack.c.h.b16 %v3841
      %v3941 = vunpack.c.l.b16 %v3842
      %v3942 = vunpack.c.h.b16 %v3842
      %v3943 = vunpack.c.l.b16 %v3843
      %v3944 = vunpack.c.h.b16 %v3843
      %v3945 = vunpack.c.l.b16 %v3844
      %v3946 = vunpack.c.h.b16 %v3844
      %v3947 = vunpack.c.l.b16 %v3845
      %v3948 = vunpack.c.h.b16 %v3845
      %v3949 = vunpack.c.l.b16 %v3846
      %v3950 = vunpack.c.h.b16 %v3846
      %v3951 = vunpack.c.l.b16 %v3847
      %v3952 = vunpack.c.h.b16 %v3847
      %v3953 = vunpack.c.l.b16 %v3848
      %v3954 = vunpack.c.h.b16 %v3848
      %v3955 = vunpack.c.l.b16 %v3849
      %v3956 = vunpack.c.h.b16 %v3849
      %v3957 = vunpack.c.l.b16 %v3850
      %v3958 = vunpack.c.h.b16 %v3850
      %v3959 = vunpack.c.l.b16 %v3851
      %v3960 = vunpack.c.h.b16 %v3851
      %v3961 = vunpack.c.l.b16 %v3852
      %v3962 = vunpack.c.h.b16 %v3852
      %v3963 = vunpack.c.l.b16 %v3853
      %v3964 = vunpack.c.h.b16 %v3853
      %v3965 = vunpack.c.l.b16 %v3854
      %v3966 = vunpack.c.h.b16 %v3854
      %v3967 = vunpack.c.l.b16 %v3855
      %v3968 = vunpack.c.h.b16 %v3855
      %v3969 = vunpack.c.l.b16 %v3856
      %v3970 = vunpack.c.h.b16 %v3856
      %v3971 = vunpack.c.l.b16 %v3857
      %v3972 = vunpack.c.h.b16 %v3857
      %v3973 = vunpack.c.l.b16 %v3858
      %v3974 = vunpack.c.h.b16 %v3858
      %v3975 = vunpack.c.l.b16 %v3859
      %v3976 = vunpack.c.h.b16 %v3859
      %v3977 = vunpack.c.l.b16 %v3860
      %v3978 = vunpack.c.h.b16 %v3860
      %v3979 = vunpack.c.l.b16 %v3861
      %v3980 = vunpack.c.h.b16 %v3861
      %v3981 = vunpack.c.l.b16 %v3862
      %v3982 = vunpack.c.h.b16 %v3862
      %v3983 = vpack.c.b16 %v3921, %v3919
      %v3984 = vpack.c.b16 %v3922, %v3920
      %v3985 = vpack.c.b16 %v3925, %v3923
      %v3986 = vpack.c.b16 %v3926, %v3924
      %v3987 = vpack.c.b16 %v3929, %v3927
      %v3988 = vpack.c.b16 %v3930, %v3928
      %v3989 = vpack.c.b16 %v3933, %v3931
      %v3990 = vpack.c.b16 %v3934, %v3932
      %v3991 = vpack.c.b16 %v3937, %v3935
      %v3992 = vpack.c.b16 %v3938, %v3936
      %v3993 = vpack.c.b16 %v3941, %v3939
      %v3994 = vpack.c.b16 %v3942, %v3940
      %v3995 = vpack.c.b16 %v3945, %v3943
      %v3996 = vpack.c.b16 %v3946, %v3944
      %v3997 = vpack.c.b16 %v3949, %v3947
      %v3998 = vpack.c.b16 %v3950, %v3948
      %v3999 = vpack.c.b16 %v3953, %v3951
      %v4000 = vpack.c.b16 %v3954, %v3952
      %v4001 = vpack.c.b16 %v3957, %v3955
      %v4002 = vpack.c.b16 %v3958, %v3956
      %v4003 = vpack.c.b16 %v3961, %v3959
      %v4004 = vpack.c.b16 %v3962, %v3960
      %v4005 = vpack.c.b16 %v3965, %v3963
      %v4006 = vpack.c.b16 %v3966, %v3964
      %v4007 = vpack.c.b16 %v3969, %v3967
      %v4008 = vpack.c.b16 %v3970, %v3968
      %v4009 = vpack.c.b16 %v3973, %v3971
      %v4010 = vpack.c.b16 %v3974, %v3972
      %v4011 = vpack.c.b16 %v3977, %v3975
      %v4012 = vpack.c.b16 %v3978, %v3976
      %v4013 = vpack.c.b16 %v3981, %v3979
      %v4014 = vpack.c.b16 %v3982, %v3980
      %v4055 = vunpack.c.l.b16 %v3863
      %v4056 = vunpack.c.l.b16 %v3864
      %v4057 = vunpack.c.l.b16 %v3865
      %v4058 = vunpack.c.l.b16 %v3866
      %v4059 = vunpack.c.l.b16 %v3867
      %v4060 = vunpack.c.l.b16 %v3868
      %v4061 = vunpack.c.l.b16 %v3869
      %v4062 = vunpack.c.l.b16 %v3870
      %v4063 = vunpack.c.l.b16 %v3871
      %v4064 = vunpack.c.l.b16 %v3872
      %v4065 = vunpack.c.l.b16 %v3873
      %v4066 = vunpack.c.l.b16 %v3874
      %v4067 = vunpack.c.l.b16 %v3875
      %v4068 = vunpack.c.l.b16 %v3876
      %v4069 = vunpack.c.l.b16 %v3877
      %v4070 = vunpack.c.l.b16 %v3878
      %v4071 = vunpack.c.l.b16 %v3879
      %v4072 = vunpack.c.l.b16 %v3880
      %v4073 = vunpack.c.l.b16 %v3881
      %v4074 = vunpack.c.l.b16 %v3882
      %v4075 = vunpack.c.l.b16 %v3883
      %v4076 = vunpack.c.l.b16 %v3884
      %v4077 = vunpack.c.l.b16 %v3885
      %v4078 = vunpack.c.l.b16 %v3886
      %v4079 = vpack.c.b16 %v4056, %v4055
      %v4080 = vpack.c.b16 %v4058, %v4057
      %v4081 = vpack.c.b16 %v4060, %v4059
      %v4082 = vpack.c.b16 %v4062, %v4061
      %v4083 = vpack.c.b16 %v4064, %v4063
      %v4084 = vpack.c.b16 %v4066, %v4065
      %v4085 = vpack.c.b16 %v4068, %v4067
      %v4086 = vpack.c.b16 %v4070, %v4069
      %v4087 = vpack.c.b16 %v4072, %v4071
      %v4088 = vpack.c.b16 %v4074, %v4073
      %v4089 = vpack.c.b16 %v4076, %v4075
      %v4090 = vpack.c.b16 %v4078, %v4077
      %v4104 = vsel %vm1564, %v3984, 0
      %v4107 = vsel %vm1564, %v3986, 0
      %v4110 = vsel %vm1564, %v3988, 0
      %v4113 = vsel %vm1564, %v3990, 0
      %v4116 = vsel %vm1564, %v3992, 0
      %v4119 = vsel %vm1564, %v3994, 0
      %v4122 = vsel %vm1564, %v3996, 0
      %v4125 = vsel %vm1564, %v3998, 0
      %v4128 = vsel %vm1564, %v4000, 0
      %v4131 = vsel %vm1564, %v4002, 0
      %v4134 = vsel %vm1564, %v4004, 0
      %v4137 = vsel %vm1564, %v4006, 0
      %v4140 = vsel %vm1564, %v4008, 0
      %v4143 = vsel %vm1564, %v4010, 0
      %v4146 = vsel %vm1564, %v4012, 0
      %v4149 = vsel %vm1564, %v4014, 0
      %4151 = vmatpush.bf16.msra.mxu0 %v4086
      %4152 = vmatpush.bf16.msra.mxu0 %v4085
      %4153 = vmatpush.bf16.msra.mxu0 %v4084
      %4154 = vmatpush.bf16.msra.mxu0 %v4083
      %4155 = vmatpush.bf16.msra.mxu0 %v4082
      %4156 = vmatpush.bf16.msra.mxu0 %v4081
      %4157 = vmatpush.bf16.msra.mxu0 %v4080
      %4158 = vmatpush.bf16.msra.mxu0 %v4079
      %4159 = vmatmul.bf16.gmra.mxu0 %v3983
      %v4160 = vpop.f32.mrf.mxu0
      %v4161 = vadd.f32 0.0, %v4160
      %v4162 = vpop.f32.mrf.mxu0
      %v4163 = vadd.f32 0.0, %v4162
      %4164 = vmatmul.bf16.gmra.mxu0 %v3985
      %v4165 = vpop.f32.mrf.mxu0
      %v4166 = vadd.f32 0.0, %v4165
      %v4167 = vpop.f32.mrf.mxu0
      %v4168 = vadd.f32 0.0, %v4167
      %4169 = vmatmul.bf16.gmra.mxu0 %v3987
      %v4170 = vpop.f32.mrf.mxu0
      %v4171 = vadd.f32 0.0, %v4170
      %v4172 = vpop.f32.mrf.mxu0
      %v4173 = vadd.f32 0.0, %v4172
      %4174 = vmatmul.bf16.gmra.mxu0 %v3989
      %v4175 = vpop.f32.mrf.mxu0
      %v4176 = vadd.f32 0.0, %v4175
      %v4177 = vpop.f32.mrf.mxu0
      %v4178 = vadd.f32 0.0, %v4177
      %4179 = vmatmul.bf16.gmra.mxu0 %v3991
      %v4180 = vpop.f32.mrf.mxu0
      %v4181 = vadd.f32 0.0, %v4180
      %v4182 = vpop.f32.mrf.mxu0
      %v4183 = vadd.f32 0.0, %v4182
      %4184 = vmatmul.bf16.gmra.mxu0 %v3993
      %v4185 = vpop.f32.mrf.mxu0
      %v4186 = vadd.f32 0.0, %v4185
      %v4187 = vpop.f32.mrf.mxu0
      %v4188 = vadd.f32 0.0, %v4187
      %4189 = vmatmul.bf16.gmra.mxu0 %v3995
      %v4190 = vpop.f32.mrf.mxu0
      %v4191 = vadd.f32 0.0, %v4190
      %v4192 = vpop.f32.mrf.mxu0
      %v4193 = vadd.f32 0.0, %v4192
      %4194 = vmatmul.bf16.gmra.mxu0 %v3997
      %v4195 = vpop.f32.mrf.mxu0
      %v4196 = vadd.f32 0.0, %v4195
      %v4197 = vpop.f32.mrf.mxu0
      %v4198 = vadd.f32 0.0, %v4197
      %4199 = vmatmul.bf16.gmra.mxu0 %v3999
      %v4200 = vpop.f32.mrf.mxu0
      %v4201 = vadd.f32 0.0, %v4200
      %v4202 = vpop.f32.mrf.mxu0
      %v4203 = vadd.f32 0.0, %v4202
      %4204 = vmatmul.bf16.gmra.mxu0 %v4001
      %v4205 = vpop.f32.mrf.mxu0
      %v4206 = vadd.f32 0.0, %v4205
      %v4207 = vpop.f32.mrf.mxu0
      %v4208 = vadd.f32 0.0, %v4207
      %4209 = vmatmul.bf16.gmra.mxu0 %v4003
      %v4210 = vpop.f32.mrf.mxu0
      %v4211 = vadd.f32 0.0, %v4210
      %v4212 = vpop.f32.mrf.mxu0
      %v4213 = vadd.f32 0.0, %v4212
      %4214 = vmatmul.bf16.gmra.mxu0 %v4005
      %v4215 = vpop.f32.mrf.mxu0
      %v4216 = vadd.f32 0.0, %v4215
      %v4217 = vpop.f32.mrf.mxu0
      %v4218 = vadd.f32 0.0, %v4217
      %4219 = vmatmul.bf16.gmra.mxu0 %v4007
      %v4220 = vpop.f32.mrf.mxu0
      %v4221 = vadd.f32 0.0, %v4220
      %v4222 = vpop.f32.mrf.mxu0
      %v4223 = vadd.f32 0.0, %v4222
      %4224 = vmatmul.bf16.gmra.mxu0 %v4009
      %v4225 = vpop.f32.mrf.mxu0
      %v4226 = vadd.f32 0.0, %v4225
      %v4227 = vpop.f32.mrf.mxu0
      %v4228 = vadd.f32 0.0, %v4227
      %4229 = vmatmul.bf16.gmra.mxu0 %v4011
      %v4230 = vpop.f32.mrf.mxu0
      %v4231 = vadd.f32 0.0, %v4230
      %v4232 = vpop.f32.mrf.mxu0
      %v4233 = vadd.f32 0.0, %v4232
      %4234 = vmatmul.bf16.gmra.mxu0 %v4013
      %v4235 = vpop.f32.mrf.mxu0
      %v4236 = vadd.f32 0.0, %v4235
      %v4237 = vpop.f32.mrf.mxu0
      %v4238 = vadd.f32 0.0, %v4237
      %4239 = vdwg.mxu0
      %4240 = vmatpush.bf16.msra.mxu0 0
      %4241 = vmatpush.bf16.msra.mxu0 0
      %4242 = vmatpush.bf16.msra.mxu0 0
      %4243 = vmatpush.bf16.msra.mxu0 0
      %4244 = vmatpush.bf16.msra.mxu0 %v4090
      %4245 = vmatpush.bf16.msra.mxu0 %v4089
      %4246 = vmatpush.bf16.msra.mxu0 %v4088
      %4247 = vmatpush.bf16.msra.mxu0 %v4087
      %4248 = vmatmul.bf16.gmra.mxu0 %v4104
      %v4249 = vpop.f32.mrf.mxu0
      %v4250 = vadd.f32 %v4161, %v4249
      %v4251 = vpop.f32.mrf.mxu0
      %v4252 = vadd.f32 %v4163, %v4251
      %4253 = vmatmul.bf16.gmra.mxu0 %v4107
      %v4254 = vpop.f32.mrf.mxu0
      %v4255 = vadd.f32 %v4166, %v4254
      %v4256 = vpop.f32.mrf.mxu0
      %v4257 = vadd.f32 %v4168, %v4256
      %4258 = vmatmul.bf16.gmra.mxu0 %v4110
      %v4259 = vpop.f32.mrf.mxu0
      %v4260 = vadd.f32 %v4171, %v4259
      %v4261 = vpop.f32.mrf.mxu0
      %v4262 = vadd.f32 %v4173, %v4261
      %4263 = vmatmul.bf16.gmra.mxu0 %v4113
      %v4264 = vpop.f32.mrf.mxu0
      %v4265 = vadd.f32 %v4176, %v4264
      %v4266 = vpop.f32.mrf.mxu0
      %v4267 = vadd.f32 %v4178, %v4266
      %4268 = vmatmul.bf16.gmra.mxu0 %v4116
      %v4269 = vpop.f32.mrf.mxu0
      %v4270 = vadd.f32 %v4181, %v4269
      %v4271 = vpop.f32.mrf.mxu0
      %v4272 = vadd.f32 %v4183, %v4271
      %4273 = vmatmul.bf16.gmra.mxu0 %v4119
      %v4274 = vpop.f32.mrf.mxu0
      %v4275 = vadd.f32 %v4186, %v4274
      %v4276 = vpop.f32.mrf.mxu0
      %v4277 = vadd.f32 %v4188, %v4276
      %4278 = vmatmul.bf16.gmra.mxu0 %v4122
      %v4279 = vpop.f32.mrf.mxu0
      %v4280 = vadd.f32 %v4191, %v4279
      %v4281 = vpop.f32.mrf.mxu0
      %v4282 = vadd.f32 %v4193, %v4281
      %4283 = vmatmul.bf16.gmra.mxu0 %v4125
      %v4284 = vpop.f32.mrf.mxu0
      %v4285 = vadd.f32 %v4196, %v4284
      %v4286 = vpop.f32.mrf.mxu0
      %v4287 = vadd.f32 %v4198, %v4286
      %4288 = vmatmul.bf16.gmra.mxu0 %v4128
      %v4289 = vpop.f32.mrf.mxu0
      %v4290 = vadd.f32 %v4201, %v4289
      %v4291 = vpop.f32.mrf.mxu0
      %v4292 = vadd.f32 %v4203, %v4291
      %4293 = vmatmul.bf16.gmra.mxu0 %v4131
      %v4294 = vpop.f32.mrf.mxu0
      %v4295 = vadd.f32 %v4206, %v4294
      %v4296 = vpop.f32.mrf.mxu0
      %v4297 = vadd.f32 %v4208, %v4296
      %4298 = vmatmul.bf16.gmra.mxu0 %v4134
      %v4299 = vpop.f32.mrf.mxu0
      %v4300 = vadd.f32 %v4211, %v4299
      %v4301 = vpop.f32.mrf.mxu0
      %v4302 = vadd.f32 %v4213, %v4301
      %4303 = vmatmul.bf16.gmra.mxu0 %v4137
      %v4304 = vpop.f32.mrf.mxu0
      %v4305 = vadd.f32 %v4216, %v4304
      %v4306 = vpop.f32.mrf.mxu0
      %v4307 = vadd.f32 %v4218, %v4306
      %4308 = vmatmul.bf16.gmra.mxu0 %v4140
      %v4309 = vpop.f32.mrf.mxu0
      %v4310 = vadd.f32 %v4221, %v4309
      %v4311 = vpop.f32.mrf.mxu0
      %v4312 = vadd.f32 %v4223, %v4311
      %4313 = vmatmul.bf16.gmra.mxu0 %v4143
      %v4314 = vpop.f32.mrf.mxu0
      %v4315 = vadd.f32 %v4226, %v4314
      %v4316 = vpop.f32.mrf.mxu0
      %v4317 = vadd.f32 %v4228, %v4316
      %4318 = vmatmul.bf16.gmra.mxu0 %v4146
      %v4319 = vpop.f32.mrf.mxu0
      %v4320 = vadd.f32 %v4231, %v4319
      %v4321 = vpop.f32.mrf.mxu0
      %v4322 = vadd.f32 %v4233, %v4321
      %4323 = vmatmul.bf16.gmra.mxu0 %v4149
      %v4324 = vpop.f32.mrf.mxu0
      %v4325 = vadd.f32 %v4236, %v4324
      %v4326 = vpop.f32.mrf.mxu0
      %v4327 = vadd.f32 %v4238, %v4326
      %4328 = vdwg.mxu0
      %v4329 = vadd.f32 %v3752, %v4250
      %v4330 = vadd.f32 %v3754, %v4252
      %v4331 = vadd.f32 %v3757, %v4255
      %v4332 = vadd.f32 %v3759, %v4257
      %v4333 = vadd.f32 %v3762, %v4260
      %v4334 = vadd.f32 %v3764, %v4262
      %v4335 = vadd.f32 %v3767, %v4265
      %v4336 = vadd.f32 %v3769, %v4267
      %v4337 = vadd.f32 %v3772, %v4270
      %v4338 = vadd.f32 %v3774, %v4272
      %v4339 = vadd.f32 %v3777, %v4275
      %v4340 = vadd.f32 %v3779, %v4277
      %v4341 = vadd.f32 %v3782, %v4280
      %v4342 = vadd.f32 %v3784, %v4282
      %v4343 = vadd.f32 %v3787, %v4285
      %v4344 = vadd.f32 %v3789, %v4287
      %v4345 = vadd.f32 %v3792, %v4290
      %v4346 = vadd.f32 %v3794, %v4292
      %v4347 = vadd.f32 %v3797, %v4295
      %v4348 = vadd.f32 %v3799, %v4297
      %v4349 = vadd.f32 %v3802, %v4300
      %v4350 = vadd.f32 %v3804, %v4302
      %v4351 = vadd.f32 %v3807, %v4305
      %v4352 = vadd.f32 %v3809, %v4307
      %v4353 = vadd.f32 %v3812, %v4310
      %v4354 = vadd.f32 %v3814, %v4312
      %v4355 = vadd.f32 %v3817, %v4315
      %v4356 = vadd.f32 %v3819, %v4317
      %v4357 = vadd.f32 %v3822, %v4320
      %v4358 = vadd.f32 %v3824, %v4322
      %v4359 = vadd.f32 %v3827, %v4325
      %v4360 = vadd.f32 %v3829, %v4327
      %v4361 = vld [vmem:[%s2] sm:$0xff]
      %v4362 = vld [vmem:[%s2 + $0x8] sm:$0xff]
      %v4363 = vld [vmem:[%s2 + $0x10] sm:$0xff]
      %v4364 = vld [vmem:[%s2 + $0x18] sm:$0xff]
      %v4365 = vld [vmem:[%s2 + $0x20] sm:$0xff]
      %v4366 = vld [vmem:[%s2 + $0x28] sm:$0xff]
      %v4367 = vld [vmem:[%s2 + $0x30] sm:$0xff]
      %v4368 = vld [vmem:[%s2 + $0x38] sm:$0xff]
      %v4369 = vld [vmem:[%s2 + $0x40] sm:$0xff]
      %v4370 = vld [vmem:[%s2 + $0x48] sm:$0xff]
      %v4371 = vld [vmem:[%s2 + $0x50] sm:$0xff]
      %v4372 = vld [vmem:[%s2 + $0x58] sm:$0xff]
      %v4373 = vld [vmem:[%s2 + $0x60] sm:$0xff]
      %v4374 = vld [vmem:[%s2 + $0x68] sm:$0xff]
      %v4375 = vld [vmem:[%s2 + $0x70] sm:$0xff]
      %v4376 = vld [vmem:[%s2 + $0x78] sm:$0xff]
      %v4377 = vld [vmem:[%s2 + $0x80] sm:$0xff]
      %v4378 = vld [vmem:[%s2 + $0x88] sm:$0xff]
      %v4379 = vld [vmem:[%s2 + $0x90] sm:$0xff]
      %v4380 = vld [vmem:[%s2 + $0x98] sm:$0xff]
      %v4381 = vld [vmem:[%s2 + $0xa0] sm:$0xff]
      %v4382 = vld [vmem:[%s2 + $0xa8] sm:$0xff]
      %v4383 = vld [vmem:[%s2 + $0xb0] sm:$0xff]
      %v4384 = vld [vmem:[%s2 + $0xb8] sm:$0xff]
      %v4385 = vld [vmem:[%s2 + $0xc0] sm:$0xff]
      %v4386 = vld [vmem:[%s2 + $0xc8] sm:$0xff]
      %v4387 = vld [vmem:[%s2 + $0xd0] sm:$0xff]
      %v4388 = vld [vmem:[%s2 + $0xd8] sm:$0xff]
      %v4389 = vld [vmem:[%s2 + $0xe0] sm:$0xff]
      %v4390 = vld [vmem:[%s2 + $0xe8] sm:$0xff]
      %v4391 = vld [vmem:[%s2 + $0xf0] sm:$0xff]
      %v4392 = vld [vmem:[%s2 + $0xf8] sm:$0xff]
      %4394 = vset.pattern.permute.xlu0 0
      %4395 = vperm.xlu0 %4394, %v4361
      %v4396 = vpop.permute.xlu0 %4395
      %4399 = vset.pattern.permute.xlu0 0
      %4400 = vperm.xlu0 %4399, %v4362
      %v4401 = vpop.permute.xlu0 %4400
      %4404 = vset.pattern.permute.xlu0 0
      %4405 = vperm.xlu0 %4404, %v4363
      %v4406 = vpop.permute.xlu0 %4405
      %4409 = vset.pattern.permute.xlu0 0
      %4410 = vperm.xlu0 %4409, %v4364
      %v4411 = vpop.permute.xlu0 %4410
      %4414 = vset.pattern.permute.xlu0 0
      %4415 = vperm.xlu0 %4414, %v4365
      %v4416 = vpop.permute.xlu0 %4415
      %4419 = vset.pattern.permute.xlu0 0
      %4420 = vperm.xlu0 %4419, %v4366
      %v4421 = vpop.permute.xlu0 %4420
      %4424 = vset.pattern.permute.xlu0 0
      %4425 = vperm.xlu0 %4424, %v4367
      %v4426 = vpop.permute.xlu0 %4425
      %4429 = vset.pattern.permute.xlu0 0
      %4430 = vperm.xlu0 %4429, %v4368
      %v4431 = vpop.permute.xlu0 %4430
      %4434 = vset.pattern.permute.xlu0 0
      %4435 = vperm.xlu0 %4434, %v4369
      %v4436 = vpop.permute.xlu0 %4435
      %4439 = vset.pattern.permute.xlu0 0
      %4440 = vperm.xlu0 %4439, %v4370
      %v4441 = vpop.permute.xlu0 %4440
      %4444 = vset.pattern.permute.xlu0 0
      %4445 = vperm.xlu0 %4444, %v4371
      %v4446 = vpop.permute.xlu0 %4445
      %4449 = vset.pattern.permute.xlu0 0
      %4450 = vperm.xlu0 %4449, %v4372
      %v4451 = vpop.permute.xlu0 %4450
      %4454 = vset.pattern.permute.xlu0 0
      %4455 = vperm.xlu0 %4454, %v4373
      %v4456 = vpop.permute.xlu0 %4455
      %4459 = vset.pattern.permute.xlu0 0
      %4460 = vperm.xlu0 %4459, %v4374
      %v4461 = vpop.permute.xlu0 %4460
      %4464 = vset.pattern.permute.xlu0 0
      %4465 = vperm.xlu0 %4464, %v4375
      %v4466 = vpop.permute.xlu0 %4465
      %4469 = vset.pattern.permute.xlu0 0
      %4470 = vperm.xlu0 %4469, %v4376
      %v4471 = vpop.permute.xlu0 %4470
      %4474 = vset.pattern.permute.xlu0 0
      %4475 = vperm.xlu0 %4474, %v4377
      %v4476 = vpop.permute.xlu0 %4475
      %4479 = vset.pattern.permute.xlu0 0
      %4480 = vperm.xlu0 %4479, %v4378
      %v4481 = vpop.permute.xlu0 %4480
      %4484 = vset.pattern.permute.xlu0 0
      %4485 = vperm.xlu0 %4484, %v4379
      %v4486 = vpop.permute.xlu0 %4485
      %4489 = vset.pattern.permute.xlu0 0
      %4490 = vperm.xlu0 %4489, %v4380
      %v4491 = vpop.permute.xlu0 %4490
      %4494 = vset.pattern.permute.xlu0 0
      %4495 = vperm.xlu0 %4494, %v4381
      %v4496 = vpop.permute.xlu0 %4495
      %4499 = vset.pattern.permute.xlu0 0
      %4500 = vperm.xlu0 %4499, %v4382
      %v4501 = vpop.permute.xlu0 %4500
      %4504 = vset.pattern.permute.xlu0 0
      %4505 = vperm.xlu0 %4504, %v4383
      %v4506 = vpop.permute.xlu0 %4505
      %4509 = vset.pattern.permute.xlu0 0
      %4510 = vperm.xlu0 %4509, %v4384
      %v4511 = vpop.permute.xlu0 %4510
      %4514 = vset.pattern.permute.xlu0 0
      %4515 = vperm.xlu0 %4514, %v4385
      %v4516 = vpop.permute.xlu0 %4515
      %4519 = vset.pattern.permute.xlu0 0
      %4520 = vperm.xlu0 %4519, %v4386
      %v4521 = vpop.permute.xlu0 %4520
      %4524 = vset.pattern.permute.xlu0 0
      %4525 = vperm.xlu0 %4524, %v4387
      %v4526 = vpop.permute.xlu0 %4525
      %4529 = vset.pattern.permute.xlu0 0
      %4530 = vperm.xlu0 %4529, %v4388
      %v4531 = vpop.permute.xlu0 %4530
      %4534 = vset.pattern.permute.xlu0 0
      %4535 = vperm.xlu0 %4534, %v4389
      %v4536 = vpop.permute.xlu0 %4535
      %4539 = vset.pattern.permute.xlu0 0
      %4540 = vperm.xlu0 %4539, %v4390
      %v4541 = vpop.permute.xlu0 %4540
      %4544 = vset.pattern.permute.xlu0 0
      %4545 = vperm.xlu0 %4544, %v4391
      %v4546 = vpop.permute.xlu0 %4545
      %4549 = vset.pattern.permute.xlu0 0
      %4550 = vperm.xlu0 %4549, %v4392
      %v4551 = vpop.permute.xlu0 %4550
      %v4553 = vmul.f32 %v4329, %v4396
      %v4554 = vmul.f32 %v4330, %v4401
      %v4555 = vmul.f32 %v4331, %v4406
      %v4556 = vmul.f32 %v4332, %v4411
      %v4557 = vmul.f32 %v4333, %v4416
      %v4558 = vmul.f32 %v4334, %v4421
      %v4559 = vmul.f32 %v4335, %v4426
      %v4560 = vmul.f32 %v4336, %v4431
      %v4561 = vmul.f32 %v4337, %v4436
      %v4562 = vmul.f32 %v4338, %v4441
      %v4563 = vmul.f32 %v4339, %v4446
      %v4564 = vmul.f32 %v4340, %v4451
      %v4565 = vmul.f32 %v4341, %v4456
      %v4566 = vmul.f32 %v4342, %v4461
      %v4567 = vmul.f32 %v4343, %v4466
      %v4568 = vmul.f32 %v4344, %v4471
      %v4569 = vmul.f32 %v4345, %v4476
      %v4570 = vmul.f32 %v4346, %v4481
      %v4571 = vmul.f32 %v4347, %v4486
      %v4572 = vmul.f32 %v4348, %v4491
      %v4573 = vmul.f32 %v4349, %v4496
      %v4574 = vmul.f32 %v4350, %v4501
      %v4575 = vmul.f32 %v4351, %v4506
      %v4576 = vmul.f32 %v4352, %v4511
      %v4577 = vmul.f32 %v4353, %v4516
      %v4578 = vmul.f32 %v4354, %v4521
      %v4579 = vmul.f32 %v4355, %v4526
      %v4580 = vmul.f32 %v4356, %v4531
      %v4581 = vmul.f32 %v4357, %v4536
      %v4582 = vmul.f32 %v4358, %v4541
      %v4583 = vmul.f32 %v4359, %v4546
      %v4584 = vmul.f32 %v4360, %v4551
      %v4585 = vsel %vm1564, %v4553, 0.0
      %v4586 = vsel %vm1564, %v4554, 0.0
      %v4587 = vadd.f32 %v4585, %v4586
      %v4588 = vsel %vm1564, %v4555, 0.0
      %v4589 = vadd.f32 %v4587, %v4588
      %v4590 = vsel %vm1564, %v4556, 0.0
      %v4591 = vadd.f32 %v4589, %v4590
      %v4592 = vsel %vm1564, %v4557, 0.0
      %v4593 = vadd.f32 %v4591, %v4592
      %v4594 = vsel %vm1564, %v4558, 0.0
      %v4595 = vadd.f32 %v4593, %v4594
      %v4596 = vsel %vm1564, %v4559, 0.0
      %v4597 = vadd.f32 %v4595, %v4596
      %v4598 = vsel %vm1564, %v4560, 0.0
      %v4599 = vadd.f32 %v4597, %v4598
      %v4600 = vsel %vm1564, %v4561, 0.0
      %v4601 = vadd.f32 %v4599, %v4600
      %v4602 = vsel %vm1564, %v4562, 0.0
      %v4603 = vadd.f32 %v4601, %v4602
      %v4604 = vsel %vm1564, %v4563, 0.0
      %v4605 = vadd.f32 %v4603, %v4604
      %v4606 = vsel %vm1564, %v4564, 0.0
      %v4607 = vadd.f32 %v4605, %v4606
      %v4608 = vsel %vm1564, %v4565, 0.0
      %v4609 = vadd.f32 %v4607, %v4608
      %v4610 = vsel %vm1564, %v4566, 0.0
      %v4611 = vadd.f32 %v4609, %v4610
      %v4612 = vsel %vm1564, %v4567, 0.0
      %v4613 = vadd.f32 %v4611, %v4612
      %v4614 = vsel %vm1564, %v4568, 0.0
      %v4615 = vadd.f32 %v4613, %v4614
      %v4616 = vsel %vm1564, %v4569, 0.0
      %v4617 = vadd.f32 %v4615, %v4616
      %v4618 = vsel %vm1564, %v4570, 0.0
      %v4619 = vadd.f32 %v4617, %v4618
      %v4620 = vsel %vm1564, %v4571, 0.0
      %v4621 = vadd.f32 %v4619, %v4620
      %v4622 = vsel %vm1564, %v4572, 0.0
      %v4623 = vadd.f32 %v4621, %v4622
      %v4624 = vsel %vm1564, %v4573, 0.0
      %v4625 = vadd.f32 %v4623, %v4624
      %v4626 = vsel %vm1564, %v4574, 0.0
      %v4627 = vadd.f32 %v4625, %v4626
      %v4628 = vsel %vm1564, %v4575, 0.0
      %v4629 = vadd.f32 %v4627, %v4628
      %v4630 = vsel %vm1564, %v4576, 0.0
      %v4631 = vadd.f32 %v4629, %v4630
      %v4632 = vsel %vm1564, %v4577, 0.0
      %v4633 = vadd.f32 %v4631, %v4632
      %v4634 = vsel %vm1564, %v4578, 0.0
      %v4635 = vadd.f32 %v4633, %v4634
      %v4636 = vsel %vm1564, %v4579, 0.0
      %v4637 = vadd.f32 %v4635, %v4636
      %v4638 = vsel %vm1564, %v4580, 0.0
      %v4639 = vadd.f32 %v4637, %v4638
      %v4640 = vsel %vm1564, %v4581, 0.0
      %v4641 = vadd.f32 %v4639, %v4640
      %v4642 = vsel %vm1564, %v4582, 0.0
      %v4643 = vadd.f32 %v4641, %v4642
      %v4644 = vsel %vm1564, %v4583, 0.0
      %v4645 = vadd.f32 %v4643, %v4644
      %v4646 = vsel %vm1564, %v4584, 0.0
      %v4647 = vadd.f32 %v4645, %v4646
      %v4648 = vrot.slane %v4647, 4
      %v4649 = vadd.f32 %v4647, %v4648
      %v4650 = vrot.slane %v4649, 2
      %v4651 = vadd.f32 %v4649, %v4650
      %v4652 = vrot.slane %v4651, 1
      %v4653 = vadd.f32 %v4651, %v4652
      %v4654 = vadd.f32 %v2889, %v4653
      %v4655 = vmul.f32 %v4553, %v4329
      %v4656 = vmul.f32 %v4554, %v4330
      %v4657 = vmul.f32 %v4555, %v4331
      %v4658 = vmul.f32 %v4556, %v4332
      %v4659 = vmul.f32 %v4557, %v4333
      %v4660 = vmul.f32 %v4558, %v4334
      %v4661 = vmul.f32 %v4559, %v4335
      %v4662 = vmul.f32 %v4560, %v4336
      %v4663 = vmul.f32 %v4561, %v4337
      %v4664 = vmul.f32 %v4562, %v4338
      %v4665 = vmul.f32 %v4563, %v4339
      %v4666 = vmul.f32 %v4564, %v4340
      %v4667 = vmul.f32 %v4565, %v4341
      %v4668 = vmul.f32 %v4566, %v4342
      %v4669 = vmul.f32 %v4567, %v4343
      %v4670 = vmul.f32 %v4568, %v4344
      %v4671 = vmul.f32 %v4569, %v4345
      %v4672 = vmul.f32 %v4570, %v4346
      %v4673 = vmul.f32 %v4571, %v4347
      %v4674 = vmul.f32 %v4572, %v4348
      %v4675 = vmul.f32 %v4573, %v4349
      %v4676 = vmul.f32 %v4574, %v4350
      %v4677 = vmul.f32 %v4575, %v4351
      %v4678 = vmul.f32 %v4576, %v4352
      %v4679 = vmul.f32 %v4577, %v4353
      %v4680 = vmul.f32 %v4578, %v4354
      %v4681 = vmul.f32 %v4579, %v4355
      %v4682 = vmul.f32 %v4580, %v4356
      %v4683 = vmul.f32 %v4581, %v4357
      %v4684 = vmul.f32 %v4582, %v4358
      %v4685 = vmul.f32 %v4583, %v4359
      %v4686 = vmul.f32 %v4584, %v4360
      %v4687 = vsel %vm1564, %v4655, 0.0
      %v4688 = vsel %vm1564, %v4656, 0.0
      %v4689 = vadd.f32 %v4687, %v4688
      %v4690 = vsel %vm1564, %v4657, 0.0
      %v4691 = vadd.f32 %v4689, %v4690
      %v4692 = vsel %vm1564, %v4658, 0.0
      %v4693 = vadd.f32 %v4691, %v4692
      %v4694 = vsel %vm1564, %v4659, 0.0
      %v4695 = vadd.f32 %v4693, %v4694
      %v4696 = vsel %vm1564, %v4660, 0.0
      %v4697 = vadd.f32 %v4695, %v4696
      %v4698 = vsel %vm1564, %v4661, 0.0
      %v4699 = vadd.f32 %v4697, %v4698
      %v4700 = vsel %vm1564, %v4662, 0.0
      %v4701 = vadd.f32 %v4699, %v4700
      %v4702 = vsel %vm1564, %v4663, 0.0
      %v4703 = vadd.f32 %v4701, %v4702
      %v4704 = vsel %vm1564, %v4664, 0.0
      %v4705 = vadd.f32 %v4703, %v4704
      %v4706 = vsel %vm1564, %v4665, 0.0
      %v4707 = vadd.f32 %v4705, %v4706
      %v4708 = vsel %vm1564, %v4666, 0.0
      %v4709 = vadd.f32 %v4707, %v4708
      %v4710 = vsel %vm1564, %v4667, 0.0
      %v4711 = vadd.f32 %v4709, %v4710
      %v4712 = vsel %vm1564, %v4668, 0.0
      %v4713 = vadd.f32 %v4711, %v4712
      %v4714 = vsel %vm1564, %v4669, 0.0
      %v4715 = vadd.f32 %v4713, %v4714
      %v4716 = vsel %vm1564, %v4670, 0.0
      %v4717 = vadd.f32 %v4715, %v4716
      %v4718 = vsel %vm1564, %v4671, 0.0
      %v4719 = vadd.f32 %v4717, %v4718
      %v4720 = vsel %vm1564, %v4672, 0.0
      %v4721 = vadd.f32 %v4719, %v4720
      %v4722 = vsel %vm1564, %v4673, 0.0
      %v4723 = vadd.f32 %v4721, %v4722
      %v4724 = vsel %vm1564, %v4674, 0.0
      %v4725 = vadd.f32 %v4723, %v4724
      %v4726 = vsel %vm1564, %v4675, 0.0
      %v4727 = vadd.f32 %v4725, %v4726
      %v4728 = vsel %vm1564, %v4676, 0.0
      %v4729 = vadd.f32 %v4727, %v4728
      %v4730 = vsel %vm1564, %v4677, 0.0
      %v4731 = vadd.f32 %v4729, %v4730
      %v4732 = vsel %vm1564, %v4678, 0.0
      %v4733 = vadd.f32 %v4731, %v4732
      %v4734 = vsel %vm1564, %v4679, 0.0
      %v4735 = vadd.f32 %v4733, %v4734
      %v4736 = vsel %vm1564, %v4680, 0.0
      %v4737 = vadd.f32 %v4735, %v4736
      %v4738 = vsel %vm1564, %v4681, 0.0
      %v4739 = vadd.f32 %v4737, %v4738
      %v4740 = vsel %vm1564, %v4682, 0.0
      %v4741 = vadd.f32 %v4739, %v4740
      %v4742 = vsel %vm1564, %v4683, 0.0
      %v4743 = vadd.f32 %v4741, %v4742
      %v4744 = vsel %vm1564, %v4684, 0.0
      %v4745 = vadd.f32 %v4743, %v4744
      %v4746 = vsel %vm1564, %v4685, 0.0
      %v4747 = vadd.f32 %v4745, %v4746
      %v4748 = vsel %vm1564, %v4686, 0.0
      %v4749 = vadd.f32 %v4747, %v4748
      %v4750 = vrot.slane %v4749, 4
      %v4751 = vadd.f32 %v4749, %v4750
      %v4752 = vrot.slane %v4751, 2
      %v4753 = vadd.f32 %v4751, %v4752
      %v4754 = vrot.slane %v4753, 1
      %v4755 = vadd.f32 %v4753, %v4754
      %v4756 = vadd.f32 %v2991, %v4755
      %v4757 = vpack.c.bf16 %v4329, %v4329
      %v4758 = vpack.c.bf16 %v4330, %v4330
      %s4759 = scalar_lea.vmem %s235, 64
      %4760 = vst.msk [vmem:[%s4759] sm:$0xf] %vm379, %v4757
      %4761 = vst.msk [vmem:[%s4759 + $0x4] sm:$0xf] %vm379, %v4758
      %v4762 = vpack.c.bf16 %v4333, %v4333
      %v4763 = vpack.c.bf16 %v4334, %v4334
      %s4764 = scalar_lea.vmem %s235, 72
      %4765 = vst.msk [vmem:[%s4764] sm:$0xf] %vm379, %v4762
      %4766 = vst.msk [vmem:[%s4764 + $0x4] sm:$0xf] %vm379, %v4763
      %v4767 = vpack.c.bf16 %v4337, %v4337
      %v4768 = vpack.c.bf16 %v4338, %v4338
      %s4769 = scalar_lea.vmem %s235, 80
      %4770 = vst.msk [vmem:[%s4769] sm:$0xf] %vm379, %v4767
      %4771 = vst.msk [vmem:[%s4769 + $0x4] sm:$0xf] %vm379, %v4768
      %v4772 = vpack.c.bf16 %v4341, %v4341
      %v4773 = vpack.c.bf16 %v4342, %v4342
      %s4774 = scalar_lea.vmem %s235, 88
      %4775 = vst.msk [vmem:[%s4774] sm:$0xf] %vm379, %v4772
      %4776 = vst.msk [vmem:[%s4774 + $0x4] sm:$0xf] %vm379, %v4773
      %v4777 = vpack.c.bf16 %v4345, %v4345
      %v4778 = vpack.c.bf16 %v4346, %v4346
      %s4779 = scalar_lea.vmem %s235, 96
      %4780 = vst.msk [vmem:[%s4779] sm:$0xf] %vm379, %v4777
      %4781 = vst.msk [vmem:[%s4779 + $0x4] sm:$0xf] %vm379, %v4778
      %v4782 = vpack.c.bf16 %v4349, %v4349
      %v4783 = vpack.c.bf16 %v4350, %v4350
      %s4784 = scalar_lea.vmem %s235, 104
      %4785 = vst.msk [vmem:[%s4784] sm:$0xf] %vm379, %v4782
      %4786 = vst.msk [vmem:[%s4784 + $0x4] sm:$0xf] %vm379, %v4783
      %v4787 = vpack.c.bf16 %v4353, %v4353
      %v4788 = vpack.c.bf16 %v4354, %v4354
      %s4789 = scalar_lea.vmem %s235, 112
      %4790 = vst.msk [vmem:[%s4789] sm:$0xf] %vm379, %v4787
      %4791 = vst.msk [vmem:[%s4789 + $0x4] sm:$0xf] %vm379, %v4788
      %v4792 = vpack.c.bf16 %v4357, %v4357
      %v4793 = vpack.c.bf16 %v4358, %v4358
      %s4794 = scalar_lea.vmem %s235, 120
      %4795 = vst.msk [vmem:[%s4794] sm:$0xf] %vm379, %v4792
      %4796 = vst.msk [vmem:[%s4794 + $0x4] sm:$0xf] %vm379, %v4793
      %vm4797 = vcmask 516096
      %4798 = vst.msk [vmem:[%s238] sm:$0x1] %vm4797, %v4654
      %4799 = vst.msk [vmem:[%s241] sm:$0x1] %vm4797, %v4756
      %p4800 = scmp.lt.s32.totalorder %s17, 1
      %s4801 = scalar_select %p4800, %s17, 1
      %s4802 = smul.addr %s4801, 32
      %s4803 = smul.addr %s4802, 4
      %s4804 = scalar_lea.vmem %s3, %s4803
      %p4805 = scmp.lt.s32.totalorder %s17, 1
      %s4806 = scalar_select %p4805, %s17, 1
      %s4807 = scalar_lea.vmem %s4, %s4806
      %p4808 = scmp.lt.s32.totalorder %s17, 1
      %s4809 = scalar_select %p4808, %s17, 1
      %s4810 = scalar_lea.vmem %s5, %s4809
      // Predicated region
      $region33: #{basic_block_res_forward.3} parent=31 // pred_check
        %p4811 = pneg %p103
      $region34: #{basic_block_res_forward.3} parent=31 // pred_check_branch
        %4813 = sbr.rel (%p4811) target = $region36
      $region35: #{basic_block_res_forward.3} parent=31 // pred_region
        _
      $region36: #{basic_block_res_forward.3} parent=31 // pred_fallthru
        _
      // Predicated region
      $region37: #{basic_block_res_forward.3} parent=31 // pred_check
        %p4814 = pneg %p129
      $region38: #{basic_block_res_forward.3} parent=31 // pred_check_branch
        %4816 = sbr.rel (%p4814) target = $region40
      $region39: #{basic_block_res_forward.3} parent=31 // pred_region
        _
      $region40: #{basic_block_res_forward.3} parent=31 // pred_fallthru
        _
      // Predicated region
      $region41: #{basic_block_res_forward.3} parent=31 // pred_check
        %p4817 = pneg %p155
      $region42: #{basic_block_res_forward.3} parent=31 // pred_check_branch
        %4819 = sbr.rel (%p4817) target = $region44
      $region43: #{basic_block_res_forward.3} parent=31 // pred_region
        _
      $region44: #{basic_block_res_forward.3} parent=31 // pred_fallthru
        _
    $region32: #{basic_block_res_forward.3} parent=5 // pred_fallthru
      _
    %p4820 = scmp.le.s32.totalorder 2, %s12
    // Predicated region
    $region45: #{basic_block_res_forward.3} parent=5 // pred_check
      %p4821 = pneg %p4820
    $region46: #{basic_block_res_forward.3} parent=5 // pred_check_branch
      %4823 = sbr.rel (%p4821) target = $region48
    $region47: #{basic_block_res_forward.3} parent=5 // pred_region
      %s4824 = ssub.s32 %s12, 2
      // Predicated region
      $region49: #{basic_block_res_forward.3} parent=47 // pred_check
        %p4825 = pneg %p109
      $region50: #{basic_block_res_forward.3} parent=47 // pred_check_branch
        %4827 = sbr.rel (%p4825) target = $region52
      $region51: #{basic_block_res_forward.3} parent=47 // pred_region
        %p4828 = scmp.lt.s32.totalorder %s18, 1
        %s4829 = scalar_select %p4828, %s18, 1
        %s4830 = smul.addr %s4829, 32
        %s4831 = smul.addr %s4830, 4
        %s4832 = scalar_lea.vmem %s3, %s4831
      $region52: #{basic_block_res_forward.3} parent=47 // pred_fallthru
        _
      // Predicated region
      $region53: #{basic_block_res_forward.3} parent=47 // pred_check
        %p4833 = pneg %p135
      $region54: #{basic_block_res_forward.3} parent=47 // pred_check_branch
        %4835 = sbr.rel (%p4833) target = $region56
      $region55: #{basic_block_res_forward.3} parent=47 // pred_region
        %p4836 = scmp.lt.s32.totalorder %s18, 1
        %s4837 = scalar_select %p4836, %s18, 1
        %s4838 = scalar_lea.vmem %s4, %s4837
      $region56: #{basic_block_res_forward.3} parent=47 // pred_fallthru
        _
      // Predicated region
      $region57: #{basic_block_res_forward.3} parent=47 // pred_check
        %p4839 = pneg %p161
      $region58: #{basic_block_res_forward.3} parent=47 // pred_check_branch
        %4841 = sbr.rel (%p4839) target = $region60
      $region59: #{basic_block_res_forward.3} parent=47 // pred_region
        %p4842 = scmp.lt.s32.totalorder %s18, 1
        %s4843 = scalar_select %p4842, %s18, 1
        %s4844 = scalar_lea.vmem %s5, %s4843
      $region60: #{basic_block_res_forward.3} parent=47 // pred_fallthru
        _
    $region48: #{basic_block_res_forward.3} parent=5 // pred_fallthru
      _
  $region6: #{basic_block_res_forward.3} parent=0 // loop_footer
    %s16 = sadd.s32 1, %s12
  $region7: #{basic_block_res_forward.3} parent=0 // loop_footer_branch
    %11 = sbr.rel target = $region3
  $region8: #{basic_block_res_forward.3} parent=0 // loop_exit
    _

// kernel: basic_block_res_forward.4
$region0: #{basic_block_res_forward.4}
  #allocation0 [shape = 'u32[]', space=smem, size = 0x4, offset = 0x4, fixed_abs, tag = 'smem constant byte address 0x4 - core index']
  #allocation1 [shape = 'u32[72,128]{1,0:T(1,128)}', space=vmem, size = 0x9000, scoped, tag = 'internal scratch']
  #allocation2 [shape = 'bf16[576,192]{1,0:T(8,128)(2,1)}', space=vmem, size = 0x48000, scoped, tag = 'scratch operand']
  %s0 = inlined_call_operand.vmem [shape: bf16[2,16,16,64], index: 0, kind: input, shape index: {}]
  %s1 = inlined_call_operand.vmem [shape: f32[1,64], index: 1, kind: input, shape index: {}]
  %s2 = inlined_call_operand.vmem [shape: f32[1,64], index: 2, kind: input, shape index: {}]
  %s3 = inlined_call_operand.vmem [shape: bf16[3,192,64], index: 3, kind: input, shape index: {}]
  %s4 = inlined_call_operand.vmem [shape: f32[256,1], index: 4, kind: input, shape index: {}]
  %s5 = inlined_call_operand.vmem [shape: bf16[2,16,16,64], index: 5, kind: output, shape index: {0}]
  %s6 = inlined_call_operand.vmem [shape: f32[2,1,64], index: 6, kind: output, shape index: {1}]
  %s7 = inlined_call_operand.vmem [shape: f32[2,1,64], index: 7, kind: output, shape index: {2}]
  %8 = xla_tuple %s5, %s6, %s7
  %s9 = sld [smem:[#allocation0]]
  $region69: #{basic_block_res_forward.4} parent=0
    _
  %s11 = ssub.s32 1, %s9
  %s12 = scalar_select 0, %s11, %s9
  loop: start=0, step=1, limit=4
  $region2: #{basic_block_res_forward.4} parent=0 // loop_pre_header
    _
  $region3: #{basic_block_res_forward.4} parent=0 // loop_header
    %s14 = sphi 0, %s18
    %p15 = scmp.ge.s32.totalorder %s14, 4
    %s24 = sphi 0, %s26
    %s27 = sphi 0, %s24
    %s28 = sphi 0, %s27
    %s44 = sphi 0, %s28
    %s48 = sphi 0, %s48
    %s50 = sphi 0, %s48
    %s51 = sphi 0, %s50
    %s65 = sphi 0, %s51
    %s69 = sphi 0, %s69
    %s71 = sphi 0, %s69
    %s72 = sphi 0, %s71
    %s86 = sphi 0, %s72
    %s90 = sphi 0, %s90
    %s92 = sphi 0, %s90
    %s93 = sphi 0, %s92
    %s107 = sphi 0, %s93
    %s111 = sphi 0, %s111
    %s113 = sphi 0, %s111
    %s114 = sphi 0, %s113
    %s128 = sphi 0, %s114
    %s134 = sphi 0, %s136
    %s137 = sphi 0, %s134
    %s138 = sphi 0, %s137
    %s154 = sphi 0, %s138
    %s160 = sphi 0, %s162
    %s163 = sphi 0, %s160
    %s164 = sphi 0, %s163
    %s180 = sphi 0, %s164
    %s186 = sphi 0, %s188
    %s189 = sphi 0, %s186
    %s190 = sphi 0, %s189
    %s206 = sphi 0, %s190
  $region4: #{basic_block_res_forward.4} parent=0 // loop_header_branch
    %17 = sbr.rel (%p15) target = $region8
  $region5: #{basic_block_res_forward.4} parent=0 // loop_body
    %s19 = ssub.s32 %s14, 1
    %s20 = ssub.s32 %s14, 2
    %s21 = sadd.s32 %s14, 1
    %s22 = ssub.s32 %s14, %s21
    %p23 = scmp.eq.s32.totalorder %s22, 0
    %s25 = sadd.s32 %s24, 1
    %s26 = scalar_select %p23, %s24, %s25
    %p29 = pneg %p23
    %p30 = scmp.eq.s32.totalorder %s14, 1
    %p31 = por %p29, %p30
    %p32 = scmp.ne.s32.totalorder %s24, %s27
    %p33 = scmp.eq.s32.totalorder %s14, 0
    %p34 = por %p32, %p33
    %p35 = scmp.ne.s32.totalorder %s24, %s27
    %p36 = scmp.eq.s32.totalorder %s19, 1
    %p37 = por %p35, %p36
    %p38 = scmp.ne.s32.totalorder %s27, %s28
    %p39 = scmp.eq.s32.totalorder %s19, 0
    %p40 = por %p38, %p39
    %p41 = scmp.ne.s32.totalorder %s27, %s28
    %p42 = scmp.eq.s32.totalorder %s20, 1
    %p43 = por %p41, %p42
    %p45 = scmp.ne.s32.totalorder %s28, %s44
    %p46 = scmp.eq.s32.totalorder %s20, 0
    %p47 = por %p45, %p46
    %s49 = sadd.s32 %s48, 1
    %p52 = scmp.eq.s32.totalorder %s14, 1
    %p53 = scmp.ne.s32.totalorder %s48, %s50
    %p54 = scmp.eq.s32.totalorder %s14, 0
    %p55 = por %p53, %p54
    %p56 = scmp.ne.s32.totalorder %s48, %s50
    %p57 = scmp.eq.s32.totalorder %s19, 1
    %p58 = por %p56, %p57
    %p59 = scmp.ne.s32.totalorder %s50, %s51
    %p60 = scmp.eq.s32.totalorder %s19, 0
    %p61 = por %p59, %p60
    %p62 = scmp.ne.s32.totalorder %s50, %s51
    %p63 = scmp.eq.s32.totalorder %s20, 1
    %p64 = por %p62, %p63
    %p66 = scmp.ne.s32.totalorder %s51, %s65
    %p67 = scmp.eq.s32.totalorder %s20, 0
    %p68 = por %p66, %p67
    %s70 = sadd.s32 %s69, 1
    %p73 = scmp.eq.s32.totalorder %s14, 1
    %p74 = scmp.ne.s32.totalorder %s69, %s71
    %p75 = scmp.eq.s32.totalorder %s14, 0
    %p76 = por %p74, %p75
    %p77 = scmp.ne.s32.totalorder %s69, %s71
    %p78 = scmp.eq.s32.totalorder %s19, 1
    %p79 = por %p77, %p78
    %p80 = scmp.ne.s32.totalorder %s71, %s72
    %p81 = scmp.eq.s32.totalorder %s19, 0
    %p82 = por %p80, %p81
    %p83 = scmp.ne.s32.totalorder %s71, %s72
    %p84 = scmp.eq.s32.totalorder %s20, 1
    %p85 = por %p83, %p84
    %p87 = scmp.ne.s32.totalorder %s72, %s86
    %p88 = scmp.eq.s32.totalorder %s20, 0
    %p89 = por %p87, %p88
    %s91 = sadd.s32 %s90, 1
    %p94 = scmp.eq.s32.totalorder %s14, 1
    %p95 = scmp.ne.s32.totalorder %s90, %s92
    %p96 = scmp.eq.s32.totalorder %s14, 0
    %p97 = por %p95, %p96
    %p98 = scmp.ne.s32.totalorder %s90, %s92
    %p99 = scmp.eq.s32.totalorder %s19, 1
    %p100 = por %p98, %p99
    %p101 = scmp.ne.s32.totalorder %s92, %s93
    %p102 = scmp.eq.s32.totalorder %s19, 0
    %p103 = por %p101, %p102
    %p104 = scmp.ne.s32.totalorder %s92, %s93
    %p105 = scmp.eq.s32.totalorder %s20, 1
    %p106 = por %p104, %p105
    %p108 = scmp.ne.s32.totalorder %s93, %s107
    %p109 = scmp.eq.s32.totalorder %s20, 0
    %p110 = por %p108, %p109
    %s112 = sadd.s32 %s111, 1
    %p115 = scmp.eq.s32.totalorder %s14, 1
    %p116 = scmp.ne.s32.totalorder %s111, %s113
    %p117 = scmp.eq.s32.totalorder %s14, 0
    %p118 = por %p116, %p117
    %p119 = scmp.ne.s32.totalorder %s111, %s113
    %p120 = scmp.eq.s32.totalorder %s19, 1
    %p121 = por %p119, %p120
    %p122 = scmp.ne.s32.totalorder %s113, %s114
    %p123 = scmp.eq.s32.totalorder %s19, 0
    %p124 = por %p122, %p123
    %p125 = scmp.ne.s32.totalorder %s113, %s114
    %p126 = scmp.eq.s32.totalorder %s20, 1
    %p127 = por %p125, %p126
    %p129 = scmp.ne.s32.totalorder %s114, %s128
    %p130 = scmp.eq.s32.totalorder %s20, 0
    %p131 = por %p129, %p130
    %s132 = ssub.s32 %s14, %s21
    %p133 = scmp.eq.s32.totalorder %s132, 0
    %s135 = sadd.s32 %s134, 1
    %s136 = scalar_select %p133, %s134, %s135
    %p139 = pneg %p133
    %p140 = scmp.eq.s32.totalorder %s14, 1
    %p141 = por %p139, %p140
    %p142 = scmp.ne.s32.totalorder %s134, %s137
    %p143 = scmp.eq.s32.totalorder %s14, 0
    %p144 = por %p142, %p143
    %p145 = scmp.ne.s32.totalorder %s134, %s137
    %p146 = scmp.eq.s32.totalorder %s19, 1
    %p147 = por %p145, %p146
    %p148 = scmp.ne.s32.totalorder %s137, %s138
    %p149 = scmp.eq.s32.totalorder %s19, 0
    %p150 = por %p148, %p149
    %p151 = scmp.ne.s32.totalorder %s137, %s138
    %p152 = scmp.eq.s32.totalorder %s20, 1
    %p153 = por %p151, %p152
    %p155 = scmp.ne.s32.totalorder %s138, %s154
    %p156 = scmp.eq.s32.totalorder %s20, 0
    %p157 = por %p155, %p156
    %s158 = ssub.s32 %s14, %s21
    %p159 = scmp.eq.s32.totalorder %s158, 0
    %s161 = sadd.s32 %s160, 1
    %s162 = scalar_select %p159, %s160, %s161
    %p165 = pneg %p159
    %p166 = scmp.eq.s32.totalorder %s14, 1
    %p167 = por %p165, %p166
    %p168 = scmp.ne.s32.totalorder %s160, %s163
    %p169 = scmp.eq.s32.totalorder %s14, 0
    %p170 = por %p168, %p169
    %p171 = scmp.ne.s32.totalorder %s160, %s163
    %p172 = scmp.eq.s32.totalorder %s19, 1
    %p173 = por %p171, %p172
    %p174 = scmp.ne.s32.totalorder %s163, %s164
    %p175 = scmp.eq.s32.totalorder %s19, 0
    %p176 = por %p174, %p175
    %p177 = scmp.ne.s32.totalorder %s163, %s164
    %p178 = scmp.eq.s32.totalorder %s20, 1
    %p179 = por %p177, %p178
    %p181 = scmp.ne.s32.totalorder %s164, %s180
    %p182 = scmp.eq.s32.totalorder %s20, 0
    %p183 = por %p181, %p182
    %s184 = ssub.s32 %s14, %s21
    %p185 = scmp.eq.s32.totalorder %s184, 0
    %s187 = sadd.s32 %s186, 1
    %s188 = scalar_select %p185, %s186, %s187
    %p191 = pneg %p185
    %p192 = scmp.eq.s32.totalorder %s14, 1
    %p193 = por %p191, %p192
    %p194 = scmp.ne.s32.totalorder %s186, %s189
    %p195 = scmp.eq.s32.totalorder %s14, 0
    %p196 = por %p194, %p195
    %p197 = scmp.ne.s32.totalorder %s186, %s189
    %p198 = scmp.eq.s32.totalorder %s19, 1
    %p199 = por %p197, %p198
    %p200 = scmp.ne.s32.totalorder %s189, %s190
    %p201 = scmp.eq.s32.totalorder %s19, 0
    %p202 = por %p200, %p201
    %p203 = scmp.ne.s32.totalorder %s189, %s190
    %p204 = scmp.eq.s32.totalorder %s20, 1
    %p205 = por %p203, %p204
    %p207 = scmp.ne.s32.totalorder %s190, %s206
    %p208 = scmp.eq.s32.totalorder %s20, 0
    %p209 = por %p207, %p208
    %p210 = scmp.le.s32.totalorder 1, %s14
    %p211 = scmp.lt.s32.totalorder %s14, 3
    %p212 = pnand %p210, %p211
    %p213 = pneg %p212
    // Predicated region
    $region9: #{basic_block_res_forward.4} parent=5 // pred_check
      _
    $region10: #{basic_block_res_forward.4} parent=5 // pred_check_branch
      %215 = sbr.rel (%p212) target = $region12
    $region11: #{basic_block_res_forward.4} parent=5 // pred_region
      %s216 = ssub.s32 %s14, 1
      // Predicated region
      $region13: #{basic_block_res_forward.4} parent=11 // pred_check
        %p217 = pneg %p61
      $region14: #{basic_block_res_forward.4} parent=11 // pred_check_branch
        %219 = sbr.rel (%p217) target = $region16
      $region15: #{basic_block_res_forward.4} parent=11 // pred_region
        _
      $region16: #{basic_block_res_forward.4} parent=11 // pred_fallthru
        _
      // Predicated region
      $region17: #{basic_block_res_forward.4} parent=11 // pred_check
        %p220 = pneg %p82
      $region18: #{basic_block_res_forward.4} parent=11 // pred_check_branch
        %222 = sbr.rel (%p220) target = $region20
      $region19: #{basic_block_res_forward.4} parent=11 // pred_region
        _
      $region20: #{basic_block_res_forward.4} parent=11 // pred_fallthru
        _
      // Predicated region
      $region21: #{basic_block_res_forward.4} parent=11 // pred_check
        %p223 = pneg %p103
      $region22: #{basic_block_res_forward.4} parent=11 // pred_check_branch
        %225 = sbr.rel (%p223) target = $region24
      $region23: #{basic_block_res_forward.4} parent=11 // pred_region
        _
      $region24: #{basic_block_res_forward.4} parent=11 // pred_fallthru
        _
      // Predicated region
      $region25: #{basic_block_res_forward.4} parent=11 // pred_check
        %p226 = pneg %p124
      $region26: #{basic_block_res_forward.4} parent=11 // pred_check_branch
        %228 = sbr.rel (%p226) target = $region28
      $region27: #{basic_block_res_forward.4} parent=11 // pred_region
        _
      $region28: #{basic_block_res_forward.4} parent=11 // pred_fallthru
        _
    $region12: #{basic_block_res_forward.4} parent=5 // pred_fallthru
      _
    %p229 = scmp.lt.s32.totalorder %s14, 2
    // Predicated region
    $region29: #{basic_block_res_forward.4} parent=5 // pred_check
      %p230 = pneg %p229
    $region30: #{basic_block_res_forward.4} parent=5 // pred_check_branch
      %232 = sbr.rel (%p230) target = $region32
    $region31: #{basic_block_res_forward.4} parent=5 // pred_region
      // Predicated region
      $region33: #{basic_block_res_forward.4} parent=31 // pred_check
        %p233 = pneg %p34
      $region34: #{basic_block_res_forward.4} parent=31 // pred_check_branch
        %235 = sbr.rel (%p233) target = $region36
      $region35: #{basic_block_res_forward.4} parent=31 // pred_region
        %p236 = scmp.lt.s32.totalorder %s14, 1
        %s237 = scalar_select %p236, %s14, 1
        %s238 = smul.addr %s237, 32
        %s239 = smul.addr %s238, 4
        %s240 = scalar_lea.vmem %s0, %s239
      $region36: #{basic_block_res_forward.4} parent=31 // pred_fallthru
        _
    $region32: #{basic_block_res_forward.4} parent=5 // pred_fallthru
      _
    %p241 = scmp.le.s32.totalorder 1, %s14
    %p242 = scmp.lt.s32.totalorder %s14, 3
    %p243 = pnand %p241, %p242
    %p244 = pneg %p243
    // Predicated region
    $region37: #{basic_block_res_forward.4} parent=5 // pred_check
      _
    $region38: #{basic_block_res_forward.4} parent=5 // pred_check_branch
      %246 = sbr.rel (%p243) target = $region40
    $region39: #{basic_block_res_forward.4} parent=5 // pred_region
      %s247 = ssub.s32 %s14, 1
      %p248 = scmp.lt.s32.totalorder %s19, 1
      %s249 = scalar_select %p248, %s19, 1
      %s250 = smul.addr %s249, 32
      %s251 = smul.addr %s250, 4
      %s252 = scalar_lea.vmem %s0, %s251
      %p253 = pneg %p40
      %p254 = pneg %p37
      %p255 = pneg %p61
      %p256 = pneg %p58
      %p257 = pneg %p82
      %p258 = pneg %p79
      %p259 = pneg %p103
      %p260 = pneg %p100
      %p261 = pneg %p124
      %p262 = pneg %p121
      %p263 = pneg %p150
      %p264 = pneg %p147
      %p265 = scmp.lt.s32.totalorder %s19, 1
      %s266 = scalar_select %p265, %s19, 1
      %s267 = smul.addr %s266, 32
      %s268 = smul.addr %s267, 4
      %s269 = scalar_lea.vmem %s5, %s268
      %p270 = pneg %p176
      %p271 = pneg %p173
      %p272 = scmp.lt.s32.totalorder %s19, 1
      %s273 = scalar_select %p272, %s19, 1
      %s274 = scalar_lea.vmem %s6, %s273
      %p275 = pneg %p202
      %p276 = pneg %p199
      %p277 = scmp.lt.s32.totalorder %s19, 1
      %s278 = scalar_select %p277, %s19, 1
      %s279 = scalar_lea.vmem %s7, %s278
      %p280 = scmp.lt.s32.totalorder %s19, 1
      %s281 = scalar_select %p280, %s19, 1
      %s282 = smul.addr %s281, 32
      %s283 = smul.addr %s282, 4
      %s284 = scalar_lea.vmem %s0, %s283
      %p285 = scmp.lt.s32.totalorder %s19, 1
      %s286 = scalar_select %p285, %s19, 1
      %s287 = smul.addr %s286, 32
      %s288 = smul.addr %s287, 4
      %s289 = scalar_lea.vmem %s5, %s288
      %p290 = scmp.lt.s32.totalorder %s19, 1
      %s291 = scalar_select %p290, %s19, 1
      %s292 = scalar_lea.vmem %s6, %s291
      %p293 = scmp.lt.s32.totalorder %s19, 1
      %s294 = scalar_select %p293, %s19, 1
      %s295 = scalar_lea.vmem %s7, %s294
      %v297 = vld [vmem:[%s284] sm:$0xf]
      %v298 = vld [vmem:[%s284 + $0x4] sm:$0xf]
      %v299 = vld [vmem:[%s284 + $0x8] sm:$0xf]
      %v300 = vld [vmem:[%s284 + $0xc] sm:$0xf]
      %v301 = vld [vmem:[%s284 + $0x10] sm:$0xf]
      %v302 = vld [vmem:[%s284 + $0x14] sm:$0xf]
      %v303 = vld [vmem:[%s284 + $0x18] sm:$0xf]
      %v304 = vld [vmem:[%s284 + $0x1c] sm:$0xf]
      %v305 = vld [vmem:[%s284 + $0x20] sm:$0xf]
      %v306 = vld [vmem:[%s284 + $0x24] sm:$0xf]
      %v307 = vld [vmem:[%s284 + $0x28] sm:$0xf]
      %v308 = vld [vmem:[%s284 + $0x2c] sm:$0xf]
      %v309 = vld [vmem:[%s284 + $0x30] sm:$0xf]
      %v310 = vld [vmem:[%s284 + $0x34] sm:$0xf]
      %v311 = vld [vmem:[%s284 + $0x38] sm:$0xf]
      %v312 = vld [vmem:[%s284 + $0x3c] sm:$0xf]
      %v313 = vld [vmem:[%s284 + $0x40] sm:$0xf]
      %v314 = vld [vmem:[%s284 + $0x44] sm:$0xf]
      %v315 = vld [vmem:[%s284 + $0x48] sm:$0xf]
      %v316 = vld [vmem:[%s284 + $0x4c] sm:$0xf]
      %v317 = vld [vmem:[%s284 + $0x50] sm:$0xf]
      %v318 = vld [vmem:[%s284 + $0x54] sm:$0xf]
      %v319 = vld [vmem:[%s284 + $0x58] sm:$0xf]
      %v320 = vld [vmem:[%s284 + $0x5c] sm:$0xf]
      %v321 = vld [vmem:[%s284 + $0x60] sm:$0xf]
      %v322 = vld [vmem:[%s284 + $0x64] sm:$0xf]
      %v323 = vld [vmem:[%s284 + $0x68] sm:$0xf]
      %v324 = vld [vmem:[%s284 + $0x6c] sm:$0xf]
      %v325 = vld [vmem:[%s284 + $0x70] sm:$0xf]
      %v326 = vld [vmem:[%s284 + $0x74] sm:$0xf]
      %v327 = vld [vmem:[%s284 + $0x78] sm:$0xf]
      %v328 = vld [vmem:[%s284 + $0x7c] sm:$0xf]
      %v329 = vunpack.c.l.bf16 %v297
      %v330 = vunpack.c.l.bf16 %v298
      %v331 = vunpack.c.l.bf16 %v299
      %v332 = vunpack.c.l.bf16 %v300
      %v333 = vunpack.c.l.bf16 %v301
      %v334 = vunpack.c.l.bf16 %v302
      %v335 = vunpack.c.l.bf16 %v303
      %v336 = vunpack.c.l.bf16 %v304
      %v337 = vunpack.c.l.bf16 %v305
      %v338 = vunpack.c.l.bf16 %v306
      %v339 = vunpack.c.l.bf16 %v307
      %v340 = vunpack.c.l.bf16 %v308
      %v341 = vunpack.c.l.bf16 %v309
      %v342 = vunpack.c.l.bf16 %v310
      %v343 = vunpack.c.l.bf16 %v311
      %v344 = vunpack.c.l.bf16 %v312
      %v345 = vunpack.c.l.bf16 %v313
      %v346 = vunpack.c.l.bf16 %v314
      %v347 = vunpack.c.l.bf16 %v315
      %v348 = vunpack.c.l.bf16 %v316
      %v349 = vunpack.c.l.bf16 %v317
      %v350 = vunpack.c.l.bf16 %v318
      %v351 = vunpack.c.l.bf16 %v319
      %v352 = vunpack.c.l.bf16 %v320
      %v353 = vunpack.c.l.bf16 %v321
      %v354 = vunpack.c.l.bf16 %v322
      %v355 = vunpack.c.l.bf16 %v323
      %v356 = vunpack.c.l.bf16 %v324
      %v357 = vunpack.c.l.bf16 %v325
      %v358 = vunpack.c.l.bf16 %v326
      %v359 = vunpack.c.l.bf16 %v327
      %v360 = vunpack.c.l.bf16 %v328
      %v361 = vld [vmem:[%s1] sm:$0x1]
      %v363 = vperm.slane %v361, 0
      %v365 = vmul.f32 %v329, %v363
      %v366 = vmul.f32 %v330, %v363
      %v367 = vmul.f32 %v331, %v363
      %v368 = vmul.f32 %v332, %v363
      %v369 = vmul.f32 %v333, %v363
      %v370 = vmul.f32 %v334, %v363
      %v371 = vmul.f32 %v335, %v363
      %v372 = vmul.f32 %v336, %v363
      %v373 = vmul.f32 %v337, %v363
      %v374 = vmul.f32 %v338, %v363
      %v375 = vmul.f32 %v339, %v363
      %v376 = vmul.f32 %v340, %v363
      %v377 = vmul.f32 %v341, %v363
      %v378 = vmul.f32 %v342, %v363
      %v379 = vmul.f32 %v343, %v363
      %v380 = vmul.f32 %v344, %v363
      %v381 = vmul.f32 %v345, %v363
      %v382 = vmul.f32 %v346, %v363
      %v383 = vmul.f32 %v347, %v363
      %v384 = vmul.f32 %v348, %v363
      %v385 = vmul.f32 %v349, %v363
      %v386 = vmul.f32 %v350, %v363
      %v387 = vmul.f32 %v351, %v363
      %v388 = vmul.f32 %v352, %v363
      %v389 = vmul.f32 %v353, %v363
      %v390 = vmul.f32 %v354, %v363
      %v391 = vmul.f32 %v355, %v363
      %v392 = vmul.f32 %v356, %v363
      %v393 = vmul.f32 %v357, %v363
      %v394 = vmul.f32 %v358, %v363
      %v395 = vmul.f32 %v359, %v363
      %v396 = vmul.f32 %v360, %v363
      %v397 = vld [vmem:[%s2] sm:$0x1]
      %v399 = vperm.slane %v397, 0
      %v401 = vadd.f32 %v365, %v399
      %v402 = vadd.f32 %v366, %v399
      %v403 = vadd.f32 %v367, %v399
      %v404 = vadd.f32 %v368, %v399
      %v405 = vadd.f32 %v369, %v399
      %v406 = vadd.f32 %v370, %v399
      %v407 = vadd.f32 %v371, %v399
      %v408 = vadd.f32 %v372, %v399
      %v409 = vadd.f32 %v373, %v399
      %v410 = vadd.f32 %v374, %v399
      %v411 = vadd.f32 %v375, %v399
      %v412 = vadd.f32 %v376, %v399
      %v413 = vadd.f32 %v377, %v399
      %v414 = vadd.f32 %v378, %v399
      %v415 = vadd.f32 %v379, %v399
      %v416 = vadd.f32 %v380, %v399
      %v417 = vadd.f32 %v381, %v399
      %v418 = vadd.f32 %v382, %v399
      %v419 = vadd.f32 %v383, %v399
      %v420 = vadd.f32 %v384, %v399
      %v421 = vadd.f32 %v385, %v399
      %v422 = vadd.f32 %v386, %v399
      %v423 = vadd.f32 %v387, %v399
      %v424 = vadd.f32 %v388, %v399
      %v425 = vadd.f32 %v389, %v399
      %v426 = vadd.f32 %v390, %v399
      %v427 = vadd.f32 %v391, %v399
      %v428 = vadd.f32 %v392, %v399
      %v429 = vadd.f32 %v393, %v399
      %v430 = vadd.f32 %v394, %v399
      %v431 = vadd.f32 %v395, %v399
      %v432 = vadd.f32 %v396, %v399
      %v433 = vmax.f32 %v401, 0.0
      %v434 = vmax.f32 %v402, 0.0
      %v435 = vmax.f32 %v403, 0.0
      %v436 = vmax.f32 %v404, 0.0
      %v437 = vmax.f32 %v405, 0.0
      %v438 = vmax.f32 %v406, 0.0
      %v439 = vmax.f32 %v407, 0.0
      %v440 = vmax.f32 %v408, 0.0
      %v441 = vmax.f32 %v409, 0.0
      %v442 = vmax.f32 %v410, 0.0
      %v443 = vmax.f32 %v411, 0.0
      %v444 = vmax.f32 %v412, 0.0
      %v445 = vmax.f32 %v413, 0.0
      %v446 = vmax.f32 %v414, 0.0
      %v447 = vmax.f32 %v415, 0.0
      %v448 = vmax.f32 %v416, 0.0
      %v449 = vmax.f32 %v417, 0.0
      %v450 = vmax.f32 %v418, 0.0
      %v451 = vmax.f32 %v419, 0.0
      %v452 = vmax.f32 %v420, 0.0
      %v453 = vmax.f32 %v421, 0.0
      %v454 = vmax.f32 %v422, 0.0
      %v455 = vmax.f32 %v423, 0.0
      %v456 = vmax.f32 %v424, 0.0
      %v457 = vmax.f32 %v425, 0.0
      %v458 = vmax.f32 %v426, 0.0
      %v459 = vmax.f32 %v427, 0.0
      %v460 = vmax.f32 %v428, 0.0
      %v461 = vmax.f32 %v429, 0.0
      %v462 = vmax.f32 %v430, 0.0
      %v463 = vmax.f32 %v431, 0.0
      %v464 = vmax.f32 %v432, 0.0
      %v465 = vpack.c.bf16 %v433, %v433
      %v466 = vpack.c.bf16 %v434, %v434
      %v467 = vpack.c.bf16 %v435, %v435
      %v468 = vpack.c.bf16 %v436, %v436
      %v469 = vpack.c.bf16 %v437, %v437
      %v470 = vpack.c.bf16 %v438, %v438
      %v471 = vpack.c.bf16 %v439, %v439
      %v472 = vpack.c.bf16 %v440, %v440
      %v473 = vpack.c.bf16 %v441, %v441
      %v474 = vpack.c.bf16 %v442, %v442
      %v475 = vpack.c.bf16 %v443, %v443
      %v476 = vpack.c.bf16 %v444, %v444
      %v477 = vpack.c.bf16 %v445, %v445
      %v478 = vpack.c.bf16 %v446, %v446
      %v479 = vpack.c.bf16 %v447, %v447
      %v480 = vpack.c.bf16 %v448, %v448
      %v481 = vpack.c.bf16 %v449, %v449
      %v482 = vpack.c.bf16 %v450, %v450
      %v483 = vpack.c.bf16 %v451, %v451
      %v484 = vpack.c.bf16 %v452, %v452
      %v485 = vpack.c.bf16 %v453, %v453
      %v486 = vpack.c.bf16 %v454, %v454
      %v487 = vpack.c.bf16 %v455, %v455
      %v488 = vpack.c.bf16 %v456, %v456
      %v489 = vpack.c.bf16 %v457, %v457
      %v490 = vpack.c.bf16 %v458, %v458
      %v491 = vpack.c.bf16 %v459, %v459
      %v492 = vpack.c.bf16 %v460, %v460
      %v493 = vpack.c.bf16 %v461, %v461
      %v494 = vpack.c.bf16 %v462, %v462
      %v495 = vpack.c.bf16 %v463, %v463
      %v496 = vpack.c.bf16 %v464, %v464
      %vm497 = vcmask 1043456
      %vm498 = vcmask 523268
      %vm499 = vmor %vm498, %vm497
      %500 = vst.msk [vmem:[#allocation2] sm:$0xff] %vm499, 0
      %501 = vst.msk [vmem:[#allocation2 + $0x8] sm:$0xff] %vm499, 0
      %502 = vst.msk [vmem:[#allocation2 + $0x10] sm:$0xff] %vm499, 0
      %503 = vst.msk [vmem:[#allocation2 + $0x18] sm:$0xff] %vm499, 0
      %504 = vst.msk [vmem:[#allocation2 + $0x20] sm:$0xff] %vm499, 0
      %505 = vst.msk [vmem:[#allocation2 + $0x28] sm:$0xff] %vm499, 0
      %506 = vst.msk [vmem:[#allocation2 + $0x30] sm:$0xff] %vm499, 0
      %507 = vst.msk [vmem:[#allocation2 + $0x38] sm:$0xff] %vm499, 0
      %508 = vst.msk [vmem:[#allocation2 + $0x40] sm:$0xff] %vm499, 0
      %509 = vst.msk [vmem:[#allocation2 + $0x48] sm:$0xff] %vm499, 0
      %510 = vst.msk [vmem:[#allocation2 + $0x50] sm:$0xff] %vm499, 0
      %511 = vst.msk [vmem:[#allocation2 + $0x58] sm:$0xff] %vm499, 0
      %512 = vst.msk [vmem:[#allocation2 + $0x60] sm:$0xff] %vm499, 0
      %513 = vst.msk [vmem:[#allocation2 + $0x68] sm:$0xff] %vm499, 0
      %514 = vst.msk [vmem:[#allocation2 + $0x70] sm:$0xff] %vm499, 0
      %515 = vst.msk [vmem:[#allocation2 + $0x78] sm:$0xff] %vm499, 0
      %516 = vst.msk [vmem:[#allocation2 + $0x80] sm:$0xff] %vm499, 0
      %517 = vst.msk [vmem:[#allocation2 + $0x88] sm:$0xff] %vm499, 0
      %518 = vst.msk [vmem:[#allocation2 + $0x90] sm:$0xff] %vm499, 0
      %519 = vst.msk [vmem:[#allocation2 + $0x98] sm:$0xff] %vm499, 0
      %520 = vst.msk [vmem:[#allocation2 + $0xa0] sm:$0xff] %vm499, 0
      %521 = vst.msk [vmem:[#allocation2 + $0xa8] sm:$0xff] %vm499, 0
      %522 = vst.msk [vmem:[#allocation2 + $0xb0] sm:$0xff] %vm499, 0
      %523 = vst.msk [vmem:[#allocation2 + $0xb8] sm:$0xff] %vm499, 0
      %524 = vst.msk [vmem:[#allocation2 + $0xc0] sm:$0xff] %vm499, 0
      %525 = vst.msk [vmem:[#allocation2 + $0xc8] sm:$0xff] %vm499, 0
      %526 = vst.msk [vmem:[#allocation2 + $0xd0] sm:$0xff] %vm499, 0
      %527 = vst.msk [vmem:[#allocation2 + $0xd8] sm:$0xff] %vm499, 0
      %528 = vst.msk [vmem:[#allocation2 + $0xe0] sm:$0xff] %vm499, 0
      %529 = vst.msk [vmem:[#allocation2 + $0xe8] sm:$0xff] %vm499, 0
      %530 = vst.msk [vmem:[#allocation2 + $0xf0] sm:$0xff] %vm499, 0
      %531 = vst.msk [vmem:[#allocation2 + $0xf8] sm:$0xff] %vm499, 0
      %532 = vst.msk [vmem:[#allocation2 + $0x100] sm:$0xff] %vm499, 0
      %533 = vst.msk [vmem:[#allocation2 + $0x108] sm:$0xff] %vm499, 0
      %534 = vst.msk [vmem:[#allocation2 + $0x110] sm:$0xff] %vm499, 0
      %535 = vst.msk [vmem:[#allocation2 + $0x118] sm:$0xff] %vm499, 0
      %536 = vst.msk [vmem:[#allocation2 + $0x120] sm:$0xff] %vm499, 0
      %537 = vst.msk [vmem:[#allocation2 + $0x128] sm:$0xff] %vm499, 0
      %538 = vst.msk [vmem:[#allocation2 + $0x130] sm:$0xff] %vm499, 0
      %539 = vst.msk [vmem:[#allocation2 + $0x138] sm:$0xff] %vm499, 0
      %540 = vst.msk [vmem:[#allocation2 + $0x140] sm:$0xff] %vm499, 0
      %541 = vst.msk [vmem:[#allocation2 + $0x148] sm:$0xff] %vm499, 0
      %542 = vst.msk [vmem:[#allocation2 + $0x150] sm:$0xff] %vm499, 0
      %543 = vst.msk [vmem:[#allocation2 + $0x158] sm:$0xff] %vm499, 0
      %544 = vst.msk [vmem:[#allocation2 + $0x160] sm:$0xff] %vm499, 0
      %545 = vst.msk [vmem:[#allocation2 + $0x168] sm:$0xff] %vm499, 0
      %546 = vst.msk [vmem:[#allocation2 + $0x170] sm:$0xff] %vm499, 0
      %547 = vst.msk [vmem:[#allocation2 + $0x178] sm:$0xff] %vm499, 0
      %548 = vst.msk [vmem:[#allocation2 + $0x180] sm:$0xff] %vm499, 0
      %549 = vst.msk [vmem:[#allocation2 + $0x188] sm:$0xff] %vm499, 0
      %550 = vst.msk [vmem:[#allocation2 + $0x190] sm:$0xff] %vm499, 0
      %551 = vst.msk [vmem:[#allocation2 + $0x198] sm:$0xff] %vm499, 0
      %552 = vst.msk [vmem:[#allocation2 + $0x1a0] sm:$0xff] %vm499, 0
      %553 = vst.msk [vmem:[#allocation2 + $0x1a8] sm:$0xff] %vm499, 0
      %554 = vst.msk [vmem:[#allocation2 + $0x1b0] sm:$0xff] %vm499, 0
      %555 = vst.msk [vmem:[#allocation2 + $0x1b8] sm:$0xff] %vm499, 0
      %556 = vst.msk [vmem:[#allocation2 + $0x1c0] sm:$0xff] %vm499, 0
      %557 = vst.msk [vmem:[#allocation2 + $0x1c8] sm:$0xff] %vm499, 0
      %558 = vst.msk [vmem:[#allocation2 + $0x1d0] sm:$0xff] %vm499, 0
      %559 = vst.msk [vmem:[#allocation2 + $0x1d8] sm:$0xff] %vm499, 0
      %560 = vst.msk [vmem:[#allocation2 + $0x1e0] sm:$0xff] %vm499, 0
      %561 = vst.msk [vmem:[#allocation2 + $0x1e8] sm:$0xff] %vm499, 0
      %562 = vst.msk [vmem:[#allocation2 + $0x1f0] sm:$0xff] %vm499, 0
      %563 = vst.msk [vmem:[#allocation2 + $0x1f8] sm:$0xff] %vm499, 0
      %564 = vst.msk [vmem:[#allocation2 + $0x200] sm:$0xff] %vm499, 0
      %565 = vst.msk [vmem:[#allocation2 + $0x208] sm:$0xff] %vm499, 0
      %566 = vst.msk [vmem:[#allocation2 + $0x210] sm:$0xff] %vm499, 0
      %567 = vst.msk [vmem:[#allocation2 + $0x218] sm:$0xff] %vm499, 0
      %568 = vst.msk [vmem:[#allocation2 + $0x220] sm:$0xff] %vm499, 0
      %569 = vst.msk [vmem:[#allocation2 + $0x228] sm:$0xff] %vm499, 0
      %570 = vst.msk [vmem:[#allocation2 + $0x230] sm:$0xff] %vm499, 0
      %571 = vst.msk [vmem:[#allocation2 + $0x238] sm:$0xff] %vm499, 0
      %vm572 = vsmask.f32 256
      %vm573 = vsmask.f32 4368
      %vm574 = vmor %vm572, %vm573
      %v576 = vshrl.u32 %v465, 16
      %v578 = vrot.slane %v576, 7
      %v579 = vshll.u32 %v465, 16
      %v581 = vor.u32 %v578, %v579
      %v582 = vrot.slane %v578, 4
      %v584 = vshrl.u32 %v466, 16
      %v586 = vrot.slane %v584, 7
      %v587 = vshll.u32 %v466, 16
      %v589 = vor.u32 %v586, %v587
      %v590 = vsel %vm574, %v582, %v589
      %v591 = vrot.slane %v586, 4
      %vm595 = vcmask 519168
      %vm596 = vsmask.f32 7938
      %vm597 = vmand %vm595, %vm596
      %v598 = vld [vmem:[#allocation2 + $0x20] sm:$0xf]
      %v599 = vsel %vm597, %v581, %v598
      %600 = vst [vmem:[#allocation2 + $0x20] sm:$0xf] %v599
      %vm601 = vcmask 519168
      %602 = vst.msk [vmem:[#allocation2 + $0x28] sm:$0xf] %vm601, %v590
      %vm603 = vcmask 516096
      %vm604 = vmand %vm603, %vm572
      %v605 = vld [vmem:[#allocation2 + $0x30] sm:$0x1]
      %v606 = vsel %vm604, %v591, %v605
      %607 = vst [vmem:[#allocation2 + $0x30] sm:$0x1] %v606
      %v609 = vshrl.u32 %v467, 16
      %v611 = vrot.slane %v609, 7
      %v612 = vshll.u32 %v467, 16
      %v614 = vor.u32 %v611, %v612
      %v615 = vrot.slane %v611, 4
      %v617 = vshrl.u32 %v468, 16
      %v619 = vrot.slane %v617, 7
      %v620 = vshll.u32 %v468, 16
      %v622 = vor.u32 %v619, %v620
      %v623 = vsel %vm574, %v615, %v622
      %v624 = vrot.slane %v619, 4
      %v628 = vld [vmem:[#allocation2 + $0x40] sm:$0xf]
      %v629 = vsel %vm597, %v614, %v628
      %630 = vst [vmem:[#allocation2 + $0x40] sm:$0xf] %v629
      %631 = vst.msk [vmem:[#allocation2 + $0x48] sm:$0xf] %vm601, %v623
      %v632 = vld [vmem:[#allocation2 + $0x50] sm:$0x1]
      %v633 = vsel %vm604, %v624, %v632
      %634 = vst [vmem:[#allocation2 + $0x50] sm:$0x1] %v633
      %v636 = vshrl.u32 %v469, 16
      %v638 = vrot.slane %v636, 7
      %v639 = vshll.u32 %v469, 16
      %v641 = vor.u32 %v638, %v639
      %v642 = vrot.slane %v638, 4
      %v644 = vshrl.u32 %v470, 16
      %v646 = vrot.slane %v644, 7
      %v647 = vshll.u32 %v470, 16
      %v649 = vor.u32 %v646, %v647
      %v650 = vsel %vm574, %v642, %v649
      %v651 = vrot.slane %v646, 4
      %v655 = vld [vmem:[#allocation2 + $0x60] sm:$0xf]
      %v656 = vsel %vm597, %v641, %v655
      %657 = vst [vmem:[#allocation2 + $0x60] sm:$0xf] %v656
      %658 = vst.msk [vmem:[#allocation2 + $0x68] sm:$0xf] %vm601, %v650
      %v659 = vld [vmem:[#allocation2 + $0x70] sm:$0x1]
      %v660 = vsel %vm604, %v651, %v659
      %661 = vst [vmem:[#allocation2 + $0x70] sm:$0x1] %v660
      %v663 = vshrl.u32 %v471, 16
      %v665 = vrot.slane %v663, 7
      %v666 = vshll.u32 %v471, 16
      %v668 = vor.u32 %v665, %v666
      %v669 = vrot.slane %v665, 4
      %v671 = vshrl.u32 %v472, 16
      %v673 = vrot.slane %v671, 7
      %v674 = vshll.u32 %v472, 16
      %v676 = vor.u32 %v673, %v674
      %v677 = vsel %vm574, %v669, %v676
      %v678 = vrot.slane %v673, 4
      %v682 = vld [vmem:[#allocation2 + $0x80] sm:$0xf]
      %v683 = vsel %vm597, %v668, %v682
      %684 = vst [vmem:[#allocation2 + $0x80] sm:$0xf] %v683
      %685 = vst.msk [vmem:[#allocation2 + $0x88] sm:$0xf] %vm601, %v677
      %v686 = vld [vmem:[#allocation2 + $0x90] sm:$0x1]
      %v687 = vsel %vm604, %v678, %v686
      %688 = vst [vmem:[#allocation2 + $0x90] sm:$0x1] %v687
      %v690 = vshrl.u32 %v473, 16
      %v692 = vrot.slane %v690, 7
      %v693 = vshll.u32 %v473, 16
      %v695 = vor.u32 %v692, %v693
      %v696 = vrot.slane %v692, 4
      %v698 = vshrl.u32 %v474, 16
      %v700 = vrot.slane %v698, 7
      %v701 = vshll.u32 %v474, 16
      %v703 = vor.u32 %v700, %v701
      %v704 = vsel %vm574, %v696, %v703
      %v705 = vrot.slane %v700, 4
      %v709 = vld [vmem:[#allocation2 + $0xa0] sm:$0xf]
      %v710 = vsel %vm597, %v695, %v709
      %711 = vst [vmem:[#allocation2 + $0xa0] sm:$0xf] %v710
      %712 = vst.msk [vmem:[#allocation2 + $0xa8] sm:$0xf] %vm601, %v704
      %v713 = vld [vmem:[#allocation2 + $0xb0] sm:$0x1]
      %v714 = vsel %vm604, %v705, %v713
      %715 = vst [vmem:[#allocation2 + $0xb0] sm:$0x1] %v714
      %v717 = vshrl.u32 %v475, 16
      %v719 = vrot.slane %v717, 7
      %v720 = vshll.u32 %v475, 16
      %v722 = vor.u32 %v719, %v720
      %v723 = vrot.slane %v719, 4
      %v725 = vshrl.u32 %v476, 16
      %v727 = vrot.slane %v725, 7
      %v728 = vshll.u32 %v476, 16
      %v730 = vor.u32 %v727, %v728
      %v731 = vsel %vm574, %v723, %v730
      %v732 = vrot.slane %v727, 4
      %v736 = vld [vmem:[#allocation2 + $0xc0] sm:$0xf]
      %v737 = vsel %vm597, %v722, %v736
      %738 = vst [vmem:[#allocation2 + $0xc0] sm:$0xf] %v737
      %739 = vst.msk [vmem:[#allocation2 + $0xc8] sm:$0xf] %vm601, %v731
      %v740 = vld [vmem:[#allocation2 + $0xd0] sm:$0x1]
      %v741 = vsel %vm604, %v732, %v740
      %742 = vst [vmem:[#allocation2 + $0xd0] sm:$0x1] %v741
      %v744 = vshrl.u32 %v477, 16
      %v746 = vrot.slane %v744, 7
      %v747 = vshll.u32 %v477, 16
      %v749 = vor.u32 %v746, %v747
      %v750 = vrot.slane %v746, 4
      %v752 = vshrl.u32 %v478, 16
      %v754 = vrot.slane %v752, 7
      %v755 = vshll.u32 %v478, 16
      %v757 = vor.u32 %v754, %v755
      %v758 = vsel %vm574, %v750, %v757
      %v759 = vrot.slane %v754, 4
      %v763 = vld [vmem:[#allocation2 + $0xe0] sm:$0xf]
      %v764 = vsel %vm597, %v749, %v763
      %765 = vst [vmem:[#allocation2 + $0xe0] sm:$0xf] %v764
      %766 = vst.msk [vmem:[#allocation2 + $0xe8] sm:$0xf] %vm601, %v758
      %v767 = vld [vmem:[#allocation2 + $0xf0] sm:$0x1]
      %v768 = vsel %vm604, %v759, %v767
      %769 = vst [vmem:[#allocation2 + $0xf0] sm:$0x1] %v768
      %v771 = vshrl.u32 %v479, 16
      %v773 = vrot.slane %v771, 7
      %v774 = vshll.u32 %v479, 16
      %v776 = vor.u32 %v773, %v774
      %v777 = vrot.slane %v773, 4
      %v779 = vshrl.u32 %v480, 16
      %v781 = vrot.slane %v779, 7
      %v782 = vshll.u32 %v480, 16
      %v784 = vor.u32 %v781, %v782
      %v785 = vsel %vm574, %v777, %v784
      %v786 = vrot.slane %v781, 4
      %v790 = vld [vmem:[#allocation2 + $0x100] sm:$0xf]
      %v791 = vsel %vm597, %v776, %v790
      %792 = vst [vmem:[#allocation2 + $0x100] sm:$0xf] %v791
      %793 = vst.msk [vmem:[#allocation2 + $0x108] sm:$0xf] %vm601, %v785
      %v794 = vld [vmem:[#allocation2 + $0x110] sm:$0x1]
      %v795 = vsel %vm604, %v786, %v794
      %796 = vst [vmem:[#allocation2 + $0x110] sm:$0x1] %v795
      %v798 = vshrl.u32 %v481, 16
      %v800 = vrot.slane %v798, 7
      %v801 = vshll.u32 %v481, 16
      %v803 = vor.u32 %v800, %v801
      %v804 = vrot.slane %v800, 4
      %v806 = vshrl.u32 %v482, 16
      %v808 = vrot.slane %v806, 7
      %v809 = vshll.u32 %v482, 16
      %v811 = vor.u32 %v808, %v809
      %v812 = vsel %vm574, %v804, %v811
      %v813 = vrot.slane %v808, 4
      %v817 = vld [vmem:[#allocation2 + $0x120] sm:$0xf]
      %v818 = vsel %vm597, %v803, %v817
      %819 = vst [vmem:[#allocation2 + $0x120] sm:$0xf] %v818
      %820 = vst.msk [vmem:[#allocation2 + $0x128] sm:$0xf] %vm601, %v812
      %v821 = vld [vmem:[#allocation2 + $0x130] sm:$0x1]
      %v822 = vsel %vm604, %v813, %v821
      %823 = vst [vmem:[#allocation2 + $0x130] sm:$0x1] %v822
      %v825 = vshrl.u32 %v483, 16
      %v827 = vrot.slane %v825, 7
      %v828 = vshll.u32 %v483, 16
      %v830 = vor.u32 %v827, %v828
      %v831 = vrot.slane %v827, 4
      %v833 = vshrl.u32 %v484, 16
      %v835 = vrot.slane %v833, 7
      %v836 = vshll.u32 %v484, 16
      %v838 = vor.u32 %v835, %v836
      %v839 = vsel %vm574, %v831, %v838
      %v840 = vrot.slane %v835, 4
      %v844 = vld [vmem:[#allocation2 + $0x140] sm:$0xf]
      %v845 = vsel %vm597, %v830, %v844
      %846 = vst [vmem:[#allocation2 + $0x140] sm:$0xf] %v845
      %847 = vst.msk [vmem:[#allocation2 + $0x148] sm:$0xf] %vm601, %v839
      %v848 = vld [vmem:[#allocation2 + $0x150] sm:$0x1]
      %v849 = vsel %vm604, %v840, %v848
      %850 = vst [vmem:[#allocation2 + $0x150] sm:$0x1] %v849
      %v852 = vshrl.u32 %v485, 16
      %v854 = vrot.slane %v852, 7
      %v855 = vshll.u32 %v485, 16
      %v857 = vor.u32 %v854, %v855
      %v858 = vrot.slane %v854, 4
      %v860 = vshrl.u32 %v486, 16
      %v862 = vrot.slane %v860, 7
      %v863 = vshll.u32 %v486, 16
      %v865 = vor.u32 %v862, %v863
      %v866 = vsel %vm574, %v858, %v865
      %v867 = vrot.slane %v862, 4
      %v871 = vld [vmem:[#allocation2 + $0x160] sm:$0xf]
      %v872 = vsel %vm597, %v857, %v871
      %873 = vst [vmem:[#allocation2 + $0x160] sm:$0xf] %v872
      %874 = vst.msk [vmem:[#allocation2 + $0x168] sm:$0xf] %vm601, %v866
      %v875 = vld [vmem:[#allocation2 + $0x170] sm:$0x1]
      %v876 = vsel %vm604, %v867, %v875
      %877 = vst [vmem:[#allocation2 + $0x170] sm:$0x1] %v876
      %v879 = vshrl.u32 %v487, 16
      %v881 = vrot.slane %v879, 7
      %v882 = vshll.u32 %v487, 16
      %v884 = vor.u32 %v881, %v882
      %v885 = vrot.slane %v881, 4
      %v887 = vshrl.u32 %v488, 16
      %v889 = vrot.slane %v887, 7
      %v890 = vshll.u32 %v488, 16
      %v892 = vor.u32 %v889, %v890
      %v893 = vsel %vm574, %v885, %v892
      %v894 = vrot.slane %v889, 4
      %v898 = vld [vmem:[#allocation2 + $0x180] sm:$0xf]
      %v899 = vsel %vm597, %v884, %v898
      %900 = vst [vmem:[#allocation2 + $0x180] sm:$0xf] %v899
      %901 = vst.msk [vmem:[#allocation2 + $0x188] sm:$0xf] %vm601, %v893
      %v902 = vld [vmem:[#allocation2 + $0x190] sm:$0x1]
      %v903 = vsel %vm604, %v894, %v902
      %904 = vst [vmem:[#allocation2 + $0x190] sm:$0x1] %v903
      %v906 = vshrl.u32 %v489, 16
      %v908 = vrot.slane %v906, 7
      %v909 = vshll.u32 %v489, 16
      %v911 = vor.u32 %v908, %v909
      %v912 = vrot.slane %v908, 4
      %v914 = vshrl.u32 %v490, 16
      %v916 = vrot.slane %v914, 7
      %v917 = vshll.u32 %v490, 16
      %v919 = vor.u32 %v916, %v917
      %v920 = vsel %vm574, %v912, %v919
      %v921 = vrot.slane %v916, 4
      %v925 = vld [vmem:[#allocation2 + $0x1a0] sm:$0xf]
      %v926 = vsel %vm597, %v911, %v925
      %927 = vst [vmem:[#allocation2 + $0x1a0] sm:$0xf] %v926
      %928 = vst.msk [vmem:[#allocation2 + $0x1a8] sm:$0xf] %vm601, %v920
      %v929 = vld [vmem:[#allocation2 + $0x1b0] sm:$0x1]
      %v930 = vsel %vm604, %v921, %v929
      %931 = vst [vmem:[#allocation2 + $0x1b0] sm:$0x1] %v930
      %v933 = vshrl.u32 %v491, 16
      %v935 = vrot.slane %v933, 7
      %v936 = vshll.u32 %v491, 16
      %v938 = vor.u32 %v935, %v936
      %v939 = vrot.slane %v935, 4
      %v941 = vshrl.u32 %v492, 16
      %v943 = vrot.slane %v941, 7
      %v944 = vshll.u32 %v492, 16
      %v946 = vor.u32 %v943, %v944
      %v947 = vsel %vm574, %v939, %v946
      %v948 = vrot.slane %v943, 4
      %v952 = vld [vmem:[#allocation2 + $0x1c0] sm:$0xf]
      %v953 = vsel %vm597, %v938, %v952
      %954 = vst [vmem:[#allocation2 + $0x1c0] sm:$0xf] %v953
      %955 = vst.msk [vmem:[#allocation2 + $0x1c8] sm:$0xf] %vm601, %v947
      %v956 = vld [vmem:[#allocation2 + $0x1d0] sm:$0x1]
      %v957 = vsel %vm604, %v948, %v956
      %958 = vst [vmem:[#allocation2 + $0x1d0] sm:$0x1] %v957
      %v960 = vshrl.u32 %v493, 16
      %v962 = vrot.slane %v960, 7
      %v963 = vshll.u32 %v493, 16
      %v965 = vor.u32 %v962, %v963
      %v966 = vrot.slane %v962, 4
      %v968 = vshrl.u32 %v494, 16
      %v970 = vrot.slane %v968, 7
      %v971 = vshll.u32 %v494, 16
      %v973 = vor.u32 %v970, %v971
      %v974 = vsel %vm574, %v966, %v973
      %v975 = vrot.slane %v970, 4
      %v979 = vld [vmem:[#allocation2 + $0x1e0] sm:$0xf]
      %v980 = vsel %vm597, %v965, %v979
      %981 = vst [vmem:[#allocation2 + $0x1e0] sm:$0xf] %v980
      %982 = vst.msk [vmem:[#allocation2 + $0x1e8] sm:$0xf] %vm601, %v974
      %v983 = vld [vmem:[#allocation2 + $0x1f0] sm:$0x1]
      %v984 = vsel %vm604, %v975, %v983
      %985 = vst [vmem:[#allocation2 + $0x1f0] sm:$0x1] %v984
      %v987 = vshrl.u32 %v495, 16
      %v989 = vrot.slane %v987, 7
      %v990 = vshll.u32 %v495, 16
      %v992 = vor.u32 %v989, %v990
      %v993 = vrot.slane %v989, 4
      %v995 = vshrl.u32 %v496, 16
      %v997 = vrot.slane %v995, 7
      %v998 = vshll.u32 %v496, 16
      %v1000 = vor.u32 %v997, %v998
      %v1001 = vsel %vm574, %v993, %v1000
      %v1002 = vrot.slane %v997, 4
      %v1006 = vld [vmem:[#allocation2 + $0x200] sm:$0xf]
      %v1007 = vsel %vm597, %v992, %v1006
      %1008 = vst [vmem:[#allocation2 + $0x200] sm:$0xf] %v1007
      %1009 = vst.msk [vmem:[#allocation2 + $0x208] sm:$0xf] %vm601, %v1001
      %v1010 = vld [vmem:[#allocation2 + $0x210] sm:$0x1]
      %v1011 = vsel %vm604, %v1002, %v1010
      %1012 = vst [vmem:[#allocation2 + $0x210] sm:$0x1] %v1011
      %1015 = vrot.lane.b32.xlu0 %v465, 64
      %v1016 = vpop.permute.xlu0 %1015
      %1017 = vrot.lane.b32.xlu0 %v466, 64
      %v1018 = vpop.permute.xlu0 %1017
      %vm1021 = vcmask 1043968
      %1022 = vst.msk [vmem:[#allocation2 + $0x20] sm:$0xf] %vm1021, %v1016
      %1023 = vst.msk [vmem:[#allocation2 + $0x28] sm:$0xf] %vm1021, %v1018
      %1026 = vrot.lane.b32.xlu0 %v467, 64
      %v1027 = vpop.permute.xlu0 %1026
      %1028 = vrot.lane.b32.xlu0 %v468, 64
      %v1029 = vpop.permute.xlu0 %1028
      %1032 = vst.msk [vmem:[#allocation2 + $0x40] sm:$0xf] %vm1021, %v1027
      %1033 = vst.msk [vmem:[#allocation2 + $0x48] sm:$0xf] %vm1021, %v1029
      %1036 = vrot.lane.b32.xlu0 %v469, 64
      %v1037 = vpop.permute.xlu0 %1036
      %1038 = vrot.lane.b32.xlu0 %v470, 64
      %v1039 = vpop.permute.xlu0 %1038
      %1042 = vst.msk [vmem:[#allocation2 + $0x60] sm:$0xf] %vm1021, %v1037
      %1043 = vst.msk [vmem:[#allocation2 + $0x68] sm:$0xf] %vm1021, %v1039
      %1046 = vrot.lane.b32.xlu0 %v471, 64
      %v1047 = vpop.permute.xlu0 %1046
      %1048 = vrot.lane.b32.xlu0 %v472, 64
      %v1049 = vpop.permute.xlu0 %1048
      %1052 = vst.msk [vmem:[#allocation2 + $0x80] sm:$0xf] %vm1021, %v1047
      %1053 = vst.msk [vmem:[#allocation2 + $0x88] sm:$0xf] %vm1021, %v1049
      %1056 = vrot.lane.b32.xlu0 %v473, 64
      %v1057 = vpop.permute.xlu0 %1056
      %1058 = vrot.lane.b32.xlu0 %v474, 64
      %v1059 = vpop.permute.xlu0 %1058
      %1062 = vst.msk [vmem:[#allocation2 + $0xa0] sm:$0xf] %vm1021, %v1057
      %1063 = vst.msk [vmem:[#allocation2 + $0xa8] sm:$0xf] %vm1021, %v1059
      %1066 = vrot.lane.b32.xlu0 %v475, 64
      %v1067 = vpop.permute.xlu0 %1066
      %1068 = vrot.lane.b32.xlu0 %v476, 64
      %v1069 = vpop.permute.xlu0 %1068
      %1072 = vst.msk [vmem:[#allocation2 + $0xc0] sm:$0xf] %vm1021, %v1067
      %1073 = vst.msk [vmem:[#allocation2 + $0xc8] sm:$0xf] %vm1021, %v1069
      %1076 = vrot.lane.b32.xlu0 %v477, 64
      %v1077 = vpop.permute.xlu0 %1076
      %1078 = vrot.lane.b32.xlu0 %v478, 64
      %v1079 = vpop.permute.xlu0 %1078
      %1082 = vst.msk [vmem:[#allocation2 + $0xe0] sm:$0xf] %vm1021, %v1077
      %1083 = vst.msk [vmem:[#allocation2 + $0xe8] sm:$0xf] %vm1021, %v1079
      %1086 = vrot.lane.b32.xlu0 %v479, 64
      %v1087 = vpop.permute.xlu0 %1086
      %1088 = vrot.lane.b32.xlu0 %v480, 64
      %v1089 = vpop.permute.xlu0 %1088
      %1092 = vst.msk [vmem:[#allocation2 + $0x100] sm:$0xf] %vm1021, %v1087
      %1093 = vst.msk [vmem:[#allocation2 + $0x108] sm:$0xf] %vm1021, %v1089
      %1096 = vrot.lane.b32.xlu0 %v481, 64
      %v1097 = vpop.permute.xlu0 %1096
      %1098 = vrot.lane.b32.xlu0 %v482, 64
      %v1099 = vpop.permute.xlu0 %1098
      %1102 = vst.msk [vmem:[#allocation2 + $0x120] sm:$0xf] %vm1021, %v1097
      %1103 = vst.msk [vmem:[#allocation2 + $0x128] sm:$0xf] %vm1021, %v1099
      %1106 = vrot.lane.b32.xlu0 %v483, 64
      %v1107 = vpop.permute.xlu0 %1106
      %1108 = vrot.lane.b32.xlu0 %v484, 64
      %v1109 = vpop.permute.xlu0 %1108
      %1112 = vst.msk [vmem:[#allocation2 + $0x140] sm:$0xf] %vm1021, %v1107
      %1113 = vst.msk [vmem:[#allocation2 + $0x148] sm:$0xf] %vm1021, %v1109
      %1116 = vrot.lane.b32.xlu0 %v485, 64
      %v1117 = vpop.permute.xlu0 %1116
      %1118 = vrot.lane.b32.xlu0 %v486, 64
      %v1119 = vpop.permute.xlu0 %1118
      %1122 = vst.msk [vmem:[#allocation2 + $0x160] sm:$0xf] %vm1021, %v1117
      %1123 = vst.msk [vmem:[#allocation2 + $0x168] sm:$0xf] %vm1021, %v1119
      %1126 = vrot.lane.b32.xlu0 %v487, 64
      %v1127 = vpop.permute.xlu0 %1126
      %1128 = vrot.lane.b32.xlu0 %v488, 64
      %v1129 = vpop.permute.xlu0 %1128
      %1132 = vst.msk [vmem:[#allocation2 + $0x180] sm:$0xf] %vm1021, %v1127
      %1133 = vst.msk [vmem:[#allocation2 + $0x188] sm:$0xf] %vm1021, %v1129
      %1136 = vrot.lane.b32.xlu0 %v489, 64
      %v1137 = vpop.permute.xlu0 %1136
      %1138 = vrot.lane.b32.xlu0 %v490, 64
      %v1139 = vpop.permute.xlu0 %1138
      %1142 = vst.msk [vmem:[#allocation2 + $0x1a0] sm:$0xf] %vm1021, %v1137
      %1143 = vst.msk [vmem:[#allocation2 + $0x1a8] sm:$0xf] %vm1021, %v1139
      %1146 = vrot.lane.b32.xlu0 %v491, 64
      %v1147 = vpop.permute.xlu0 %1146
      %1148 = vrot.lane.b32.xlu0 %v492, 64
      %v1149 = vpop.permute.xlu0 %1148
      %1152 = vst.msk [vmem:[#allocation2 + $0x1c0] sm:$0xf] %vm1021, %v1147
      %1153 = vst.msk [vmem:[#allocation2 + $0x1c8] sm:$0xf] %vm1021, %v1149
      %1156 = vrot.lane.b32.xlu0 %v493, 64
      %v1157 = vpop.permute.xlu0 %1156
      %1158 = vrot.lane.b32.xlu0 %v494, 64
      %v1159 = vpop.permute.xlu0 %1158
      %1162 = vst.msk [vmem:[#allocation2 + $0x1e0] sm:$0xf] %vm1021, %v1157
      %1163 = vst.msk [vmem:[#allocation2 + $0x1e8] sm:$0xf] %vm1021, %v1159
      %1166 = vrot.lane.b32.xlu0 %v495, 64
      %v1167 = vpop.permute.xlu0 %1166
      %1168 = vrot.lane.b32.xlu0 %v496, 64
      %v1169 = vpop.permute.xlu0 %1168
      %1172 = vst.msk [vmem:[#allocation2 + $0x200] sm:$0xf] %vm1021, %v1167
      %1173 = vst.msk [vmem:[#allocation2 + $0x208] sm:$0xf] %vm1021, %v1169
      %vm1174 = vsmask.f32 3328
      %vm1175 = vsmask.f32 7440
      %vm1176 = vmor %vm1174, %vm1175
      %v1177 = vrot.slane %v579, 5
      %v1178 = vrot.slane %v576, 4
      %v1179 = vor.u32 %v1178, %v1177
      %v1180 = vrot.slane %v1179, 4
      %v1181 = vrot.slane %v587, 5
      %v1182 = vsel %vm1176, %v1180, %v1181
      %v1183 = vrot.slane %v584, 4
      %v1184 = vor.u32 %v1183, %v1181
      %v1185 = vrot.slane %v1184, 4
      %vm1189 = vcmask 519171
      %vm1190 = vsmask.f32 7950
      %vm1191 = vmand %vm1189, %vm1190
      %v1192 = vld [vmem:[#allocation2 + $0x1c] sm:$0x8]
      %v1193 = vsel %vm1191, %v1177, %v1192
      %1194 = vst [vmem:[#allocation2 + $0x1c] sm:$0x8] %v1193
      %1195 = vst.msk [vmem:[#allocation2 + $0x24] sm:$0xf] %vm601, %v1182
      %vm1196 = vmand %vm595, %vm1174
      %v1197 = vld [vmem:[#allocation2 + $0x2c] sm:$0xf]
      %v1198 = vsel %vm1196, %v1185, %v1197
      %1199 = vst [vmem:[#allocation2 + $0x2c] sm:$0xf] %v1198
      %v1200 = vrot.slane %v612, 5
      %v1201 = vrot.slane %v609, 4
      %v1202 = vor.u32 %v1201, %v1200
      %v1203 = vrot.slane %v1202, 4
      %v1204 = vrot.slane %v620, 5
      %v1205 = vsel %vm1176, %v1203, %v1204
      %v1206 = vrot.slane %v617, 4
      %v1207 = vor.u32 %v1206, %v1204
      %v1208 = vrot.slane %v1207, 4
      %v1212 = vld [vmem:[#allocation2 + $0x3c] sm:$0x8]
      %v1213 = vsel %vm1191, %v1200, %v1212
      %1214 = vst [vmem:[#allocation2 + $0x3c] sm:$0x8] %v1213
      %1215 = vst.msk [vmem:[#allocation2 + $0x44] sm:$0xf] %vm601, %v1205
      %v1216 = vld [vmem:[#allocation2 + $0x4c] sm:$0xf]
      %v1217 = vsel %vm1196, %v1208, %v1216
      %1218 = vst [vmem:[#allocation2 + $0x4c] sm:$0xf] %v1217
      %v1219 = vrot.slane %v639, 5
      %v1220 = vrot.slane %v636, 4
      %v1221 = vor.u32 %v1220, %v1219
      %v1222 = vrot.slane %v1221, 4
      %v1223 = vrot.slane %v647, 5
      %v1224 = vsel %vm1176, %v1222, %v1223
      %v1225 = vrot.slane %v644, 4
      %v1226 = vor.u32 %v1225, %v1223
      %v1227 = vrot.slane %v1226, 4
      %v1231 = vld [vmem:[#allocation2 + $0x5c] sm:$0x8]
      %v1232 = vsel %vm1191, %v1219, %v1231
      %1233 = vst [vmem:[#allocation2 + $0x5c] sm:$0x8] %v1232
      %1234 = vst.msk [vmem:[#allocation2 + $0x64] sm:$0xf] %vm601, %v1224
      %v1235 = vld [vmem:[#allocation2 + $0x6c] sm:$0xf]
      %v1236 = vsel %vm1196, %v1227, %v1235
      %1237 = vst [vmem:[#allocation2 + $0x6c] sm:$0xf] %v1236
      %v1238 = vrot.slane %v666, 5
      %v1239 = vrot.slane %v663, 4
      %v1240 = vor.u32 %v1239, %v1238
      %v1241 = vrot.slane %v1240, 4
      %v1242 = vrot.slane %v674, 5
      %v1243 = vsel %vm1176, %v1241, %v1242
      %v1244 = vrot.slane %v671, 4
      %v1245 = vor.u32 %v1244, %v1242
      %v1246 = vrot.slane %v1245, 4
      %v1250 = vld [vmem:[#allocation2 + $0x7c] sm:$0x8]
      %v1251 = vsel %vm1191, %v1238, %v1250
      %1252 = vst [vmem:[#allocation2 + $0x7c] sm:$0x8] %v1251
      %1253 = vst.msk [vmem:[#allocation2 + $0x84] sm:$0xf] %vm601, %v1243
      %v1254 = vld [vmem:[#allocation2 + $0x8c] sm:$0xf]
      %v1255 = vsel %vm1196, %v1246, %v1254
      %1256 = vst [vmem:[#allocation2 + $0x8c] sm:$0xf] %v1255
      %v1257 = vrot.slane %v693, 5
      %v1258 = vrot.slane %v690, 4
      %v1259 = vor.u32 %v1258, %v1257
      %v1260 = vrot.slane %v1259, 4
      %v1261 = vrot.slane %v701, 5
      %v1262 = vsel %vm1176, %v1260, %v1261
      %v1263 = vrot.slane %v698, 4
      %v1264 = vor.u32 %v1263, %v1261
      %v1265 = vrot.slane %v1264, 4
      %v1269 = vld [vmem:[#allocation2 + $0x9c] sm:$0x8]
      %v1270 = vsel %vm1191, %v1257, %v1269
      %1271 = vst [vmem:[#allocation2 + $0x9c] sm:$0x8] %v1270
      %1272 = vst.msk [vmem:[#allocation2 + $0xa4] sm:$0xf] %vm601, %v1262
      %v1273 = vld [vmem:[#allocation2 + $0xac] sm:$0xf]
      %v1274 = vsel %vm1196, %v1265, %v1273
      %1275 = vst [vmem:[#allocation2 + $0xac] sm:$0xf] %v1274
      %v1276 = vrot.slane %v720, 5
      %v1277 = vrot.slane %v717, 4
      %v1278 = vor.u32 %v1277, %v1276
      %v1279 = vrot.slane %v1278, 4
      %v1280 = vrot.slane %v728, 5
      %v1281 = vsel %vm1176, %v1279, %v1280
      %v1282 = vrot.slane %v725, 4
      %v1283 = vor.u32 %v1282, %v1280
      %v1284 = vrot.slane %v1283, 4
      %v1288 = vld [vmem:[#allocation2 + $0xbc] sm:$0x8]
      %v1289 = vsel %vm1191, %v1276, %v1288
      %1290 = vst [vmem:[#allocation2 + $0xbc] sm:$0x8] %v1289
      %1291 = vst.msk [vmem:[#allocation2 + $0xc4] sm:$0xf] %vm601, %v1281
      %v1292 = vld [vmem:[#allocation2 + $0xcc] sm:$0xf]
      %v1293 = vsel %vm1196, %v1284, %v1292
      %1294 = vst [vmem:[#allocation2 + $0xcc] sm:$0xf] %v1293
      %v1295 = vrot.slane %v747, 5
      %v1296 = vrot.slane %v744, 4
      %v1297 = vor.u32 %v1296, %v1295
      %v1298 = vrot.slane %v1297, 4
      %v1299 = vrot.slane %v755, 5
      %v1300 = vsel %vm1176, %v1298, %v1299
      %v1301 = vrot.slane %v752, 4
      %v1302 = vor.u32 %v1301, %v1299
      %v1303 = vrot.slane %v1302, 4
      %v1307 = vld [vmem:[#allocation2 + $0xdc] sm:$0x8]
      %v1308 = vsel %vm1191, %v1295, %v1307
      %1309 = vst [vmem:[#allocation2 + $0xdc] sm:$0x8] %v1308
      %1310 = vst.msk [vmem:[#allocation2 + $0xe4] sm:$0xf] %vm601, %v1300
      %v1311 = vld [vmem:[#allocation2 + $0xec] sm:$0xf]
      %v1312 = vsel %vm1196, %v1303, %v1311
      %1313 = vst [vmem:[#allocation2 + $0xec] sm:$0xf] %v1312
      %v1314 = vrot.slane %v774, 5
      %v1315 = vrot.slane %v771, 4
      %v1316 = vor.u32 %v1315, %v1314
      %v1317 = vrot.slane %v1316, 4
      %v1318 = vrot.slane %v782, 5
      %v1319 = vsel %vm1176, %v1317, %v1318
      %v1320 = vrot.slane %v779, 4
      %v1321 = vor.u32 %v1320, %v1318
      %v1322 = vrot.slane %v1321, 4
      %v1326 = vld [vmem:[#allocation2 + $0xfc] sm:$0x8]
      %v1327 = vsel %vm1191, %v1314, %v1326
      %1328 = vst [vmem:[#allocation2 + $0xfc] sm:$0x8] %v1327
      %1329 = vst.msk [vmem:[#allocation2 + $0x104] sm:$0xf] %vm601, %v1319
      %v1330 = vld [vmem:[#allocation2 + $0x10c] sm:$0xf]
      %v1331 = vsel %vm1196, %v1322, %v1330
      %1332 = vst [vmem:[#allocation2 + $0x10c] sm:$0xf] %v1331
      %v1333 = vrot.slane %v801, 5
      %v1334 = vrot.slane %v798, 4
      %v1335 = vor.u32 %v1334, %v1333
      %v1336 = vrot.slane %v1335, 4
      %v1337 = vrot.slane %v809, 5
      %v1338 = vsel %vm1176, %v1336, %v1337
      %v1339 = vrot.slane %v806, 4
      %v1340 = vor.u32 %v1339, %v1337
      %v1341 = vrot.slane %v1340, 4
      %v1345 = vld [vmem:[#allocation2 + $0x11c] sm:$0x8]
      %v1346 = vsel %vm1191, %v1333, %v1345
      %1347 = vst [vmem:[#allocation2 + $0x11c] sm:$0x8] %v1346
      %1348 = vst.msk [vmem:[#allocation2 + $0x124] sm:$0xf] %vm601, %v1338
      %v1349 = vld [vmem:[#allocation2 + $0x12c] sm:$0xf]
      %v1350 = vsel %vm1196, %v1341, %v1349
      %1351 = vst [vmem:[#allocation2 + $0x12c] sm:$0xf] %v1350
      %v1352 = vrot.slane %v828, 5
      %v1353 = vrot.slane %v825, 4
      %v1354 = vor.u32 %v1353, %v1352
      %v1355 = vrot.slane %v1354, 4
      %v1356 = vrot.slane %v836, 5
      %v1357 = vsel %vm1176, %v1355, %v1356
      %v1358 = vrot.slane %v833, 4
      %v1359 = vor.u32 %v1358, %v1356
      %v1360 = vrot.slane %v1359, 4
      %v1364 = vld [vmem:[#allocation2 + $0x13c] sm:$0x8]
      %v1365 = vsel %vm1191, %v1352, %v1364
      %1366 = vst [vmem:[#allocation2 + $0x13c] sm:$0x8] %v1365
      %1367 = vst.msk [vmem:[#allocation2 + $0x144] sm:$0xf] %vm601, %v1357
      %v1368 = vld [vmem:[#allocation2 + $0x14c] sm:$0xf]
      %v1369 = vsel %vm1196, %v1360, %v1368
      %1370 = vst [vmem:[#allocation2 + $0x14c] sm:$0xf] %v1369
      %v1371 = vrot.slane %v855, 5
      %v1372 = vrot.slane %v852, 4
      %v1373 = vor.u32 %v1372, %v1371
      %v1374 = vrot.slane %v1373, 4
      %v1375 = vrot.slane %v863, 5
      %v1376 = vsel %vm1176, %v1374, %v1375
      %v1377 = vrot.slane %v860, 4
      %v1378 = vor.u32 %v1377, %v1375
      %v1379 = vrot.slane %v1378, 4
      %v1383 = vld [vmem:[#allocation2 + $0x15c] sm:$0x8]
      %v1384 = vsel %vm1191, %v1371, %v1383
      %1385 = vst [vmem:[#allocation2 + $0x15c] sm:$0x8] %v1384
      %1386 = vst.msk [vmem:[#allocation2 + $0x164] sm:$0xf] %vm601, %v1376
      %v1387 = vld [vmem:[#allocation2 + $0x16c] sm:$0xf]
      %v1388 = vsel %vm1196, %v1379, %v1387
      %1389 = vst [vmem:[#allocation2 + $0x16c] sm:$0xf] %v1388
      %v1390 = vrot.slane %v882, 5
      %v1391 = vrot.slane %v879, 4
      %v1392 = vor.u32 %v1391, %v1390
      %v1393 = vrot.slane %v1392, 4
      %v1394 = vrot.slane %v890, 5
      %v1395 = vsel %vm1176, %v1393, %v1394
      %v1396 = vrot.slane %v887, 4
      %v1397 = vor.u32 %v1396, %v1394
      %v1398 = vrot.slane %v1397, 4
      %v1402 = vld [vmem:[#allocation2 + $0x17c] sm:$0x8]
      %v1403 = vsel %vm1191, %v1390, %v1402
      %1404 = vst [vmem:[#allocation2 + $0x17c] sm:$0x8] %v1403
      %1405 = vst.msk [vmem:[#allocation2 + $0x184] sm:$0xf] %vm601, %v1395
      %v1406 = vld [vmem:[#allocation2 + $0x18c] sm:$0xf]
      %v1407 = vsel %vm1196, %v1398, %v1406
      %1408 = vst [vmem:[#allocation2 + $0x18c] sm:$0xf] %v1407
      %v1409 = vrot.slane %v909, 5
      %v1410 = vrot.slane %v906, 4
      %v1411 = vor.u32 %v1410, %v1409
      %v1412 = vrot.slane %v1411, 4
      %v1413 = vrot.slane %v917, 5
      %v1414 = vsel %vm1176, %v1412, %v1413
      %v1415 = vrot.slane %v914, 4
      %v1416 = vor.u32 %v1415, %v1413
      %v1417 = vrot.slane %v1416, 4
      %v1421 = vld [vmem:[#allocation2 + $0x19c] sm:$0x8]
      %v1422 = vsel %vm1191, %v1409, %v1421
      %1423 = vst [vmem:[#allocation2 + $0x19c] sm:$0x8] %v1422
      %1424 = vst.msk [vmem:[#allocation2 + $0x1a4] sm:$0xf] %vm601, %v1414
      %v1425 = vld [vmem:[#allocation2 + $0x1ac] sm:$0xf]
      %v1426 = vsel %vm1196, %v1417, %v1425
      %1427 = vst [vmem:[#allocation2 + $0x1ac] sm:$0xf] %v1426
      %v1428 = vrot.slane %v936, 5
      %v1429 = vrot.slane %v933, 4
      %v1430 = vor.u32 %v1429, %v1428
      %v1431 = vrot.slane %v1430, 4
      %v1432 = vrot.slane %v944, 5
      %v1433 = vsel %vm1176, %v1431, %v1432
      %v1434 = vrot.slane %v941, 4
      %v1435 = vor.u32 %v1434, %v1432
      %v1436 = vrot.slane %v1435, 4
      %v1440 = vld [vmem:[#allocation2 + $0x1bc] sm:$0x8]
      %v1441 = vsel %vm1191, %v1428, %v1440
      %1442 = vst [vmem:[#allocation2 + $0x1bc] sm:$0x8] %v1441
      %1443 = vst.msk [vmem:[#allocation2 + $0x1c4] sm:$0xf] %vm601, %v1433
      %v1444 = vld [vmem:[#allocation2 + $0x1cc] sm:$0xf]
      %v1445 = vsel %vm1196, %v1436, %v1444
      %1446 = vst [vmem:[#allocation2 + $0x1cc] sm:$0xf] %v1445
      %v1447 = vrot.slane %v963, 5
      %v1448 = vrot.slane %v960, 4
      %v1449 = vor.u32 %v1448, %v1447
      %v1450 = vrot.slane %v1449, 4
      %v1451 = vrot.slane %v971, 5
      %v1452 = vsel %vm1176, %v1450, %v1451
      %v1453 = vrot.slane %v968, 4
      %v1454 = vor.u32 %v1453, %v1451
      %v1455 = vrot.slane %v1454, 4
      %v1459 = vld [vmem:[#allocation2 + $0x1dc] sm:$0x8]
      %v1460 = vsel %vm1191, %v1447, %v1459
      %1461 = vst [vmem:[#allocation2 + $0x1dc] sm:$0x8] %v1460
      %1462 = vst.msk [vmem:[#allocation2 + $0x1e4] sm:$0xf] %vm601, %v1452
      %v1463 = vld [vmem:[#allocation2 + $0x1ec] sm:$0xf]
      %v1464 = vsel %vm1196, %v1455, %v1463
      %1465 = vst [vmem:[#allocation2 + $0x1ec] sm:$0xf] %v1464
      %v1466 = vrot.slane %v990, 5
      %v1467 = vrot.slane %v987, 4
      %v1468 = vor.u32 %v1467, %v1466
      %v1469 = vrot.slane %v1468, 4
      %v1470 = vrot.slane %v998, 5
      %v1471 = vsel %vm1176, %v1469, %v1470
      %v1472 = vrot.slane %v995, 4
      %v1473 = vor.u32 %v1472, %v1470
      %v1474 = vrot.slane %v1473, 4
      %v1478 = vld [vmem:[#allocation2 + $0x1fc] sm:$0x8]
      %v1479 = vsel %vm1191, %v1466, %v1478
      %1480 = vst [vmem:[#allocation2 + $0x1fc] sm:$0x8] %v1479
      %1481 = vst.msk [vmem:[#allocation2 + $0x204] sm:$0xf] %vm601, %v1471
      %v1482 = vld [vmem:[#allocation2 + $0x20c] sm:$0xf]
      %v1483 = vsel %vm1196, %v1474, %v1482
      %1484 = vst [vmem:[#allocation2 + $0x20c] sm:$0xf] %v1483
      %v1485 = vld [vmem:[#allocation2] sm:$0xff]
      %v1486 = vld [vmem:[#allocation2 + $0x8] sm:$0xff]
      %v1487 = vld [vmem:[#allocation2 + $0x10] sm:$0xff]
      %v1488 = vld [vmem:[#allocation2 + $0x18] sm:$0xff]
      %v1489 = vld [vmem:[#allocation2 + $0x20] sm:$0xff]
      %v1490 = vld [vmem:[#allocation2 + $0x28] sm:$0xff]
      %v1491 = vld [vmem:[#allocation2 + $0x30] sm:$0xff]
      %v1492 = vld [vmem:[#allocation2 + $0x38] sm:$0xff]
      %v1493 = vld [vmem:[#allocation2 + $0x40] sm:$0xff]
      %v1494 = vld [vmem:[#allocation2 + $0x48] sm:$0xff]
      %v1495 = vld [vmem:[#allocation2 + $0x50] sm:$0xff]
      %v1496 = vld [vmem:[#allocation2 + $0x58] sm:$0xff]
      %v1497 = vld [vmem:[#allocation2 + $0x60] sm:$0xff]
      %v1498 = vld [vmem:[#allocation2 + $0x68] sm:$0xff]
      %v1499 = vld [vmem:[#allocation2 + $0x70] sm:$0xff]
      %v1500 = vld [vmem:[#allocation2 + $0x78] sm:$0xff]
      %v1501 = vld [vmem:[#allocation2 + $0x80] sm:$0xff]
      %v1502 = vld [vmem:[#allocation2 + $0x88] sm:$0xff]
      %v1503 = vld [vmem:[#allocation2 + $0x90] sm:$0xff]
      %v1504 = vld [vmem:[#allocation2 + $0x98] sm:$0xff]
      %v1505 = vld [vmem:[#allocation2 + $0xa0] sm:$0xff]
      %v1506 = vld [vmem:[#allocation2 + $0xa8] sm:$0xff]
      %v1507 = vld [vmem:[#allocation2 + $0xb0] sm:$0xff]
      %v1508 = vld [vmem:[#allocation2 + $0xb8] sm:$0xff]
      %v1509 = vld [vmem:[#allocation2 + $0xc0] sm:$0xff]
      %v1510 = vld [vmem:[#allocation2 + $0xc8] sm:$0xff]
      %v1511 = vld [vmem:[#allocation2 + $0xd0] sm:$0xff]
      %v1512 = vld [vmem:[#allocation2 + $0xd8] sm:$0xff]
      %v1513 = vld [vmem:[#allocation2 + $0xe0] sm:$0xff]
      %v1514 = vld [vmem:[#allocation2 + $0xe8] sm:$0xff]
      %v1515 = vld [vmem:[#allocation2 + $0xf0] sm:$0xff]
      %v1516 = vld [vmem:[#allocation2 + $0xf8] sm:$0xff]
      %v1517 = vld [vmem:[%s3] sm:$0xf]
      %v1518 = vld [vmem:[%s3 + $0x4] sm:$0xf]
      %v1519 = vld [vmem:[%s3 + $0x8] sm:$0xf]
      %v1520 = vld [vmem:[%s3 + $0xc] sm:$0xf]
      %v1521 = vld [vmem:[%s3 + $0x10] sm:$0xf]
      %v1522 = vld [vmem:[%s3 + $0x14] sm:$0xf]
      %v1523 = vld [vmem:[%s3 + $0x18] sm:$0xf]
      %v1524 = vld [vmem:[%s3 + $0x1c] sm:$0xf]
      %v1525 = vld [vmem:[%s3 + $0x20] sm:$0xf]
      %v1526 = vld [vmem:[%s3 + $0x24] sm:$0xf]
      %v1527 = vld [vmem:[%s3 + $0x28] sm:$0xf]
      %v1528 = vld [vmem:[%s3 + $0x2c] sm:$0xf]
      %v1529 = vld [vmem:[%s3 + $0x30] sm:$0xf]
      %v1530 = vld [vmem:[%s3 + $0x34] sm:$0xf]
      %v1531 = vld [vmem:[%s3 + $0x38] sm:$0xf]
      %v1532 = vld [vmem:[%s3 + $0x3c] sm:$0xf]
      %v1533 = vld [vmem:[%s3 + $0x40] sm:$0xf]
      %v1534 = vld [vmem:[%s3 + $0x44] sm:$0xf]
      %v1535 = vld [vmem:[%s3 + $0x48] sm:$0xf]
      %v1536 = vld [vmem:[%s3 + $0x4c] sm:$0xf]
      %v1537 = vld [vmem:[%s3 + $0x50] sm:$0xf]
      %v1538 = vld [vmem:[%s3 + $0x54] sm:$0xf]
      %v1539 = vld [vmem:[%s3 + $0x58] sm:$0xf]
      %v1540 = vld [vmem:[%s3 + $0x5c] sm:$0xf]
      %v1541 = vld [vmem:[#allocation2 + $0x100] sm:$0xff]
      %v1542 = vld [vmem:[#allocation2 + $0x108] sm:$0xff]
      %v1543 = vld [vmem:[#allocation2 + $0x110] sm:$0xff]
      %v1544 = vld [vmem:[#allocation2 + $0x118] sm:$0xff]
      %s1545 = scalar_lea.vmem %s3, 96
      %v1546 = vld [vmem:[%s1545] sm:$0xf]
      %v1547 = vld [vmem:[%s1545 + $0x4] sm:$0xf]
      %v1548 = vld [vmem:[%s1545 + $0x8] sm:$0xf]
      %v1549 = vld [vmem:[%s1545 + $0xc] sm:$0xf]
      %v1550 = vld [vmem:[%s1545 + $0x10] sm:$0xf]
      %v1551 = vld [vmem:[%s1545 + $0x14] sm:$0xf]
      %v1552 = vld [vmem:[%s1545 + $0x18] sm:$0xf]
      %v1553 = vld [vmem:[%s1545 + $0x1c] sm:$0xf]
      %v1554 = vld [vmem:[%s1545 + $0x20] sm:$0xf]
      %v1555 = vld [vmem:[%s1545 + $0x24] sm:$0xf]
      %v1556 = vld [vmem:[%s1545 + $0x28] sm:$0xf]
      %v1557 = vld [vmem:[%s1545 + $0x2c] sm:$0xf]
      %v1558 = vld [vmem:[%s1545 + $0x30] sm:$0xf]
      %v1559 = vld [vmem:[%s1545 + $0x34] sm:$0xf]
      %v1560 = vld [vmem:[%s1545 + $0x38] sm:$0xf]
      %v1561 = vld [vmem:[%s1545 + $0x3c] sm:$0xf]
      %v1562 = vld [vmem:[%s1545 + $0x40] sm:$0xf]
      %v1563 = vld [vmem:[%s1545 + $0x44] sm:$0xf]
      %v1564 = vld [vmem:[%s1545 + $0x48] sm:$0xf]
      %v1565 = vld [vmem:[%s1545 + $0x4c] sm:$0xf]
      %v1566 = vld [vmem:[%s1545 + $0x50] sm:$0xf]
      %v1567 = vld [vmem:[%s1545 + $0x54] sm:$0xf]
      %v1568 = vld [vmem:[%s1545 + $0x58] sm:$0xf]
      %v1569 = vld [vmem:[%s1545 + $0x5c] sm:$0xf]
      %v1602 = vunpack.c.l.b16 %v1489
      %v1603 = vunpack.c.h.b16 %v1489
      %v1604 = vunpack.c.l.b16 %v1490
      %v1605 = vunpack.c.h.b16 %v1490
      %v1606 = vunpack.c.l.b16 %v1491
      %v1607 = vunpack.c.h.b16 %v1491
      %v1608 = vunpack.c.l.b16 %v1492
      %v1609 = vunpack.c.h.b16 %v1492
      %v1610 = vunpack.c.l.b16 %v1493
      %v1611 = vunpack.c.h.b16 %v1493
      %v1612 = vunpack.c.l.b16 %v1494
      %v1613 = vunpack.c.h.b16 %v1494
      %v1614 = vunpack.c.l.b16 %v1495
      %v1615 = vunpack.c.h.b16 %v1495
      %v1616 = vunpack.c.l.b16 %v1496
      %v1617 = vunpack.c.h.b16 %v1496
      %v1618 = vunpack.c.l.b16 %v1497
      %v1619 = vunpack.c.h.b16 %v1497
      %v1620 = vunpack.c.l.b16 %v1498
      %v1621 = vunpack.c.h.b16 %v1498
      %v1622 = vunpack.c.l.b16 %v1499
      %v1623 = vunpack.c.h.b16 %v1499
      %v1624 = vunpack.c.l.b16 %v1500
      %v1625 = vunpack.c.h.b16 %v1500
      %v1626 = vunpack.c.l.b16 %v1501
      %v1627 = vunpack.c.h.b16 %v1501
      %v1628 = vunpack.c.l.b16 %v1502
      %v1629 = vunpack.c.h.b16 %v1502
      %v1630 = vunpack.c.l.b16 %v1503
      %v1631 = vunpack.c.h.b16 %v1503
      %v1632 = vunpack.c.l.b16 %v1504
      %v1633 = vunpack.c.h.b16 %v1504
      %v1634 = vunpack.c.l.b16 %v1505
      %v1635 = vunpack.c.h.b16 %v1505
      %v1636 = vunpack.c.l.b16 %v1506
      %v1637 = vunpack.c.h.b16 %v1506
      %v1638 = vunpack.c.l.b16 %v1507
      %v1639 = vunpack.c.h.b16 %v1507
      %v1640 = vunpack.c.l.b16 %v1508
      %v1641 = vunpack.c.h.b16 %v1508
      %v1642 = vunpack.c.l.b16 %v1509
      %v1643 = vunpack.c.h.b16 %v1509
      %v1644 = vunpack.c.l.b16 %v1510
      %v1645 = vunpack.c.h.b16 %v1510
      %v1646 = vunpack.c.l.b16 %v1511
      %v1647 = vunpack.c.h.b16 %v1511
      %v1648 = vunpack.c.l.b16 %v1512
      %v1649 = vunpack.c.h.b16 %v1512
      %v1650 = vunpack.c.l.b16 %v1513
      %v1651 = vunpack.c.h.b16 %v1513
      %v1652 = vunpack.c.l.b16 %v1514
      %v1653 = vunpack.c.h.b16 %v1514
      %v1654 = vunpack.c.l.b16 %v1515
      %v1655 = vunpack.c.h.b16 %v1515
      %v1656 = vunpack.c.l.b16 %v1516
      %v1657 = vunpack.c.h.b16 %v1516
      %v1658 = vunpack.c.l.b16 %v1541
      %v1659 = vunpack.c.h.b16 %v1541
      %v1660 = vunpack.c.l.b16 %v1542
      %v1661 = vunpack.c.h.b16 %v1542
      %v1662 = vunpack.c.l.b16 %v1543
      %v1663 = vunpack.c.h.b16 %v1543
      %v1664 = vunpack.c.l.b16 %v1544
      %v1665 = vunpack.c.h.b16 %v1544
      %v1666 = vpack.c.b16 %v1604, %v1602
      %v1667 = vpack.c.b16 %v1605, %v1603
      %v1668 = vpack.c.b16 %v1608, %v1606
      %v1669 = vpack.c.b16 %v1609, %v1607
      %v1670 = vpack.c.b16 %v1612, %v1610
      %v1671 = vpack.c.b16 %v1613, %v1611
      %v1672 = vpack.c.b16 %v1616, %v1614
      %v1673 = vpack.c.b16 %v1617, %v1615
      %v1674 = vpack.c.b16 %v1620, %v1618
      %v1675 = vpack.c.b16 %v1621, %v1619
      %v1676 = vpack.c.b16 %v1624, %v1622
      %v1677 = vpack.c.b16 %v1625, %v1623
      %v1678 = vpack.c.b16 %v1628, %v1626
      %v1679 = vpack.c.b16 %v1629, %v1627
      %v1680 = vpack.c.b16 %v1632, %v1630
      %v1681 = vpack.c.b16 %v1633, %v1631
      %v1682 = vpack.c.b16 %v1636, %v1634
      %v1683 = vpack.c.b16 %v1637, %v1635
      %v1684 = vpack.c.b16 %v1640, %v1638
      %v1685 = vpack.c.b16 %v1641, %v1639
      %v1686 = vpack.c.b16 %v1644, %v1642
      %v1687 = vpack.c.b16 %v1645, %v1643
      %v1688 = vpack.c.b16 %v1648, %v1646
      %v1689 = vpack.c.b16 %v1649, %v1647
      %v1690 = vpack.c.b16 %v1652, %v1650
      %v1691 = vpack.c.b16 %v1653, %v1651
      %v1692 = vpack.c.b16 %v1656, %v1654
      %v1693 = vpack.c.b16 %v1657, %v1655
      %v1694 = vpack.c.b16 %v1660, %v1658
      %v1695 = vpack.c.b16 %v1661, %v1659
      %v1696 = vpack.c.b16 %v1664, %v1662
      %v1697 = vpack.c.b16 %v1665, %v1663
      %v1738 = vunpack.c.l.b16 %v1546
      %v1739 = vunpack.c.l.b16 %v1547
      %v1740 = vunpack.c.l.b16 %v1548
      %v1741 = vunpack.c.l.b16 %v1549
      %v1742 = vunpack.c.l.b16 %v1550
      %v1743 = vunpack.c.l.b16 %v1551
      %v1744 = vunpack.c.l.b16 %v1552
      %v1745 = vunpack.c.l.b16 %v1553
      %v1746 = vunpack.c.l.b16 %v1554
      %v1747 = vunpack.c.l.b16 %v1555
      %v1748 = vunpack.c.l.b16 %v1556
      %v1749 = vunpack.c.l.b16 %v1557
      %v1750 = vunpack.c.l.b16 %v1558
      %v1751 = vunpack.c.l.b16 %v1559
      %v1752 = vunpack.c.l.b16 %v1560
      %v1753 = vunpack.c.l.b16 %v1561
      %v1754 = vunpack.c.l.b16 %v1562
      %v1755 = vunpack.c.l.b16 %v1563
      %v1756 = vunpack.c.l.b16 %v1564
      %v1757 = vunpack.c.l.b16 %v1565
      %v1758 = vunpack.c.l.b16 %v1566
      %v1759 = vunpack.c.l.b16 %v1567
      %v1760 = vunpack.c.l.b16 %v1568
      %v1761 = vunpack.c.l.b16 %v1569
      %v1762 = vpack.c.b16 %v1739, %v1738
      %v1763 = vpack.c.b16 %v1741, %v1740
      %v1764 = vpack.c.b16 %v1743, %v1742
      %v1765 = vpack.c.b16 %v1745, %v1744
      %v1766 = vpack.c.b16 %v1747, %v1746
      %v1767 = vpack.c.b16 %v1749, %v1748
      %v1768 = vpack.c.b16 %v1751, %v1750
      %v1769 = vpack.c.b16 %v1753, %v1752
      %v1770 = vpack.c.b16 %v1755, %v1754
      %v1771 = vpack.c.b16 %v1757, %v1756
      %v1772 = vpack.c.b16 %v1759, %v1758
      %v1773 = vpack.c.b16 %v1761, %v1760
      %vm1786 = vcmask 523264
      %v1788 = vsel %vm1786, %v1667, 0
      %v1791 = vsel %vm1786, %v1669, 0
      %v1794 = vsel %vm1786, %v1671, 0
      %v1797 = vsel %vm1786, %v1673, 0
      %v1800 = vsel %vm1786, %v1675, 0
      %v1803 = vsel %vm1786, %v1677, 0
      %v1806 = vsel %vm1786, %v1679, 0
      %v1809 = vsel %vm1786, %v1681, 0
      %v1812 = vsel %vm1786, %v1683, 0
      %v1815 = vsel %vm1786, %v1685, 0
      %v1818 = vsel %vm1786, %v1687, 0
      %v1821 = vsel %vm1786, %v1689, 0
      %v1824 = vsel %vm1786, %v1691, 0
      %v1827 = vsel %vm1786, %v1693, 0
      %v1830 = vsel %vm1786, %v1695, 0
      %v1833 = vsel %vm1786, %v1697, 0
      %1835 = vmatpush.bf16.msra.mxu0 %v1769
      %1836 = vmatpush.bf16.msra.mxu0 %v1768
      %1837 = vmatpush.bf16.msra.mxu0 %v1767
      %1838 = vmatpush.bf16.msra.mxu0 %v1766
      %1839 = vmatpush.bf16.msra.mxu0 %v1765
      %1840 = vmatpush.bf16.msra.mxu0 %v1764
      %1841 = vmatpush.bf16.msra.mxu0 %v1763
      %1842 = vmatpush.bf16.msra.mxu0 %v1762
      %1843 = vmatmul.bf16.gmra.mxu0 %v1666
      %v1844 = vpop.f32.mrf.mxu0
      %v1845 = vadd.f32 0.0, %v1844
      %v1846 = vpop.f32.mrf.mxu0
      %v1847 = vadd.f32 0.0, %v1846
      %1848 = vmatmul.bf16.gmra.mxu0 %v1668
      %v1849 = vpop.f32.mrf.mxu0
      %v1850 = vadd.f32 0.0, %v1849
      %v1851 = vpop.f32.mrf.mxu0
      %v1852 = vadd.f32 0.0, %v1851
      %1853 = vmatmul.bf16.gmra.mxu0 %v1670
      %v1854 = vpop.f32.mrf.mxu0
      %v1855 = vadd.f32 0.0, %v1854
      %v1856 = vpop.f32.mrf.mxu0
      %v1857 = vadd.f32 0.0, %v1856
      %1858 = vmatmul.bf16.gmra.mxu0 %v1672
      %v1859 = vpop.f32.mrf.mxu0
      %v1860 = vadd.f32 0.0, %v1859
      %v1861 = vpop.f32.mrf.mxu0
      %v1862 = vadd.f32 0.0, %v1861
      %1863 = vmatmul.bf16.gmra.mxu0 %v1674
      %v1864 = vpop.f32.mrf.mxu0
      %v1865 = vadd.f32 0.0, %v1864
      %v1866 = vpop.f32.mrf.mxu0
      %v1867 = vadd.f32 0.0, %v1866
      %1868 = vmatmul.bf16.gmra.mxu0 %v1676
      %v1869 = vpop.f32.mrf.mxu0
      %v1870 = vadd.f32 0.0, %v1869
      %v1871 = vpop.f32.mrf.mxu0
      %v1872 = vadd.f32 0.0, %v1871
      %1873 = vmatmul.bf16.gmra.mxu0 %v1678
      %v1874 = vpop.f32.mrf.mxu0
      %v1875 = vadd.f32 0.0, %v1874
      %v1876 = vpop.f32.mrf.mxu0
      %v1877 = vadd.f32 0.0, %v1876
      %1878 = vmatmul.bf16.gmra.mxu0 %v1680
      %v1879 = vpop.f32.mrf.mxu0
      %v1880 = vadd.f32 0.0, %v1879
      %v1881 = vpop.f32.mrf.mxu0
      %v1882 = vadd.f32 0.0, %v1881
      %1883 = vmatmul.bf16.gmra.mxu0 %v1682
      %v1884 = vpop.f32.mrf.mxu0
      %v1885 = vadd.f32 0.0, %v1884
      %v1886 = vpop.f32.mrf.mxu0
      %v1887 = vadd.f32 0.0, %v1886
      %1888 = vmatmul.bf16.gmra.mxu0 %v1684
      %v1889 = vpop.f32.mrf.mxu0
      %v1890 = vadd.f32 0.0, %v1889
      %v1891 = vpop.f32.mrf.mxu0
      %v1892 = vadd.f32 0.0, %v1891
      %1893 = vmatmul.bf16.gmra.mxu0 %v1686
      %v1894 = vpop.f32.mrf.mxu0
      %v1895 = vadd.f32 0.0, %v1894
      %v1896 = vpop.f32.mrf.mxu0
      %v1897 = vadd.f32 0.0, %v1896
      %1898 = vmatmul.bf16.gmra.mxu0 %v1688
      %v1899 = vpop.f32.mrf.mxu0
      %v1900 = vadd.f32 0.0, %v1899
      %v1901 = vpop.f32.mrf.mxu0
      %v1902 = vadd.f32 0.0, %v1901
      %1903 = vmatmul.bf16.gmra.mxu0 %v1690
      %v1904 = vpop.f32.mrf.mxu0
      %v1905 = vadd.f32 0.0, %v1904
      %v1906 = vpop.f32.mrf.mxu0
      %v1907 = vadd.f32 0.0, %v1906
      %1908 = vmatmul.bf16.gmra.mxu0 %v1692
      %v1909 = vpop.f32.mrf.mxu0
      %v1910 = vadd.f32 0.0, %v1909
      %v1911 = vpop.f32.mrf.mxu0
      %v1912 = vadd.f32 0.0, %v1911
      %1913 = vmatmul.bf16.gmra.mxu0 %v1694
      %v1914 = vpop.f32.mrf.mxu0
      %v1915 = vadd.f32 0.0, %v1914
      %v1916 = vpop.f32.mrf.mxu0
      %v1917 = vadd.f32 0.0, %v1916
      %1918 = vmatmul.bf16.gmra.mxu0 %v1696
      %v1919 = vpop.f32.mrf.mxu0
      %v1920 = vadd.f32 0.0, %v1919
      %v1921 = vpop.f32.mrf.mxu0
      %v1922 = vadd.f32 0.0, %v1921
      %1923 = vdwg.mxu0
      %1924 = vmatpush.bf16.msra.mxu0 0
      %1925 = vmatpush.bf16.msra.mxu0 0
      %1926 = vmatpush.bf16.msra.mxu0 0
      %1927 = vmatpush.bf16.msra.mxu0 0
      %1928 = vmatpush.bf16.msra.mxu0 %v1773
      %1929 = vmatpush.bf16.msra.mxu0 %v1772
      %1930 = vmatpush.bf16.msra.mxu0 %v1771
      %1931 = vmatpush.bf16.msra.mxu0 %v1770
      %1932 = vmatmul.bf16.gmra.mxu0 %v1788
      %v1933 = vpop.f32.mrf.mxu0
      %v1934 = vadd.f32 %v1845, %v1933
      %v1935 = vpop.f32.mrf.mxu0
      %v1936 = vadd.f32 %v1847, %v1935
      %1937 = vmatmul.bf16.gmra.mxu0 %v1791
      %v1938 = vpop.f32.mrf.mxu0
      %v1939 = vadd.f32 %v1850, %v1938
      %v1940 = vpop.f32.mrf.mxu0
      %v1941 = vadd.f32 %v1852, %v1940
      %1942 = vmatmul.bf16.gmra.mxu0 %v1794
      %v1943 = vpop.f32.mrf.mxu0
      %v1944 = vadd.f32 %v1855, %v1943
      %v1945 = vpop.f32.mrf.mxu0
      %v1946 = vadd.f32 %v1857, %v1945
      %1947 = vmatmul.bf16.gmra.mxu0 %v1797
      %v1948 = vpop.f32.mrf.mxu0
      %v1949 = vadd.f32 %v1860, %v1948
      %v1950 = vpop.f32.mrf.mxu0
      %v1951 = vadd.f32 %v1862, %v1950
      %1952 = vmatmul.bf16.gmra.mxu0 %v1800
      %v1953 = vpop.f32.mrf.mxu0
      %v1954 = vadd.f32 %v1865, %v1953
      %v1955 = vpop.f32.mrf.mxu0
      %v1956 = vadd.f32 %v1867, %v1955
      %1957 = vmatmul.bf16.gmra.mxu0 %v1803
      %v1958 = vpop.f32.mrf.mxu0
      %v1959 = vadd.f32 %v1870, %v1958
      %v1960 = vpop.f32.mrf.mxu0
      %v1961 = vadd.f32 %v1872, %v1960
      %1962 = vmatmul.bf16.gmra.mxu0 %v1806
      %v1963 = vpop.f32.mrf.mxu0
      %v1964 = vadd.f32 %v1875, %v1963
      %v1965 = vpop.f32.mrf.mxu0
      %v1966 = vadd.f32 %v1877, %v1965
      %1967 = vmatmul.bf16.gmra.mxu0 %v1809
      %v1968 = vpop.f32.mrf.mxu0
      %v1969 = vadd.f32 %v1880, %v1968
      %v1970 = vpop.f32.mrf.mxu0
      %v1971 = vadd.f32 %v1882, %v1970
      %1972 = vmatmul.bf16.gmra.mxu0 %v1812
      %v1973 = vpop.f32.mrf.mxu0
      %v1974 = vadd.f32 %v1885, %v1973
      %v1975 = vpop.f32.mrf.mxu0
      %v1976 = vadd.f32 %v1887, %v1975
      %1977 = vmatmul.bf16.gmra.mxu0 %v1815
      %v1978 = vpop.f32.mrf.mxu0
      %v1979 = vadd.f32 %v1890, %v1978
      %v1980 = vpop.f32.mrf.mxu0
      %v1981 = vadd.f32 %v1892, %v1980
      %1982 = vmatmul.bf16.gmra.mxu0 %v1818
      %v1983 = vpop.f32.mrf.mxu0
      %v1984 = vadd.f32 %v1895, %v1983
      %v1985 = vpop.f32.mrf.mxu0
      %v1986 = vadd.f32 %v1897, %v1985
      %1987 = vmatmul.bf16.gmra.mxu0 %v1821
      %v1988 = vpop.f32.mrf.mxu0
      %v1989 = vadd.f32 %v1900, %v1988
      %v1990 = vpop.f32.mrf.mxu0
      %v1991 = vadd.f32 %v1902, %v1990
      %1992 = vmatmul.bf16.gmra.mxu0 %v1824
      %v1993 = vpop.f32.mrf.mxu0
      %v1994 = vadd.f32 %v1905, %v1993
      %v1995 = vpop.f32.mrf.mxu0
      %v1996 = vadd.f32 %v1907, %v1995
      %1997 = vmatmul.bf16.gmra.mxu0 %v1827
      %v1998 = vpop.f32.mrf.mxu0
      %v1999 = vadd.f32 %v1910, %v1998
      %v2000 = vpop.f32.mrf.mxu0
      %v2001 = vadd.f32 %v1912, %v2000
      %2002 = vmatmul.bf16.gmra.mxu0 %v1830
      %v2003 = vpop.f32.mrf.mxu0
      %v2004 = vadd.f32 %v1915, %v2003
      %v2005 = vpop.f32.mrf.mxu0
      %v2006 = vadd.f32 %v1917, %v2005
      %2007 = vmatmul.bf16.gmra.mxu0 %v1833
      %v2008 = vpop.f32.mrf.mxu0
      %v2009 = vadd.f32 %v1920, %v2008
      %v2010 = vpop.f32.mrf.mxu0
      %v2011 = vadd.f32 %v1922, %v2010
      %2012 = vdwg.mxu0
      %v2017 = vunpack.c.l.b16 %v1485
      %v2018 = vunpack.c.h.b16 %v1485
      %v2019 = vunpack.c.l.b16 %v1486
      %v2020 = vunpack.c.h.b16 %v1486
      %v2021 = vunpack.c.l.b16 %v1487
      %v2022 = vunpack.c.h.b16 %v1487
      %v2023 = vunpack.c.l.b16 %v1488
      %v2024 = vunpack.c.h.b16 %v1488
      %v2025 = vpack.c.b16 %v2019, %v2017
      %v2026 = vpack.c.b16 %v2020, %v2018
      %v2027 = vpack.c.b16 %v2023, %v2021
      %v2028 = vpack.c.b16 %v2024, %v2022
      %v2055 = vunpack.c.l.b16 %v1517
      %v2056 = vunpack.c.l.b16 %v1518
      %v2057 = vunpack.c.l.b16 %v1519
      %v2058 = vunpack.c.l.b16 %v1520
      %v2059 = vunpack.c.l.b16 %v1521
      %v2060 = vunpack.c.l.b16 %v1522
      %v2061 = vunpack.c.l.b16 %v1523
      %v2062 = vunpack.c.l.b16 %v1524
      %v2063 = vunpack.c.l.b16 %v1525
      %v2064 = vunpack.c.l.b16 %v1526
      %v2065 = vunpack.c.l.b16 %v1527
      %v2066 = vunpack.c.l.b16 %v1528
      %v2067 = vunpack.c.l.b16 %v1529
      %v2068 = vunpack.c.l.b16 %v1530
      %v2069 = vunpack.c.l.b16 %v1531
      %v2070 = vunpack.c.l.b16 %v1532
      %v2071 = vunpack.c.l.b16 %v1533
      %v2072 = vunpack.c.l.b16 %v1534
      %v2073 = vunpack.c.l.b16 %v1535
      %v2074 = vunpack.c.l.b16 %v1536
      %v2075 = vunpack.c.l.b16 %v1537
      %v2076 = vunpack.c.l.b16 %v1538
      %v2077 = vunpack.c.l.b16 %v1539
      %v2078 = vunpack.c.l.b16 %v1540
      %v2079 = vpack.c.b16 %v2056, %v2055
      %v2080 = vpack.c.b16 %v2058, %v2057
      %v2081 = vpack.c.b16 %v2060, %v2059
      %v2082 = vpack.c.b16 %v2062, %v2061
      %v2083 = vpack.c.b16 %v2064, %v2063
      %v2084 = vpack.c.b16 %v2066, %v2065
      %v2085 = vpack.c.b16 %v2068, %v2067
      %v2086 = vpack.c.b16 %v2070, %v2069
      %v2087 = vpack.c.b16 %v2072, %v2071
      %v2088 = vpack.c.b16 %v2074, %v2073
      %v2089 = vpack.c.b16 %v2076, %v2075
      %v2090 = vpack.c.b16 %v2078, %v2077
      %v2104 = vsel %vm1786, %v2026, 0
      %v2107 = vsel %vm1786, %v2028, 0
      %2109 = vmatpush.bf16.msra.mxu0 %v2086
      %2110 = vmatpush.bf16.msra.mxu0 %v2085
      %2111 = vmatpush.bf16.msra.mxu0 %v2084
      %2112 = vmatpush.bf16.msra.mxu0 %v2083
      %2113 = vmatpush.bf16.msra.mxu0 %v2082
      %2114 = vmatpush.bf16.msra.mxu0 %v2081
      %2115 = vmatpush.bf16.msra.mxu0 %v2080
      %2116 = vmatpush.bf16.msra.mxu0 %v2079
      %2117 = vmatmul.bf16.gmra.mxu0 %v2025
      %v2118 = vpop.f32.mrf.mxu0
      %v2119 = vadd.f32 %v1934, %v2118
      %v2120 = vpop.f32.mrf.mxu0
      %v2121 = vadd.f32 %v1936, %v2120
      %2122 = vmatmul.bf16.gmra.mxu0 %v2027
      %v2123 = vpop.f32.mrf.mxu0
      %v2124 = vadd.f32 %v1939, %v2123
      %v2125 = vpop.f32.mrf.mxu0
      %v2126 = vadd.f32 %v1941, %v2125
      %2127 = vmatmul.bf16.gmra.mxu0 %v1666
      %v2128 = vpop.f32.mrf.mxu0
      %v2129 = vadd.f32 %v1944, %v2128
      %v2130 = vpop.f32.mrf.mxu0
      %v2131 = vadd.f32 %v1946, %v2130
      %2132 = vmatmul.bf16.gmra.mxu0 %v1668
      %v2133 = vpop.f32.mrf.mxu0
      %v2134 = vadd.f32 %v1949, %v2133
      %v2135 = vpop.f32.mrf.mxu0
      %v2136 = vadd.f32 %v1951, %v2135
      %2137 = vmatmul.bf16.gmra.mxu0 %v1670
      %v2138 = vpop.f32.mrf.mxu0
      %v2139 = vadd.f32 %v1954, %v2138
      %v2140 = vpop.f32.mrf.mxu0
      %v2141 = vadd.f32 %v1956, %v2140
      %2142 = vmatmul.bf16.gmra.mxu0 %v1672
      %v2143 = vpop.f32.mrf.mxu0
      %v2144 = vadd.f32 %v1959, %v2143
      %v2145 = vpop.f32.mrf.mxu0
      %v2146 = vadd.f32 %v1961, %v2145
      %2147 = vmatmul.bf16.gmra.mxu0 %v1674
      %v2148 = vpop.f32.mrf.mxu0
      %v2149 = vadd.f32 %v1964, %v2148
      %v2150 = vpop.f32.mrf.mxu0
      %v2151 = vadd.f32 %v1966, %v2150
      %2152 = vmatmul.bf16.gmra.mxu0 %v1676
      %v2153 = vpop.f32.mrf.mxu0
      %v2154 = vadd.f32 %v1969, %v2153
      %v2155 = vpop.f32.mrf.mxu0
      %v2156 = vadd.f32 %v1971, %v2155
      %2157 = vmatmul.bf16.gmra.mxu0 %v1678
      %v2158 = vpop.f32.mrf.mxu0
      %v2159 = vadd.f32 %v1974, %v2158
      %v2160 = vpop.f32.mrf.mxu0
      %v2161 = vadd.f32 %v1976, %v2160
      %2162 = vmatmul.bf16.gmra.mxu0 %v1680
      %v2163 = vpop.f32.mrf.mxu0
      %v2164 = vadd.f32 %v1979, %v2163
      %v2165 = vpop.f32.mrf.mxu0
      %v2166 = vadd.f32 %v1981, %v2165
      %2167 = vmatmul.bf16.gmra.mxu0 %v1682
      %v2168 = vpop.f32.mrf.mxu0
      %v2169 = vadd.f32 %v1984, %v2168
      %v2170 = vpop.f32.mrf.mxu0
      %v2171 = vadd.f32 %v1986, %v2170
      %2172 = vmatmul.bf16.gmra.mxu0 %v1684
      %v2173 = vpop.f32.mrf.mxu0
      %v2174 = vadd.f32 %v1989, %v2173
      %v2175 = vpop.f32.mrf.mxu0
      %v2176 = vadd.f32 %v1991, %v2175
      %2177 = vmatmul.bf16.gmra.mxu0 %v1686
      %v2178 = vpop.f32.mrf.mxu0
      %v2179 = vadd.f32 %v1994, %v2178
      %v2180 = vpop.f32.mrf.mxu0
      %v2181 = vadd.f32 %v1996, %v2180
      %2182 = vmatmul.bf16.gmra.mxu0 %v1688
      %v2183 = vpop.f32.mrf.mxu0
      %v2184 = vadd.f32 %v1999, %v2183
      %v2185 = vpop.f32.mrf.mxu0
      %v2186 = vadd.f32 %v2001, %v2185
      %2187 = vmatmul.bf16.gmra.mxu0 %v1690
      %v2188 = vpop.f32.mrf.mxu0
      %v2189 = vadd.f32 %v2004, %v2188
      %v2190 = vpop.f32.mrf.mxu0
      %v2191 = vadd.f32 %v2006, %v2190
      %2192 = vmatmul.bf16.gmra.mxu0 %v1692
      %v2193 = vpop.f32.mrf.mxu0
      %v2194 = vadd.f32 %v2009, %v2193
      %v2195 = vpop.f32.mrf.mxu0
      %v2196 = vadd.f32 %v2011, %v2195
      %2197 = vdwg.mxu0
      %2198 = vmatpush.bf16.msra.mxu0 0
      %2199 = vmatpush.bf16.msra.mxu0 0
      %2200 = vmatpush.bf16.msra.mxu0 0
      %2201 = vmatpush.bf16.msra.mxu0 0
      %2202 = vmatpush.bf16.msra.mxu0 %v2090
      %2203 = vmatpush.bf16.msra.mxu0 %v2089
      %2204 = vmatpush.bf16.msra.mxu0 %v2088
      %2205 = vmatpush.bf16.msra.mxu0 %v2087
      %2206 = vmatmul.bf16.gmra.mxu0 %v2104
      %v2207 = vpop.f32.mrf.mxu0
      %v2208 = vadd.f32 %v2119, %v2207
      %v2209 = vpop.f32.mrf.mxu0
      %v2210 = vadd.f32 %v2121, %v2209
      %2211 = vmatmul.bf16.gmra.mxu0 %v2107
      %v2212 = vpop.f32.mrf.mxu0
      %v2213 = vadd.f32 %v2124, %v2212
      %v2214 = vpop.f32.mrf.mxu0
      %v2215 = vadd.f32 %v2126, %v2214
      %2216 = vmatmul.bf16.gmra.mxu0 %v1788
      %v2217 = vpop.f32.mrf.mxu0
      %v2218 = vadd.f32 %v2129, %v2217
      %v2219 = vpop.f32.mrf.mxu0
      %v2220 = vadd.f32 %v2131, %v2219
      %2221 = vmatmul.bf16.gmra.mxu0 %v1791
      %v2222 = vpop.f32.mrf.mxu0
      %v2223 = vadd.f32 %v2134, %v2222
      %v2224 = vpop.f32.mrf.mxu0
      %v2225 = vadd.f32 %v2136, %v2224
      %2226 = vmatmul.bf16.gmra.mxu0 %v1794
      %v2227 = vpop.f32.mrf.mxu0
      %v2228 = vadd.f32 %v2139, %v2227
      %v2229 = vpop.f32.mrf.mxu0
      %v2230 = vadd.f32 %v2141, %v2229
      %2231 = vmatmul.bf16.gmra.mxu0 %v1797
      %v2232 = vpop.f32.mrf.mxu0
      %v2233 = vadd.f32 %v2144, %v2232
      %v2234 = vpop.f32.mrf.mxu0
      %v2235 = vadd.f32 %v2146, %v2234
      %2236 = vmatmul.bf16.gmra.mxu0 %v1800
      %v2237 = vpop.f32.mrf.mxu0
      %v2238 = vadd.f32 %v2149, %v2237
      %v2239 = vpop.f32.mrf.mxu0
      %v2240 = vadd.f32 %v2151, %v2239
      %2241 = vmatmul.bf16.gmra.mxu0 %v1803
      %v2242 = vpop.f32.mrf.mxu0
      %v2243 = vadd.f32 %v2154, %v2242
      %v2244 = vpop.f32.mrf.mxu0
      %v2245 = vadd.f32 %v2156, %v2244
      %2246 = vmatmul.bf16.gmra.mxu0 %v1806
      %v2247 = vpop.f32.mrf.mxu0
      %v2248 = vadd.f32 %v2159, %v2247
      %v2249 = vpop.f32.mrf.mxu0
      %v2250 = vadd.f32 %v2161, %v2249
      %2251 = vmatmul.bf16.gmra.mxu0 %v1809
      %v2252 = vpop.f32.mrf.mxu0
      %v2253 = vadd.f32 %v2164, %v2252
      %v2254 = vpop.f32.mrf.mxu0
      %v2255 = vadd.f32 %v2166, %v2254
      %2256 = vmatmul.bf16.gmra.mxu0 %v1812
      %v2257 = vpop.f32.mrf.mxu0
      %v2258 = vadd.f32 %v2169, %v2257
      %v2259 = vpop.f32.mrf.mxu0
      %v2260 = vadd.f32 %v2171, %v2259
      %2261 = vmatmul.bf16.gmra.mxu0 %v1815
      %v2262 = vpop.f32.mrf.mxu0
      %v2263 = vadd.f32 %v2174, %v2262
      %v2264 = vpop.f32.mrf.mxu0
      %v2265 = vadd.f32 %v2176, %v2264
      %2266 = vmatmul.bf16.gmra.mxu0 %v1818
      %v2267 = vpop.f32.mrf.mxu0
      %v2268 = vadd.f32 %v2179, %v2267
      %v2269 = vpop.f32.mrf.mxu0
      %v2270 = vadd.f32 %v2181, %v2269
      %2271 = vmatmul.bf16.gmra.mxu0 %v1821
      %v2272 = vpop.f32.mrf.mxu0
      %v2273 = vadd.f32 %v2184, %v2272
      %v2274 = vpop.f32.mrf.mxu0
      %v2275 = vadd.f32 %v2186, %v2274
      %2276 = vmatmul.bf16.gmra.mxu0 %v1824
      %v2277 = vpop.f32.mrf.mxu0
      %v2278 = vadd.f32 %v2189, %v2277
      %v2279 = vpop.f32.mrf.mxu0
      %v2280 = vadd.f32 %v2191, %v2279
      %2281 = vmatmul.bf16.gmra.mxu0 %v1827
      %v2282 = vpop.f32.mrf.mxu0
      %v2283 = vadd.f32 %v2194, %v2282
      %v2284 = vpop.f32.mrf.mxu0
      %v2285 = vadd.f32 %v2196, %v2284
      %2286 = vdwg.mxu0
      %v2287 = vld [vmem:[#allocation2 + $0x40] sm:$0xff]
      %v2288 = vld [vmem:[#allocation2 + $0x48] sm:$0xff]
      %v2289 = vld [vmem:[#allocation2 + $0x50] sm:$0xff]
      %v2290 = vld [vmem:[#allocation2 + $0x58] sm:$0xff]
      %v2291 = vld [vmem:[#allocation2 + $0x60] sm:$0xff]
      %v2292 = vld [vmem:[#allocation2 + $0x68] sm:$0xff]
      %v2293 = vld [vmem:[#allocation2 + $0x70] sm:$0xff]
      %v2294 = vld [vmem:[#allocation2 + $0x78] sm:$0xff]
      %v2295 = vld [vmem:[#allocation2 + $0x80] sm:$0xff]
      %v2296 = vld [vmem:[#allocation2 + $0x88] sm:$0xff]
      %v2297 = vld [vmem:[#allocation2 + $0x90] sm:$0xff]
      %v2298 = vld [vmem:[#allocation2 + $0x98] sm:$0xff]
      %v2299 = vld [vmem:[#allocation2 + $0xa0] sm:$0xff]
      %v2300 = vld [vmem:[#allocation2 + $0xa8] sm:$0xff]
      %v2301 = vld [vmem:[#allocation2 + $0xb0] sm:$0xff]
      %v2302 = vld [vmem:[#allocation2 + $0xb8] sm:$0xff]
      %v2303 = vld [vmem:[#allocation2 + $0xc0] sm:$0xff]
      %v2304 = vld [vmem:[#allocation2 + $0xc8] sm:$0xff]
      %v2305 = vld [vmem:[#allocation2 + $0xd0] sm:$0xff]
      %v2306 = vld [vmem:[#allocation2 + $0xd8] sm:$0xff]
      %v2307 = vld [vmem:[#allocation2 + $0xe0] sm:$0xff]
      %v2308 = vld [vmem:[#allocation2 + $0xe8] sm:$0xff]
      %v2309 = vld [vmem:[#allocation2 + $0xf0] sm:$0xff]
      %v2310 = vld [vmem:[#allocation2 + $0xf8] sm:$0xff]
      %v2311 = vld [vmem:[#allocation2 + $0x100] sm:$0xff]
      %v2312 = vld [vmem:[#allocation2 + $0x108] sm:$0xff]
      %v2313 = vld [vmem:[#allocation2 + $0x110] sm:$0xff]
      %v2314 = vld [vmem:[#allocation2 + $0x118] sm:$0xff]
      %v2315 = vld [vmem:[#allocation2 + $0x120] sm:$0xff]
      %v2316 = vld [vmem:[#allocation2 + $0x128] sm:$0xff]
      %v2317 = vld [vmem:[#allocation2 + $0x130] sm:$0xff]
      %v2318 = vld [vmem:[#allocation2 + $0x138] sm:$0xff]
      %s2319 = scalar_lea.vmem %s3, 192
      %v2320 = vld [vmem:[%s2319] sm:$0xf]
      %v2321 = vld [vmem:[%s2319 + $0x4] sm:$0xf]
      %v2322 = vld [vmem:[%s2319 + $0x8] sm:$0xf]
      %v2323 = vld [vmem:[%s2319 + $0xc] sm:$0xf]
      %v2324 = vld [vmem:[%s2319 + $0x10] sm:$0xf]
      %v2325 = vld [vmem:[%s2319 + $0x14] sm:$0xf]
      %v2326 = vld [vmem:[%s2319 + $0x18] sm:$0xf]
      %v2327 = vld [vmem:[%s2319 + $0x1c] sm:$0xf]
      %v2328 = vld [vmem:[%s2319 + $0x20] sm:$0xf]
      %v2329 = vld [vmem:[%s2319 + $0x24] sm:$0xf]
      %v2330 = vld [vmem:[%s2319 + $0x28] sm:$0xf]
      %v2331 = vld [vmem:[%s2319 + $0x2c] sm:$0xf]
      %v2332 = vld [vmem:[%s2319 + $0x30] sm:$0xf]
      %v2333 = vld [vmem:[%s2319 + $0x34] sm:$0xf]
      %v2334 = vld [vmem:[%s2319 + $0x38] sm:$0xf]
      %v2335 = vld [vmem:[%s2319 + $0x3c] sm:$0xf]
      %v2336 = vld [vmem:[%s2319 + $0x40] sm:$0xf]
      %v2337 = vld [vmem:[%s2319 + $0x44] sm:$0xf]
      %v2338 = vld [vmem:[%s2319 + $0x48] sm:$0xf]
      %v2339 = vld [vmem:[%s2319 + $0x4c] sm:$0xf]
      %v2340 = vld [vmem:[%s2319 + $0x50] sm:$0xf]
      %v2341 = vld [vmem:[%s2319 + $0x54] sm:$0xf]
      %v2342 = vld [vmem:[%s2319 + $0x58] sm:$0xf]
      %v2343 = vld [vmem:[%s2319 + $0x5c] sm:$0xf]
      %v2376 = vunpack.c.l.b16 %v2287
      %v2377 = vunpack.c.h.b16 %v2287
      %v2378 = vunpack.c.l.b16 %v2288
      %v2379 = vunpack.c.h.b16 %v2288
      %v2380 = vunpack.c.l.b16 %v2289
      %v2381 = vunpack.c.h.b16 %v2289
      %v2382 = vunpack.c.l.b16 %v2290
      %v2383 = vunpack.c.h.b16 %v2290
      %v2384 = vunpack.c.l.b16 %v2291
      %v2385 = vunpack.c.h.b16 %v2291
      %v2386 = vunpack.c.l.b16 %v2292
      %v2387 = vunpack.c.h.b16 %v2292
      %v2388 = vunpack.c.l.b16 %v2293
      %v2389 = vunpack.c.h.b16 %v2293
      %v2390 = vunpack.c.l.b16 %v2294
      %v2391 = vunpack.c.h.b16 %v2294
      %v2392 = vunpack.c.l.b16 %v2295
      %v2393 = vunpack.c.h.b16 %v2295
      %v2394 = vunpack.c.l.b16 %v2296
      %v2395 = vunpack.c.h.b16 %v2296
      %v2396 = vunpack.c.l.b16 %v2297
      %v2397 = vunpack.c.h.b16 %v2297
      %v2398 = vunpack.c.l.b16 %v2298
      %v2399 = vunpack.c.h.b16 %v2298
      %v2400 = vunpack.c.l.b16 %v2299
      %v2401 = vunpack.c.h.b16 %v2299
      %v2402 = vunpack.c.l.b16 %v2300
      %v2403 = vunpack.c.h.b16 %v2300
      %v2404 = vunpack.c.l.b16 %v2301
      %v2405 = vunpack.c.h.b16 %v2301
      %v2406 = vunpack.c.l.b16 %v2302
      %v2407 = vunpack.c.h.b16 %v2302
      %v2408 = vunpack.c.l.b16 %v2303
      %v2409 = vunpack.c.h.b16 %v2303
      %v2410 = vunpack.c.l.b16 %v2304
      %v2411 = vunpack.c.h.b16 %v2304
      %v2412 = vunpack.c.l.b16 %v2305
      %v2413 = vunpack.c.h.b16 %v2305
      %v2414 = vunpack.c.l.b16 %v2306
      %v2415 = vunpack.c.h.b16 %v2306
      %v2416 = vunpack.c.l.b16 %v2307
      %v2417 = vunpack.c.h.b16 %v2307
      %v2418 = vunpack.c.l.b16 %v2308
      %v2419 = vunpack.c.h.b16 %v2308
      %v2420 = vunpack.c.l.b16 %v2309
      %v2421 = vunpack.c.h.b16 %v2309
      %v2422 = vunpack.c.l.b16 %v2310
      %v2423 = vunpack.c.h.b16 %v2310
      %v2424 = vunpack.c.l.b16 %v2311
      %v2425 = vunpack.c.h.b16 %v2311
      %v2426 = vunpack.c.l.b16 %v2312
      %v2427 = vunpack.c.h.b16 %v2312
      %v2428 = vunpack.c.l.b16 %v2313
      %v2429 = vunpack.c.h.b16 %v2313
      %v2430 = vunpack.c.l.b16 %v2314
      %v2431 = vunpack.c.h.b16 %v2314
      %v2432 = vunpack.c.l.b16 %v2315
      %v2433 = vunpack.c.h.b16 %v2315
      %v2434 = vunpack.c.l.b16 %v2316
      %v2435 = vunpack.c.h.b16 %v2316
      %v2436 = vunpack.c.l.b16 %v2317
      %v2437 = vunpack.c.h.b16 %v2317
      %v2438 = vunpack.c.l.b16 %v2318
      %v2439 = vunpack.c.h.b16 %v2318
      %v2440 = vpack.c.b16 %v2378, %v2376
      %v2441 = vpack.c.b16 %v2379, %v2377
      %v2442 = vpack.c.b16 %v2382, %v2380
      %v2443 = vpack.c.b16 %v2383, %v2381
      %v2444 = vpack.c.b16 %v2386, %v2384
      %v2445 = vpack.c.b16 %v2387, %v2385
      %v2446 = vpack.c.b16 %v2390, %v2388
      %v2447 = vpack.c.b16 %v2391, %v2389
      %v2448 = vpack.c.b16 %v2394, %v2392
      %v2449 = vpack.c.b16 %v2395, %v2393
      %v2450 = vpack.c.b16 %v2398, %v2396
      %v2451 = vpack.c.b16 %v2399, %v2397
      %v2452 = vpack.c.b16 %v2402, %v2400
      %v2453 = vpack.c.b16 %v2403, %v2401
      %v2454 = vpack.c.b16 %v2406, %v2404
      %v2455 = vpack.c.b16 %v2407, %v2405
      %v2456 = vpack.c.b16 %v2410, %v2408
      %v2457 = vpack.c.b16 %v2411, %v2409
      %v2458 = vpack.c.b16 %v2414, %v2412
      %v2459 = vpack.c.b16 %v2415, %v2413
      %v2460 = vpack.c.b16 %v2418, %v2416
      %v2461 = vpack.c.b16 %v2419, %v2417
      %v2462 = vpack.c.b16 %v2422, %v2420
      %v2463 = vpack.c.b16 %v2423, %v2421
      %v2464 = vpack.c.b16 %v2426, %v2424
      %v2465 = vpack.c.b16 %v2427, %v2425
      %v2466 = vpack.c.b16 %v2430, %v2428
      %v2467 = vpack.c.b16 %v2431, %v2429
      %v2468 = vpack.c.b16 %v2434, %v2432
      %v2469 = vpack.c.b16 %v2435, %v2433
      %v2470 = vpack.c.b16 %v2438, %v2436
      %v2471 = vpack.c.b16 %v2439, %v2437
      %v2512 = vunpack.c.l.b16 %v2320
      %v2513 = vunpack.c.l.b16 %v2321
      %v2514 = vunpack.c.l.b16 %v2322
      %v2515 = vunpack.c.l.b16 %v2323
      %v2516 = vunpack.c.l.b16 %v2324
      %v2517 = vunpack.c.l.b16 %v2325
      %v2518 = vunpack.c.l.b16 %v2326
      %v2519 = vunpack.c.l.b16 %v2327
      %v2520 = vunpack.c.l.b16 %v2328
      %v2521 = vunpack.c.l.b16 %v2329
      %v2522 = vunpack.c.l.b16 %v2330
      %v2523 = vunpack.c.l.b16 %v2331
      %v2524 = vunpack.c.l.b16 %v2332
      %v2525 = vunpack.c.l.b16 %v2333
      %v2526 = vunpack.c.l.b16 %v2334
      %v2527 = vunpack.c.l.b16 %v2335
      %v2528 = vunpack.c.l.b16 %v2336
      %v2529 = vunpack.c.l.b16 %v2337
      %v2530 = vunpack.c.l.b16 %v2338
      %v2531 = vunpack.c.l.b16 %v2339
      %v2532 = vunpack.c.l.b16 %v2340
      %v2533 = vunpack.c.l.b16 %v2341
      %v2534 = vunpack.c.l.b16 %v2342
      %v2535 = vunpack.c.l.b16 %v2343
      %v2536 = vpack.c.b16 %v2513, %v2512
      %v2537 = vpack.c.b16 %v2515, %v2514
      %v2538 = vpack.c.b16 %v2517, %v2516
      %v2539 = vpack.c.b16 %v2519, %v2518
      %v2540 = vpack.c.b16 %v2521, %v2520
      %v2541 = vpack.c.b16 %v2523, %v2522
      %v2542 = vpack.c.b16 %v2525, %v2524
      %v2543 = vpack.c.b16 %v2527, %v2526
      %v2544 = vpack.c.b16 %v2529, %v2528
      %v2545 = vpack.c.b16 %v2531, %v2530
      %v2546 = vpack.c.b16 %v2533, %v2532
      %v2547 = vpack.c.b16 %v2535, %v2534
      %v2561 = vsel %vm1786, %v2441, 0
      %v2564 = vsel %vm1786, %v2443, 0
      %v2567 = vsel %vm1786, %v2445, 0
      %v2570 = vsel %vm1786, %v2447, 0
      %v2573 = vsel %vm1786, %v2449, 0
      %v2576 = vsel %vm1786, %v2451, 0
      %v2579 = vsel %vm1786, %v2453, 0
      %v2582 = vsel %vm1786, %v2455, 0
      %v2585 = vsel %vm1786, %v2457, 0
      %v2588 = vsel %vm1786, %v2459, 0
      %v2591 = vsel %vm1786, %v2461, 0
      %v2594 = vsel %vm1786, %v2463, 0
      %v2597 = vsel %vm1786, %v2465, 0
      %v2600 = vsel %vm1786, %v2467, 0
      %v2603 = vsel %vm1786, %v2469, 0
      %v2606 = vsel %vm1786, %v2471, 0
      %2608 = vmatpush.bf16.msra.mxu0 %v2543
      %2609 = vmatpush.bf16.msra.mxu0 %v2542
      %2610 = vmatpush.bf16.msra.mxu0 %v2541
      %2611 = vmatpush.bf16.msra.mxu0 %v2540
      %2612 = vmatpush.bf16.msra.mxu0 %v2539
      %2613 = vmatpush.bf16.msra.mxu0 %v2538
      %2614 = vmatpush.bf16.msra.mxu0 %v2537
      %2615 = vmatpush.bf16.msra.mxu0 %v2536
      %2616 = vmatmul.bf16.gmra.mxu0 %v2440
      %v2617 = vpop.f32.mrf.mxu0
      %v2618 = vadd.f32 0.0, %v2617
      %v2619 = vpop.f32.mrf.mxu0
      %v2620 = vadd.f32 0.0, %v2619
      %2621 = vmatmul.bf16.gmra.mxu0 %v2442
      %v2622 = vpop.f32.mrf.mxu0
      %v2623 = vadd.f32 0.0, %v2622
      %v2624 = vpop.f32.mrf.mxu0
      %v2625 = vadd.f32 0.0, %v2624
      %2626 = vmatmul.bf16.gmra.mxu0 %v2444
      %v2627 = vpop.f32.mrf.mxu0
      %v2628 = vadd.f32 0.0, %v2627
      %v2629 = vpop.f32.mrf.mxu0
      %v2630 = vadd.f32 0.0, %v2629
      %2631 = vmatmul.bf16.gmra.mxu0 %v2446
      %v2632 = vpop.f32.mrf.mxu0
      %v2633 = vadd.f32 0.0, %v2632
      %v2634 = vpop.f32.mrf.mxu0
      %v2635 = vadd.f32 0.0, %v2634
      %2636 = vmatmul.bf16.gmra.mxu0 %v2448
      %v2637 = vpop.f32.mrf.mxu0
      %v2638 = vadd.f32 0.0, %v2637
      %v2639 = vpop.f32.mrf.mxu0
      %v2640 = vadd.f32 0.0, %v2639
      %2641 = vmatmul.bf16.gmra.mxu0 %v2450
      %v2642 = vpop.f32.mrf.mxu0
      %v2643 = vadd.f32 0.0, %v2642
      %v2644 = vpop.f32.mrf.mxu0
      %v2645 = vadd.f32 0.0, %v2644
      %2646 = vmatmul.bf16.gmra.mxu0 %v2452
      %v2647 = vpop.f32.mrf.mxu0
      %v2648 = vadd.f32 0.0, %v2647
      %v2649 = vpop.f32.mrf.mxu0
      %v2650 = vadd.f32 0.0, %v2649
      %2651 = vmatmul.bf16.gmra.mxu0 %v2454
      %v2652 = vpop.f32.mrf.mxu0
      %v2653 = vadd.f32 0.0, %v2652
      %v2654 = vpop.f32.mrf.mxu0
      %v2655 = vadd.f32 0.0, %v2654
      %2656 = vmatmul.bf16.gmra.mxu0 %v2456
      %v2657 = vpop.f32.mrf.mxu0
      %v2658 = vadd.f32 0.0, %v2657
      %v2659 = vpop.f32.mrf.mxu0
      %v2660 = vadd.f32 0.0, %v2659
      %2661 = vmatmul.bf16.gmra.mxu0 %v2458
      %v2662 = vpop.f32.mrf.mxu0
      %v2663 = vadd.f32 0.0, %v2662
      %v2664 = vpop.f32.mrf.mxu0
      %v2665 = vadd.f32 0.0, %v2664
      %2666 = vmatmul.bf16.gmra.mxu0 %v2460
      %v2667 = vpop.f32.mrf.mxu0
      %v2668 = vadd.f32 0.0, %v2667
      %v2669 = vpop.f32.mrf.mxu0
      %v2670 = vadd.f32 0.0, %v2669
      %2671 = vmatmul.bf16.gmra.mxu0 %v2462
      %v2672 = vpop.f32.mrf.mxu0
      %v2673 = vadd.f32 0.0, %v2672
      %v2674 = vpop.f32.mrf.mxu0
      %v2675 = vadd.f32 0.0, %v2674
      %2676 = vmatmul.bf16.gmra.mxu0 %v2464
      %v2677 = vpop.f32.mrf.mxu0
      %v2678 = vadd.f32 0.0, %v2677
      %v2679 = vpop.f32.mrf.mxu0
      %v2680 = vadd.f32 0.0, %v2679
      %2681 = vmatmul.bf16.gmra.mxu0 %v2466
      %v2682 = vpop.f32.mrf.mxu0
      %v2683 = vadd.f32 0.0, %v2682
      %v2684 = vpop.f32.mrf.mxu0
      %v2685 = vadd.f32 0.0, %v2684
      %2686 = vmatmul.bf16.gmra.mxu0 %v2468
      %v2687 = vpop.f32.mrf.mxu0
      %v2688 = vadd.f32 0.0, %v2687
      %v2689 = vpop.f32.mrf.mxu0
      %v2690 = vadd.f32 0.0, %v2689
      %2691 = vmatmul.bf16.gmra.mxu0 %v2470
      %v2692 = vpop.f32.mrf.mxu0
      %v2693 = vadd.f32 0.0, %v2692
      %v2694 = vpop.f32.mrf.mxu0
      %v2695 = vadd.f32 0.0, %v2694
      %2696 = vdwg.mxu0
      %2697 = vmatpush.bf16.msra.mxu0 0
      %2698 = vmatpush.bf16.msra.mxu0 0
      %2699 = vmatpush.bf16.msra.mxu0 0
      %2700 = vmatpush.bf16.msra.mxu0 0
      %2701 = vmatpush.bf16.msra.mxu0 %v2547
      %2702 = vmatpush.bf16.msra.mxu0 %v2546
      %2703 = vmatpush.bf16.msra.mxu0 %v2545
      %2704 = vmatpush.bf16.msra.mxu0 %v2544
      %2705 = vmatmul.bf16.gmra.mxu0 %v2561
      %v2706 = vpop.f32.mrf.mxu0
      %v2707 = vadd.f32 %v2618, %v2706
      %v2708 = vpop.f32.mrf.mxu0
      %v2709 = vadd.f32 %v2620, %v2708
      %2710 = vmatmul.bf16.gmra.mxu0 %v2564
      %v2711 = vpop.f32.mrf.mxu0
      %v2712 = vadd.f32 %v2623, %v2711
      %v2713 = vpop.f32.mrf.mxu0
      %v2714 = vadd.f32 %v2625, %v2713
      %2715 = vmatmul.bf16.gmra.mxu0 %v2567
      %v2716 = vpop.f32.mrf.mxu0
      %v2717 = vadd.f32 %v2628, %v2716
      %v2718 = vpop.f32.mrf.mxu0
      %v2719 = vadd.f32 %v2630, %v2718
      %2720 = vmatmul.bf16.gmra.mxu0 %v2570
      %v2721 = vpop.f32.mrf.mxu0
      %v2722 = vadd.f32 %v2633, %v2721
      %v2723 = vpop.f32.mrf.mxu0
      %v2724 = vadd.f32 %v2635, %v2723
      %2725 = vmatmul.bf16.gmra.mxu0 %v2573
      %v2726 = vpop.f32.mrf.mxu0
      %v2727 = vadd.f32 %v2638, %v2726
      %v2728 = vpop.f32.mrf.mxu0
      %v2729 = vadd.f32 %v2640, %v2728
      %2730 = vmatmul.bf16.gmra.mxu0 %v2576
      %v2731 = vpop.f32.mrf.mxu0
      %v2732 = vadd.f32 %v2643, %v2731
      %v2733 = vpop.f32.mrf.mxu0
      %v2734 = vadd.f32 %v2645, %v2733
      %2735 = vmatmul.bf16.gmra.mxu0 %v2579
      %v2736 = vpop.f32.mrf.mxu0
      %v2737 = vadd.f32 %v2648, %v2736
      %v2738 = vpop.f32.mrf.mxu0
      %v2739 = vadd.f32 %v2650, %v2738
      %2740 = vmatmul.bf16.gmra.mxu0 %v2582
      %v2741 = vpop.f32.mrf.mxu0
      %v2742 = vadd.f32 %v2653, %v2741
      %v2743 = vpop.f32.mrf.mxu0
      %v2744 = vadd.f32 %v2655, %v2743
      %2745 = vmatmul.bf16.gmra.mxu0 %v2585
      %v2746 = vpop.f32.mrf.mxu0
      %v2747 = vadd.f32 %v2658, %v2746
      %v2748 = vpop.f32.mrf.mxu0
      %v2749 = vadd.f32 %v2660, %v2748
      %2750 = vmatmul.bf16.gmra.mxu0 %v2588
      %v2751 = vpop.f32.mrf.mxu0
      %v2752 = vadd.f32 %v2663, %v2751
      %v2753 = vpop.f32.mrf.mxu0
      %v2754 = vadd.f32 %v2665, %v2753
      %2755 = vmatmul.bf16.gmra.mxu0 %v2591
      %v2756 = vpop.f32.mrf.mxu0
      %v2757 = vadd.f32 %v2668, %v2756
      %v2758 = vpop.f32.mrf.mxu0
      %v2759 = vadd.f32 %v2670, %v2758
      %2760 = vmatmul.bf16.gmra.mxu0 %v2594
      %v2761 = vpop.f32.mrf.mxu0
      %v2762 = vadd.f32 %v2673, %v2761
      %v2763 = vpop.f32.mrf.mxu0
      %v2764 = vadd.f32 %v2675, %v2763
      %2765 = vmatmul.bf16.gmra.mxu0 %v2597
      %v2766 = vpop.f32.mrf.mxu0
      %v2767 = vadd.f32 %v2678, %v2766
      %v2768 = vpop.f32.mrf.mxu0
      %v2769 = vadd.f32 %v2680, %v2768
      %2770 = vmatmul.bf16.gmra.mxu0 %v2600
      %v2771 = vpop.f32.mrf.mxu0
      %v2772 = vadd.f32 %v2683, %v2771
      %v2773 = vpop.f32.mrf.mxu0
      %v2774 = vadd.f32 %v2685, %v2773
      %2775 = vmatmul.bf16.gmra.mxu0 %v2603
      %v2776 = vpop.f32.mrf.mxu0
      %v2777 = vadd.f32 %v2688, %v2776
      %v2778 = vpop.f32.mrf.mxu0
      %v2779 = vadd.f32 %v2690, %v2778
      %2780 = vmatmul.bf16.gmra.mxu0 %v2606
      %v2781 = vpop.f32.mrf.mxu0
      %v2782 = vadd.f32 %v2693, %v2781
      %v2783 = vpop.f32.mrf.mxu0
      %v2784 = vadd.f32 %v2695, %v2783
      %2785 = vdwg.mxu0
      %v2786 = vadd.f32 %v2208, %v2707
      %v2787 = vadd.f32 %v2210, %v2709
      %v2788 = vadd.f32 %v2213, %v2712
      %v2789 = vadd.f32 %v2215, %v2714
      %v2790 = vadd.f32 %v2218, %v2717
      %v2791 = vadd.f32 %v2220, %v2719
      %v2792 = vadd.f32 %v2223, %v2722
      %v2793 = vadd.f32 %v2225, %v2724
      %v2794 = vadd.f32 %v2228, %v2727
      %v2795 = vadd.f32 %v2230, %v2729
      %v2796 = vadd.f32 %v2233, %v2732
      %v2797 = vadd.f32 %v2235, %v2734
      %v2798 = vadd.f32 %v2238, %v2737
      %v2799 = vadd.f32 %v2240, %v2739
      %v2800 = vadd.f32 %v2243, %v2742
      %v2801 = vadd.f32 %v2245, %v2744
      %v2802 = vadd.f32 %v2248, %v2747
      %v2803 = vadd.f32 %v2250, %v2749
      %v2804 = vadd.f32 %v2253, %v2752
      %v2805 = vadd.f32 %v2255, %v2754
      %v2806 = vadd.f32 %v2258, %v2757
      %v2807 = vadd.f32 %v2260, %v2759
      %v2808 = vadd.f32 %v2263, %v2762
      %v2809 = vadd.f32 %v2265, %v2764
      %v2810 = vadd.f32 %v2268, %v2767
      %v2811 = vadd.f32 %v2270, %v2769
      %v2812 = vadd.f32 %v2273, %v2772
      %v2813 = vadd.f32 %v2275, %v2774
      %v2814 = vadd.f32 %v2278, %v2777
      %v2815 = vadd.f32 %v2280, %v2779
      %v2816 = vadd.f32 %v2283, %v2782
      %v2817 = vadd.f32 %v2285, %v2784
      %v2818 = vld [vmem:[%s4] sm:$0xff]
      %v2819 = vld [vmem:[%s4 + $0x8] sm:$0xff]
      %v2820 = vld [vmem:[%s4 + $0x10] sm:$0xff]
      %v2821 = vld [vmem:[%s4 + $0x18] sm:$0xff]
      %v2822 = vld [vmem:[%s4 + $0x20] sm:$0xff]
      %v2823 = vld [vmem:[%s4 + $0x28] sm:$0xff]
      %v2824 = vld [vmem:[%s4 + $0x30] sm:$0xff]
      %v2825 = vld [vmem:[%s4 + $0x38] sm:$0xff]
      %v2826 = vld [vmem:[%s4 + $0x40] sm:$0xff]
      %v2827 = vld [vmem:[%s4 + $0x48] sm:$0xff]
      %v2828 = vld [vmem:[%s4 + $0x50] sm:$0xff]
      %v2829 = vld [vmem:[%s4 + $0x58] sm:$0xff]
      %v2830 = vld [vmem:[%s4 + $0x60] sm:$0xff]
      %v2831 = vld [vmem:[%s4 + $0x68] sm:$0xff]
      %v2832 = vld [vmem:[%s4 + $0x70] sm:$0xff]
      %v2833 = vld [vmem:[%s4 + $0x78] sm:$0xff]
      %v2834 = vld [vmem:[%s4 + $0x80] sm:$0xff]
      %v2835 = vld [vmem:[%s4 + $0x88] sm:$0xff]
      %v2836 = vld [vmem:[%s4 + $0x90] sm:$0xff]
      %v2837 = vld [vmem:[%s4 + $0x98] sm:$0xff]
      %v2838 = vld [vmem:[%s4 + $0xa0] sm:$0xff]
      %v2839 = vld [vmem:[%s4 + $0xa8] sm:$0xff]
      %v2840 = vld [vmem:[%s4 + $0xb0] sm:$0xff]
      %v2841 = vld [vmem:[%s4 + $0xb8] sm:$0xff]
      %v2842 = vld [vmem:[%s4 + $0xc0] sm:$0xff]
      %v2843 = vld [vmem:[%s4 + $0xc8] sm:$0xff]
      %v2844 = vld [vmem:[%s4 + $0xd0] sm:$0xff]
      %v2845 = vld [vmem:[%s4 + $0xd8] sm:$0xff]
      %v2846 = vld [vmem:[%s4 + $0xe0] sm:$0xff]
      %v2847 = vld [vmem:[%s4 + $0xe8] sm:$0xff]
      %v2848 = vld [vmem:[%s4 + $0xf0] sm:$0xff]
      %v2849 = vld [vmem:[%s4 + $0xf8] sm:$0xff]
      %2851 = vset.pattern.permute.xlu0 0
      %2852 = vperm.xlu0 %2851, %v2818
      %v2853 = vpop.permute.xlu0 %2852
      %2856 = vset.pattern.permute.xlu0 0
      %2857 = vperm.xlu0 %2856, %v2819
      %v2858 = vpop.permute.xlu0 %2857
      %2861 = vset.pattern.permute.xlu0 0
      %2862 = vperm.xlu0 %2861, %v2820
      %v2863 = vpop.permute.xlu0 %2862
      %2866 = vset.pattern.permute.xlu0 0
      %2867 = vperm.xlu0 %2866, %v2821
      %v2868 = vpop.permute.xlu0 %2867
      %2871 = vset.pattern.permute.xlu0 0
      %2872 = vperm.xlu0 %2871, %v2822
      %v2873 = vpop.permute.xlu0 %2872
      %2876 = vset.pattern.permute.xlu0 0
      %2877 = vperm.xlu0 %2876, %v2823
      %v2878 = vpop.permute.xlu0 %2877
      %2881 = vset.pattern.permute.xlu0 0
      %2882 = vperm.xlu0 %2881, %v2824
      %v2883 = vpop.permute.xlu0 %2882
      %2886 = vset.pattern.permute.xlu0 0
      %2887 = vperm.xlu0 %2886, %v2825
      %v2888 = vpop.permute.xlu0 %2887
      %2891 = vset.pattern.permute.xlu0 0
      %2892 = vperm.xlu0 %2891, %v2826
      %v2893 = vpop.permute.xlu0 %2892
      %2896 = vset.pattern.permute.xlu0 0
      %2897 = vperm.xlu0 %2896, %v2827
      %v2898 = vpop.permute.xlu0 %2897
      %2901 = vset.pattern.permute.xlu0 0
      %2902 = vperm.xlu0 %2901, %v2828
      %v2903 = vpop.permute.xlu0 %2902
      %2906 = vset.pattern.permute.xlu0 0
      %2907 = vperm.xlu0 %2906, %v2829
      %v2908 = vpop.permute.xlu0 %2907
      %2911 = vset.pattern.permute.xlu0 0
      %2912 = vperm.xlu0 %2911, %v2830
      %v2913 = vpop.permute.xlu0 %2912
      %2916 = vset.pattern.permute.xlu0 0
      %2917 = vperm.xlu0 %2916, %v2831
      %v2918 = vpop.permute.xlu0 %2917
      %2921 = vset.pattern.permute.xlu0 0
      %2922 = vperm.xlu0 %2921, %v2832
      %v2923 = vpop.permute.xlu0 %2922
      %2926 = vset.pattern.permute.xlu0 0
      %2927 = vperm.xlu0 %2926, %v2833
      %v2928 = vpop.permute.xlu0 %2927
      %2931 = vset.pattern.permute.xlu0 0
      %2932 = vperm.xlu0 %2931, %v2834
      %v2933 = vpop.permute.xlu0 %2932
      %2936 = vset.pattern.permute.xlu0 0
      %2937 = vperm.xlu0 %2936, %v2835
      %v2938 = vpop.permute.xlu0 %2937
      %2941 = vset.pattern.permute.xlu0 0
      %2942 = vperm.xlu0 %2941, %v2836
      %v2943 = vpop.permute.xlu0 %2942
      %2946 = vset.pattern.permute.xlu0 0
      %2947 = vperm.xlu0 %2946, %v2837
      %v2948 = vpop.permute.xlu0 %2947
      %2951 = vset.pattern.permute.xlu0 0
      %2952 = vperm.xlu0 %2951, %v2838
      %v2953 = vpop.permute.xlu0 %2952
      %2956 = vset.pattern.permute.xlu0 0
      %2957 = vperm.xlu0 %2956, %v2839
      %v2958 = vpop.permute.xlu0 %2957
      %2961 = vset.pattern.permute.xlu0 0
      %2962 = vperm.xlu0 %2961, %v2840
      %v2963 = vpop.permute.xlu0 %2962
      %2966 = vset.pattern.permute.xlu0 0
      %2967 = vperm.xlu0 %2966, %v2841
      %v2968 = vpop.permute.xlu0 %2967
      %2971 = vset.pattern.permute.xlu0 0
      %2972 = vperm.xlu0 %2971, %v2842
      %v2973 = vpop.permute.xlu0 %2972
      %2976 = vset.pattern.permute.xlu0 0
      %2977 = vperm.xlu0 %2976, %v2843
      %v2978 = vpop.permute.xlu0 %2977
      %2981 = vset.pattern.permute.xlu0 0
      %2982 = vperm.xlu0 %2981, %v2844
      %v2983 = vpop.permute.xlu0 %2982
      %2986 = vset.pattern.permute.xlu0 0
      %2987 = vperm.xlu0 %2986, %v2845
      %v2988 = vpop.permute.xlu0 %2987
      %2991 = vset.pattern.permute.xlu0 0
      %2992 = vperm.xlu0 %2991, %v2846
      %v2993 = vpop.permute.xlu0 %2992
      %2996 = vset.pattern.permute.xlu0 0
      %2997 = vperm.xlu0 %2996, %v2847
      %v2998 = vpop.permute.xlu0 %2997
      %3001 = vset.pattern.permute.xlu0 0
      %3002 = vperm.xlu0 %3001, %v2848
      %v3003 = vpop.permute.xlu0 %3002
      %3006 = vset.pattern.permute.xlu0 0
      %3007 = vperm.xlu0 %3006, %v2849
      %v3008 = vpop.permute.xlu0 %3007
      %v3010 = vmul.f32 %v2786, %v2853
      %v3011 = vmul.f32 %v2787, %v2858
      %v3012 = vmul.f32 %v2788, %v2863
      %v3013 = vmul.f32 %v2789, %v2868
      %v3014 = vmul.f32 %v2790, %v2873
      %v3015 = vmul.f32 %v2791, %v2878
      %v3016 = vmul.f32 %v2792, %v2883
      %v3017 = vmul.f32 %v2793, %v2888
      %v3018 = vmul.f32 %v2794, %v2893
      %v3019 = vmul.f32 %v2795, %v2898
      %v3020 = vmul.f32 %v2796, %v2903
      %v3021 = vmul.f32 %v2797, %v2908
      %v3022 = vmul.f32 %v2798, %v2913
      %v3023 = vmul.f32 %v2799, %v2918
      %v3024 = vmul.f32 %v2800, %v2923
      %v3025 = vmul.f32 %v2801, %v2928
      %v3026 = vmul.f32 %v2802, %v2933
      %v3027 = vmul.f32 %v2803, %v2938
      %v3028 = vmul.f32 %v2804, %v2943
      %v3029 = vmul.f32 %v2805, %v2948
      %v3030 = vmul.f32 %v2806, %v2953
      %v3031 = vmul.f32 %v2807, %v2958
      %v3032 = vmul.f32 %v2808, %v2963
      %v3033 = vmul.f32 %v2809, %v2968
      %v3034 = vmul.f32 %v2810, %v2973
      %v3035 = vmul.f32 %v2811, %v2978
      %v3036 = vmul.f32 %v2812, %v2983
      %v3037 = vmul.f32 %v2813, %v2988
      %v3038 = vmul.f32 %v2814, %v2993
      %v3039 = vmul.f32 %v2815, %v2998
      %v3040 = vmul.f32 %v2816, %v3003
      %v3041 = vmul.f32 %v2817, %v3008
      %v3042 = vsel %vm1786, %v3010, 0.0
      %v3043 = vsel %vm1786, %v3011, 0.0
      %v3044 = vadd.f32 %v3042, %v3043
      %v3045 = vsel %vm1786, %v3012, 0.0
      %v3046 = vadd.f32 %v3044, %v3045
      %v3047 = vsel %vm1786, %v3013, 0.0
      %v3048 = vadd.f32 %v3046, %v3047
      %v3049 = vsel %vm1786, %v3014, 0.0
      %v3050 = vadd.f32 %v3048, %v3049
      %v3051 = vsel %vm1786, %v3015, 0.0
      %v3052 = vadd.f32 %v3050, %v3051
      %v3053 = vsel %vm1786, %v3016, 0.0
      %v3054 = vadd.f32 %v3052, %v3053
      %v3055 = vsel %vm1786, %v3017, 0.0
      %v3056 = vadd.f32 %v3054, %v3055
      %v3057 = vsel %vm1786, %v3018, 0.0
      %v3058 = vadd.f32 %v3056, %v3057
      %v3059 = vsel %vm1786, %v3019, 0.0
      %v3060 = vadd.f32 %v3058, %v3059
      %v3061 = vsel %vm1786, %v3020, 0.0
      %v3062 = vadd.f32 %v3060, %v3061
      %v3063 = vsel %vm1786, %v3021, 0.0
      %v3064 = vadd.f32 %v3062, %v3063
      %v3065 = vsel %vm1786, %v3022, 0.0
      %v3066 = vadd.f32 %v3064, %v3065
      %v3067 = vsel %vm1786, %v3023, 0.0
      %v3068 = vadd.f32 %v3066, %v3067
      %v3069 = vsel %vm1786, %v3024, 0.0
      %v3070 = vadd.f32 %v3068, %v3069
      %v3071 = vsel %vm1786, %v3025, 0.0
      %v3072 = vadd.f32 %v3070, %v3071
      %v3073 = vsel %vm1786, %v3026, 0.0
      %v3074 = vadd.f32 %v3072, %v3073
      %v3075 = vsel %vm1786, %v3027, 0.0
      %v3076 = vadd.f32 %v3074, %v3075
      %v3077 = vsel %vm1786, %v3028, 0.0
      %v3078 = vadd.f32 %v3076, %v3077
      %v3079 = vsel %vm1786, %v3029, 0.0
      %v3080 = vadd.f32 %v3078, %v3079
      %v3081 = vsel %vm1786, %v3030, 0.0
      %v3082 = vadd.f32 %v3080, %v3081
      %v3083 = vsel %vm1786, %v3031, 0.0
      %v3084 = vadd.f32 %v3082, %v3083
      %v3085 = vsel %vm1786, %v3032, 0.0
      %v3086 = vadd.f32 %v3084, %v3085
      %v3087 = vsel %vm1786, %v3033, 0.0
      %v3088 = vadd.f32 %v3086, %v3087
      %v3089 = vsel %vm1786, %v3034, 0.0
      %v3090 = vadd.f32 %v3088, %v3089
      %v3091 = vsel %vm1786, %v3035, 0.0
      %v3092 = vadd.f32 %v3090, %v3091
      %v3093 = vsel %vm1786, %v3036, 0.0
      %v3094 = vadd.f32 %v3092, %v3093
      %v3095 = vsel %vm1786, %v3037, 0.0
      %v3096 = vadd.f32 %v3094, %v3095
      %v3097 = vsel %vm1786, %v3038, 0.0
      %v3098 = vadd.f32 %v3096, %v3097
      %v3099 = vsel %vm1786, %v3039, 0.0
      %v3100 = vadd.f32 %v3098, %v3099
      %v3101 = vsel %vm1786, %v3040, 0.0
      %v3102 = vadd.f32 %v3100, %v3101
      %v3103 = vsel %vm1786, %v3041, 0.0
      %v3104 = vadd.f32 %v3102, %v3103
      %v3105 = vrot.slane %v3104, 4
      %v3106 = vadd.f32 %v3104, %v3105
      %v3107 = vrot.slane %v3106, 2
      %v3108 = vadd.f32 %v3106, %v3107
      %v3109 = vrot.slane %v3108, 1
      %v3110 = vadd.f32 %v3108, %v3109
      %v3111 = vadd.f32 %v3110, 0.0
      %v3112 = vmul.f32 %v3010, %v2786
      %v3113 = vmul.f32 %v3011, %v2787
      %v3114 = vmul.f32 %v3012, %v2788
      %v3115 = vmul.f32 %v3013, %v2789
      %v3116 = vmul.f32 %v3014, %v2790
      %v3117 = vmul.f32 %v3015, %v2791
      %v3118 = vmul.f32 %v3016, %v2792
      %v3119 = vmul.f32 %v3017, %v2793
      %v3120 = vmul.f32 %v3018, %v2794
      %v3121 = vmul.f32 %v3019, %v2795
      %v3122 = vmul.f32 %v3020, %v2796
      %v3123 = vmul.f32 %v3021, %v2797
      %v3124 = vmul.f32 %v3022, %v2798
      %v3125 = vmul.f32 %v3023, %v2799
      %v3126 = vmul.f32 %v3024, %v2800
      %v3127 = vmul.f32 %v3025, %v2801
      %v3128 = vmul.f32 %v3026, %v2802
      %v3129 = vmul.f32 %v3027, %v2803
      %v3130 = vmul.f32 %v3028, %v2804
      %v3131 = vmul.f32 %v3029, %v2805
      %v3132 = vmul.f32 %v3030, %v2806
      %v3133 = vmul.f32 %v3031, %v2807
      %v3134 = vmul.f32 %v3032, %v2808
      %v3135 = vmul.f32 %v3033, %v2809
      %v3136 = vmul.f32 %v3034, %v2810
      %v3137 = vmul.f32 %v3035, %v2811
      %v3138 = vmul.f32 %v3036, %v2812
      %v3139 = vmul.f32 %v3037, %v2813
      %v3140 = vmul.f32 %v3038, %v2814
      %v3141 = vmul.f32 %v3039, %v2815
      %v3142 = vmul.f32 %v3040, %v2816
      %v3143 = vmul.f32 %v3041, %v2817
      %v3144 = vsel %vm1786, %v3112, 0.0
      %v3145 = vsel %vm1786, %v3113, 0.0
      %v3146 = vadd.f32 %v3144, %v3145
      %v3147 = vsel %vm1786, %v3114, 0.0
      %v3148 = vadd.f32 %v3146, %v3147
      %v3149 = vsel %vm1786, %v3115, 0.0
      %v3150 = vadd.f32 %v3148, %v3149
      %v3151 = vsel %vm1786, %v3116, 0.0
      %v3152 = vadd.f32 %v3150, %v3151
      %v3153 = vsel %vm1786, %v3117, 0.0
      %v3154 = vadd.f32 %v3152, %v3153
      %v3155 = vsel %vm1786, %v3118, 0.0
      %v3156 = vadd.f32 %v3154, %v3155
      %v3157 = vsel %vm1786, %v3119, 0.0
      %v3158 = vadd.f32 %v3156, %v3157
      %v3159 = vsel %vm1786, %v3120, 0.0
      %v3160 = vadd.f32 %v3158, %v3159
      %v3161 = vsel %vm1786, %v3121, 0.0
      %v3162 = vadd.f32 %v3160, %v3161
      %v3163 = vsel %vm1786, %v3122, 0.0
      %v3164 = vadd.f32 %v3162, %v3163
      %v3165 = vsel %vm1786, %v3123, 0.0
      %v3166 = vadd.f32 %v3164, %v3165
      %v3167 = vsel %vm1786, %v3124, 0.0
      %v3168 = vadd.f32 %v3166, %v3167
      %v3169 = vsel %vm1786, %v3125, 0.0
      %v3170 = vadd.f32 %v3168, %v3169
      %v3171 = vsel %vm1786, %v3126, 0.0
      %v3172 = vadd.f32 %v3170, %v3171
      %v3173 = vsel %vm1786, %v3127, 0.0
      %v3174 = vadd.f32 %v3172, %v3173
      %v3175 = vsel %vm1786, %v3128, 0.0
      %v3176 = vadd.f32 %v3174, %v3175
      %v3177 = vsel %vm1786, %v3129, 0.0
      %v3178 = vadd.f32 %v3176, %v3177
      %v3179 = vsel %vm1786, %v3130, 0.0
      %v3180 = vadd.f32 %v3178, %v3179
      %v3181 = vsel %vm1786, %v3131, 0.0
      %v3182 = vadd.f32 %v3180, %v3181
      %v3183 = vsel %vm1786, %v3132, 0.0
      %v3184 = vadd.f32 %v3182, %v3183
      %v3185 = vsel %vm1786, %v3133, 0.0
      %v3186 = vadd.f32 %v3184, %v3185
      %v3187 = vsel %vm1786, %v3134, 0.0
      %v3188 = vadd.f32 %v3186, %v3187
      %v3189 = vsel %vm1786, %v3135, 0.0
      %v3190 = vadd.f32 %v3188, %v3189
      %v3191 = vsel %vm1786, %v3136, 0.0
      %v3192 = vadd.f32 %v3190, %v3191
      %v3193 = vsel %vm1786, %v3137, 0.0
      %v3194 = vadd.f32 %v3192, %v3193
      %v3195 = vsel %vm1786, %v3138, 0.0
      %v3196 = vadd.f32 %v3194, %v3195
      %v3197 = vsel %vm1786, %v3139, 0.0
      %v3198 = vadd.f32 %v3196, %v3197
      %v3199 = vsel %vm1786, %v3140, 0.0
      %v3200 = vadd.f32 %v3198, %v3199
      %v3201 = vsel %vm1786, %v3141, 0.0
      %v3202 = vadd.f32 %v3200, %v3201
      %v3203 = vsel %vm1786, %v3142, 0.0
      %v3204 = vadd.f32 %v3202, %v3203
      %v3205 = vsel %vm1786, %v3143, 0.0
      %v3206 = vadd.f32 %v3204, %v3205
      %v3207 = vrot.slane %v3206, 4
      %v3208 = vadd.f32 %v3206, %v3207
      %v3209 = vrot.slane %v3208, 2
      %v3210 = vadd.f32 %v3208, %v3209
      %v3211 = vrot.slane %v3210, 1
      %v3212 = vadd.f32 %v3210, %v3211
      %v3213 = vadd.f32 %v3212, 0.0
      %v3214 = vpack.c.bf16 %v2786, %v2786
      %v3215 = vpack.c.bf16 %v2787, %v2787
      %3216 = vst.msk [vmem:[%s289] sm:$0xf] %vm601, %v3214
      %3217 = vst.msk [vmem:[%s289 + $0x4] sm:$0xf] %vm601, %v3215
      %v3218 = vpack.c.bf16 %v2790, %v2790
      %v3219 = vpack.c.bf16 %v2791, %v2791
      %s3220 = scalar_lea.vmem %s289, 8
      %3221 = vst.msk [vmem:[%s3220] sm:$0xf] %vm601, %v3218
      %3222 = vst.msk [vmem:[%s3220 + $0x4] sm:$0xf] %vm601, %v3219
      %v3223 = vpack.c.bf16 %v2794, %v2794
      %v3224 = vpack.c.bf16 %v2795, %v2795
      %s3225 = scalar_lea.vmem %s289, 16
      %3226 = vst.msk [vmem:[%s3225] sm:$0xf] %vm601, %v3223
      %3227 = vst.msk [vmem:[%s3225 + $0x4] sm:$0xf] %vm601, %v3224
      %v3228 = vpack.c.bf16 %v2798, %v2798
      %v3229 = vpack.c.bf16 %v2799, %v2799
      %s3230 = scalar_lea.vmem %s289, 24
      %3231 = vst.msk [vmem:[%s3230] sm:$0xf] %vm601, %v3228
      %3232 = vst.msk [vmem:[%s3230 + $0x4] sm:$0xf] %vm601, %v3229
      %v3233 = vpack.c.bf16 %v2802, %v2802
      %v3234 = vpack.c.bf16 %v2803, %v2803
      %s3235 = scalar_lea.vmem %s289, 32
      %3236 = vst.msk [vmem:[%s3235] sm:$0xf] %vm601, %v3233
      %3237 = vst.msk [vmem:[%s3235 + $0x4] sm:$0xf] %vm601, %v3234
      %v3238 = vpack.c.bf16 %v2806, %v2806
      %v3239 = vpack.c.bf16 %v2807, %v2807
      %s3240 = scalar_lea.vmem %s289, 40
      %3241 = vst.msk [vmem:[%s3240] sm:$0xf] %vm601, %v3238
      %3242 = vst.msk [vmem:[%s3240 + $0x4] sm:$0xf] %vm601, %v3239
      %v3243 = vpack.c.bf16 %v2810, %v2810
      %v3244 = vpack.c.bf16 %v2811, %v2811
      %s3245 = scalar_lea.vmem %s289, 48
      %3246 = vst.msk [vmem:[%s3245] sm:$0xf] %vm601, %v3243
      %3247 = vst.msk [vmem:[%s3245 + $0x4] sm:$0xf] %vm601, %v3244
      %v3248 = vpack.c.bf16 %v2814, %v2814
      %v3249 = vpack.c.bf16 %v2815, %v2815
      %s3250 = scalar_lea.vmem %s289, 56
      %3251 = vst.msk [vmem:[%s3250] sm:$0xf] %vm601, %v3248
      %3252 = vst.msk [vmem:[%s3250 + $0x4] sm:$0xf] %vm601, %v3249
      %v3253 = vld [vmem:[#allocation2 + $0x100] sm:$0xff]
      %v3254 = vld [vmem:[#allocation2 + $0x108] sm:$0xff]
      %v3255 = vld [vmem:[#allocation2 + $0x110] sm:$0xff]
      %v3256 = vld [vmem:[#allocation2 + $0x118] sm:$0xff]
      %v3257 = vld [vmem:[#allocation2 + $0x120] sm:$0xff]
      %v3258 = vld [vmem:[#allocation2 + $0x128] sm:$0xff]
      %v3259 = vld [vmem:[#allocation2 + $0x130] sm:$0xff]
      %v3260 = vld [vmem:[#allocation2 + $0x138] sm:$0xff]
      %v3261 = vld [vmem:[#allocation2 + $0x140] sm:$0xff]
      %v3262 = vld [vmem:[#allocation2 + $0x148] sm:$0xff]
      %v3263 = vld [vmem:[#allocation2 + $0x150] sm:$0xff]
      %v3264 = vld [vmem:[#allocation2 + $0x158] sm:$0xff]
      %v3265 = vld [vmem:[#allocation2 + $0x160] sm:$0xff]
      %v3266 = vld [vmem:[#allocation2 + $0x168] sm:$0xff]
      %v3267 = vld [vmem:[#allocation2 + $0x170] sm:$0xff]
      %v3268 = vld [vmem:[#allocation2 + $0x178] sm:$0xff]
      %v3269 = vld [vmem:[#allocation2 + $0x180] sm:$0xff]
      %v3270 = vld [vmem:[#allocation2 + $0x188] sm:$0xff]
      %v3271 = vld [vmem:[#allocation2 + $0x190] sm:$0xff]
      %v3272 = vld [vmem:[#allocation2 + $0x198] sm:$0xff]
      %v3273 = vld [vmem:[#allocation2 + $0x1a0] sm:$0xff]
      %v3274 = vld [vmem:[#allocation2 + $0x1a8] sm:$0xff]
      %v3275 = vld [vmem:[#allocation2 + $0x1b0] sm:$0xff]
      %v3276 = vld [vmem:[#allocation2 + $0x1b8] sm:$0xff]
      %v3277 = vld [vmem:[#allocation2 + $0x1c0] sm:$0xff]
      %v3278 = vld [vmem:[#allocation2 + $0x1c8] sm:$0xff]
      %v3279 = vld [vmem:[#allocation2 + $0x1d0] sm:$0xff]
      %v3280 = vld [vmem:[#allocation2 + $0x1d8] sm:$0xff]
      %v3281 = vld [vmem:[#allocation2 + $0x1e0] sm:$0xff]
      %v3282 = vld [vmem:[#allocation2 + $0x1e8] sm:$0xff]
      %v3283 = vld [vmem:[#allocation2 + $0x1f0] sm:$0xff]
      %v3284 = vld [vmem:[#allocation2 + $0x1f8] sm:$0xff]
      %v3285 = vld [vmem:[%s3] sm:$0xf]
      %v3286 = vld [vmem:[%s3 + $0x4] sm:$0xf]
      %v3287 = vld [vmem:[%s3 + $0x8] sm:$0xf]
      %v3288 = vld [vmem:[%s3 + $0xc] sm:$0xf]
      %v3289 = vld [vmem:[%s3 + $0x10] sm:$0xf]
      %v3290 = vld [vmem:[%s3 + $0x14] sm:$0xf]
      %v3291 = vld [vmem:[%s3 + $0x18] sm:$0xf]
      %v3292 = vld [vmem:[%s3 + $0x1c] sm:$0xf]
      %v3293 = vld [vmem:[%s3 + $0x20] sm:$0xf]
      %v3294 = vld [vmem:[%s3 + $0x24] sm:$0xf]
      %v3295 = vld [vmem:[%s3 + $0x28] sm:$0xf]
      %v3296 = vld [vmem:[%s3 + $0x2c] sm:$0xf]
      %v3297 = vld [vmem:[%s3 + $0x30] sm:$0xf]
      %v3298 = vld [vmem:[%s3 + $0x34] sm:$0xf]
      %v3299 = vld [vmem:[%s3 + $0x38] sm:$0xf]
      %v3300 = vld [vmem:[%s3 + $0x3c] sm:$0xf]
      %v3301 = vld [vmem:[%s3 + $0x40] sm:$0xf]
      %v3302 = vld [vmem:[%s3 + $0x44] sm:$0xf]
      %v3303 = vld [vmem:[%s3 + $0x48] sm:$0xf]
      %v3304 = vld [vmem:[%s3 + $0x4c] sm:$0xf]
      %v3305 = vld [vmem:[%s3 + $0x50] sm:$0xf]
      %v3306 = vld [vmem:[%s3 + $0x54] sm:$0xf]
      %v3307 = vld [vmem:[%s3 + $0x58] sm:$0xf]
      %v3308 = vld [vmem:[%s3 + $0x5c] sm:$0xf]
      %v3309 = vld [vmem:[#allocation2 + $0x200] sm:$0xff]
      %v3310 = vld [vmem:[#allocation2 + $0x208] sm:$0xff]
      %v3311 = vld [vmem:[#allocation2 + $0x210] sm:$0xff]
      %v3312 = vld [vmem:[#allocation2 + $0x218] sm:$0xff]
      %v3313 = vld [vmem:[%s1545] sm:$0xf]
      %v3314 = vld [vmem:[%s1545 + $0x4] sm:$0xf]
      %v3315 = vld [vmem:[%s1545 + $0x8] sm:$0xf]
      %v3316 = vld [vmem:[%s1545 + $0xc] sm:$0xf]
      %v3317 = vld [vmem:[%s1545 + $0x10] sm:$0xf]
      %v3318 = vld [vmem:[%s1545 + $0x14] sm:$0xf]
      %v3319 = vld [vmem:[%s1545 + $0x18] sm:$0xf]
      %v3320 = vld [vmem:[%s1545 + $0x1c] sm:$0xf]
      %v3321 = vld [vmem:[%s1545 + $0x20] sm:$0xf]
      %v3322 = vld [vmem:[%s1545 + $0x24] sm:$0xf]
      %v3323 = vld [vmem:[%s1545 + $0x28] sm:$0xf]
      %v3324 = vld [vmem:[%s1545 + $0x2c] sm:$0xf]
      %v3325 = vld [vmem:[%s1545 + $0x30] sm:$0xf]
      %v3326 = vld [vmem:[%s1545 + $0x34] sm:$0xf]
      %v3327 = vld [vmem:[%s1545 + $0x38] sm:$0xf]
      %v3328 = vld [vmem:[%s1545 + $0x3c] sm:$0xf]
      %v3329 = vld [vmem:[%s1545 + $0x40] sm:$0xf]
      %v3330 = vld [vmem:[%s1545 + $0x44] sm:$0xf]
      %v3331 = vld [vmem:[%s1545 + $0x48] sm:$0xf]
      %v3332 = vld [vmem:[%s1545 + $0x4c] sm:$0xf]
      %v3333 = vld [vmem:[%s1545 + $0x50] sm:$0xf]
      %v3334 = vld [vmem:[%s1545 + $0x54] sm:$0xf]
      %v3335 = vld [vmem:[%s1545 + $0x58] sm:$0xf]
      %v3336 = vld [vmem:[%s1545 + $0x5c] sm:$0xf]
      %v3369 = vunpack.c.l.b16 %v3257
      %v3370 = vunpack.c.h.b16 %v3257
      %v3371 = vunpack.c.l.b16 %v3258
      %v3372 = vunpack.c.h.b16 %v3258
      %v3373 = vunpack.c.l.b16 %v3259
      %v3374 = vunpack.c.h.b16 %v3259
      %v3375 = vunpack.c.l.b16 %v3260
      %v3376 = vunpack.c.h.b16 %v3260
      %v3377 = vunpack.c.l.b16 %v3261
      %v3378 = vunpack.c.h.b16 %v3261
      %v3379 = vunpack.c.l.b16 %v3262
      %v3380 = vunpack.c.h.b16 %v3262
      %v3381 = vunpack.c.l.b16 %v3263
      %v3382 = vunpack.c.h.b16 %v3263
      %v3383 = vunpack.c.l.b16 %v3264
      %v3384 = vunpack.c.h.b16 %v3264
      %v3385 = vunpack.c.l.b16 %v3265
      %v3386 = vunpack.c.h.b16 %v3265
      %v3387 = vunpack.c.l.b16 %v3266
      %v3388 = vunpack.c.h.b16 %v3266
      %v3389 = vunpack.c.l.b16 %v3267
      %v3390 = vunpack.c.h.b16 %v3267
      %v3391 = vunpack.c.l.b16 %v3268
      %v3392 = vunpack.c.h.b16 %v3268
      %v3393 = vunpack.c.l.b16 %v3269
      %v3394 = vunpack.c.h.b16 %v3269
      %v3395 = vunpack.c.l.b16 %v3270
      %v3396 = vunpack.c.h.b16 %v3270
      %v3397 = vunpack.c.l.b16 %v3271
      %v3398 = vunpack.c.h.b16 %v3271
      %v3399 = vunpack.c.l.b16 %v3272
      %v3400 = vunpack.c.h.b16 %v3272
      %v3401 = vunpack.c.l.b16 %v3273
      %v3402 = vunpack.c.h.b16 %v3273
      %v3403 = vunpack.c.l.b16 %v3274
      %v3404 = vunpack.c.h.b16 %v3274
      %v3405 = vunpack.c.l.b16 %v3275
      %v3406 = vunpack.c.h.b16 %v3275
      %v3407 = vunpack.c.l.b16 %v3276
      %v3408 = vunpack.c.h.b16 %v3276
      %v3409 = vunpack.c.l.b16 %v3277
      %v3410 = vunpack.c.h.b16 %v3277
      %v3411 = vunpack.c.l.b16 %v3278
      %v3412 = vunpack.c.h.b16 %v3278
      %v3413 = vunpack.c.l.b16 %v3279
      %v3414 = vunpack.c.h.b16 %v3279
      %v3415 = vunpack.c.l.b16 %v3280
      %v3416 = vunpack.c.h.b16 %v3280
      %v3417 = vunpack.c.l.b16 %v3281
      %v3418 = vunpack.c.h.b16 %v3281
      %v3419 = vunpack.c.l.b16 %v3282
      %v3420 = vunpack.c.h.b16 %v3282
      %v3421 = vunpack.c.l.b16 %v3283
      %v3422 = vunpack.c.h.b16 %v3283
      %v3423 = vunpack.c.l.b16 %v3284
      %v3424 = vunpack.c.h.b16 %v3284
      %v3425 = vunpack.c.l.b16 %v3309
      %v3426 = vunpack.c.h.b16 %v3309
      %v3427 = vunpack.c.l.b16 %v3310
      %v3428 = vunpack.c.h.b16 %v3310
      %v3429 = vunpack.c.l.b16 %v3311
      %v3430 = vunpack.c.h.b16 %v3311
      %v3431 = vunpack.c.l.b16 %v3312
      %v3432 = vunpack.c.h.b16 %v3312
      %v3433 = vpack.c.b16 %v3371, %v3369
      %v3434 = vpack.c.b16 %v3372, %v3370
      %v3435 = vpack.c.b16 %v3375, %v3373
      %v3436 = vpack.c.b16 %v3376, %v3374
      %v3437 = vpack.c.b16 %v3379, %v3377
      %v3438 = vpack.c.b16 %v3380, %v3378
      %v3439 = vpack.c.b16 %v3383, %v3381
      %v3440 = vpack.c.b16 %v3384, %v3382
      %v3441 = vpack.c.b16 %v3387, %v3385
      %v3442 = vpack.c.b16 %v3388, %v3386
      %v3443 = vpack.c.b16 %v3391, %v3389
      %v3444 = vpack.c.b16 %v3392, %v3390
      %v3445 = vpack.c.b16 %v3395, %v3393
      %v3446 = vpack.c.b16 %v3396, %v3394
      %v3447 = vpack.c.b16 %v3399, %v3397
      %v3448 = vpack.c.b16 %v3400, %v3398
      %v3449 = vpack.c.b16 %v3403, %v3401
      %v3450 = vpack.c.b16 %v3404, %v3402
      %v3451 = vpack.c.b16 %v3407, %v3405
      %v3452 = vpack.c.b16 %v3408, %v3406
      %v3453 = vpack.c.b16 %v3411, %v3409
      %v3454 = vpack.c.b16 %v3412, %v3410
      %v3455 = vpack.c.b16 %v3415, %v3413
      %v3456 = vpack.c.b16 %v3416, %v3414
      %v3457 = vpack.c.b16 %v3419, %v3417
      %v3458 = vpack.c.b16 %v3420, %v3418
      %v3459 = vpack.c.b16 %v3423, %v3421
      %v3460 = vpack.c.b16 %v3424, %v3422
      %v3461 = vpack.c.b16 %v3427, %v3425
      %v3462 = vpack.c.b16 %v3428, %v3426
      %v3463 = vpack.c.b16 %v3431, %v3429
      %v3464 = vpack.c.b16 %v3432, %v3430
      %v3505 = vunpack.c.l.b16 %v3313
      %v3506 = vunpack.c.l.b16 %v3314
      %v3507 = vunpack.c.l.b16 %v3315
      %v3508 = vunpack.c.l.b16 %v3316
      %v3509 = vunpack.c.l.b16 %v3317
      %v3510 = vunpack.c.l.b16 %v3318
      %v3511 = vunpack.c.l.b16 %v3319
      %v3512 = vunpack.c.l.b16 %v3320
      %v3513 = vunpack.c.l.b16 %v3321
      %v3514 = vunpack.c.l.b16 %v3322
      %v3515 = vunpack.c.l.b16 %v3323
      %v3516 = vunpack.c.l.b16 %v3324
      %v3517 = vunpack.c.l.b16 %v3325
      %v3518 = vunpack.c.l.b16 %v3326
      %v3519 = vunpack.c.l.b16 %v3327
      %v3520 = vunpack.c.l.b16 %v3328
      %v3521 = vunpack.c.l.b16 %v3329
      %v3522 = vunpack.c.l.b16 %v3330
      %v3523 = vunpack.c.l.b16 %v3331
      %v3524 = vunpack.c.l.b16 %v3332
      %v3525 = vunpack.c.l.b16 %v3333
      %v3526 = vunpack.c.l.b16 %v3334
      %v3527 = vunpack.c.l.b16 %v3335
      %v3528 = vunpack.c.l.b16 %v3336
      %v3529 = vpack.c.b16 %v3506, %v3505
      %v3530 = vpack.c.b16 %v3508, %v3507
      %v3531 = vpack.c.b16 %v3510, %v3509
      %v3532 = vpack.c.b16 %v3512, %v3511
      %v3533 = vpack.c.b16 %v3514, %v3513
      %v3534 = vpack.c.b16 %v3516, %v3515
      %v3535 = vpack.c.b16 %v3518, %v3517
      %v3536 = vpack.c.b16 %v3520, %v3519
      %v3537 = vpack.c.b16 %v3522, %v3521
      %v3538 = vpack.c.b16 %v3524, %v3523
      %v3539 = vpack.c.b16 %v3526, %v3525
      %v3540 = vpack.c.b16 %v3528, %v3527
      %v3554 = vsel %vm1786, %v3434, 0
      %v3557 = vsel %vm1786, %v3436, 0
      %v3560 = vsel %vm1786, %v3438, 0
      %v3563 = vsel %vm1786, %v3440, 0
      %v3566 = vsel %vm1786, %v3442, 0
      %v3569 = vsel %vm1786, %v3444, 0
      %v3572 = vsel %vm1786, %v3446, 0
      %v3575 = vsel %vm1786, %v3448, 0
      %v3578 = vsel %vm1786, %v3450, 0
      %v3581 = vsel %vm1786, %v3452, 0
      %v3584 = vsel %vm1786, %v3454, 0
      %v3587 = vsel %vm1786, %v3456, 0
      %v3590 = vsel %vm1786, %v3458, 0
      %v3593 = vsel %vm1786, %v3460, 0
      %v3596 = vsel %vm1786, %v3462, 0
      %v3599 = vsel %vm1786, %v3464, 0
      %3601 = vmatpush.bf16.msra.mxu0 %v3536
      %3602 = vmatpush.bf16.msra.mxu0 %v3535
      %3603 = vmatpush.bf16.msra.mxu0 %v3534
      %3604 = vmatpush.bf16.msra.mxu0 %v3533
      %3605 = vmatpush.bf16.msra.mxu0 %v3532
      %3606 = vmatpush.bf16.msra.mxu0 %v3531
      %3607 = vmatpush.bf16.msra.mxu0 %v3530
      %3608 = vmatpush.bf16.msra.mxu0 %v3529
      %3609 = vmatmul.bf16.gmra.mxu0 %v3433
      %v3610 = vpop.f32.mrf.mxu0
      %v3611 = vadd.f32 0.0, %v3610
      %v3612 = vpop.f32.mrf.mxu0
      %v3613 = vadd.f32 0.0, %v3612
      %3614 = vmatmul.bf16.gmra.mxu0 %v3435
      %v3615 = vpop.f32.mrf.mxu0
      %v3616 = vadd.f32 0.0, %v3615
      %v3617 = vpop.f32.mrf.mxu0
      %v3618 = vadd.f32 0.0, %v3617
      %3619 = vmatmul.bf16.gmra.mxu0 %v3437
      %v3620 = vpop.f32.mrf.mxu0
      %v3621 = vadd.f32 0.0, %v3620
      %v3622 = vpop.f32.mrf.mxu0
      %v3623 = vadd.f32 0.0, %v3622
      %3624 = vmatmul.bf16.gmra.mxu0 %v3439
      %v3625 = vpop.f32.mrf.mxu0
      %v3626 = vadd.f32 0.0, %v3625
      %v3627 = vpop.f32.mrf.mxu0
      %v3628 = vadd.f32 0.0, %v3627
      %3629 = vmatmul.bf16.gmra.mxu0 %v3441
      %v3630 = vpop.f32.mrf.mxu0
      %v3631 = vadd.f32 0.0, %v3630
      %v3632 = vpop.f32.mrf.mxu0
      %v3633 = vadd.f32 0.0, %v3632
      %3634 = vmatmul.bf16.gmra.mxu0 %v3443
      %v3635 = vpop.f32.mrf.mxu0
      %v3636 = vadd.f32 0.0, %v3635
      %v3637 = vpop.f32.mrf.mxu0
      %v3638 = vadd.f32 0.0, %v3637
      %3639 = vmatmul.bf16.gmra.mxu0 %v3445
      %v3640 = vpop.f32.mrf.mxu0
      %v3641 = vadd.f32 0.0, %v3640
      %v3642 = vpop.f32.mrf.mxu0
      %v3643 = vadd.f32 0.0, %v3642
      %3644 = vmatmul.bf16.gmra.mxu0 %v3447
      %v3645 = vpop.f32.mrf.mxu0
      %v3646 = vadd.f32 0.0, %v3645
      %v3647 = vpop.f32.mrf.mxu0
      %v3648 = vadd.f32 0.0, %v3647
      %3649 = vmatmul.bf16.gmra.mxu0 %v3449
      %v3650 = vpop.f32.mrf.mxu0
      %v3651 = vadd.f32 0.0, %v3650
      %v3652 = vpop.f32.mrf.mxu0
      %v3653 = vadd.f32 0.0, %v3652
      %3654 = vmatmul.bf16.gmra.mxu0 %v3451
      %v3655 = vpop.f32.mrf.mxu0
      %v3656 = vadd.f32 0.0, %v3655
      %v3657 = vpop.f32.mrf.mxu0
      %v3658 = vadd.f32 0.0, %v3657
      %3659 = vmatmul.bf16.gmra.mxu0 %v3453
      %v3660 = vpop.f32.mrf.mxu0
      %v3661 = vadd.f32 0.0, %v3660
      %v3662 = vpop.f32.mrf.mxu0
      %v3663 = vadd.f32 0.0, %v3662
      %3664 = vmatmul.bf16.gmra.mxu0 %v3455
      %v3665 = vpop.f32.mrf.mxu0
      %v3666 = vadd.f32 0.0, %v3665
      %v3667 = vpop.f32.mrf.mxu0
      %v3668 = vadd.f32 0.0, %v3667
      %3669 = vmatmul.bf16.gmra.mxu0 %v3457
      %v3670 = vpop.f32.mrf.mxu0
      %v3671 = vadd.f32 0.0, %v3670
      %v3672 = vpop.f32.mrf.mxu0
      %v3673 = vadd.f32 0.0, %v3672
      %3674 = vmatmul.bf16.gmra.mxu0 %v3459
      %v3675 = vpop.f32.mrf.mxu0
      %v3676 = vadd.f32 0.0, %v3675
      %v3677 = vpop.f32.mrf.mxu0
      %v3678 = vadd.f32 0.0, %v3677
      %3679 = vmatmul.bf16.gmra.mxu0 %v3461
      %v3680 = vpop.f32.mrf.mxu0
      %v3681 = vadd.f32 0.0, %v3680
      %v3682 = vpop.f32.mrf.mxu0
      %v3683 = vadd.f32 0.0, %v3682
      %3684 = vmatmul.bf16.gmra.mxu0 %v3463
      %v3685 = vpop.f32.mrf.mxu0
      %v3686 = vadd.f32 0.0, %v3685
      %v3687 = vpop.f32.mrf.mxu0
      %v3688 = vadd.f32 0.0, %v3687
      %3689 = vdwg.mxu0
      %3690 = vmatpush.bf16.msra.mxu0 0
      %3691 = vmatpush.bf16.msra.mxu0 0
      %3692 = vmatpush.bf16.msra.mxu0 0
      %3693 = vmatpush.bf16.msra.mxu0 0
      %3694 = vmatpush.bf16.msra.mxu0 %v3540
      %3695 = vmatpush.bf16.msra.mxu0 %v3539
      %3696 = vmatpush.bf16.msra.mxu0 %v3538
      %3697 = vmatpush.bf16.msra.mxu0 %v3537
      %3698 = vmatmul.bf16.gmra.mxu0 %v3554
      %v3699 = vpop.f32.mrf.mxu0
      %v3700 = vadd.f32 %v3611, %v3699
      %v3701 = vpop.f32.mrf.mxu0
      %v3702 = vadd.f32 %v3613, %v3701
      %3703 = vmatmul.bf16.gmra.mxu0 %v3557
      %v3704 = vpop.f32.mrf.mxu0
      %v3705 = vadd.f32 %v3616, %v3704
      %v3706 = vpop.f32.mrf.mxu0
      %v3707 = vadd.f32 %v3618, %v3706
      %3708 = vmatmul.bf16.gmra.mxu0 %v3560
      %v3709 = vpop.f32.mrf.mxu0
      %v3710 = vadd.f32 %v3621, %v3709
      %v3711 = vpop.f32.mrf.mxu0
      %v3712 = vadd.f32 %v3623, %v3711
      %3713 = vmatmul.bf16.gmra.mxu0 %v3563
      %v3714 = vpop.f32.mrf.mxu0
      %v3715 = vadd.f32 %v3626, %v3714
      %v3716 = vpop.f32.mrf.mxu0
      %v3717 = vadd.f32 %v3628, %v3716
      %3718 = vmatmul.bf16.gmra.mxu0 %v3566
      %v3719 = vpop.f32.mrf.mxu0
      %v3720 = vadd.f32 %v3631, %v3719
      %v3721 = vpop.f32.mrf.mxu0
      %v3722 = vadd.f32 %v3633, %v3721
      %3723 = vmatmul.bf16.gmra.mxu0 %v3569
      %v3724 = vpop.f32.mrf.mxu0
      %v3725 = vadd.f32 %v3636, %v3724
      %v3726 = vpop.f32.mrf.mxu0
      %v3727 = vadd.f32 %v3638, %v3726
      %3728 = vmatmul.bf16.gmra.mxu0 %v3572
      %v3729 = vpop.f32.mrf.mxu0
      %v3730 = vadd.f32 %v3641, %v3729
      %v3731 = vpop.f32.mrf.mxu0
      %v3732 = vadd.f32 %v3643, %v3731
      %3733 = vmatmul.bf16.gmra.mxu0 %v3575
      %v3734 = vpop.f32.mrf.mxu0
      %v3735 = vadd.f32 %v3646, %v3734
      %v3736 = vpop.f32.mrf.mxu0
      %v3737 = vadd.f32 %v3648, %v3736
      %3738 = vmatmul.bf16.gmra.mxu0 %v3578
      %v3739 = vpop.f32.mrf.mxu0
      %v3740 = vadd.f32 %v3651, %v3739
      %v3741 = vpop.f32.mrf.mxu0
      %v3742 = vadd.f32 %v3653, %v3741
      %3743 = vmatmul.bf16.gmra.mxu0 %v3581
      %v3744 = vpop.f32.mrf.mxu0
      %v3745 = vadd.f32 %v3656, %v3744
      %v3746 = vpop.f32.mrf.mxu0
      %v3747 = vadd.f32 %v3658, %v3746
      %3748 = vmatmul.bf16.gmra.mxu0 %v3584
      %v3749 = vpop.f32.mrf.mxu0
      %v3750 = vadd.f32 %v3661, %v3749
      %v3751 = vpop.f32.mrf.mxu0
      %v3752 = vadd.f32 %v3663, %v3751
      %3753 = vmatmul.bf16.gmra.mxu0 %v3587
      %v3754 = vpop.f32.mrf.mxu0
      %v3755 = vadd.f32 %v3666, %v3754
      %v3756 = vpop.f32.mrf.mxu0
      %v3757 = vadd.f32 %v3668, %v3756
      %3758 = vmatmul.bf16.gmra.mxu0 %v3590
      %v3759 = vpop.f32.mrf.mxu0
      %v3760 = vadd.f32 %v3671, %v3759
      %v3761 = vpop.f32.mrf.mxu0
      %v3762 = vadd.f32 %v3673, %v3761
      %3763 = vmatmul.bf16.gmra.mxu0 %v3593
      %v3764 = vpop.f32.mrf.mxu0
      %v3765 = vadd.f32 %v3676, %v3764
      %v3766 = vpop.f32.mrf.mxu0
      %v3767 = vadd.f32 %v3678, %v3766
      %3768 = vmatmul.bf16.gmra.mxu0 %v3596
      %v3769 = vpop.f32.mrf.mxu0
      %v3770 = vadd.f32 %v3681, %v3769
      %v3771 = vpop.f32.mrf.mxu0
      %v3772 = vadd.f32 %v3683, %v3771
      %3773 = vmatmul.bf16.gmra.mxu0 %v3599
      %v3774 = vpop.f32.mrf.mxu0
      %v3775 = vadd.f32 %v3686, %v3774
      %v3776 = vpop.f32.mrf.mxu0
      %v3777 = vadd.f32 %v3688, %v3776
      %3778 = vdwg.mxu0
      %v3783 = vunpack.c.l.b16 %v3253
      %v3784 = vunpack.c.h.b16 %v3253
      %v3785 = vunpack.c.l.b16 %v3254
      %v3786 = vunpack.c.h.b16 %v3254
      %v3787 = vunpack.c.l.b16 %v3255
      %v3788 = vunpack.c.h.b16 %v3255
      %v3789 = vunpack.c.l.b16 %v3256
      %v3790 = vunpack.c.h.b16 %v3256
      %v3791 = vpack.c.b16 %v3785, %v3783
      %v3792 = vpack.c.b16 %v3786, %v3784
      %v3793 = vpack.c.b16 %v3789, %v3787
      %v3794 = vpack.c.b16 %v3790, %v3788
      %v3821 = vunpack.c.l.b16 %v3285
      %v3822 = vunpack.c.l.b16 %v3286
      %v3823 = vunpack.c.l.b16 %v3287
      %v3824 = vunpack.c.l.b16 %v3288
      %v3825 = vunpack.c.l.b16 %v3289
      %v3826 = vunpack.c.l.b16 %v3290
      %v3827 = vunpack.c.l.b16 %v3291
      %v3828 = vunpack.c.l.b16 %v3292
      %v3829 = vunpack.c.l.b16 %v3293
      %v3830 = vunpack.c.l.b16 %v3294
      %v3831 = vunpack.c.l.b16 %v3295
      %v3832 = vunpack.c.l.b16 %v3296
      %v3833 = vunpack.c.l.b16 %v3297
      %v3834 = vunpack.c.l.b16 %v3298
      %v3835 = vunpack.c.l.b16 %v3299
      %v3836 = vunpack.c.l.b16 %v3300
      %v3837 = vunpack.c.l.b16 %v3301
      %v3838 = vunpack.c.l.b16 %v3302
      %v3839 = vunpack.c.l.b16 %v3303
      %v3840 = vunpack.c.l.b16 %v3304
      %v3841 = vunpack.c.l.b16 %v3305
      %v3842 = vunpack.c.l.b16 %v3306
      %v3843 = vunpack.c.l.b16 %v3307
      %v3844 = vunpack.c.l.b16 %v3308
      %v3845 = vpack.c.b16 %v3822, %v3821
      %v3846 = vpack.c.b16 %v3824, %v3823
      %v3847 = vpack.c.b16 %v3826, %v3825
      %v3848 = vpack.c.b16 %v3828, %v3827
      %v3849 = vpack.c.b16 %v3830, %v3829
      %v3850 = vpack.c.b16 %v3832, %v3831
      %v3851 = vpack.c.b16 %v3834, %v3833
      %v3852 = vpack.c.b16 %v3836, %v3835
      %v3853 = vpack.c.b16 %v3838, %v3837
      %v3854 = vpack.c.b16 %v3840, %v3839
      %v3855 = vpack.c.b16 %v3842, %v3841
      %v3856 = vpack.c.b16 %v3844, %v3843
      %v3870 = vsel %vm1786, %v3792, 0
      %v3873 = vsel %vm1786, %v3794, 0
      %3875 = vmatpush.bf16.msra.mxu0 %v3852
      %3876 = vmatpush.bf16.msra.mxu0 %v3851
      %3877 = vmatpush.bf16.msra.mxu0 %v3850
      %3878 = vmatpush.bf16.msra.mxu0 %v3849
      %3879 = vmatpush.bf16.msra.mxu0 %v3848
      %3880 = vmatpush.bf16.msra.mxu0 %v3847
      %3881 = vmatpush.bf16.msra.mxu0 %v3846
      %3882 = vmatpush.bf16.msra.mxu0 %v3845
      %3883 = vmatmul.bf16.gmra.mxu0 %v3791
      %v3884 = vpop.f32.mrf.mxu0
      %v3885 = vadd.f32 %v3700, %v3884
      %v3886 = vpop.f32.mrf.mxu0
      %v3887 = vadd.f32 %v3702, %v3886
      %3888 = vmatmul.bf16.gmra.mxu0 %v3793
      %v3889 = vpop.f32.mrf.mxu0
      %v3890 = vadd.f32 %v3705, %v3889
      %v3891 = vpop.f32.mrf.mxu0
      %v3892 = vadd.f32 %v3707, %v3891
      %3893 = vmatmul.bf16.gmra.mxu0 %v3433
      %v3894 = vpop.f32.mrf.mxu0
      %v3895 = vadd.f32 %v3710, %v3894
      %v3896 = vpop.f32.mrf.mxu0
      %v3897 = vadd.f32 %v3712, %v3896
      %3898 = vmatmul.bf16.gmra.mxu0 %v3435
      %v3899 = vpop.f32.mrf.mxu0
      %v3900 = vadd.f32 %v3715, %v3899
      %v3901 = vpop.f32.mrf.mxu0
      %v3902 = vadd.f32 %v3717, %v3901
      %3903 = vmatmul.bf16.gmra.mxu0 %v3437
      %v3904 = vpop.f32.mrf.mxu0
      %v3905 = vadd.f32 %v3720, %v3904
      %v3906 = vpop.f32.mrf.mxu0
      %v3907 = vadd.f32 %v3722, %v3906
      %3908 = vmatmul.bf16.gmra.mxu0 %v3439
      %v3909 = vpop.f32.mrf.mxu0
      %v3910 = vadd.f32 %v3725, %v3909
      %v3911 = vpop.f32.mrf.mxu0
      %v3912 = vadd.f32 %v3727, %v3911
      %3913 = vmatmul.bf16.gmra.mxu0 %v3441
      %v3914 = vpop.f32.mrf.mxu0
      %v3915 = vadd.f32 %v3730, %v3914
      %v3916 = vpop.f32.mrf.mxu0
      %v3917 = vadd.f32 %v3732, %v3916
      %3918 = vmatmul.bf16.gmra.mxu0 %v3443
      %v3919 = vpop.f32.mrf.mxu0
      %v3920 = vadd.f32 %v3735, %v3919
      %v3921 = vpop.f32.mrf.mxu0
      %v3922 = vadd.f32 %v3737, %v3921
      %3923 = vmatmul.bf16.gmra.mxu0 %v3445
      %v3924 = vpop.f32.mrf.mxu0
      %v3925 = vadd.f32 %v3740, %v3924
      %v3926 = vpop.f32.mrf.mxu0
      %v3927 = vadd.f32 %v3742, %v3926
      %3928 = vmatmul.bf16.gmra.mxu0 %v3447
      %v3929 = vpop.f32.mrf.mxu0
      %v3930 = vadd.f32 %v3745, %v3929
      %v3931 = vpop.f32.mrf.mxu0
      %v3932 = vadd.f32 %v3747, %v3931
      %3933 = vmatmul.bf16.gmra.mxu0 %v3449
      %v3934 = vpop.f32.mrf.mxu0
      %v3935 = vadd.f32 %v3750, %v3934
      %v3936 = vpop.f32.mrf.mxu0
      %v3937 = vadd.f32 %v3752, %v3936
      %3938 = vmatmul.bf16.gmra.mxu0 %v3451
      %v3939 = vpop.f32.mrf.mxu0
      %v3940 = vadd.f32 %v3755, %v3939
      %v3941 = vpop.f32.mrf.mxu0
      %v3942 = vadd.f32 %v3757, %v3941
      %3943 = vmatmul.bf16.gmra.mxu0 %v3453
      %v3944 = vpop.f32.mrf.mxu0
      %v3945 = vadd.f32 %v3760, %v3944
      %v3946 = vpop.f32.mrf.mxu0
      %v3947 = vadd.f32 %v3762, %v3946
      %3948 = vmatmul.bf16.gmra.mxu0 %v3455
      %v3949 = vpop.f32.mrf.mxu0
      %v3950 = vadd.f32 %v3765, %v3949
      %v3951 = vpop.f32.mrf.mxu0
      %v3952 = vadd.f32 %v3767, %v3951
      %3953 = vmatmul.bf16.gmra.mxu0 %v3457
      %v3954 = vpop.f32.mrf.mxu0
      %v3955 = vadd.f32 %v3770, %v3954
      %v3956 = vpop.f32.mrf.mxu0
      %v3957 = vadd.f32 %v3772, %v3956
      %3958 = vmatmul.bf16.gmra.mxu0 %v3459
      %v3959 = vpop.f32.mrf.mxu0
      %v3960 = vadd.f32 %v3775, %v3959
      %v3961 = vpop.f32.mrf.mxu0
      %v3962 = vadd.f32 %v3777, %v3961
      %3963 = vdwg.mxu0
      %3964 = vmatpush.bf16.msra.mxu0 0
      %3965 = vmatpush.bf16.msra.mxu0 0
      %3966 = vmatpush.bf16.msra.mxu0 0
      %3967 = vmatpush.bf16.msra.mxu0 0
      %3968 = vmatpush.bf16.msra.mxu0 %v3856
      %3969 = vmatpush.bf16.msra.mxu0 %v3855
      %3970 = vmatpush.bf16.msra.mxu0 %v3854
      %3971 = vmatpush.bf16.msra.mxu0 %v3853
      %3972 = vmatmul.bf16.gmra.mxu0 %v3870
      %v3973 = vpop.f32.mrf.mxu0
      %v3974 = vadd.f32 %v3885, %v3973
      %v3975 = vpop.f32.mrf.mxu0
      %v3976 = vadd.f32 %v3887, %v3975
      %3977 = vmatmul.bf16.gmra.mxu0 %v3873
      %v3978 = vpop.f32.mrf.mxu0
      %v3979 = vadd.f32 %v3890, %v3978
      %v3980 = vpop.f32.mrf.mxu0
      %v3981 = vadd.f32 %v3892, %v3980
      %3982 = vmatmul.bf16.gmra.mxu0 %v3554
      %v3983 = vpop.f32.mrf.mxu0
      %v3984 = vadd.f32 %v3895, %v3983
      %v3985 = vpop.f32.mrf.mxu0
      %v3986 = vadd.f32 %v3897, %v3985
      %3987 = vmatmul.bf16.gmra.mxu0 %v3557
      %v3988 = vpop.f32.mrf.mxu0
      %v3989 = vadd.f32 %v3900, %v3988
      %v3990 = vpop.f32.mrf.mxu0
      %v3991 = vadd.f32 %v3902, %v3990
      %3992 = vmatmul.bf16.gmra.mxu0 %v3560
      %v3993 = vpop.f32.mrf.mxu0
      %v3994 = vadd.f32 %v3905, %v3993
      %v3995 = vpop.f32.mrf.mxu0
      %v3996 = vadd.f32 %v3907, %v3995
      %3997 = vmatmul.bf16.gmra.mxu0 %v3563
      %v3998 = vpop.f32.mrf.mxu0
      %v3999 = vadd.f32 %v3910, %v3998
      %v4000 = vpop.f32.mrf.mxu0
      %v4001 = vadd.f32 %v3912, %v4000
      %4002 = vmatmul.bf16.gmra.mxu0 %v3566
      %v4003 = vpop.f32.mrf.mxu0
      %v4004 = vadd.f32 %v3915, %v4003
      %v4005 = vpop.f32.mrf.mxu0
      %v4006 = vadd.f32 %v3917, %v4005
      %4007 = vmatmul.bf16.gmra.mxu0 %v3569
      %v4008 = vpop.f32.mrf.mxu0
      %v4009 = vadd.f32 %v3920, %v4008
      %v4010 = vpop.f32.mrf.mxu0
      %v4011 = vadd.f32 %v3922, %v4010
      %4012 = vmatmul.bf16.gmra.mxu0 %v3572
      %v4013 = vpop.f32.mrf.mxu0
      %v4014 = vadd.f32 %v3925, %v4013
      %v4015 = vpop.f32.mrf.mxu0
      %v4016 = vadd.f32 %v3927, %v4015
      %4017 = vmatmul.bf16.gmra.mxu0 %v3575
      %v4018 = vpop.f32.mrf.mxu0
      %v4019 = vadd.f32 %v3930, %v4018
      %v4020 = vpop.f32.mrf.mxu0
      %v4021 = vadd.f32 %v3932, %v4020
      %4022 = vmatmul.bf16.gmra.mxu0 %v3578
      %v4023 = vpop.f32.mrf.mxu0
      %v4024 = vadd.f32 %v3935, %v4023
      %v4025 = vpop.f32.mrf.mxu0
      %v4026 = vadd.f32 %v3937, %v4025
      %4027 = vmatmul.bf16.gmra.mxu0 %v3581
      %v4028 = vpop.f32.mrf.mxu0
      %v4029 = vadd.f32 %v3940, %v4028
      %v4030 = vpop.f32.mrf.mxu0
      %v4031 = vadd.f32 %v3942, %v4030
      %4032 = vmatmul.bf16.gmra.mxu0 %v3584
      %v4033 = vpop.f32.mrf.mxu0
      %v4034 = vadd.f32 %v3945, %v4033
      %v4035 = vpop.f32.mrf.mxu0
      %v4036 = vadd.f32 %v3947, %v4035
      %4037 = vmatmul.bf16.gmra.mxu0 %v3587
      %v4038 = vpop.f32.mrf.mxu0
      %v4039 = vadd.f32 %v3950, %v4038
      %v4040 = vpop.f32.mrf.mxu0
      %v4041 = vadd.f32 %v3952, %v4040
      %4042 = vmatmul.bf16.gmra.mxu0 %v3590
      %v4043 = vpop.f32.mrf.mxu0
      %v4044 = vadd.f32 %v3955, %v4043
      %v4045 = vpop.f32.mrf.mxu0
      %v4046 = vadd.f32 %v3957, %v4045
      %4047 = vmatmul.bf16.gmra.mxu0 %v3593
      %v4048 = vpop.f32.mrf.mxu0
      %v4049 = vadd.f32 %v3960, %v4048
      %v4050 = vpop.f32.mrf.mxu0
      %v4051 = vadd.f32 %v3962, %v4050
      %4052 = vdwg.mxu0
      %v4053 = vld [vmem:[#allocation2 + $0x140] sm:$0xff]
      %v4054 = vld [vmem:[#allocation2 + $0x148] sm:$0xff]
      %v4055 = vld [vmem:[#allocation2 + $0x150] sm:$0xff]
      %v4056 = vld [vmem:[#allocation2 + $0x158] sm:$0xff]
      %v4057 = vld [vmem:[#allocation2 + $0x160] sm:$0xff]
      %v4058 = vld [vmem:[#allocation2 + $0x168] sm:$0xff]
      %v4059 = vld [vmem:[#allocation2 + $0x170] sm:$0xff]
      %v4060 = vld [vmem:[#allocation2 + $0x178] sm:$0xff]
      %v4061 = vld [vmem:[#allocation2 + $0x180] sm:$0xff]
      %v4062 = vld [vmem:[#allocation2 + $0x188] sm:$0xff]
      %v4063 = vld [vmem:[#allocation2 + $0x190] sm:$0xff]
      %v4064 = vld [vmem:[#allocation2 + $0x198] sm:$0xff]
      %v4065 = vld [vmem:[#allocation2 + $0x1a0] sm:$0xff]
      %v4066 = vld [vmem:[#allocation2 + $0x1a8] sm:$0xff]
      %v4067 = vld [vmem:[#allocation2 + $0x1b0] sm:$0xff]
      %v4068 = vld [vmem:[#allocation2 + $0x1b8] sm:$0xff]
      %v4069 = vld [vmem:[#allocation2 + $0x1c0] sm:$0xff]
      %v4070 = vld [vmem:[#allocation2 + $0x1c8] sm:$0xff]
      %v4071 = vld [vmem:[#allocation2 + $0x1d0] sm:$0xff]
      %v4072 = vld [vmem:[#allocation2 + $0x1d8] sm:$0xff]
      %v4073 = vld [vmem:[#allocation2 + $0x1e0] sm:$0xff]
      %v4074 = vld [vmem:[#allocation2 + $0x1e8] sm:$0xff]
      %v4075 = vld [vmem:[#allocation2 + $0x1f0] sm:$0xff]
      %v4076 = vld [vmem:[#allocation2 + $0x1f8] sm:$0xff]
      %v4077 = vld [vmem:[#allocation2 + $0x200] sm:$0xff]
      %v4078 = vld [vmem:[#allocation2 + $0x208] sm:$0xff]
      %v4079 = vld [vmem:[#allocation2 + $0x210] sm:$0xff]
      %v4080 = vld [vmem:[#allocation2 + $0x218] sm:$0xff]
      %v4081 = vld [vmem:[#allocation2 + $0x220] sm:$0xff]
      %v4082 = vld [vmem:[#allocation2 + $0x228] sm:$0xff]
      %v4083 = vld [vmem:[#allocation2 + $0x230] sm:$0xff]
      %v4084 = vld [vmem:[#allocation2 + $0x238] sm:$0xff]
      %v4085 = vld [vmem:[%s2319] sm:$0xf]
      %v4086 = vld [vmem:[%s2319 + $0x4] sm:$0xf]
      %v4087 = vld [vmem:[%s2319 + $0x8] sm:$0xf]
      %v4088 = vld [vmem:[%s2319 + $0xc] sm:$0xf]
      %v4089 = vld [vmem:[%s2319 + $0x10] sm:$0xf]
      %v4090 = vld [vmem:[%s2319 + $0x14] sm:$0xf]
      %v4091 = vld [vmem:[%s2319 + $0x18] sm:$0xf]
      %v4092 = vld [vmem:[%s2319 + $0x1c] sm:$0xf]
      %v4093 = vld [vmem:[%s2319 + $0x20] sm:$0xf]
      %v4094 = vld [vmem:[%s2319 + $0x24] sm:$0xf]
      %v4095 = vld [vmem:[%s2319 + $0x28] sm:$0xf]
      %v4096 = vld [vmem:[%s2319 + $0x2c] sm:$0xf]
      %v4097 = vld [vmem:[%s2319 + $0x30] sm:$0xf]
      %v4098 = vld [vmem:[%s2319 + $0x34] sm:$0xf]
      %v4099 = vld [vmem:[%s2319 + $0x38] sm:$0xf]
      %v4100 = vld [vmem:[%s2319 + $0x3c] sm:$0xf]
      %v4101 = vld [vmem:[%s2319 + $0x40] sm:$0xf]
      %v4102 = vld [vmem:[%s2319 + $0x44] sm:$0xf]
      %v4103 = vld [vmem:[%s2319 + $0x48] sm:$0xf]
      %v4104 = vld [vmem:[%s2319 + $0x4c] sm:$0xf]
      %v4105 = vld [vmem:[%s2319 + $0x50] sm:$0xf]
      %v4106 = vld [vmem:[%s2319 + $0x54] sm:$0xf]
      %v4107 = vld [vmem:[%s2319 + $0x58] sm:$0xf]
      %v4108 = vld [vmem:[%s2319 + $0x5c] sm:$0xf]
      %v4141 = vunpack.c.l.b16 %v4053
      %v4142 = vunpack.c.h.b16 %v4053
      %v4143 = vunpack.c.l.b16 %v4054
      %v4144 = vunpack.c.h.b16 %v4054
      %v4145 = vunpack.c.l.b16 %v4055
      %v4146 = vunpack.c.h.b16 %v4055
      %v4147 = vunpack.c.l.b16 %v4056
      %v4148 = vunpack.c.h.b16 %v4056
      %v4149 = vunpack.c.l.b16 %v4057
      %v4150 = vunpack.c.h.b16 %v4057
      %v4151 = vunpack.c.l.b16 %v4058
      %v4152 = vunpack.c.h.b16 %v4058
      %v4153 = vunpack.c.l.b16 %v4059
      %v4154 = vunpack.c.h.b16 %v4059
      %v4155 = vunpack.c.l.b16 %v4060
      %v4156 = vunpack.c.h.b16 %v4060
      %v4157 = vunpack.c.l.b16 %v4061
      %v4158 = vunpack.c.h.b16 %v4061
      %v4159 = vunpack.c.l.b16 %v4062
      %v4160 = vunpack.c.h.b16 %v4062
      %v4161 = vunpack.c.l.b16 %v4063
      %v4162 = vunpack.c.h.b16 %v4063
      %v4163 = vunpack.c.l.b16 %v4064
      %v4164 = vunpack.c.h.b16 %v4064
      %v4165 = vunpack.c.l.b16 %v4065
      %v4166 = vunpack.c.h.b16 %v4065
      %v4167 = vunpack.c.l.b16 %v4066
      %v4168 = vunpack.c.h.b16 %v4066
      %v4169 = vunpack.c.l.b16 %v4067
      %v4170 = vunpack.c.h.b16 %v4067
      %v4171 = vunpack.c.l.b16 %v4068
      %v4172 = vunpack.c.h.b16 %v4068
      %v4173 = vunpack.c.l.b16 %v4069
      %v4174 = vunpack.c.h.b16 %v4069
      %v4175 = vunpack.c.l.b16 %v4070
      %v4176 = vunpack.c.h.b16 %v4070
      %v4177 = vunpack.c.l.b16 %v4071
      %v4178 = vunpack.c.h.b16 %v4071
      %v4179 = vunpack.c.l.b16 %v4072
      %v4180 = vunpack.c.h.b16 %v4072
      %v4181 = vunpack.c.l.b16 %v4073
      %v4182 = vunpack.c.h.b16 %v4073
      %v4183 = vunpack.c.l.b16 %v4074
      %v4184 = vunpack.c.h.b16 %v4074
      %v4185 = vunpack.c.l.b16 %v4075
      %v4186 = vunpack.c.h.b16 %v4075
      %v4187 = vunpack.c.l.b16 %v4076
      %v4188 = vunpack.c.h.b16 %v4076
      %v4189 = vunpack.c.l.b16 %v4077
      %v4190 = vunpack.c.h.b16 %v4077
      %v4191 = vunpack.c.l.b16 %v4078
      %v4192 = vunpack.c.h.b16 %v4078
      %v4193 = vunpack.c.l.b16 %v4079
      %v4194 = vunpack.c.h.b16 %v4079
      %v4195 = vunpack.c.l.b16 %v4080
      %v4196 = vunpack.c.h.b16 %v4080
      %v4197 = vunpack.c.l.b16 %v4081
      %v4198 = vunpack.c.h.b16 %v4081
      %v4199 = vunpack.c.l.b16 %v4082
      %v4200 = vunpack.c.h.b16 %v4082
      %v4201 = vunpack.c.l.b16 %v4083
      %v4202 = vunpack.c.h.b16 %v4083
      %v4203 = vunpack.c.l.b16 %v4084
      %v4204 = vunpack.c.h.b16 %v4084
      %v4205 = vpack.c.b16 %v4143, %v4141
      %v4206 = vpack.c.b16 %v4144, %v4142
      %v4207 = vpack.c.b16 %v4147, %v4145
      %v4208 = vpack.c.b16 %v4148, %v4146
      %v4209 = vpack.c.b16 %v4151, %v4149
      %v4210 = vpack.c.b16 %v4152, %v4150
      %v4211 = vpack.c.b16 %v4155, %v4153
      %v4212 = vpack.c.b16 %v4156, %v4154
      %v4213 = vpack.c.b16 %v4159, %v4157
      %v4214 = vpack.c.b16 %v4160, %v4158
      %v4215 = vpack.c.b16 %v4163, %v4161
      %v4216 = vpack.c.b16 %v4164, %v4162
      %v4217 = vpack.c.b16 %v4167, %v4165
      %v4218 = vpack.c.b16 %v4168, %v4166
      %v4219 = vpack.c.b16 %v4171, %v4169
      %v4220 = vpack.c.b16 %v4172, %v4170
      %v4221 = vpack.c.b16 %v4175, %v4173
      %v4222 = vpack.c.b16 %v4176, %v4174
      %v4223 = vpack.c.b16 %v4179, %v4177
      %v4224 = vpack.c.b16 %v4180, %v4178
      %v4225 = vpack.c.b16 %v4183, %v4181
      %v4226 = vpack.c.b16 %v4184, %v4182
      %v4227 = vpack.c.b16 %v4187, %v4185
      %v4228 = vpack.c.b16 %v4188, %v4186
      %v4229 = vpack.c.b16 %v4191, %v4189
      %v4230 = vpack.c.b16 %v4192, %v4190
      %v4231 = vpack.c.b16 %v4195, %v4193
      %v4232 = vpack.c.b16 %v4196, %v4194
      %v4233 = vpack.c.b16 %v4199, %v4197
      %v4234 = vpack.c.b16 %v4200, %v4198
      %v4235 = vpack.c.b16 %v4203, %v4201
      %v4236 = vpack.c.b16 %v4204, %v4202
      %v4277 = vunpack.c.l.b16 %v4085
      %v4278 = vunpack.c.l.b16 %v4086
      %v4279 = vunpack.c.l.b16 %v4087
      %v4280 = vunpack.c.l.b16 %v4088
      %v4281 = vunpack.c.l.b16 %v4089
      %v4282 = vunpack.c.l.b16 %v4090
      %v4283 = vunpack.c.l.b16 %v4091
      %v4284 = vunpack.c.l.b16 %v4092
      %v4285 = vunpack.c.l.b16 %v4093
      %v4286 = vunpack.c.l.b16 %v4094
      %v4287 = vunpack.c.l.b16 %v4095
      %v4288 = vunpack.c.l.b16 %v4096
      %v4289 = vunpack.c.l.b16 %v4097
      %v4290 = vunpack.c.l.b16 %v4098
      %v4291 = vunpack.c.l.b16 %v4099
      %v4292 = vunpack.c.l.b16 %v4100
      %v4293 = vunpack.c.l.b16 %v4101
      %v4294 = vunpack.c.l.b16 %v4102
      %v4295 = vunpack.c.l.b16 %v4103
      %v4296 = vunpack.c.l.b16 %v4104
      %v4297 = vunpack.c.l.b16 %v4105
      %v4298 = vunpack.c.l.b16 %v4106
      %v4299 = vunpack.c.l.b16 %v4107
      %v4300 = vunpack.c.l.b16 %v4108
      %v4301 = vpack.c.b16 %v4278, %v4277
      %v4302 = vpack.c.b16 %v4280, %v4279
      %v4303 = vpack.c.b16 %v4282, %v4281
      %v4304 = vpack.c.b16 %v4284, %v4283
      %v4305 = vpack.c.b16 %v4286, %v4285
      %v4306 = vpack.c.b16 %v4288, %v4287
      %v4307 = vpack.c.b16 %v4290, %v4289
      %v4308 = vpack.c.b16 %v4292, %v4291
      %v4309 = vpack.c.b16 %v4294, %v4293
      %v4310 = vpack.c.b16 %v4296, %v4295
      %v4311 = vpack.c.b16 %v4298, %v4297
      %v4312 = vpack.c.b16 %v4300, %v4299
      %v4326 = vsel %vm1786, %v4206, 0
      %v4329 = vsel %vm1786, %v4208, 0
      %v4332 = vsel %vm1786, %v4210, 0
      %v4335 = vsel %vm1786, %v4212, 0
      %v4338 = vsel %vm1786, %v4214, 0
      %v4341 = vsel %vm1786, %v4216, 0
      %v4344 = vsel %vm1786, %v4218, 0
      %v4347 = vsel %vm1786, %v4220, 0
      %v4350 = vsel %vm1786, %v4222, 0
      %v4353 = vsel %vm1786, %v4224, 0
      %v4356 = vsel %vm1786, %v4226, 0
      %v4359 = vsel %vm1786, %v4228, 0
      %v4362 = vsel %vm1786, %v4230, 0
      %v4365 = vsel %vm1786, %v4232, 0
      %v4368 = vsel %vm1786, %v4234, 0
      %v4371 = vsel %vm1786, %v4236, 0
      %4373 = vmatpush.bf16.msra.mxu0 %v4308
      %4374 = vmatpush.bf16.msra.mxu0 %v4307
      %4375 = vmatpush.bf16.msra.mxu0 %v4306
      %4376 = vmatpush.bf16.msra.mxu0 %v4305
      %4377 = vmatpush.bf16.msra.mxu0 %v4304
      %4378 = vmatpush.bf16.msra.mxu0 %v4303
      %4379 = vmatpush.bf16.msra.mxu0 %v4302
      %4380 = vmatpush.bf16.msra.mxu0 %v4301
      %4381 = vmatmul.bf16.gmra.mxu0 %v4205
      %v4382 = vpop.f32.mrf.mxu0
      %v4383 = vadd.f32 0.0, %v4382
      %v4384 = vpop.f32.mrf.mxu0
      %v4385 = vadd.f32 0.0, %v4384
      %4386 = vmatmul.bf16.gmra.mxu0 %v4207
      %v4387 = vpop.f32.mrf.mxu0
      %v4388 = vadd.f32 0.0, %v4387
      %v4389 = vpop.f32.mrf.mxu0
      %v4390 = vadd.f32 0.0, %v4389
      %4391 = vmatmul.bf16.gmra.mxu0 %v4209
      %v4392 = vpop.f32.mrf.mxu0
      %v4393 = vadd.f32 0.0, %v4392
      %v4394 = vpop.f32.mrf.mxu0
      %v4395 = vadd.f32 0.0, %v4394
      %4396 = vmatmul.bf16.gmra.mxu0 %v4211
      %v4397 = vpop.f32.mrf.mxu0
      %v4398 = vadd.f32 0.0, %v4397
      %v4399 = vpop.f32.mrf.mxu0
      %v4400 = vadd.f32 0.0, %v4399
      %4401 = vmatmul.bf16.gmra.mxu0 %v4213
      %v4402 = vpop.f32.mrf.mxu0
      %v4403 = vadd.f32 0.0, %v4402
      %v4404 = vpop.f32.mrf.mxu0
      %v4405 = vadd.f32 0.0, %v4404
      %4406 = vmatmul.bf16.gmra.mxu0 %v4215
      %v4407 = vpop.f32.mrf.mxu0
      %v4408 = vadd.f32 0.0, %v4407
      %v4409 = vpop.f32.mrf.mxu0
      %v4410 = vadd.f32 0.0, %v4409
      %4411 = vmatmul.bf16.gmra.mxu0 %v4217
      %v4412 = vpop.f32.mrf.mxu0
      %v4413 = vadd.f32 0.0, %v4412
      %v4414 = vpop.f32.mrf.mxu0
      %v4415 = vadd.f32 0.0, %v4414
      %4416 = vmatmul.bf16.gmra.mxu0 %v4219
      %v4417 = vpop.f32.mrf.mxu0
      %v4418 = vadd.f32 0.0, %v4417
      %v4419 = vpop.f32.mrf.mxu0
      %v4420 = vadd.f32 0.0, %v4419
      %4421 = vmatmul.bf16.gmra.mxu0 %v4221
      %v4422 = vpop.f32.mrf.mxu0
      %v4423 = vadd.f32 0.0, %v4422
      %v4424 = vpop.f32.mrf.mxu0
      %v4425 = vadd.f32 0.0, %v4424
      %4426 = vmatmul.bf16.gmra.mxu0 %v4223
      %v4427 = vpop.f32.mrf.mxu0
      %v4428 = vadd.f32 0.0, %v4427
      %v4429 = vpop.f32.mrf.mxu0
      %v4430 = vadd.f32 0.0, %v4429
      %4431 = vmatmul.bf16.gmra.mxu0 %v4225
      %v4432 = vpop.f32.mrf.mxu0
      %v4433 = vadd.f32 0.0, %v4432
      %v4434 = vpop.f32.mrf.mxu0
      %v4435 = vadd.f32 0.0, %v4434
      %4436 = vmatmul.bf16.gmra.mxu0 %v4227
      %v4437 = vpop.f32.mrf.mxu0
      %v4438 = vadd.f32 0.0, %v4437
      %v4439 = vpop.f32.mrf.mxu0
      %v4440 = vadd.f32 0.0, %v4439
      %4441 = vmatmul.bf16.gmra.mxu0 %v4229
      %v4442 = vpop.f32.mrf.mxu0
      %v4443 = vadd.f32 0.0, %v4442
      %v4444 = vpop.f32.mrf.mxu0
      %v4445 = vadd.f32 0.0, %v4444
      %4446 = vmatmul.bf16.gmra.mxu0 %v4231
      %v4447 = vpop.f32.mrf.mxu0
      %v4448 = vadd.f32 0.0, %v4447
      %v4449 = vpop.f32.mrf.mxu0
      %v4450 = vadd.f32 0.0, %v4449
      %4451 = vmatmul.bf16.gmra.mxu0 %v4233
      %v4452 = vpop.f32.mrf.mxu0
      %v4453 = vadd.f32 0.0, %v4452
      %v4454 = vpop.f32.mrf.mxu0
      %v4455 = vadd.f32 0.0, %v4454
      %4456 = vmatmul.bf16.gmra.mxu0 %v4235
      %v4457 = vpop.f32.mrf.mxu0
      %v4458 = vadd.f32 0.0, %v4457
      %v4459 = vpop.f32.mrf.mxu0
      %v4460 = vadd.f32 0.0, %v4459
      %4461 = vdwg.mxu0
      %4462 = vmatpush.bf16.msra.mxu0 0
      %4463 = vmatpush.bf16.msra.mxu0 0
      %4464 = vmatpush.bf16.msra.mxu0 0
      %4465 = vmatpush.bf16.msra.mxu0 0
      %4466 = vmatpush.bf16.msra.mxu0 %v4312
      %4467 = vmatpush.bf16.msra.mxu0 %v4311
      %4468 = vmatpush.bf16.msra.mxu0 %v4310
      %4469 = vmatpush.bf16.msra.mxu0 %v4309
      %4470 = vmatmul.bf16.gmra.mxu0 %v4326
      %v4471 = vpop.f32.mrf.mxu0
      %v4472 = vadd.f32 %v4383, %v4471
      %v4473 = vpop.f32.mrf.mxu0
      %v4474 = vadd.f32 %v4385, %v4473
      %4475 = vmatmul.bf16.gmra.mxu0 %v4329
      %v4476 = vpop.f32.mrf.mxu0
      %v4477 = vadd.f32 %v4388, %v4476
      %v4478 = vpop.f32.mrf.mxu0
      %v4479 = vadd.f32 %v4390, %v4478
      %4480 = vmatmul.bf16.gmra.mxu0 %v4332
      %v4481 = vpop.f32.mrf.mxu0
      %v4482 = vadd.f32 %v4393, %v4481
      %v4483 = vpop.f32.mrf.mxu0
      %v4484 = vadd.f32 %v4395, %v4483
      %4485 = vmatmul.bf16.gmra.mxu0 %v4335
      %v4486 = vpop.f32.mrf.mxu0
      %v4487 = vadd.f32 %v4398, %v4486
      %v4488 = vpop.f32.mrf.mxu0
      %v4489 = vadd.f32 %v4400, %v4488
      %4490 = vmatmul.bf16.gmra.mxu0 %v4338
      %v4491 = vpop.f32.mrf.mxu0
      %v4492 = vadd.f32 %v4403, %v4491
      %v4493 = vpop.f32.mrf.mxu0
      %v4494 = vadd.f32 %v4405, %v4493
      %4495 = vmatmul.bf16.gmra.mxu0 %v4341
      %v4496 = vpop.f32.mrf.mxu0
      %v4497 = vadd.f32 %v4408, %v4496
      %v4498 = vpop.f32.mrf.mxu0
      %v4499 = vadd.f32 %v4410, %v4498
      %4500 = vmatmul.bf16.gmra.mxu0 %v4344
      %v4501 = vpop.f32.mrf.mxu0
      %v4502 = vadd.f32 %v4413, %v4501
      %v4503 = vpop.f32.mrf.mxu0
      %v4504 = vadd.f32 %v4415, %v4503
      %4505 = vmatmul.bf16.gmra.mxu0 %v4347
      %v4506 = vpop.f32.mrf.mxu0
      %v4507 = vadd.f32 %v4418, %v4506
      %v4508 = vpop.f32.mrf.mxu0
      %v4509 = vadd.f32 %v4420, %v4508
      %4510 = vmatmul.bf16.gmra.mxu0 %v4350
      %v4511 = vpop.f32.mrf.mxu0
      %v4512 = vadd.f32 %v4423, %v4511
      %v4513 = vpop.f32.mrf.mxu0
      %v4514 = vadd.f32 %v4425, %v4513
      %4515 = vmatmul.bf16.gmra.mxu0 %v4353
      %v4516 = vpop.f32.mrf.mxu0
      %v4517 = vadd.f32 %v4428, %v4516
      %v4518 = vpop.f32.mrf.mxu0
      %v4519 = vadd.f32 %v4430, %v4518
      %4520 = vmatmul.bf16.gmra.mxu0 %v4356
      %v4521 = vpop.f32.mrf.mxu0
      %v4522 = vadd.f32 %v4433, %v4521
      %v4523 = vpop.f32.mrf.mxu0
      %v4524 = vadd.f32 %v4435, %v4523
      %4525 = vmatmul.bf16.gmra.mxu0 %v4359
      %v4526 = vpop.f32.mrf.mxu0
      %v4527 = vadd.f32 %v4438, %v4526
      %v4528 = vpop.f32.mrf.mxu0
      %v4529 = vadd.f32 %v4440, %v4528
      %4530 = vmatmul.bf16.gmra.mxu0 %v4362
      %v4531 = vpop.f32.mrf.mxu0
      %v4532 = vadd.f32 %v4443, %v4531
      %v4533 = vpop.f32.mrf.mxu0
      %v4534 = vadd.f32 %v4445, %v4533
      %4535 = vmatmul.bf16.gmra.mxu0 %v4365
      %v4536 = vpop.f32.mrf.mxu0
      %v4537 = vadd.f32 %v4448, %v4536
      %v4538 = vpop.f32.mrf.mxu0
      %v4539 = vadd.f32 %v4450, %v4538
      %4540 = vmatmul.bf16.gmra.mxu0 %v4368
      %v4541 = vpop.f32.mrf.mxu0
      %v4542 = vadd.f32 %v4453, %v4541
      %v4543 = vpop.f32.mrf.mxu0
      %v4544 = vadd.f32 %v4455, %v4543
      %4545 = vmatmul.bf16.gmra.mxu0 %v4371
      %v4546 = vpop.f32.mrf.mxu0
      %v4547 = vadd.f32 %v4458, %v4546
      %v4548 = vpop.f32.mrf.mxu0
      %v4549 = vadd.f32 %v4460, %v4548
      %4550 = vdwg.mxu0
      %v4551 = vadd.f32 %v3974, %v4472
      %v4552 = vadd.f32 %v3976, %v4474
      %v4553 = vadd.f32 %v3979, %v4477
      %v4554 = vadd.f32 %v3981, %v4479
      %v4555 = vadd.f32 %v3984, %v4482
      %v4556 = vadd.f32 %v3986, %v4484
      %v4557 = vadd.f32 %v3989, %v4487
      %v4558 = vadd.f32 %v3991, %v4489
      %v4559 = vadd.f32 %v3994, %v4492
      %v4560 = vadd.f32 %v3996, %v4494
      %v4561 = vadd.f32 %v3999, %v4497
      %v4562 = vadd.f32 %v4001, %v4499
      %v4563 = vadd.f32 %v4004, %v4502
      %v4564 = vadd.f32 %v4006, %v4504
      %v4565 = vadd.f32 %v4009, %v4507
      %v4566 = vadd.f32 %v4011, %v4509
      %v4567 = vadd.f32 %v4014, %v4512
      %v4568 = vadd.f32 %v4016, %v4514
      %v4569 = vadd.f32 %v4019, %v4517
      %v4570 = vadd.f32 %v4021, %v4519
      %v4571 = vadd.f32 %v4024, %v4522
      %v4572 = vadd.f32 %v4026, %v4524
      %v4573 = vadd.f32 %v4029, %v4527
      %v4574 = vadd.f32 %v4031, %v4529
      %v4575 = vadd.f32 %v4034, %v4532
      %v4576 = vadd.f32 %v4036, %v4534
      %v4577 = vadd.f32 %v4039, %v4537
      %v4578 = vadd.f32 %v4041, %v4539
      %v4579 = vadd.f32 %v4044, %v4542
      %v4580 = vadd.f32 %v4046, %v4544
      %v4581 = vadd.f32 %v4049, %v4547
      %v4582 = vadd.f32 %v4051, %v4549
      %v4583 = vld [vmem:[%s4] sm:$0xff]
      %v4584 = vld [vmem:[%s4 + $0x8] sm:$0xff]
      %v4585 = vld [vmem:[%s4 + $0x10] sm:$0xff]
      %v4586 = vld [vmem:[%s4 + $0x18] sm:$0xff]
      %v4587 = vld [vmem:[%s4 + $0x20] sm:$0xff]
      %v4588 = vld [vmem:[%s4 + $0x28] sm:$0xff]
      %v4589 = vld [vmem:[%s4 + $0x30] sm:$0xff]
      %v4590 = vld [vmem:[%s4 + $0x38] sm:$0xff]
      %v4591 = vld [vmem:[%s4 + $0x40] sm:$0xff]
      %v4592 = vld [vmem:[%s4 + $0x48] sm:$0xff]
      %v4593 = vld [vmem:[%s4 + $0x50] sm:$0xff]
      %v4594 = vld [vmem:[%s4 + $0x58] sm:$0xff]
      %v4595 = vld [vmem:[%s4 + $0x60] sm:$0xff]
      %v4596 = vld [vmem:[%s4 + $0x68] sm:$0xff]
      %v4597 = vld [vmem:[%s4 + $0x70] sm:$0xff]
      %v4598 = vld [vmem:[%s4 + $0x78] sm:$0xff]
      %v4599 = vld [vmem:[%s4 + $0x80] sm:$0xff]
      %v4600 = vld [vmem:[%s4 + $0x88] sm:$0xff]
      %v4601 = vld [vmem:[%s4 + $0x90] sm:$0xff]
      %v4602 = vld [vmem:[%s4 + $0x98] sm:$0xff]
      %v4603 = vld [vmem:[%s4 + $0xa0] sm:$0xff]
      %v4604 = vld [vmem:[%s4 + $0xa8] sm:$0xff]
      %v4605 = vld [vmem:[%s4 + $0xb0] sm:$0xff]
      %v4606 = vld [vmem:[%s4 + $0xb8] sm:$0xff]
      %v4607 = vld [vmem:[%s4 + $0xc0] sm:$0xff]
      %v4608 = vld [vmem:[%s4 + $0xc8] sm:$0xff]
      %v4609 = vld [vmem:[%s4 + $0xd0] sm:$0xff]
      %v4610 = vld [vmem:[%s4 + $0xd8] sm:$0xff]
      %v4611 = vld [vmem:[%s4 + $0xe0] sm:$0xff]
      %v4612 = vld [vmem:[%s4 + $0xe8] sm:$0xff]
      %v4613 = vld [vmem:[%s4 + $0xf0] sm:$0xff]
      %v4614 = vld [vmem:[%s4 + $0xf8] sm:$0xff]
      %4616 = vset.pattern.permute.xlu0 0
      %4617 = vperm.xlu0 %4616, %v4583
      %v4618 = vpop.permute.xlu0 %4617
      %4621 = vset.pattern.permute.xlu0 0
      %4622 = vperm.xlu0 %4621, %v4584
      %v4623 = vpop.permute.xlu0 %4622
      %4626 = vset.pattern.permute.xlu0 0
      %4627 = vperm.xlu0 %4626, %v4585
      %v4628 = vpop.permute.xlu0 %4627
      %4631 = vset.pattern.permute.xlu0 0
      %4632 = vperm.xlu0 %4631, %v4586
      %v4633 = vpop.permute.xlu0 %4632
      %4636 = vset.pattern.permute.xlu0 0
      %4637 = vperm.xlu0 %4636, %v4587
      %v4638 = vpop.permute.xlu0 %4637
      %4641 = vset.pattern.permute.xlu0 0
      %4642 = vperm.xlu0 %4641, %v4588
      %v4643 = vpop.permute.xlu0 %4642
      %4646 = vset.pattern.permute.xlu0 0
      %4647 = vperm.xlu0 %4646, %v4589
      %v4648 = vpop.permute.xlu0 %4647
      %4651 = vset.pattern.permute.xlu0 0
      %4652 = vperm.xlu0 %4651, %v4590
      %v4653 = vpop.permute.xlu0 %4652
      %4656 = vset.pattern.permute.xlu0 0
      %4657 = vperm.xlu0 %4656, %v4591
      %v4658 = vpop.permute.xlu0 %4657
      %4661 = vset.pattern.permute.xlu0 0
      %4662 = vperm.xlu0 %4661, %v4592
      %v4663 = vpop.permute.xlu0 %4662
      %4666 = vset.pattern.permute.xlu0 0
      %4667 = vperm.xlu0 %4666, %v4593
      %v4668 = vpop.permute.xlu0 %4667
      %4671 = vset.pattern.permute.xlu0 0
      %4672 = vperm.xlu0 %4671, %v4594
      %v4673 = vpop.permute.xlu0 %4672
      %4676 = vset.pattern.permute.xlu0 0
      %4677 = vperm.xlu0 %4676, %v4595
      %v4678 = vpop.permute.xlu0 %4677
      %4681 = vset.pattern.permute.xlu0 0
      %4682 = vperm.xlu0 %4681, %v4596
      %v4683 = vpop.permute.xlu0 %4682
      %4686 = vset.pattern.permute.xlu0 0
      %4687 = vperm.xlu0 %4686, %v4597
      %v4688 = vpop.permute.xlu0 %4687
      %4691 = vset.pattern.permute.xlu0 0
      %4692 = vperm.xlu0 %4691, %v4598
      %v4693 = vpop.permute.xlu0 %4692
      %4696 = vset.pattern.permute.xlu0 0
      %4697 = vperm.xlu0 %4696, %v4599
      %v4698 = vpop.permute.xlu0 %4697
      %4701 = vset.pattern.permute.xlu0 0
      %4702 = vperm.xlu0 %4701, %v4600
      %v4703 = vpop.permute.xlu0 %4702
      %4706 = vset.pattern.permute.xlu0 0
      %4707 = vperm.xlu0 %4706, %v4601
      %v4708 = vpop.permute.xlu0 %4707
      %4711 = vset.pattern.permute.xlu0 0
      %4712 = vperm.xlu0 %4711, %v4602
      %v4713 = vpop.permute.xlu0 %4712
      %4716 = vset.pattern.permute.xlu0 0
      %4717 = vperm.xlu0 %4716, %v4603
      %v4718 = vpop.permute.xlu0 %4717
      %4721 = vset.pattern.permute.xlu0 0
      %4722 = vperm.xlu0 %4721, %v4604
      %v4723 = vpop.permute.xlu0 %4722
      %4726 = vset.pattern.permute.xlu0 0
      %4727 = vperm.xlu0 %4726, %v4605
      %v4728 = vpop.permute.xlu0 %4727
      %4731 = vset.pattern.permute.xlu0 0
      %4732 = vperm.xlu0 %4731, %v4606
      %v4733 = vpop.permute.xlu0 %4732
      %4736 = vset.pattern.permute.xlu0 0
      %4737 = vperm.xlu0 %4736, %v4607
      %v4738 = vpop.permute.xlu0 %4737
      %4741 = vset.pattern.permute.xlu0 0
      %4742 = vperm.xlu0 %4741, %v4608
      %v4743 = vpop.permute.xlu0 %4742
      %4746 = vset.pattern.permute.xlu0 0
      %4747 = vperm.xlu0 %4746, %v4609
      %v4748 = vpop.permute.xlu0 %4747
      %4751 = vset.pattern.permute.xlu0 0
      %4752 = vperm.xlu0 %4751, %v4610
      %v4753 = vpop.permute.xlu0 %4752
      %4756 = vset.pattern.permute.xlu0 0
      %4757 = vperm.xlu0 %4756, %v4611
      %v4758 = vpop.permute.xlu0 %4757
      %4761 = vset.pattern.permute.xlu0 0
      %4762 = vperm.xlu0 %4761, %v4612
      %v4763 = vpop.permute.xlu0 %4762
      %4766 = vset.pattern.permute.xlu0 0
      %4767 = vperm.xlu0 %4766, %v4613
      %v4768 = vpop.permute.xlu0 %4767
      %4771 = vset.pattern.permute.xlu0 0
      %4772 = vperm.xlu0 %4771, %v4614
      %v4773 = vpop.permute.xlu0 %4772
      %v4775 = vmul.f32 %v4551, %v4618
      %v4776 = vmul.f32 %v4552, %v4623
      %v4777 = vmul.f32 %v4553, %v4628
      %v4778 = vmul.f32 %v4554, %v4633
      %v4779 = vmul.f32 %v4555, %v4638
      %v4780 = vmul.f32 %v4556, %v4643
      %v4781 = vmul.f32 %v4557, %v4648
      %v4782 = vmul.f32 %v4558, %v4653
      %v4783 = vmul.f32 %v4559, %v4658
      %v4784 = vmul.f32 %v4560, %v4663
      %v4785 = vmul.f32 %v4561, %v4668
      %v4786 = vmul.f32 %v4562, %v4673
      %v4787 = vmul.f32 %v4563, %v4678
      %v4788 = vmul.f32 %v4564, %v4683
      %v4789 = vmul.f32 %v4565, %v4688
      %v4790 = vmul.f32 %v4566, %v4693
      %v4791 = vmul.f32 %v4567, %v4698
      %v4792 = vmul.f32 %v4568, %v4703
      %v4793 = vmul.f32 %v4569, %v4708
      %v4794 = vmul.f32 %v4570, %v4713
      %v4795 = vmul.f32 %v4571, %v4718
      %v4796 = vmul.f32 %v4572, %v4723
      %v4797 = vmul.f32 %v4573, %v4728
      %v4798 = vmul.f32 %v4574, %v4733
      %v4799 = vmul.f32 %v4575, %v4738
      %v4800 = vmul.f32 %v4576, %v4743
      %v4801 = vmul.f32 %v4577, %v4748
      %v4802 = vmul.f32 %v4578, %v4753
      %v4803 = vmul.f32 %v4579, %v4758
      %v4804 = vmul.f32 %v4580, %v4763
      %v4805 = vmul.f32 %v4581, %v4768
      %v4806 = vmul.f32 %v4582, %v4773
      %v4807 = vsel %vm1786, %v4775, 0.0
      %v4808 = vsel %vm1786, %v4776, 0.0
      %v4809 = vadd.f32 %v4807, %v4808
      %v4810 = vsel %vm1786, %v4777, 0.0
      %v4811 = vadd.f32 %v4809, %v4810
      %v4812 = vsel %vm1786, %v4778, 0.0
      %v4813 = vadd.f32 %v4811, %v4812
      %v4814 = vsel %vm1786, %v4779, 0.0
      %v4815 = vadd.f32 %v4813, %v4814
      %v4816 = vsel %vm1786, %v4780, 0.0
      %v4817 = vadd.f32 %v4815, %v4816
      %v4818 = vsel %vm1786, %v4781, 0.0
      %v4819 = vadd.f32 %v4817, %v4818
      %v4820 = vsel %vm1786, %v4782, 0.0
      %v4821 = vadd.f32 %v4819, %v4820
      %v4822 = vsel %vm1786, %v4783, 0.0
      %v4823 = vadd.f32 %v4821, %v4822
      %v4824 = vsel %vm1786, %v4784, 0.0
      %v4825 = vadd.f32 %v4823, %v4824
      %v4826 = vsel %vm1786, %v4785, 0.0
      %v4827 = vadd.f32 %v4825, %v4826
      %v4828 = vsel %vm1786, %v4786, 0.0
      %v4829 = vadd.f32 %v4827, %v4828
      %v4830 = vsel %vm1786, %v4787, 0.0
      %v4831 = vadd.f32 %v4829, %v4830
      %v4832 = vsel %vm1786, %v4788, 0.0
      %v4833 = vadd.f32 %v4831, %v4832
      %v4834 = vsel %vm1786, %v4789, 0.0
      %v4835 = vadd.f32 %v4833, %v4834
      %v4836 = vsel %vm1786, %v4790, 0.0
      %v4837 = vadd.f32 %v4835, %v4836
      %v4838 = vsel %vm1786, %v4791, 0.0
      %v4839 = vadd.f32 %v4837, %v4838
      %v4840 = vsel %vm1786, %v4792, 0.0
      %v4841 = vadd.f32 %v4839, %v4840
      %v4842 = vsel %vm1786, %v4793, 0.0
      %v4843 = vadd.f32 %v4841, %v4842
      %v4844 = vsel %vm1786, %v4794, 0.0
      %v4845 = vadd.f32 %v4843, %v4844
      %v4846 = vsel %vm1786, %v4795, 0.0
      %v4847 = vadd.f32 %v4845, %v4846
      %v4848 = vsel %vm1786, %v4796, 0.0
      %v4849 = vadd.f32 %v4847, %v4848
      %v4850 = vsel %vm1786, %v4797, 0.0
      %v4851 = vadd.f32 %v4849, %v4850
      %v4852 = vsel %vm1786, %v4798, 0.0
      %v4853 = vadd.f32 %v4851, %v4852
      %v4854 = vsel %vm1786, %v4799, 0.0
      %v4855 = vadd.f32 %v4853, %v4854
      %v4856 = vsel %vm1786, %v4800, 0.0
      %v4857 = vadd.f32 %v4855, %v4856
      %v4858 = vsel %vm1786, %v4801, 0.0
      %v4859 = vadd.f32 %v4857, %v4858
      %v4860 = vsel %vm1786, %v4802, 0.0
      %v4861 = vadd.f32 %v4859, %v4860
      %v4862 = vsel %vm1786, %v4803, 0.0
      %v4863 = vadd.f32 %v4861, %v4862
      %v4864 = vsel %vm1786, %v4804, 0.0
      %v4865 = vadd.f32 %v4863, %v4864
      %v4866 = vsel %vm1786, %v4805, 0.0
      %v4867 = vadd.f32 %v4865, %v4866
      %v4868 = vsel %vm1786, %v4806, 0.0
      %v4869 = vadd.f32 %v4867, %v4868
      %v4870 = vrot.slane %v4869, 4
      %v4871 = vadd.f32 %v4869, %v4870
      %v4872 = vrot.slane %v4871, 2
      %v4873 = vadd.f32 %v4871, %v4872
      %v4874 = vrot.slane %v4873, 1
      %v4875 = vadd.f32 %v4873, %v4874
      %v4876 = vadd.f32 %v3111, %v4875
      %v4877 = vmul.f32 %v4775, %v4551
      %v4878 = vmul.f32 %v4776, %v4552
      %v4879 = vmul.f32 %v4777, %v4553
      %v4880 = vmul.f32 %v4778, %v4554
      %v4881 = vmul.f32 %v4779, %v4555
      %v4882 = vmul.f32 %v4780, %v4556
      %v4883 = vmul.f32 %v4781, %v4557
      %v4884 = vmul.f32 %v4782, %v4558
      %v4885 = vmul.f32 %v4783, %v4559
      %v4886 = vmul.f32 %v4784, %v4560
      %v4887 = vmul.f32 %v4785, %v4561
      %v4888 = vmul.f32 %v4786, %v4562
      %v4889 = vmul.f32 %v4787, %v4563
      %v4890 = vmul.f32 %v4788, %v4564
      %v4891 = vmul.f32 %v4789, %v4565
      %v4892 = vmul.f32 %v4790, %v4566
      %v4893 = vmul.f32 %v4791, %v4567
      %v4894 = vmul.f32 %v4792, %v4568
      %v4895 = vmul.f32 %v4793, %v4569
      %v4896 = vmul.f32 %v4794, %v4570
      %v4897 = vmul.f32 %v4795, %v4571
      %v4898 = vmul.f32 %v4796, %v4572
      %v4899 = vmul.f32 %v4797, %v4573
      %v4900 = vmul.f32 %v4798, %v4574
      %v4901 = vmul.f32 %v4799, %v4575
      %v4902 = vmul.f32 %v4800, %v4576
      %v4903 = vmul.f32 %v4801, %v4577
      %v4904 = vmul.f32 %v4802, %v4578
      %v4905 = vmul.f32 %v4803, %v4579
      %v4906 = vmul.f32 %v4804, %v4580
      %v4907 = vmul.f32 %v4805, %v4581
      %v4908 = vmul.f32 %v4806, %v4582
      %v4909 = vsel %vm1786, %v4877, 0.0
      %v4910 = vsel %vm1786, %v4878, 0.0
      %v4911 = vadd.f32 %v4909, %v4910
      %v4912 = vsel %vm1786, %v4879, 0.0
      %v4913 = vadd.f32 %v4911, %v4912
      %v4914 = vsel %vm1786, %v4880, 0.0
      %v4915 = vadd.f32 %v4913, %v4914
      %v4916 = vsel %vm1786, %v4881, 0.0
      %v4917 = vadd.f32 %v4915, %v4916
      %v4918 = vsel %vm1786, %v4882, 0.0
      %v4919 = vadd.f32 %v4917, %v4918
      %v4920 = vsel %vm1786, %v4883, 0.0
      %v4921 = vadd.f32 %v4919, %v4920
      %v4922 = vsel %vm1786, %v4884, 0.0
      %v4923 = vadd.f32 %v4921, %v4922
      %v4924 = vsel %vm1786, %v4885, 0.0
      %v4925 = vadd.f32 %v4923, %v4924
      %v4926 = vsel %vm1786, %v4886, 0.0
      %v4927 = vadd.f32 %v4925, %v4926
      %v4928 = vsel %vm1786, %v4887, 0.0
      %v4929 = vadd.f32 %v4927, %v4928
      %v4930 = vsel %vm1786, %v4888, 0.0
      %v4931 = vadd.f32 %v4929, %v4930
      %v4932 = vsel %vm1786, %v4889, 0.0
      %v4933 = vadd.f32 %v4931, %v4932
      %v4934 = vsel %vm1786, %v4890, 0.0
      %v4935 = vadd.f32 %v4933, %v4934
      %v4936 = vsel %vm1786, %v4891, 0.0
      %v4937 = vadd.f32 %v4935, %v4936
      %v4938 = vsel %vm1786, %v4892, 0.0
      %v4939 = vadd.f32 %v4937, %v4938
      %v4940 = vsel %vm1786, %v4893, 0.0
      %v4941 = vadd.f32 %v4939, %v4940
      %v4942 = vsel %vm1786, %v4894, 0.0
      %v4943 = vadd.f32 %v4941, %v4942
      %v4944 = vsel %vm1786, %v4895, 0.0
      %v4945 = vadd.f32 %v4943, %v4944
      %v4946 = vsel %vm1786, %v4896, 0.0
      %v4947 = vadd.f32 %v4945, %v4946
      %v4948 = vsel %vm1786, %v4897, 0.0
      %v4949 = vadd.f32 %v4947, %v4948
      %v4950 = vsel %vm1786, %v4898, 0.0
      %v4951 = vadd.f32 %v4949, %v4950
      %v4952 = vsel %vm1786, %v4899, 0.0
      %v4953 = vadd.f32 %v4951, %v4952
      %v4954 = vsel %vm1786, %v4900, 0.0
      %v4955 = vadd.f32 %v4953, %v4954
      %v4956 = vsel %vm1786, %v4901, 0.0
      %v4957 = vadd.f32 %v4955, %v4956
      %v4958 = vsel %vm1786, %v4902, 0.0
      %v4959 = vadd.f32 %v4957, %v4958
      %v4960 = vsel %vm1786, %v4903, 0.0
      %v4961 = vadd.f32 %v4959, %v4960
      %v4962 = vsel %vm1786, %v4904, 0.0
      %v4963 = vadd.f32 %v4961, %v4962
      %v4964 = vsel %vm1786, %v4905, 0.0
      %v4965 = vadd.f32 %v4963, %v4964
      %v4966 = vsel %vm1786, %v4906, 0.0
      %v4967 = vadd.f32 %v4965, %v4966
      %v4968 = vsel %vm1786, %v4907, 0.0
      %v4969 = vadd.f32 %v4967, %v4968
      %v4970 = vsel %vm1786, %v4908, 0.0
      %v4971 = vadd.f32 %v4969, %v4970
      %v4972 = vrot.slane %v4971, 4
      %v4973 = vadd.f32 %v4971, %v4972
      %v4974 = vrot.slane %v4973, 2
      %v4975 = vadd.f32 %v4973, %v4974
      %v4976 = vrot.slane %v4975, 1
      %v4977 = vadd.f32 %v4975, %v4976
      %v4978 = vadd.f32 %v3213, %v4977
      %v4979 = vpack.c.bf16 %v4551, %v4551
      %v4980 = vpack.c.bf16 %v4552, %v4552
      %s4981 = scalar_lea.vmem %s289, 64
      %4982 = vst.msk [vmem:[%s4981] sm:$0xf] %vm601, %v4979
      %4983 = vst.msk [vmem:[%s4981 + $0x4] sm:$0xf] %vm601, %v4980
      %v4984 = vpack.c.bf16 %v4555, %v4555
      %v4985 = vpack.c.bf16 %v4556, %v4556
      %s4986 = scalar_lea.vmem %s289, 72
      %4987 = vst.msk [vmem:[%s4986] sm:$0xf] %vm601, %v4984
      %4988 = vst.msk [vmem:[%s4986 + $0x4] sm:$0xf] %vm601, %v4985
      %v4989 = vpack.c.bf16 %v4559, %v4559
      %v4990 = vpack.c.bf16 %v4560, %v4560
      %s4991 = scalar_lea.vmem %s289, 80
      %4992 = vst.msk [vmem:[%s4991] sm:$0xf] %vm601, %v4989
      %4993 = vst.msk [vmem:[%s4991 + $0x4] sm:$0xf] %vm601, %v4990
      %v4994 = vpack.c.bf16 %v4563, %v4563
      %v4995 = vpack.c.bf16 %v4564, %v4564
      %s4996 = scalar_lea.vmem %s289, 88
      %4997 = vst.msk [vmem:[%s4996] sm:$0xf] %vm601, %v4994
      %4998 = vst.msk [vmem:[%s4996 + $0x4] sm:$0xf] %vm601, %v4995
      %v4999 = vpack.c.bf16 %v4567, %v4567
      %v5000 = vpack.c.bf16 %v4568, %v4568
      %s5001 = scalar_lea.vmem %s289, 96
      %5002 = vst.msk [vmem:[%s5001] sm:$0xf] %vm601, %v4999
      %5003 = vst.msk [vmem:[%s5001 + $0x4] sm:$0xf] %vm601, %v5000
      %v5004 = vpack.c.bf16 %v4571, %v4571
      %v5005 = vpack.c.bf16 %v4572, %v4572
      %s5006 = scalar_lea.vmem %s289, 104
      %5007 = vst.msk [vmem:[%s5006] sm:$0xf] %vm601, %v5004
      %5008 = vst.msk [vmem:[%s5006 + $0x4] sm:$0xf] %vm601, %v5005
      %v5009 = vpack.c.bf16 %v4575, %v4575
      %v5010 = vpack.c.bf16 %v4576, %v4576
      %s5011 = scalar_lea.vmem %s289, 112
      %5012 = vst.msk [vmem:[%s5011] sm:$0xf] %vm601, %v5009
      %5013 = vst.msk [vmem:[%s5011 + $0x4] sm:$0xf] %vm601, %v5010
      %v5014 = vpack.c.bf16 %v4579, %v4579
      %v5015 = vpack.c.bf16 %v4580, %v4580
      %s5016 = scalar_lea.vmem %s289, 120
      %5017 = vst.msk [vmem:[%s5016] sm:$0xf] %vm601, %v5014
      %5018 = vst.msk [vmem:[%s5016 + $0x4] sm:$0xf] %vm601, %v5015
      %vm5019 = vcmask 516096
      %5020 = vst.msk [vmem:[%s292] sm:$0x1] %vm5019, %v4876
      %5021 = vst.msk [vmem:[%s295] sm:$0x1] %vm5019, %v4978
      %p5022 = scmp.lt.s32.totalorder %s19, 1
      %s5023 = scalar_select %p5022, %s19, 1
      %s5024 = smul.addr %s5023, 32
      %s5025 = smul.addr %s5024, 4
      %s5026 = scalar_lea.vmem %s5, %s5025
      %p5027 = scmp.lt.s32.totalorder %s19, 1
      %s5028 = scalar_select %p5027, %s19, 1
      %s5029 = scalar_lea.vmem %s6, %s5028
      %p5030 = scmp.lt.s32.totalorder %s19, 1
      %s5031 = scalar_select %p5030, %s19, 1
      %s5032 = scalar_lea.vmem %s7, %s5031
      // Predicated region
      $region41: #{basic_block_res_forward.4} parent=39 // pred_check
        %p5033 = pneg %p147
      $region42: #{basic_block_res_forward.4} parent=39 // pred_check_branch
        %5035 = sbr.rel (%p5033) target = $region44
      $region43: #{basic_block_res_forward.4} parent=39 // pred_region
        _
      $region44: #{basic_block_res_forward.4} parent=39 // pred_fallthru
        _
      // Predicated region
      $region45: #{basic_block_res_forward.4} parent=39 // pred_check
        %p5036 = pneg %p173
      $region46: #{basic_block_res_forward.4} parent=39 // pred_check_branch
        %5038 = sbr.rel (%p5036) target = $region48
      $region47: #{basic_block_res_forward.4} parent=39 // pred_region
        _
      $region48: #{basic_block_res_forward.4} parent=39 // pred_fallthru
        _
      // Predicated region
      $region49: #{basic_block_res_forward.4} parent=39 // pred_check
        %p5039 = pneg %p199
      $region50: #{basic_block_res_forward.4} parent=39 // pred_check_branch
        %5041 = sbr.rel (%p5039) target = $region52
      $region51: #{basic_block_res_forward.4} parent=39 // pred_region
        _
      $region52: #{basic_block_res_forward.4} parent=39 // pred_fallthru
        _
    $region40: #{basic_block_res_forward.4} parent=5 // pred_fallthru
      _
    %p5042 = scmp.le.s32.totalorder 2, %s14
    // Predicated region
    $region53: #{basic_block_res_forward.4} parent=5 // pred_check
      %p5043 = pneg %p5042
    $region54: #{basic_block_res_forward.4} parent=5 // pred_check_branch
      %5045 = sbr.rel (%p5043) target = $region56
    $region55: #{basic_block_res_forward.4} parent=5 // pred_region
      %s5046 = ssub.s32 %s14, 2
      // Predicated region
      $region57: #{basic_block_res_forward.4} parent=55 // pred_check
        %p5047 = pneg %p153
      $region58: #{basic_block_res_forward.4} parent=55 // pred_check_branch
        %5049 = sbr.rel (%p5047) target = $region60
      $region59: #{basic_block_res_forward.4} parent=55 // pred_region
        %p5050 = scmp.lt.s32.totalorder %s20, 1
        %s5051 = scalar_select %p5050, %s20, 1
        %s5052 = smul.addr %s5051, 32
        %s5053 = smul.addr %s5052, 4
        %s5054 = scalar_lea.vmem %s5, %s5053
      $region60: #{basic_block_res_forward.4} parent=55 // pred_fallthru
        _
      // Predicated region
      $region61: #{basic_block_res_forward.4} parent=55 // pred_check
        %p5055 = pneg %p179
      $region62: #{basic_block_res_forward.4} parent=55 // pred_check_branch
        %5057 = sbr.rel (%p5055) target = $region64
      $region63: #{basic_block_res_forward.4} parent=55 // pred_region
        %p5058 = scmp.lt.s32.totalorder %s20, 1
        %s5059 = scalar_select %p5058, %s20, 1
        %s5060 = scalar_lea.vmem %s6, %s5059
      $region64: #{basic_block_res_forward.4} parent=55 // pred_fallthru
        _
      // Predicated region
      $region65: #{basic_block_res_forward.4} parent=55 // pred_check
        %p5061 = pneg %p205
      $region66: #{basic_block_res_forward.4} parent=55 // pred_check_branch
        %5063 = sbr.rel (%p5061) target = $region68
      $region67: #{basic_block_res_forward.4} parent=55 // pred_region
        %p5064 = scmp.lt.s32.totalorder %s20, 1
        %s5065 = scalar_select %p5064, %s20, 1
        %s5066 = scalar_lea.vmem %s7, %s5065
      $region68: #{basic_block_res_forward.4} parent=55 // pred_fallthru
        _
    $region56: #{basic_block_res_forward.4} parent=5 // pred_fallthru
      _
  $region6: #{basic_block_res_forward.4} parent=0 // loop_footer
    %s18 = sadd.s32 1, %s14
  $region7: #{basic_block_res_forward.4} parent=0 // loop_footer_branch
    %13 = sbr.rel target = $region3
  $region8: #{basic_block_res_forward.4} parent=0 // loop_exit
    _

</llo_original>
